<compile_context>
chip_gen: v7x
topology: tpu7x:2x2x1
jax: 0.10.0
libtpu: 0.0.40
codegen_flags: <defaults>
</compile_context>

<pallas_src>
import functools

import jax
import jax.numpy as jnp
from jax.experimental import pallas as pl
from jax.experimental.pallas import tpu as pltpu


# ----------------------------------------------------------------------------
# Pallas kernels
# ----------------------------------------------------------------------------

def fc_in_pos_kernel(x_ref, w_ref, pos_ref, o_ref):
    """out = x @ W_in + pos  (bf16 MXU operands, f32 accumulate)."""
    y = jnp.dot(x_ref[...], w_ref[...], preferred_element_type=jnp.float32)
    o_ref[...] = (y + pos_ref[...]).astype(o_ref.dtype)


def encoder_stack_kernel(x_ref,
                         ln1_g_ref, ln1_b_ref,
                         wqkv_ref, bqkv_ref,
                         wo_ref, bo_ref,
                         ln2_g_ref, ln2_b_ref,
                         w1_ref, b1_ref,
                         w2_ref, b2_ref,
                         o_ref, res_ref, *, num_heads, batch, seq):
    """Whole TransformerEncoder stack; grid axis = layer index (arbitrary).

    res_ref is the f32 residual stream (B*S, C), resident in VMEM across all
    layers.  x_ref is only consumed at layer 0; o_ref only written at the last
    layer.
    """
    eps = 1e-5
    B, S = batch, seq
    l = pl.program_id(0)

    @pl.when(l == 0)
    def _():
        res_ref[...] = x_ref[...].reshape(B * S, -1).astype(jnp.float32)

    x = res_ref[...]                          # (B*S, C) f32 residual
    BS, C = x.shape
    H = num_heads
    dh = C // H

    def layer_norm(v, g_ref, b_ref):
        # E[x^2] - E[x]^2: both reductions over the same pass of v.
        mu = jnp.mean(v, axis=-1, keepdims=True)
        ms = jnp.mean(v * v, axis=-1, keepdims=True)
        var = ms - mu * mu
        return (v - mu) * jax.lax.rsqrt(var + eps) * g_ref[...] + b_ref[...]

    # ---- PreNorm + MultiheadAttention + residual ----
    y = layer_norm(x, ln1_g_ref, ln1_b_ref).astype(jnp.bfloat16)
    # Fused QKV projection (Q columns pre-scaled by 1/sqrt(dh) at init).
    qkv = (jnp.dot(y, wqkv_ref[...], preferred_element_type=jnp.float32)
           + bqkv_ref[...]).astype(jnp.bfloat16)          # (B*S, 3C)

    ctx_heads = []
    for h in range(H):                                     # static unroll, small H
        # lane-aligned 128-wide slices; reshape only splits the major dim.
        qh = qkv[:, h * dh:(h + 1) * dh].reshape(B, S, dh)
        kh = qkv[:, C + h * dh:C + (h + 1) * dh].reshape(B, S, dh)
        vh = qkv[:, 2 * C + h * dh:2 * C + (h + 1) * dh].reshape(B, S, dh)
        s = jnp.einsum('bqd,bkd->bqk', qh, kh,
                       preferred_element_type=jnp.float32)         # (B, S, S)
        s = s - jnp.max(s, axis=-1, keepdims=True)
        p = jnp.exp(s)
        p = p * pl.reciprocal(jnp.sum(p, axis=-1, keepdims=True), approx=True)
        ctx = jnp.einsum('bqk,bkd->bqd', p.astype(jnp.bfloat16), vh,
                         preferred_element_type=jnp.float32)        # (B, S, dh)
        ctx_heads.append(ctx.reshape(B * S, dh).astype(jnp.bfloat16))
    # concat heads along lanes -> single (B*S,C)@(C,C) out-proj: head-sum
    # happens inside the MXU f32 accumulator.
    ctx2d = ctx_heads[0] if H == 1 else jnp.concatenate(ctx_heads, axis=-1)

    attn = (jnp.dot(ctx2d, wo_ref[...], preferred_element_type=jnp.float32)
            + bo_ref[...])                                  # (B*S, C) f32
    x = x + attn

    # ---- PreNorm + FeedForward + residual ----
    z = layer_norm(x, ln2_g_ref, ln2_b_ref).astype(jnp.bfloat16)
    h1 = jnp.dot(z, w1_ref[...], preferred_element_type=jnp.float32) + b1_ref[...]
    # TODO(synk): torch nn.GELU() default is exact erf-GELU; tanh approximation
    # used for guaranteed Mosaic lowering of the transcendental.
    h1 = jax.nn.gelu(h1, approximate=True)
    ff = jnp.dot(h1.astype(jnp.bfloat16), w2_ref[...],
                 preferred_element_type=jnp.float32) + b2_ref[...]
    x = x + ff

    res_ref[...] = x                                        # f32 carry

    @pl.when(l == pl.num_programs(0) - 1)
    def _():
        o_ref[...] = x.reshape(B, S, C).astype(o_ref.dtype)


def fc_out_kernel(x_ref, w_ref, o_ref):
    """out = x @ W_out  (no bias, matching use_fc_bias=False)."""
    o_ref[...] = jnp.dot(x_ref[...], w_ref[...],
                         preferred_element_type=jnp.float32).astype(o_ref.dtype)


# ----------------------------------------------------------------------------
# Wrappers around pallas_call
# ----------------------------------------------------------------------------

def _row_tile(S, max_rows=512):
    """Largest row tile <= max_rows that divides S (multiple of 8), else S."""
    if S <= max_rows:
        return S
    for t in range(max_rows, 0, -8):
        if S % t == 0:
            return t
    # TODO(synk): masked-tail tiles for S not divisible by any 8-multiple.
    return S


def fc_in_pos(x, w_in, pos, *, ts):
    B, S, C = x.shape
    n_r = S // ts
    ce = pl.CostEstimate(flops=2 * B * S * C * C, transcendentals=0,
                         bytes_accessed=2 * (2 * B * S * C) + 2 * C * C + 4 * S * C)
    return pl.pallas_call(
        fc_in_pos_kernel,
        out_shape=jax.ShapeDtypeStruct((B, S, C), jnp.bfloat16),
        grid=(B, n_r),
        in_specs=[pl.BlockSpec((None, ts, C), lambda b, r: (b, r, 0)),
                  # constant-index weight: single-buffer (no prefetch benefit)
                  pl.BlockSpec((C, C), lambda b, r: (0, 0),
                               pipeline_mode=pl.Buffered(1)),
                  pl.BlockSpec((ts, C), lambda b, r: (r, 0))],
        out_specs=pl.BlockSpec((None, ts, C), lambda b, r: (b, r, 0)),
        compiler_params=pltpu.CompilerParams(
            dimension_semantics=("parallel", "parallel")),
        cost_estimate=ce,
    )(x, w_in, pos)


def encoder_stack(x, lp, *, num_heads):
    """All transformer layers in one pipelined pallas_call over grid=(depth,)."""
    B, S, C = x.shape
    depth = lp["wqkv"].shape[0]
    mlp = lp["w1"].shape[2]

    kern = functools.partial(encoder_stack_kernel, num_heads=num_heads,
                             batch=B, seq=S)

    def wspec(shape):
        n = len(shape)
        return pl.BlockSpec((None,) + shape,
                            lambda l, _n=n: (l,) + (0,) * _n)

    flops = depth * B * (2 * S * C * 3 * C + 4 * S * S * C
                         + 2 * S * C * C + 4 * S * C * mlp)
    trans = depth * B * (num_heads * S * S + S * mlp)
    wbytes = depth * 2 * (3 * C * C + C * C + 2 * C * mlp)
    ce = pl.CostEstimate(flops=flops, transcendentals=trans,
                         bytes_accessed=2 * (2 * B * S * C) + wbytes)

    return pl.pallas_call(
        kern,
        out_shape=jax.ShapeDtypeStruct((B, S, C), jnp.bfloat16),
        grid=(depth,),
        in_specs=[
            # activation block: constant index across layers -> single buffer
            pl.BlockSpec((B, S, C), lambda l: (0, 0, 0),
                         pipeline_mode=pl.Buffered(1)),
            wspec((1, C)), wspec((1, C)),              # LN1 gamma/beta
            wspec((C, 3 * C)), wspec((1, 3 * C)),      # fused in-proj (Q pre-scaled)
            wspec((C, C)), wspec((1, C)),              # out-proj
            wspec((1, C)), wspec((1, C)),              # LN2 gamma/beta
            wspec((C, mlp)), wspec((1, mlp)),          # MLP fc1
            wspec((mlp, C)), wspec((1, C)),            # MLP fc2
        ],
        out_specs=pl.BlockSpec((B, S, C), lambda l: (0, 0, 0)),
        scratch_shapes=[pltpu.VMEM((B * S, C), jnp.float32)],  # f32 residual
        compiler_params=pltpu.CompilerParams(
            # single "arbitrary" layer axis: resident residual + weight
            # prefetch; no parallel batch axis so v7x cores don't duplicate
            # the weight DMA stream.
            dimension_semantics=("arbitrary",),
            vmem_limit_bytes=48 * 1024 * 1024),
        cost_estimate=ce,
    )(x, lp["ln1_g"], lp["ln1_b"], lp["wqkv"], lp["bqkv"], lp["wo"], lp["bo"],
      lp["ln2_g"], lp["ln2_b"], lp["w1"], lp["b1"], lp["w2"], lp["b2"])


def fc_out(x, w_out, *, ts):
    B, S, C = x.shape
    E = w_out.shape[1]
    n_r = S // ts
    ce = pl.CostEstimate(flops=2 * B * S * C * E, transcendentals=0,
                         bytes_accessed=2 * B * S * C + 2 * C * E + 4 * B * S * E)
    return pl.pallas_call(
        fc_out_kernel,
        out_shape=jax.ShapeDtypeStruct((B, S, E), jnp.float32),
        grid=(B, n_r),
        in_specs=[pl.BlockSpec((None, ts, C), lambda b, r: (b, r, 0)),
                  pl.BlockSpec((C, E), lambda b, r: (0, 0),
                               pipeline_mode=pl.Buffered(1))],
        out_specs=pl.BlockSpec((None, ts, E), lambda b, r: (b, r, 0)),
        compiler_params=pltpu.CompilerParams(
            dimension_semantics=("parallel", "parallel")),
        cost_estimate=ce,
    )(x, w_out)


# ----------------------------------------------------------------------------
# Model: parameter init + forward
# ----------------------------------------------------------------------------

def init_params(key, *, shape, hidden_dim, embedding_dim, mlp_dim, depth,
                num_heads):
    n_dim = 3
    assert hidden_dim % n_dim == 0 and hidden_dim % num_heads == 0
    dh = hidden_dim // num_heads
    scale = 1.0 / float(dh) ** 0.5
    keys = iter(jax.random.split(key, 8 + 4 * depth))

    def tn(k, s, std=0.02):
        return std * jax.random.truncated_normal(k, -2.0, 2.0, s, jnp.float32)

    params = {
        # fc_in: torch Linear(hidden, hidden, bias=False); stored (in, out), bf16
        "w_in": tn(next(keys), (hidden_dim, hidden_dim)).astype(jnp.bfloat16),
        # AddBroadcastPosEmbed: emb d_i of shape (shape[i], hidden_dim // 3)
        "pos_d": [tn(next(keys), (shape[i], hidden_dim // n_dim))
                  for i in range(n_dim)],
        # fc_out (torch zero-inits; random here so the demo output is non-trivial)
        "w_out": tn(next(keys), (hidden_dim, embedding_dim)).astype(jnp.bfloat16),
    }

    wqkv_l, wo_l, w1_l, w2_l = [], [], [], []
    for _ in range(depth):
        wqkv = tn(next(keys), (hidden_dim, 3 * hidden_dim))
        # Fold the 1/sqrt(dh) attention scale into the Q columns (free at init).
        wqkv = wqkv.at[:, :hidden_dim].multiply(scale)
        wqkv_l.append(wqkv.astype(jnp.bfloat16))
        wo_l.append(tn(next(keys), (hidden_dim, hidden_dim)).astype(jnp.bfloat16))
        w1_l.append(tn(next(keys), (hidden_dim, mlp_dim)).astype(jnp.bfloat16))
        w2_l.append(tn(next(keys), (mlp_dim, hidden_dim)).astype(jnp.bfloat16))

    D, C, M = depth, hidden_dim, mlp_dim
    params["layers"] = {
        "ln1_g": jnp.ones((D, 1, C), jnp.float32),
        "ln1_b": jnp.zeros((D, 1, C), jnp.float32),
        "wqkv": jnp.stack(wqkv_l),                 # (D, C, 3C) bf16
        "bqkv": jnp.zeros((D, 1, 3 * C), jnp.float32),
        "wo": jnp.stack(wo_l),                     # (D, C, C) bf16
        "bo": jnp.zeros((D, 1, C), jnp.float32),
        "ln2_g": jnp.ones((D, 1, C), jnp.float32),
        "ln2_b": jnp.zeros((D, 1, C), jnp.float32),
        "w1": jnp.stack(w1_l),                     # (D, C, mlp) bf16
        "b1": jnp.zeros((D, 1, M), jnp.float32),
        "w2": jnp.stack(w2_l),                     # (D, mlp, C) bf16
        "b2": jnp.zeros((D, 1, C), jnp.float32),
    }
    return params


def build_pos_embed(pos_d, shape, hidden_dim):
    """Glue: broadcast-concat positional embeddings -> (S, hidden_dim), f32."""
    t, h, w = shape
    c3 = hidden_dim // 3
    e0 = jnp.broadcast_to(pos_d[0][:, None, None, :], (t, h, w, c3))
    e1 = jnp.broadcast_to(pos_d[1][None, :, None, :], (t, h, w, c3))
    e2 = jnp.broadcast_to(pos_d[2][None, None, :, :], (t, h, w, c3))
    pos = jnp.concatenate([e0, e1, e2], axis=-1)            # (t, h, w, C)
    return pos.reshape(t * h * w, hidden_dim)


def mask_transformer_forward(vid_token, params, *, num_heads):
    b, t, h, w, c = vid_token.shape
    S = t * h * w
    x = vid_token.reshape(b, S, c).astype(jnp.bfloat16)     # glue reshape + bf16
    pos = build_pos_embed(params["pos_d"], (t, h, w), c)    # f32
    ts = _row_tile(S)

    x = fc_in_pos(x, params["w_in"], pos, ts=ts)            # fc_in + pos_embd
    x = encoder_stack(x, params["layers"], num_heads=num_heads)  # all layers, fused
    x_out = fc_out(x, params["w_out"], ts=ts)               # fc_out (f32 logits)
    return (x_out,)


# ----------------------------------------------------------------------------
# Demo
# ----------------------------------------------------------------------------

if __name__ == "__main__":
    # Small but lane-dense config: shape=(t,h,w)=(2,4,4) -> S=32,
    # hidden=384 (divisible by 3 and by heads, multiple of 128),
    # mlp=768, embedding=256, depth=2, heads=3 (head dim = 128), batch=2.
    B, T, H, W = 2, 2, 4, 4
    HIDDEN, EMBED, MLP, DEPTH, HEADS = 384, 256, 768, 2, 3

    key = jax.random.PRNGKey(0)
    k_x, k_p = jax.random.split(key)
    vid_token = jax.random.normal(k_x, (B, T, H, W, HIDDEN), jnp.float32)

    params = init_params(k_p, shape=(T, H, W), hidden_dim=HIDDEN,
                         embedding_dim=EMBED, mlp_dim=MLP, depth=DEPTH,
                         num_heads=HEADS)

    (logits,) = jax.jit(
        functools.partial(mask_transformer_forward, num_heads=HEADS)
    )(vid_token, params)
    jax.block_until_ready(logits)

    assert logits.shape == (B, T * H * W, EMBED), logits.shape
    assert bool(jnp.all(jnp.isfinite(logits)))
    print("KERNEL_OK")
</pallas_src>

<mosaic_0001>
module attributes {stable_mosaic.version = 11 : i64} {
  func.func @encoder_stack_kernel(%arg0: i32, %arg1: memref<2x32x384xbf16, #tpu.memory_space<vmem>>, %arg2: memref<1x1x384xf32, #tpu.memory_space<vmem>>, %arg3: memref<1x1x384xf32, #tpu.memory_space<vmem>>, %arg4: memref<1x384x1152xbf16, #tpu.memory_space<vmem>>, %arg5: memref<1x1x1152xf32, #tpu.memory_space<vmem>>, %arg6: memref<1x384x384xbf16, #tpu.memory_space<vmem>>, %arg7: memref<1x1x384xf32, #tpu.memory_space<vmem>>, %arg8: memref<1x1x384xf32, #tpu.memory_space<vmem>>, %arg9: memref<1x1x384xf32, #tpu.memory_space<vmem>>, %arg10: memref<1x384x768xbf16, #tpu.memory_space<vmem>>, %arg11: memref<1x1x768xf32, #tpu.memory_space<vmem>>, %arg12: memref<1x768x384xbf16, #tpu.memory_space<vmem>>, %arg13: memref<1x1x384xf32, #tpu.memory_space<vmem>>, %arg14: memref<2x32x384xbf16, #tpu.memory_space<vmem>>, %arg15: memref<64x384xf32, #tpu.memory_space<vmem>>) attributes {dimension_semantics = [#tpu.dimension_semantics<arbitrary>], iteration_bounds = array<i64: 2>, scalar_prefetch = 0 : i64, scratch_operands = 1 : i64, tpu.core_type = #tpu.core_type<tc>, window_params = [{pipeline_mode = #tpu.pipeline_mode<synchronous>, transform_indices = @transform_0, window_bounds = array<i64: 2, 32, 384>}, {transform_indices = @transform_1, window_bounds = array<i64: 1, 1, 384>}, {transform_indices = @transform_2, window_bounds = array<i64: 1, 1, 384>}, {transform_indices = @transform_3, window_bounds = array<i64: 1, 384, 1152>}, {transform_indices = @transform_4, window_bounds = array<i64: 1, 1, 1152>}, {transform_indices = @transform_5, window_bounds = array<i64: 1, 384, 384>}, {transform_indices = @transform_6, window_bounds = array<i64: 1, 1, 384>}, {transform_indices = @transform_7, window_bounds = array<i64: 1, 1, 384>}, {transform_indices = @transform_8, window_bounds = array<i64: 1, 1, 384>}, {transform_indices = @transform_9, window_bounds = array<i64: 1, 384, 768>}, {transform_indices = @transform_10, window_bounds = array<i64: 1, 1, 768>}, {transform_indices = @transform_11, window_bounds = array<i64: 1, 768, 384>}, {transform_indices = @transform_12, window_bounds = array<i64: 1, 1, 384>}, {pipeline_mode = #tpu.pipeline_mode<synchronous>, transform_indices = @transform_13, window_bounds = array<i64: 2, 32, 384>}]} {
    %c0_i32 = arith.constant 0 : i32
    %0 = arith.cmpi eq, %arg0, %c0_i32 : i32
    %1 = arith.extui %0 : i1 to i32
    %c0_i32_0 = arith.constant 0 : i32
    %2 = arith.cmpi ne, %1, %c0_i32_0 : i32
    scf.if %2 {
      %c0_70 = arith.constant 0 : index
      %c0_71 = arith.constant 0 : index
      %c0_72 = arith.constant 0 : index
      %171 = vector.load %arg1[%c0_70, %c0_71, %c0_72] : memref<2x32x384xbf16, #tpu.memory_space<vmem>>, vector<2x32x384xbf16>
      %172 = vector.shape_cast %171 : vector<2x32x384xbf16> to vector<64x384xbf16>
      %173 = arith.extf %172 : vector<64x384xbf16> to vector<64x384xf32>
      %c0_73 = arith.constant 0 : index
      %c0_74 = arith.constant 0 : index
      %174 = vector.load %arg15[%c0_73, %c0_74] : memref<64x384xf32, #tpu.memory_space<vmem>>, vector<64x384xf32>
      tpu.vector_store %arg15[%c0_73, %c0_74], %173 {strides = array<i32>} : memref<64x384xf32, #tpu.memory_space<vmem>>, vector<64x384xf32>,
    } else {
    }
    %c0 = arith.constant 0 : index
    %c0_1 = arith.constant 0 : index
    %3 = vector.load %arg15[%c0, %c0_1] : memref<64x384xf32, #tpu.memory_space<vmem>>, vector<64x384xf32>
    %cst = arith.constant dense<0.000000e+00> : vector<64xf32>
    %4 = vector.multi_reduction <add>, %3, %cst [1] : vector<64x384xf32> to vector<64xf32>
    %5 = vector.shape_cast %4 : vector<64xf32> to vector<64x1xf32>
    %cst_2 = arith.constant 3.840000e+02 : f32
    %6 = vector.broadcast %cst_2 : f32 to vector<64x1xf32>
    %7 = arith.divf %5, %6 : vector<64x1xf32>
    %8 = arith.mulf %3, %3 : vector<64x384xf32>
    %cst_3 = arith.constant dense<0.000000e+00> : vector<64xf32>
    %9 = vector.multi_reduction <add>, %8, %cst_3 [1] : vector<64x384xf32> to vector<64xf32>
    %10 = vector.shape_cast %9 : vector<64xf32> to vector<64x1xf32>
    %cst_4 = arith.constant 3.840000e+02 : f32
    %11 = vector.broadcast %cst_4 : f32 to vector<64x1xf32>
    %12 = arith.divf %10, %11 : vector<64x1xf32>
    %13 = arith.mulf %7, %7 : vector<64x1xf32>
    %14 = arith.subf %12, %13 : vector<64x1xf32>
    %15 = vector.broadcast %7 : vector<64x1xf32> to vector<64x384xf32>
    %16 = arith.subf %3, %15 : vector<64x384xf32>
    %cst_5 = arith.constant 9.99999974E-6 : f32
    %17 = vector.broadcast %cst_5 : f32 to vector<64x1xf32>
    %18 = arith.addf %14, %17 : vector<64x1xf32>
    %19 = math.rsqrt %18 : vector<64x1xf32>
    %20 = vector.broadcast %19 : vector<64x1xf32> to vector<64x384xf32>
    %21 = arith.mulf %16, %20 : vector<64x384xf32>
    %c0_6 = arith.constant 0 : index
    %c0_7 = arith.constant 0 : index
    %c0_8 = arith.constant 0 : index
    %22 = vector.load %arg2[%c0_6, %c0_7, %c0_8] : memref<1x1x384xf32, #tpu.memory_space<vmem>>, vector<1x1x384xf32>
    %23 = vector.shape_cast %22 : vector<1x1x384xf32> to vector<1x384xf32>
    %24 = vector.broadcast %23 : vector<1x384xf32> to vector<64x384xf32>
    %25 = arith.mulf %21, %24 : vector<64x384xf32>
    %c0_9 = arith.constant 0 : index
    %c0_10 = arith.constant 0 : index
    %c0_11 = arith.constant 0 : index
    %26 = vector.load %arg3[%c0_9, %c0_10, %c0_11] : memref<1x1x384xf32, #tpu.memory_space<vmem>>, vector<1x1x384xf32>
    %27 = vector.shape_cast %26 : vector<1x1x384xf32> to vector<1x384xf32>
    %28 = vector.broadcast %27 : vector<1x384xf32> to vector<64x384xf32>
    %29 = arith.addf %25, %28 : vector<64x384xf32>
    %30 = arith.truncf %29 : vector<64x384xf32> to vector<64x384xbf16>
    %c0_12 = arith.constant 0 : index
    %c0_13 = arith.constant 0 : index
    %c0_14 = arith.constant 0 : index
    %31 = vector.load %arg4[%c0_12, %c0_13, %c0_14] : memref<1x384x1152xbf16, #tpu.memory_space<vmem>>, vector<1x384x1152xbf16>
    %32 = vector.shape_cast %31 : vector<1x384x1152xbf16> to vector<384x1152xbf16>
    %cst_15 = arith.constant dense<0.000000e+00> : vector<64x1152xf32>
    %33 = tpu.matmul %30, %32, %cst_15 {dimension_numbers = #tpu.dot_dimension_numbers<[1], [0], [0], [1], [0, 0, 1, 1], [], []>} : vector<64x384xbf16>, vector<384x1152xbf16>, vector<64x1152xf32> -> vector<64x1152xf32>
    %c0_16 = arith.constant 0 : index
    %c0_17 = arith.constant 0 : index
    %c0_18 = arith.constant 0 : index
    %34 = vector.load %arg5[%c0_16, %c0_17, %c0_18] : memref<1x1x1152xf32, #tpu.memory_space<vmem>>, vector<1x1x1152xf32>
    %35 = vector.shape_cast %34 : vector<1x1x1152xf32> to vector<1x1152xf32>
    %36 = vector.broadcast %35 : vector<1x1152xf32> to vector<64x1152xf32>
    %37 = arith.addf %33, %36 : vector<64x1152xf32>
    %38 = arith.truncf %37 : vector<64x1152xf32> to vector<64x1152xbf16>
    %39 = vector.extract_strided_slice %38 {offsets = [0, 0], sizes = [64, 128], strides = [1, 1]} : vector<64x1152xbf16> to vector<64x128xbf16>
    %40 = vector.shape_cast %39 : vector<64x128xbf16> to vector<2x32x128xbf16>
    %41 = vector.extract_strided_slice %38 {offsets = [0, 384], sizes = [64, 128], strides = [1, 1]} : vector<64x1152xbf16> to vector<64x128xbf16>
    %42 = vector.shape_cast %41 : vector<64x128xbf16> to vector<2x32x128xbf16>
    %43 = vector.extract_strided_slice %38 {offsets = [0, 768], sizes = [64, 128], strides = [1, 1]} : vector<64x1152xbf16> to vector<64x128xbf16>
    %44 = vector.shape_cast %43 : vector<64x128xbf16> to vector<2x32x128xbf16>
    "tpu.trace_start"() <{level = 10 : i32, message = "bqd,bkd->bqk"}> : () -> ()
    %cst_19 = arith.constant dense<0.000000e+00> : vector<2x32x32xf32>
    %45 = tpu.matmul %40, %42, %cst_19 {dimension_numbers = #tpu.dot_dimension_numbers<[2], [2], [1], [1], [0, 0, 0, 1, 1, 1], [0], [0]>} : vector<2x32x128xbf16>, vector<2x32x128xbf16>, vector<2x32x32xf32> -> vector<2x32x32xf32>
    "tpu.trace_stop"() : () -> ()
    %cst_20 = arith.constant dense<0xFF800000> : vector<2x32xf32>
    %46 = vector.multi_reduction <maximumf>, %45, %cst_20 [2] : vector<2x32x32xf32> to vector<2x32xf32>
    %47 = vector.shape_cast %46 : vector<2x32xf32> to vector<2x32x1xf32>
    %48 = vector.broadcast %47 : vector<2x32x1xf32> to vector<2x32x32xf32>
    %49 = arith.subf %45, %48 : vector<2x32x32xf32>
    %50 = math.exp %49 : vector<2x32x32xf32>
    %cst_21 = arith.constant dense<0.000000e+00> : vector<2x32xf32>
    %51 = vector.multi_reduction <add>, %50, %cst_21 [2] : vector<2x32x32xf32> to vector<2x32xf32>
    %52 = vector.shape_cast %51 : vector<2x32xf32> to vector<2x32x1xf32>
    %53 = tpu.reciprocal %52 {approx = true} : vector<2x32x1xf32> -> vector<2x32x1xf32>
    %54 = vector.broadcast %53 : vector<2x32x1xf32> to vector<2x32x32xf32>
    %55 = arith.mulf %50, %54 : vector<2x32x32xf32>
    %56 = arith.truncf %55 : vector<2x32x32xf32> to vector<2x32x32xbf16>
    "tpu.trace_start"() <{level = 10 : i32, message = "bqk,bkd->bqd"}> : () -> ()
    %cst_22 = arith.constant dense<0.000000e+00> : vector<2x32x128xf32>
    %57 = tpu.matmul %56, %44, %cst_22 {dimension_numbers = #tpu.dot_dimension_numbers<[2], [1], [1], [2], [0, 0, 0, 1, 1, 2], [0], [0]>} : vector<2x32x32xbf16>, vector<2x32x128xbf16>, vector<2x32x128xf32> -> vector<2x32x128xf32>
    "tpu.trace_stop"() : () -> ()
    %58 = vector.shape_cast %57 : vector<2x32x128xf32> to vector<64x128xf32>
    %59 = arith.truncf %58 : vector<64x128xf32> to vector<64x128xbf16>
    %60 = vector.extract_strided_slice %38 {offsets = [0, 128], sizes = [64, 128], strides = [1, 1]} : vector<64x1152xbf16> to vector<64x128xbf16>
    %61 = vector.shape_cast %60 : vector<64x128xbf16> to vector<2x32x128xbf16>
    %62 = vector.extract_strided_slice %38 {offsets = [0, 512], sizes = [64, 128], strides = [1, 1]} : vector<64x1152xbf16> to vector<64x128xbf16>
    %63 = vector.shape_cast %62 : vector<64x128xbf16> to vector<2x32x128xbf16>
    %64 = vector.extract_strided_slice %38 {offsets = [0, 896], sizes = [64, 128], strides = [1, 1]} : vector<64x1152xbf16> to vector<64x128xbf16>
    %65 = vector.shape_cast %64 : vector<64x128xbf16> to vector<2x32x128xbf16>
    "tpu.trace_start"() <{level = 10 : i32, message = "bqd,bkd->bqk"}> : () -> ()
    %cst_23 = arith.constant dense<0.000000e+00> : vector<2x32x32xf32>
    %66 = tpu.matmul %61, %63, %cst_23 {dimension_numbers = #tpu.dot_dimension_numbers<[2], [2], [1], [1], [0, 0, 0, 1, 1, 1], [0], [0]>} : vector<2x32x128xbf16>, vector<2x32x128xbf16>, vector<2x32x32xf32> -> vector<2x32x32xf32>
    "tpu.trace_stop"() : () -> ()
    %cst_24 = arith.constant dense<0xFF800000> : vector<2x32xf32>
    %67 = vector.multi_reduction <maximumf>, %66, %cst_24 [2] : vector<2x32x32xf32> to vector<2x32xf32>
    %68 = vector.shape_cast %67 : vector<2x32xf32> to vector<2x32x1xf32>
    %69 = vector.broadcast %68 : vector<2x32x1xf32> to vector<2x32x32xf32>
    %70 = arith.subf %66, %69 : vector<2x32x32xf32>
    %71 = math.exp %70 : vector<2x32x32xf32>
    %cst_25 = arith.constant dense<0.000000e+00> : vector<2x32xf32>
    %72 = vector.multi_reduction <add>, %71, %cst_25 [2] : vector<2x32x32xf32> to vector<2x32xf32>
    %73 = vector.shape_cast %72 : vector<2x32xf32> to vector<2x32x1xf32>
    %74 = tpu.reciprocal %73 {approx = true} : vector<2x32x1xf32> -> vector<2x32x1xf32>
    %75 = vector.broadcast %74 : vector<2x32x1xf32> to vector<2x32x32xf32>
    %76 = arith.mulf %71, %75 : vector<2x32x32xf32>
    %77 = arith.truncf %76 : vector<2x32x32xf32> to vector<2x32x32xbf16>
    "tpu.trace_start"() <{level = 10 : i32, message = "bqk,bkd->bqd"}> : () -> ()
    %cst_26 = arith.constant dense<0.000000e+00> : vector<2x32x128xf32>
    %78 = tpu.matmul %77, %65, %cst_26 {dimension_numbers = #tpu.dot_dimension_numbers<[2], [1], [1], [2], [0, 0, 0, 1, 1, 2], [0], [0]>} : vector<2x32x32xbf16>, vector<2x32x128xbf16>, vector<2x32x128xf32> -> vector<2x32x128xf32>
    "tpu.trace_stop"() : () -> ()
    %79 = vector.shape_cast %78 : vector<2x32x128xf32> to vector<64x128xf32>
    %80 = arith.truncf %79 : vector<64x128xf32> to vector<64x128xbf16>
    %81 = vector.extract_strided_slice %38 {offsets = [0, 256], sizes = [64, 128], strides = [1, 1]} : vector<64x1152xbf16> to vector<64x128xbf16>
    %82 = vector.shape_cast %81 : vector<64x128xbf16> to vector<2x32x128xbf16>
    %83 = vector.extract_strided_slice %38 {offsets = [0, 640], sizes = [64, 128], strides = [1, 1]} : vector<64x1152xbf16> to vector<64x128xbf16>
    %84 = vector.shape_cast %83 : vector<64x128xbf16> to vector<2x32x128xbf16>
    %85 = vector.extract_strided_slice %38 {offsets = [0, 1024], sizes = [64, 128], strides = [1, 1]} : vector<64x1152xbf16> to vector<64x128xbf16>
    %86 = vector.shape_cast %85 : vector<64x128xbf16> to vector<2x32x128xbf16>
    "tpu.trace_start"() <{level = 10 : i32, message = "bqd,bkd->bqk"}> : () -> ()
    %cst_27 = arith.constant dense<0.000000e+00> : vector<2x32x32xf32>
    %87 = tpu.matmul %82, %84, %cst_27 {dimension_numbers = #tpu.dot_dimension_numbers<[2], [2], [1], [1], [0, 0, 0, 1, 1, 1], [0], [0]>} : vector<2x32x128xbf16>, vector<2x32x128xbf16>, vector<2x32x32xf32> -> vector<2x32x32xf32>
    "tpu.trace_stop"() : () -> ()
    %cst_28 = arith.constant dense<0xFF800000> : vector<2x32xf32>
    %88 = vector.multi_reduction <maximumf>, %87, %cst_28 [2] : vector<2x32x32xf32> to vector<2x32xf32>
    %89 = vector.shape_cast %88 : vector<2x32xf32> to vector<2x32x1xf32>
    %90 = vector.broadcast %89 : vector<2x32x1xf32> to vector<2x32x32xf32>
    %91 = arith.subf %87, %90 : vector<2x32x32xf32>
    %92 = math.exp %91 : vector<2x32x32xf32>
    %cst_29 = arith.constant dense<0.000000e+00> : vector<2x32xf32>
    %93 = vector.multi_reduction <add>, %92, %cst_29 [2] : vector<2x32x32xf32> to vector<2x32xf32>
    %94 = vector.shape_cast %93 : vector<2x32xf32> to vector<2x32x1xf32>
    %95 = tpu.reciprocal %94 {approx = true} : vector<2x32x1xf32> -> vector<2x32x1xf32>
    %96 = vector.broadcast %95 : vector<2x32x1xf32> to vector<2x32x32xf32>
    %97 = arith.mulf %92, %96 : vector<2x32x32xf32>
    %98 = arith.truncf %97 : vector<2x32x32xf32> to vector<2x32x32xbf16>
    "tpu.trace_start"() <{level = 10 : i32, message = "bqk,bkd->bqd"}> : () -> ()
    %cst_30 = arith.constant dense<0.000000e+00> : vector<2x32x128xf32>
    %99 = tpu.matmul %98, %86, %cst_30 {dimension_numbers = #tpu.dot_dimension_numbers<[2], [1], [1], [2], [0, 0, 0, 1, 1, 2], [0], [0]>} : vector<2x32x32xbf16>, vector<2x32x128xbf16>, vector<2x32x128xf32> -> vector<2x32x128xf32>
    "tpu.trace_stop"() : () -> ()
    %100 = vector.shape_cast %99 : vector<2x32x128xf32> to vector<64x128xf32>
    %101 = arith.truncf %100 : vector<64x128xf32> to vector<64x128xbf16>
    %102 = tpu.concatenate %59, %80, %101 in 1 : vector<64x128xbf16>, vector<64x128xbf16>, vector<64x128xbf16> -> vector<64x384xbf16>
    %c0_31 = arith.constant 0 : index
    %c0_32 = arith.constant 0 : index
    %c0_33 = arith.constant 0 : index
    %103 = vector.load %arg6[%c0_31, %c0_32, %c0_33] : memref<1x384x384xbf16, #tpu.memory_space<vmem>>, vector<1x384x384xbf16>
    %104 = vector.shape_cast %103 : vector<1x384x384xbf16> to vector<384x384xbf16>
    %cst_34 = arith.constant dense<0.000000e+00> : vector<64x384xf32>
    %105 = tpu.matmul %102, %104, %cst_34 {dimension_numbers = #tpu.dot_dimension_numbers<[1], [0], [0], [1], [0, 0, 1, 1], [], []>} : vector<64x384xbf16>, vector<384x384xbf16>, vector<64x384xf32> -> vector<64x384xf32>
    %c0_35 = arith.constant 0 : index
    %c0_36 = arith.constant 0 : index
    %c0_37 = arith.constant 0 : index
    %106 = vector.load %arg7[%c0_35, %c0_36, %c0_37] : memref<1x1x384xf32, #tpu.memory_space<vmem>>, vector<1x1x384xf32>
    %107 = vector.shape_cast %106 : vector<1x1x384xf32> to vector<1x384xf32>
    %108 = vector.broadcast %107 : vector<1x384xf32> to vector<64x384xf32>
    %109 = arith.addf %105, %108 : vector<64x384xf32>
    %110 = arith.addf %3, %109 : vector<64x384xf32>
    %cst_38 = arith.constant dense<0.000000e+00> : vector<64xf32>
    %111 = vector.multi_reduction <add>, %110, %cst_38 [1] : vector<64x384xf32> to vector<64xf32>
    %112 = vector.shape_cast %111 : vector<64xf32> to vector<64x1xf32>
    %cst_39 = arith.constant 3.840000e+02 : f32
    %113 = vector.broadcast %cst_39 : f32 to vector<64x1xf32>
    %114 = arith.divf %112, %113 : vector<64x1xf32>
    %115 = arith.mulf %110, %110 : vector<64x384xf32>
    %cst_40 = arith.constant dense<0.000000e+00> : vector<64xf32>
    %116 = vector.multi_reduction <add>, %115, %cst_40 [1] : vector<64x384xf32> to vector<64xf32>
    %117 = vector.shape_cast %116 : vector<64xf32> to vector<64x1xf32>
    %cst_41 = arith.constant 3.840000e+02 : f32
    %118 = vector.broadcast %cst_41 : f32 to vector<64x1xf32>
    %119 = arith.divf %117, %118 : vector<64x1xf32>
    %120 = arith.mulf %114, %114 : vector<64x1xf32>
    %121 = arith.subf %119, %120 : vector<64x1xf32>
    %122 = vector.broadcast %114 : vector<64x1xf32> to vector<64x384xf32>
    %123 = arith.subf %110, %122 : vector<64x384xf32>
    %cst_42 = arith.constant 9.99999974E-6 : f32
    %124 = vector.broadcast %cst_42 : f32 to vector<64x1xf32>
    %125 = arith.addf %121, %124 : vector<64x1xf32>
    %126 = math.rsqrt %125 : vector<64x1xf32>
    %127 = vector.broadcast %126 : vector<64x1xf32> to vector<64x384xf32>
    %128 = arith.mulf %123, %127 : vector<64x384xf32>
    %c0_43 = arith.constant 0 : index
    %c0_44 = arith.constant 0 : index
    %c0_45 = arith.constant 0 : index
    %129 = vector.load %arg8[%c0_43, %c0_44, %c0_45] : memref<1x1x384xf32, #tpu.memory_space<vmem>>, vector<1x1x384xf32>
    %130 = vector.shape_cast %129 : vector<1x1x384xf32> to vector<1x384xf32>
    %131 = vector.broadcast %130 : vector<1x384xf32> to vector<64x384xf32>
    %132 = arith.mulf %128, %131 : vector<64x384xf32>
    %c0_46 = arith.constant 0 : index
    %c0_47 = arith.constant 0 : index
    %c0_48 = arith.constant 0 : index
    %133 = vector.load %arg9[%c0_46, %c0_47, %c0_48] : memref<1x1x384xf32, #tpu.memory_space<vmem>>, vector<1x1x384xf32>
    %134 = vector.shape_cast %133 : vector<1x1x384xf32> to vector<1x384xf32>
    %135 = vector.broadcast %134 : vector<1x384xf32> to vector<64x384xf32>
    %136 = arith.addf %132, %135 : vector<64x384xf32>
    %137 = arith.truncf %136 : vector<64x384xf32> to vector<64x384xbf16>
    %c0_49 = arith.constant 0 : index
    %c0_50 = arith.constant 0 : index
    %c0_51 = arith.constant 0 : index
    %138 = vector.load %arg10[%c0_49, %c0_50, %c0_51] : memref<1x384x768xbf16, #tpu.memory_space<vmem>>, vector<1x384x768xbf16>
    %139 = vector.shape_cast %138 : vector<1x384x768xbf16> to vector<384x768xbf16>
    %cst_52 = arith.constant dense<0.000000e+00> : vector<64x768xf32>
    %140 = tpu.matmul %137, %139, %cst_52 {dimension_numbers = #tpu.dot_dimension_numbers<[1], [0], [0], [1], [0, 0, 1, 1], [], []>} : vector<64x384xbf16>, vector<384x768xbf16>, vector<64x768xf32> -> vector<64x768xf32>
    %c0_53 = arith.constant 0 : index
    %c0_54 = arith.constant 0 : index
    %c0_55 = arith.constant 0 : index
    %141 = vector.load %arg11[%c0_53, %c0_54, %c0_55] : memref<1x1x768xf32, #tpu.memory_space<vmem>>, vector<1x1x768xf32>
    %142 = vector.shape_cast %141 : vector<1x1x768xf32> to vector<1x768xf32>
    %143 = vector.broadcast %142 : vector<1x768xf32> to vector<64x768xf32>
    %144 = arith.addf %140, %143 : vector<64x768xf32>
    %145 = arith.mulf %144, %144 : vector<64x768xf32>
    %146 = arith.mulf %144, %145 : vector<64x768xf32>
    %cst_56 = arith.constant 4.471500e-02 : f32
    %147 = vector.broadcast %cst_56 : f32 to vector<64x768xf32>
    %148 = arith.mulf %147, %146 : vector<64x768xf32>
    %149 = arith.addf %144, %148 : vector<64x768xf32>
    %cst_57 = arith.constant 0.797884583 : f32
    %150 = vector.broadcast %cst_57 : f32 to vector<64x768xf32>
    %151 = arith.mulf %150, %149 : vector<64x768xf32>
    %152 = math.tanh %151 : vector<64x768xf32>
    %cst_58 = arith.constant 1.000000e+00 : f32
    %153 = vector.broadcast %cst_58 : f32 to vector<64x768xf32>
    %154 = arith.addf %153, %152 : vector<64x768xf32>
    %cst_59 = arith.constant 5.000000e-01 : f32
    %155 = vector.broadcast %cst_59 : f32 to vector<64x768xf32>
    %156 = arith.mulf %155, %154 : vector<64x768xf32>
    %157 = arith.mulf %144, %156 : vector<64x768xf32>
    %158 = arith.truncf %157 : vector<64x768xf32> to vector<64x768xbf16>
    %c0_60 = arith.constant 0 : index
    %c0_61 = arith.constant 0 : index
    %c0_62 = arith.constant 0 : index
    %159 = vector.load %arg12[%c0_60, %c0_61, %c0_62] : memref<1x768x384xbf16, #tpu.memory_space<vmem>>, vector<1x768x384xbf16>
    %160 = vector.shape_cast %159 : vector<1x768x384xbf16> to vector<768x384xbf16>
    %cst_63 = arith.constant dense<0.000000e+00> : vector<64x384xf32>
    %161 = tpu.matmul %158, %160, %cst_63 {dimension_numbers = #tpu.dot_dimension_numbers<[1], [0], [0], [1], [0, 0, 1, 1], [], []>} : vector<64x768xbf16>, vector<768x384xbf16>, vector<64x384xf32> -> vector<64x384xf32>
    %c0_64 = arith.constant 0 : index
    %c0_65 = arith.constant 0 : index
    %c0_66 = arith.constant 0 : index
    %162 = vector.load %arg13[%c0_64, %c0_65, %c0_66] : memref<1x1x384xf32, #tpu.memory_space<vmem>>, vector<1x1x384xf32>
    %163 = vector.shape_cast %162 : vector<1x1x384xf32> to vector<1x384xf32>
    %164 = vector.broadcast %163 : vector<1x384xf32> to vector<64x384xf32>
    %165 = arith.addf %161, %164 : vector<64x384xf32>
    %166 = arith.addf %110, %165 : vector<64x384xf32>
    %c0_67 = arith.constant 0 : index
    %c0_68 = arith.constant 0 : index
    %167 = vector.load %arg15[%c0_67, %c0_68] : memref<64x384xf32, #tpu.memory_space<vmem>>, vector<64x384xf32>
    tpu.vector_store %arg15[%c0_67, %c0_68], %166 {strides = array<i32>} : memref<64x384xf32, #tpu.memory_space<vmem>>, vector<64x384xf32>,
    %c1_i32 = arith.constant 1 : i32
    %168 = arith.cmpi eq, %arg0, %c1_i32 : i32
    %169 = arith.extui %168 : i1 to i32
    %c0_i32_69 = arith.constant 0 : i32
    %170 = arith.cmpi ne, %169, %c0_i32_69 : i32
    scf.if %170 {
      %171 = vector.shape_cast %166 : vector<64x384xf32> to vector<2x32x384xf32>
      %172 = arith.truncf %171 : vector<2x32x384xf32> to vector<2x32x384xbf16>
      %c0_70 = arith.constant 0 : index
      %c0_71 = arith.constant 0 : index
      %c0_72 = arith.constant 0 : index
      %173 = vector.load %arg14[%c0_70, %c0_71, %c0_72] : memref<2x32x384xbf16, #tpu.memory_space<vmem>>, vector<2x32x384xbf16>
      tpu.vector_store %arg14[%c0_70, %c0_71, %c0_72], %172 {strides = array<i32>} : memref<2x32x384xbf16, #tpu.memory_space<vmem>>, vector<2x32x384xbf16>,
    } else {
    }
    return
  }
  func.func @transform_0(%arg0: i32) -> (i32, i32, i32) {
    %c0_i32 = arith.constant 0 : i32
    %c0_i32_0 = arith.constant 0 : i32
    %c0_i32_1 = arith.constant 0 : i32
    %c0_i32_2 = arith.constant 0 : i32
    return %c0_i32, %c0_i32_0, %c0_i32_1 : i32, i32, i32
  }
  func.func @transform_1(%arg0: i32) -> (i32, i32, i32) {
    %c0_i32 = arith.constant 0 : i32
    %c0_i32_0 = arith.constant 0 : i32
    %c0_i32_1 = arith.constant 0 : i32
    return %arg0, %c0_i32, %c0_i32_0 : i32, i32, i32
  }
  func.func @transform_2(%arg0: i32) -> (i32, i32, i32) {
    %c0_i32 = arith.constant 0 : i32
    %c0_i32_0 = arith.constant 0 : i32
    %c0_i32_1 = arith.constant 0 : i32
    return %arg0, %c0_i32, %c0_i32_0 : i32, i32, i32
  }
  func.func @transform_3(%arg0: i32) -> (i32, i32, i32) {
    %c0_i32 = arith.constant 0 : i32
    %c0_i32_0 = arith.constant 0 : i32
    %c0_i32_1 = arith.constant 0 : i32
    return %arg0, %c0_i32, %c0_i32_0 : i32, i32, i32
  }
  func.func @transform_4(%arg0: i32) -> (i32, i32, i32) {
    %c0_i32 = arith.constant 0 : i32
    %c0_i32_0 = arith.constant 0 : i32
    %c0_i32_1 = arith.constant 0 : i32
    return %arg0, %c0_i32, %c0_i32_0 : i32, i32, i32
  }
  func.func @transform_5(%arg0: i32) -> (i32, i32, i32) {
    %c0_i32 = arith.constant 0 : i32
    %c0_i32_0 = arith.constant 0 : i32
    %c0_i32_1 = arith.constant 0 : i32
    return %arg0, %c0_i32, %c0_i32_0 : i32, i32, i32
  }
  func.func @transform_6(%arg0: i32) -> (i32, i32, i32) {
    %c0_i32 = arith.constant 0 : i32
    %c0_i32_0 = arith.constant 0 : i32
    %c0_i32_1 = arith.constant 0 : i32
    return %arg0, %c0_i32, %c0_i32_0 : i32, i32, i32
  }
  func.func @transform_7(%arg0: i32) -> (i32, i32, i32) {
    %c0_i32 = arith.constant 0 : i32
    %c0_i32_0 = arith.constant 0 : i32
    %c0_i32_1 = arith.constant 0 : i32
    return %arg0, %c0_i32, %c0_i32_0 : i32, i32, i32
  }
  func.func @transform_8(%arg0: i32) -> (i32, i32, i32) {
    %c0_i32 = arith.constant 0 : i32
    %c0_i32_0 = arith.constant 0 : i32
    %c0_i32_1 = arith.constant 0 : i32
    return %arg0, %c0_i32, %c0_i32_0 : i32, i32, i32
  }
  func.func @transform_9(%arg0: i32) -> (i32, i32, i32) {
    %c0_i32 = arith.constant 0 : i32
    %c0_i32_0 = arith.constant 0 : i32
    %c0_i32_1 = arith.constant 0 : i32
    return %arg0, %c0_i32, %c0_i32_0 : i32, i32, i32
  }
  func.func @transform_10(%arg0: i32) -> (i32, i32, i32) {
    %c0_i32 = arith.constant 0 : i32
    %c0_i32_0 = arith.constant 0 : i32
    %c0_i32_1 = arith.constant 0 : i32
    return %arg0, %c0_i32, %c0_i32_0 : i32, i32, i32
  }
  func.func @transform_11(%arg0: i32) -> (i32, i32, i32) {
    %c0_i32 = arith.constant 0 : i32
    %c0_i32_0 = arith.constant 0 : i32
    %c0_i32_1 = arith.constant 0 : i32
    return %arg0, %c0_i32, %c0_i32_0 : i32, i32, i32
  }
  func.func @transform_12(%arg0: i32) -> (i32, i32, i32) {
    %c0_i32 = arith.constant 0 : i32
    %c0_i32_0 = arith.constant 0 : i32
    %c0_i32_1 = arith.constant 0 : i32
    return %arg0, %c0_i32, %c0_i32_0 : i32, i32, i32
  }
  func.func @transform_13(%arg0: i32) -> (i32, i32, i32) {
    %c0_i32 = arith.constant 0 : i32
    %c0_i32_0 = arith.constant 0 : i32
    %c0_i32_1 = arith.constant 0 : i32
    %c0_i32_2 = arith.constant 0 : i32
    return %c0_i32, %c0_i32_0, %c0_i32_1 : i32, i32, i32
  }
}

module attributes {stable_mosaic.version = 11 : i64} {
  func.func @fc_in_pos_kernel(%arg0: i32, %arg1: i32, %arg2: memref<1x32x384xbf16, #tpu.memory_space<vmem>>, %arg3: memref<384x384xbf16, #tpu.memory_space<vmem>>, %arg4: memref<32x384xf32, #tpu.memory_space<vmem>>, %arg5: memref<1x32x384xbf16, #tpu.memory_space<vmem>>) attributes {dimension_semantics = [#tpu.dimension_semantics<parallel>, #tpu.dimension_semantics<parallel>], iteration_bounds = array<i64: 2, 1>, scalar_prefetch = 0 : i64, scratch_operands = 0 : i64, tpu.core_type = #tpu.core_type<tc>, window_params = [{transform_indices = @transform_0, window_bounds = array<i64: 1, 32, 384>}, {pipeline_mode = #tpu.pipeline_mode<synchronous>, transform_indices = @transform_1, window_bounds = array<i64: 384, 384>}, {transform_indices = @transform_2, window_bounds = array<i64: 32, 384>}, {transform_indices = @transform_3, window_bounds = array<i64: 1, 32, 384>}]} {
    %c0 = arith.constant 0 : index
    %c0_0 = arith.constant 0 : index
    %c0_1 = arith.constant 0 : index
    %0 = vector.load %arg2[%c0, %c0_0, %c0_1] : memref<1x32x384xbf16, #tpu.memory_space<vmem>>, vector<1x32x384xbf16>
    %1 = vector.shape_cast %0 : vector<1x32x384xbf16> to vector<32x384xbf16>
    %c0_2 = arith.constant 0 : index
    %c0_3 = arith.constant 0 : index
    %2 = vector.load %arg3[%c0_2, %c0_3] : memref<384x384xbf16, #tpu.memory_space<vmem>>, vector<384x384xbf16>
    %cst = arith.constant dense<0.000000e+00> : vector<32x384xf32>
    %3 = tpu.matmul %1, %2, %cst {dimension_numbers = #tpu.dot_dimension_numbers<[1], [0], [0], [1], [0, 0, 1, 1], [], []>} : vector<32x384xbf16>, vector<384x384xbf16>, vector<32x384xf32> -> vector<32x384xf32>
    %c0_4 = arith.constant 0 : index
    %c0_5 = arith.constant 0 : index
    %4 = vector.load %arg4[%c0_4, %c0_5] : memref<32x384xf32, #tpu.memory_space<vmem>>, vector<32x384xf32>
    %5 = arith.addf %3, %4 : vector<32x384xf32>
    %6 = arith.truncf %5 : vector<32x384xf32> to vector<32x384xbf16>
    %c0_6 = arith.constant 0 : index
    %c0_7 = arith.constant 0 : index
    %c0_8 = arith.constant 0 : index
    %7 = vector.load %arg5[%c0_6, %c0_7, %c0_8] : memref<1x32x384xbf16, #tpu.memory_space<vmem>>, vector<1x32x384xbf16>
    %8 = vector.shape_cast %7 : vector<1x32x384xbf16> to vector<32x384xbf16>
    %9 = vector.shape_cast %6 : vector<32x384xbf16> to vector<1x32x384xbf16>
    tpu.vector_store %arg5[%c0_6, %c0_7, %c0_8], %9 {strides = array<i32>} : memref<1x32x384xbf16, #tpu.memory_space<vmem>>, vector<1x32x384xbf16>,
    return
  }
  func.func @transform_0(%arg0: i32, %arg1: i32) -> (i32, i32, i32) {
    %c0_i32 = arith.constant 0 : i32
    %c0_i32_0 = arith.constant 0 : i32
    return %arg0, %arg1, %c0_i32 : i32, i32, i32
  }
  func.func @transform_1(%arg0: i32, %arg1: i32) -> (i32, i32) {
    %c0_i32 = arith.constant 0 : i32
    %c0_i32_0 = arith.constant 0 : i32
    %c0_i32_1 = arith.constant 0 : i32
    return %c0_i32, %c0_i32_0 : i32, i32
  }
  func.func @transform_2(%arg0: i32, %arg1: i32) -> (i32, i32) {
    %c0_i32 = arith.constant 0 : i32
    %c0_i32_0 = arith.constant 0 : i32
    return %arg1, %c0_i32 : i32, i32
  }
  func.func @transform_3(%arg0: i32, %arg1: i32) -> (i32, i32, i32) {
    %c0_i32 = arith.constant 0 : i32
    %c0_i32_0 = arith.constant 0 : i32
    return %arg0, %arg1, %c0_i32 : i32, i32, i32
  }
}

module attributes {stable_mosaic.version = 11 : i64} {
  func.func @fc_out_kernel(%arg0: i32, %arg1: i32, %arg2: memref<1x32x384xbf16, #tpu.memory_space<vmem>>, %arg3: memref<384x256xbf16, #tpu.memory_space<vmem>>, %arg4: memref<1x32x256xf32, #tpu.memory_space<vmem>>) attributes {dimension_semantics = [#tpu.dimension_semantics<parallel>, #tpu.dimension_semantics<parallel>], iteration_bounds = array<i64: 2, 1>, scalar_prefetch = 0 : i64, scratch_operands = 0 : i64, tpu.core_type = #tpu.core_type<tc>, window_params = [{transform_indices = @transform_0, window_bounds = array<i64: 1, 32, 384>}, {pipeline_mode = #tpu.pipeline_mode<synchronous>, transform_indices = @transform_1, window_bounds = array<i64: 384, 256>}, {transform_indices = @transform_2, window_bounds = array<i64: 1, 32, 256>}]} {
    %c0 = arith.constant 0 : index
    %c0_0 = arith.constant 0 : index
    %c0_1 = arith.constant 0 : index
    %0 = vector.load %arg2[%c0, %c0_0, %c0_1] : memref<1x32x384xbf16, #tpu.memory_space<vmem>>, vector<1x32x384xbf16>
    %1 = vector.shape_cast %0 : vector<1x32x384xbf16> to vector<32x384xbf16>
    %c0_2 = arith.constant 0 : index
    %c0_3 = arith.constant 0 : index
    %2 = vector.load %arg3[%c0_2, %c0_3] : memref<384x256xbf16, #tpu.memory_space<vmem>>, vector<384x256xbf16>
    %cst = arith.constant dense<0.000000e+00> : vector<32x256xf32>
    %3 = tpu.matmul %1, %2, %cst {dimension_numbers = #tpu.dot_dimension_numbers<[1], [0], [0], [1], [0, 0, 1, 1], [], []>} : vector<32x384xbf16>, vector<384x256xbf16>, vector<32x256xf32> -> vector<32x256xf32>
    %c0_4 = arith.constant 0 : index
    %c0_5 = arith.constant 0 : index
    %c0_6 = arith.constant 0 : index
    %4 = vector.load %arg4[%c0_4, %c0_5, %c0_6] : memref<1x32x256xf32, #tpu.memory_space<vmem>>, vector<1x32x256xf32>
    %5 = vector.shape_cast %4 : vector<1x32x256xf32> to vector<32x256xf32>
    %6 = vector.shape_cast %3 : vector<32x256xf32> to vector<1x32x256xf32>
    tpu.vector_store %arg4[%c0_4, %c0_5, %c0_6], %6 {strides = array<i32>} : memref<1x32x256xf32, #tpu.memory_space<vmem>>, vector<1x32x256xf32>,
    return
  }
  func.func @transform_0(%arg0: i32, %arg1: i32) -> (i32, i32, i32) {
    %c0_i32 = arith.constant 0 : i32
    %c0_i32_0 = arith.constant 0 : i32
    return %arg0, %arg1, %c0_i32 : i32, i32, i32
  }
  func.func @transform_1(%arg0: i32, %arg1: i32) -> (i32, i32) {
    %c0_i32 = arith.constant 0 : i32
    %c0_i32_0 = arith.constant 0 : i32
    %c0_i32_1 = arith.constant 0 : i32
    return %c0_i32, %c0_i32_0 : i32, i32
  }
  func.func @transform_2(%arg0: i32, %arg1: i32) -> (i32, i32, i32) {
    %c0_i32 = arith.constant 0 : i32
    %c0_i32_0 = arith.constant 0 : i32
    return %arg0, %arg1, %c0_i32 : i32, i32, i32
  }
}

</mosaic_0001>

<llo_original>
// kernel: mask_transformer_forward.5
$region0: #{mask_transformer_forward.5}
  #allocation0 [shape = 'u32[]', space=smem, size = 0x4, offset = 0x4, fixed_abs, tag = 'smem constant byte address 0x4 - core index']
  #allocation1 [shape = 'u32[144,128]{1,0:T(1,128)}', space=vmem, size = 0x12000, scoped, tag = 'internal scratch']
  %s0 = inlined_call_operand.vmem [shape: bf16[2,32,384], index: 0, kind: input, shape index: {}]
  %s1 = inlined_call_operand.vmem [shape: bf16[384,256], index: 1, kind: input, shape index: {}]
  %s2 = inlined_call_operand.hbm [shape: f32[2,32,256], index: 2, kind: output, shape index: {}]
  %s3 = sld [smem:[#allocation0]]
  $region41: #{mask_transformer_forward.5} parent=0
    _
  %s5 = ssub.s32 1, %s3
  %s6 = scalar_select 0, %s5, %s3
  $region1: #{mask_transformer_forward.5} parent=0
    #allocation2 [shape = 'u8[65536]{0}', space=vmem, size = 0x10000, scoped, tag = 'output window, operand 0']
    #allocation3 [shape = 's32[2]{0}', space=sflag, size = 0x8, scoped, tag = 'scoped memory for mask_transformer_forward.5']
    %7 = vsyncpa [#allocation3], 0
    %s8 = scalar_lea.sflag [#allocation3], 1
    %9 = vsyncpa %s8, 0
    loop: start=0, step=1, limit=4
    $region2: #{mask_transformer_forward.5} parent=1 // loop_pre_header
      _
    $region3: #{mask_transformer_forward.5} parent=1 // loop_header
      %s11 = sphi 0, %s15
      %p12 = scmp.ge.s32.totalorder %s11, 4
      %s18 = sphi 0, %s30
      %s19 = sphi 0, %s26
      %s20 = sphi 0, %s18
      %s21 = sphi 0, %s19
      %s22 = sphi 0, %s20
      %s23 = sphi 0, %s21
      %s35 = sphi 0, %s37
      %s38 = sphi 0, %s35
      %s39 = sphi 0, %s38
      %s55 = sphi 0, %s39
      %s59 = sphi 0, %s59
      %s61 = sphi 0, %s59
      %s62 = sphi 0, %s61
      %s76 = sphi 0, %s62
      %s84 = sphi 0, %s86
      %s87 = sphi 0, %s84
      %s88 = sphi 0, %s87
      %s104 = sphi 0, %s88
    $region4: #{mask_transformer_forward.5} parent=1 // loop_header_branch
      %14 = sbr.rel (%p12) target = $region8
    $region5: #{mask_transformer_forward.5} parent=1 // loop_body
      %s16 = ssub.s32 %s11, 1
      %s17 = ssub.s32 %s11, 2
      %s24 = sadd.s32 1, %s19
      %p25 = scmp.ge.s32.totalorder %s24, 1
      %s26 = scalar_select %p25, 0, %s24
      %s27 = sadd.s32 1, %s18
      %s28 = scalar_select %p25, %s27, %s18
      %p29 = scmp.ge.s32.totalorder %s28, 2
      %s30 = scalar_select %p29, 0, %s28
      %s31 = ssub.s32 %s18, %s30
      %s32 = ssub.s32 %s19, %s26
      %s33 = sor.u32 %s31, %s32
      %p34 = scmp.eq.s32.totalorder %s33, 0
      %s36 = sadd.s32 %s35, 1
      %s37 = scalar_select %p34, %s35, %s36
      %p40 = pneg %p34
      %p41 = scmp.eq.s32.totalorder %s11, 1
      %p42 = por %p40, %p41
      %p43 = scmp.ne.s32.totalorder %s35, %s38
      %p44 = scmp.eq.s32.totalorder %s11, 0
      %p45 = por %p43, %p44
      %p46 = scmp.ne.s32.totalorder %s35, %s38
      %p47 = scmp.eq.s32.totalorder %s16, 1
      %p48 = por %p46, %p47
      %p49 = scmp.ne.s32.totalorder %s38, %s39
      %p50 = scmp.eq.s32.totalorder %s16, 0
      %p51 = por %p49, %p50
      %p52 = scmp.ne.s32.totalorder %s38, %s39
      %p53 = scmp.eq.s32.totalorder %s17, 1
      %p54 = por %p52, %p53
      %p56 = scmp.ne.s32.totalorder %s39, %s55
      %p57 = scmp.eq.s32.totalorder %s17, 0
      %p58 = por %p56, %p57
      %s60 = sadd.s32 %s59, 1
      %p63 = scmp.eq.s32.totalorder %s11, 1
      %p64 = scmp.ne.s32.totalorder %s59, %s61
      %p65 = scmp.eq.s32.totalorder %s11, 0
      %p66 = por %p64, %p65
      %p67 = scmp.ne.s32.totalorder %s59, %s61
      %p68 = scmp.eq.s32.totalorder %s16, 1
      %p69 = por %p67, %p68
      %p70 = scmp.ne.s32.totalorder %s61, %s62
      %p71 = scmp.eq.s32.totalorder %s16, 0
      %p72 = por %p70, %p71
      %p73 = scmp.ne.s32.totalorder %s61, %s62
      %p74 = scmp.eq.s32.totalorder %s17, 1
      %p75 = por %p73, %p74
      %p77 = scmp.ne.s32.totalorder %s62, %s76
      %p78 = scmp.eq.s32.totalorder %s17, 0
      %p79 = por %p77, %p78
      %s80 = ssub.s32 %s18, %s30
      %s81 = ssub.s32 %s19, %s26
      %s82 = sor.u32 %s80, %s81
      %p83 = scmp.eq.s32.totalorder %s82, 0
      %s85 = sadd.s32 %s84, 1
      %s86 = scalar_select %p83, %s84, %s85
      %p89 = pneg %p83
      %p90 = scmp.eq.s32.totalorder %s11, 1
      %p91 = por %p89, %p90
      %p92 = scmp.ne.s32.totalorder %s84, %s87
      %p93 = scmp.eq.s32.totalorder %s11, 0
      %p94 = por %p92, %p93
      %p95 = scmp.ne.s32.totalorder %s84, %s87
      %p96 = scmp.eq.s32.totalorder %s16, 1
      %p97 = por %p95, %p96
      %p98 = scmp.ne.s32.totalorder %s87, %s88
      %p99 = scmp.eq.s32.totalorder %s16, 0
      %p100 = por %p98, %p99
      %p101 = scmp.ne.s32.totalorder %s87, %s88
      %p102 = scmp.eq.s32.totalorder %s17, 1
      %p103 = por %p101, %p102
      %p105 = scmp.ne.s32.totalorder %s88, %s104
      %p106 = scmp.eq.s32.totalorder %s17, 0
      %p107 = por %p105, %p106
      %p108 = scmp.le.s32.totalorder 1, %s11
      %p109 = scmp.lt.s32.totalorder %s11, 3
      %p110 = pnand %p108, %p109
      %p111 = pneg %p110
      // Predicated region
      $region9: #{mask_transformer_forward.5} parent=5 // pred_check
        _
      $region10: #{mask_transformer_forward.5} parent=5 // pred_check_branch
        %113 = sbr.rel (%p110) target = $region12
      $region11: #{mask_transformer_forward.5} parent=5 // pred_region
        %s114 = ssub.s32 %s11, 1
        // Predicated region
        $region13: #{mask_transformer_forward.5} parent=11 // pred_check
          %p115 = pneg %p72
        $region14: #{mask_transformer_forward.5} parent=11 // pred_check_branch
          %117 = sbr.rel (%p115) target = $region16
        $region15: #{mask_transformer_forward.5} parent=11 // pred_region
          _
        $region16: #{mask_transformer_forward.5} parent=11 // pred_fallthru
          _
      $region12: #{mask_transformer_forward.5} parent=5 // pred_fallthru
        _
      %p118 = scmp.lt.s32.totalorder %s11, 2
      // Predicated region
      $region17: #{mask_transformer_forward.5} parent=5 // pred_check
        %p119 = pneg %p118
      $region18: #{mask_transformer_forward.5} parent=5 // pred_check_branch
        %121 = sbr.rel (%p119) target = $region20
      $region19: #{mask_transformer_forward.5} parent=5 // pred_region
        // Predicated region
        $region21: #{mask_transformer_forward.5} parent=19 // pred_check
          %p122 = pneg %p45
        $region22: #{mask_transformer_forward.5} parent=19 // pred_check_branch
          %124 = sbr.rel (%p122) target = $region24
        $region23: #{mask_transformer_forward.5} parent=19 // pred_region
          %s125 = smul.u32 4, %s19
          %p126 = scmp.lt.s32.totalorder %s18, 1
          %s127 = scalar_select %p126, %s18, 1
          %p128 = scmp.lt.s32.totalorder %s125, 3
          %s129 = scalar_select %p128, %s125, 3
          %s130 = smul.addr %s129, 3
          %s131 = smul.addr %s127, 12
          %s132 = sadd.s32 %s130, %s131
          %s133 = smul.addr %s132, 4
          %s134 = scalar_lea.vmem %s0, %s133
          %s135 = smul.u32 4, %s19
        $region24: #{mask_transformer_forward.5} parent=19 // pred_fallthru
          _
      $region20: #{mask_transformer_forward.5} parent=5 // pred_fallthru
        _
      %p136 = scmp.le.s32.totalorder 1, %s11
      %p137 = scmp.lt.s32.totalorder %s11, 3
      %p138 = pnand %p136, %p137
      %p139 = pneg %p138
      // Predicated region
      $region25: #{mask_transformer_forward.5} parent=5 // pred_check
        _
      $region26: #{mask_transformer_forward.5} parent=5 // pred_check_branch
        %141 = sbr.rel (%p138) target = $region28
      $region27: #{mask_transformer_forward.5} parent=5 // pred_region
        %s142 = ssub.s32 %s11, 1
        %s143 = smul.u32 4, %s21
        %p144 = scmp.lt.s32.totalorder %s20, 1
        %s145 = scalar_select %p144, %s20, 1
        %p146 = scmp.lt.s32.totalorder %s143, 3
        %s147 = scalar_select %p146, %s143, 3
        %s148 = smul.addr %s147, 3
        %s149 = smul.addr %s145, 12
        %s150 = sadd.s32 %s148, %s149
        %s151 = smul.addr %s150, 4
        %s152 = scalar_lea.vmem %s0, %s151
        %p153 = pneg %p51
        %p154 = pneg %p48
        %p155 = pneg %p72
        %p156 = pneg %p69
        %p157 = pneg %p100
        %p158 = pneg %p97
        %s159 = sand.u32 %s87, 1
        %s160 = scalar_lea.sflag [#allocation3], %s159
        %s161 = sand.u32 %s87, 1
        %s162 = smul.addr %s161, 64
        %s163 = scalar_lea.vmem [#allocation2], %s162
        %s164 = smul.u32 4, %s21
        %p165 = scmp.lt.s32.totalorder %s20, 1
        %s166 = scalar_select %p165, %s20, 1
        %p167 = scmp.lt.s32.totalorder %s164, 3
        %s168 = scalar_select %p167, %s164, 3
        %s169 = smul.addr %s168, 3
        %s170 = smul.addr %s166, 12
        %s171 = sadd.s32 %s169, %s170
        %s172 = smul.addr %s171, 4
        %s173 = scalar_lea.vmem %s0, %s172
        %s174 = smul.u32 4, %s21
        %s175 = smul.u32 4, %s21
        %v177 = vld [vmem:[%s173] sm:$0xff]
        %v178 = vld [vmem:[%s173 + $0x8] sm:$0xf]
        %v179 = vld [vmem:[%s173 + $0xc] sm:$0xff]
        %v180 = vld [vmem:[%s173 + $0x14] sm:$0xf]
        %v181 = vld [vmem:[%s173 + $0x18] sm:$0xff]
        %v182 = vld [vmem:[%s173 + $0x20] sm:$0xf]
        %v183 = vld [vmem:[%s173 + $0x24] sm:$0xff]
        %v184 = vld [vmem:[%s173 + $0x2c] sm:$0xf]
        %v185 = vld [vmem:[%s1] sm:$0xff]
        %v186 = vld [vmem:[%s1 + $0x8] sm:$0xff]
        %v187 = vld [vmem:[%s1 + $0x10] sm:$0xff]
        %v188 = vld [vmem:[%s1 + $0x18] sm:$0xff]
        %v189 = vld [vmem:[%s1 + $0x20] sm:$0xff]
        %v190 = vld [vmem:[%s1 + $0x28] sm:$0xff]
        %v191 = vld [vmem:[%s1 + $0x30] sm:$0xff]
        %v192 = vld [vmem:[%s1 + $0x38] sm:$0xff]
        %v193 = vld [vmem:[%s1 + $0x40] sm:$0xff]
        %v194 = vld [vmem:[%s1 + $0x48] sm:$0xff]
        %v195 = vld [vmem:[%s1 + $0x50] sm:$0xff]
        %v196 = vld [vmem:[%s1 + $0x58] sm:$0xff]
        %v197 = vld [vmem:[%s1 + $0x60] sm:$0xff]
        %v198 = vld [vmem:[%s1 + $0x68] sm:$0xff]
        %v199 = vld [vmem:[%s1 + $0x70] sm:$0xff]
        %v200 = vld [vmem:[%s1 + $0x78] sm:$0xff]
        %v201 = vld [vmem:[%s1 + $0x80] sm:$0xff]
        %v202 = vld [vmem:[%s1 + $0x88] sm:$0xff]
        %v203 = vld [vmem:[%s1 + $0x90] sm:$0xff]
        %v204 = vld [vmem:[%s1 + $0x98] sm:$0xff]
        %v205 = vld [vmem:[%s1 + $0xa0] sm:$0xff]
        %v206 = vld [vmem:[%s1 + $0xa8] sm:$0xff]
        %v207 = vld [vmem:[%s1 + $0xb0] sm:$0xff]
        %v208 = vld [vmem:[%s1 + $0xb8] sm:$0xff]
        %v209 = vld [vmem:[%s1 + $0xc0] sm:$0xff]
        %v210 = vld [vmem:[%s1 + $0xc8] sm:$0xff]
        %v211 = vld [vmem:[%s1 + $0xd0] sm:$0xff]
        %v212 = vld [vmem:[%s1 + $0xd8] sm:$0xff]
        %v213 = vld [vmem:[%s1 + $0xe0] sm:$0xff]
        %v214 = vld [vmem:[%s1 + $0xe8] sm:$0xff]
        %v215 = vld [vmem:[%s1 + $0xf0] sm:$0xff]
        %v216 = vld [vmem:[%s1 + $0xf8] sm:$0xff]
        %v217 = vld [vmem:[%s1 + $0x100] sm:$0xff]
        %v218 = vld [vmem:[%s1 + $0x108] sm:$0xff]
        %v219 = vld [vmem:[%s1 + $0x110] sm:$0xff]
        %v220 = vld [vmem:[%s1 + $0x118] sm:$0xff]
        %v221 = vld [vmem:[%s1 + $0x120] sm:$0xff]
        %v222 = vld [vmem:[%s1 + $0x128] sm:$0xff]
        %v223 = vld [vmem:[%s1 + $0x130] sm:$0xff]
        %v224 = vld [vmem:[%s1 + $0x138] sm:$0xff]
        %v225 = vld [vmem:[%s1 + $0x140] sm:$0xff]
        %v226 = vld [vmem:[%s1 + $0x148] sm:$0xff]
        %v227 = vld [vmem:[%s1 + $0x150] sm:$0xff]
        %v228 = vld [vmem:[%s1 + $0x158] sm:$0xff]
        %v229 = vld [vmem:[%s1 + $0x160] sm:$0xff]
        %v230 = vld [vmem:[%s1 + $0x168] sm:$0xff]
        %v231 = vld [vmem:[%s1 + $0x170] sm:$0xff]
        %v232 = vld [vmem:[%s1 + $0x178] sm:$0xff]
        %v241 = vunpack.c.l.b16 %v177
        %v242 = vunpack.c.h.b16 %v177
        %v243 = vunpack.c.l.b16 %v178
        %v244 = vunpack.c.l.b16 %v179
        %v245 = vunpack.c.h.b16 %v179
        %v246 = vunpack.c.l.b16 %v180
        %v247 = vunpack.c.l.b16 %v181
        %v248 = vunpack.c.h.b16 %v181
        %v249 = vunpack.c.l.b16 %v182
        %v250 = vunpack.c.l.b16 %v183
        %v251 = vunpack.c.h.b16 %v183
        %v252 = vunpack.c.l.b16 %v184
        %v253 = vpack.c.b16 %v244, %v241
        %v254 = vpack.c.b16 %v245, %v242
        %v255 = vpack.c.b16 %v246, %v243
        %v256 = vpack.c.b16 %v250, %v247
        %v257 = vpack.c.b16 %v251, %v248
        %v258 = vpack.c.b16 %v252, %v249
        %v313 = vunpack.c.l.b16 %v185
        %v314 = vunpack.c.h.b16 %v185
        %v315 = vunpack.c.l.b16 %v186
        %v316 = vunpack.c.h.b16 %v186
        %v317 = vunpack.c.l.b16 %v187
        %v318 = vunpack.c.h.b16 %v187
        %v319 = vunpack.c.l.b16 %v188
        %v320 = vunpack.c.h.b16 %v188
        %v321 = vunpack.c.l.b16 %v189
        %v322 = vunpack.c.h.b16 %v189
        %v323 = vunpack.c.l.b16 %v190
        %v324 = vunpack.c.h.b16 %v190
        %v325 = vunpack.c.l.b16 %v191
        %v326 = vunpack.c.h.b16 %v191
        %v327 = vunpack.c.l.b16 %v192
        %v328 = vunpack.c.h.b16 %v192
        %v329 = vunpack.c.l.b16 %v193
        %v330 = vunpack.c.h.b16 %v193
        %v331 = vunpack.c.l.b16 %v194
        %v332 = vunpack.c.h.b16 %v194
        %v333 = vunpack.c.l.b16 %v195
        %v334 = vunpack.c.h.b16 %v195
        %v335 = vunpack.c.l.b16 %v196
        %v336 = vunpack.c.h.b16 %v196
        %v337 = vunpack.c.l.b16 %v197
        %v338 = vunpack.c.h.b16 %v197
        %v339 = vunpack.c.l.b16 %v198
        %v340 = vunpack.c.h.b16 %v198
        %v341 = vunpack.c.l.b16 %v199
        %v342 = vunpack.c.h.b16 %v199
        %v343 = vunpack.c.l.b16 %v200
        %v344 = vunpack.c.h.b16 %v200
        %v345 = vunpack.c.l.b16 %v201
        %v346 = vunpack.c.h.b16 %v201
        %v347 = vunpack.c.l.b16 %v202
        %v348 = vunpack.c.h.b16 %v202
        %v349 = vunpack.c.l.b16 %v203
        %v350 = vunpack.c.h.b16 %v203
        %v351 = vunpack.c.l.b16 %v204
        %v352 = vunpack.c.h.b16 %v204
        %v353 = vunpack.c.l.b16 %v205
        %v354 = vunpack.c.h.b16 %v205
        %v355 = vunpack.c.l.b16 %v206
        %v356 = vunpack.c.h.b16 %v206
        %v357 = vunpack.c.l.b16 %v207
        %v358 = vunpack.c.h.b16 %v207
        %v359 = vunpack.c.l.b16 %v208
        %v360 = vunpack.c.h.b16 %v208
        %v361 = vunpack.c.l.b16 %v209
        %v362 = vunpack.c.h.b16 %v209
        %v363 = vunpack.c.l.b16 %v210
        %v364 = vunpack.c.h.b16 %v210
        %v365 = vunpack.c.l.b16 %v211
        %v366 = vunpack.c.h.b16 %v211
        %v367 = vunpack.c.l.b16 %v212
        %v368 = vunpack.c.h.b16 %v212
        %v369 = vunpack.c.l.b16 %v213
        %v370 = vunpack.c.h.b16 %v213
        %v371 = vunpack.c.l.b16 %v214
        %v372 = vunpack.c.h.b16 %v214
        %v373 = vunpack.c.l.b16 %v215
        %v374 = vunpack.c.h.b16 %v215
        %v375 = vunpack.c.l.b16 %v216
        %v376 = vunpack.c.h.b16 %v216
        %v377 = vunpack.c.l.b16 %v217
        %v378 = vunpack.c.h.b16 %v217
        %v379 = vunpack.c.l.b16 %v218
        %v380 = vunpack.c.h.b16 %v218
        %v381 = vunpack.c.l.b16 %v219
        %v382 = vunpack.c.h.b16 %v219
        %v383 = vunpack.c.l.b16 %v220
        %v384 = vunpack.c.h.b16 %v220
        %v385 = vunpack.c.l.b16 %v221
        %v386 = vunpack.c.h.b16 %v221
        %v387 = vunpack.c.l.b16 %v222
        %v388 = vunpack.c.h.b16 %v222
        %v389 = vunpack.c.l.b16 %v223
        %v390 = vunpack.c.h.b16 %v223
        %v391 = vunpack.c.l.b16 %v224
        %v392 = vunpack.c.h.b16 %v224
        %v393 = vunpack.c.l.b16 %v225
        %v394 = vunpack.c.h.b16 %v225
        %v395 = vunpack.c.l.b16 %v226
        %v396 = vunpack.c.h.b16 %v226
        %v397 = vunpack.c.l.b16 %v227
        %v398 = vunpack.c.h.b16 %v227
        %v399 = vunpack.c.l.b16 %v228
        %v400 = vunpack.c.h.b16 %v228
        %v401 = vunpack.c.l.b16 %v229
        %v402 = vunpack.c.h.b16 %v229
        %v403 = vunpack.c.l.b16 %v230
        %v404 = vunpack.c.h.b16 %v230
        %v405 = vunpack.c.l.b16 %v231
        %v406 = vunpack.c.h.b16 %v231
        %v407 = vunpack.c.l.b16 %v232
        %v408 = vunpack.c.h.b16 %v232
        %v409 = vpack.c.b16 %v315, %v313
        %v410 = vpack.c.b16 %v316, %v314
        %v411 = vpack.c.b16 %v319, %v317
        %v412 = vpack.c.b16 %v320, %v318
        %v413 = vpack.c.b16 %v323, %v321
        %v414 = vpack.c.b16 %v324, %v322
        %v415 = vpack.c.b16 %v327, %v325
        %v416 = vpack.c.b16 %v328, %v326
        %v417 = vpack.c.b16 %v331, %v329
        %v418 = vpack.c.b16 %v332, %v330
        %v419 = vpack.c.b16 %v335, %v333
        %v420 = vpack.c.b16 %v336, %v334
        %v421 = vpack.c.b16 %v339, %v337
        %v422 = vpack.c.b16 %v340, %v338
        %v423 = vpack.c.b16 %v343, %v341
        %v424 = vpack.c.b16 %v344, %v342
        %v425 = vpack.c.b16 %v347, %v345
        %v426 = vpack.c.b16 %v348, %v346
        %v427 = vpack.c.b16 %v351, %v349
        %v428 = vpack.c.b16 %v352, %v350
        %v429 = vpack.c.b16 %v355, %v353
        %v430 = vpack.c.b16 %v356, %v354
        %v431 = vpack.c.b16 %v359, %v357
        %v432 = vpack.c.b16 %v360, %v358
        %v433 = vpack.c.b16 %v363, %v361
        %v434 = vpack.c.b16 %v364, %v362
        %v435 = vpack.c.b16 %v367, %v365
        %v436 = vpack.c.b16 %v368, %v366
        %v437 = vpack.c.b16 %v371, %v369
        %v438 = vpack.c.b16 %v372, %v370
        %v439 = vpack.c.b16 %v375, %v373
        %v440 = vpack.c.b16 %v376, %v374
        %v441 = vpack.c.b16 %v379, %v377
        %v442 = vpack.c.b16 %v380, %v378
        %v443 = vpack.c.b16 %v383, %v381
        %v444 = vpack.c.b16 %v384, %v382
        %v445 = vpack.c.b16 %v387, %v385
        %v446 = vpack.c.b16 %v388, %v386
        %v447 = vpack.c.b16 %v391, %v389
        %v448 = vpack.c.b16 %v392, %v390
        %v449 = vpack.c.b16 %v395, %v393
        %v450 = vpack.c.b16 %v396, %v394
        %v451 = vpack.c.b16 %v399, %v397
        %v452 = vpack.c.b16 %v400, %v398
        %v453 = vpack.c.b16 %v403, %v401
        %v454 = vpack.c.b16 %v404, %v402
        %v455 = vpack.c.b16 %v407, %v405
        %v456 = vpack.c.b16 %v408, %v406
        %505 = vmatprep.subr.bf16.mxu0 %v410
        %506 = vmatpush1.bf16.msra.mxu0 %v409
        %507 = vmatprep.subr.bf16.mxu0 %v412
        %508 = vmatpush1.bf16.msra.mxu0 %v411
        %509 = vmatprep.subr.bf16.mxu0 %v414
        %510 = vmatpush1.bf16.msra.mxu0 %v413
        %511 = vmatprep.subr.bf16.mxu0 %v416
        %512 = vmatpush1.bf16.msra.mxu0 %v415
        %513 = vmatprep.subr.bf16.mxu0 %v418
        %514 = vmatpush1.bf16.msra.mxu0 %v417
        %515 = vmatprep.subr.bf16.mxu0 %v420
        %516 = vmatpush1.bf16.msra.mxu0 %v419
        %517 = vmatprep.subr.bf16.mxu0 %v422
        %518 = vmatpush1.bf16.msra.mxu0 %v421
        %519 = vmatprep.subr.bf16.mxu0 %v424
        %520 = vmatpush1.bf16.msra.mxu0 %v423
        %521 = vmatprep.subr.bf16.mxu0 %v426
        %522 = vmatpush1.bf16.msra.mxu0 %v425
        %523 = vmatprep.subr.bf16.mxu0 %v428
        %524 = vmatpush1.bf16.msra.mxu0 %v427
        %525 = vmatprep.subr.bf16.mxu0 %v430
        %526 = vmatpush1.bf16.msra.mxu0 %v429
        %527 = vmatprep.subr.bf16.mxu0 %v432
        %528 = vmatpush1.bf16.msra.mxu0 %v431
        %529 = vmatprep.subr.bf16.mxu0 %v434
        %530 = vmatpush1.bf16.msra.mxu0 %v433
        %531 = vmatprep.subr.bf16.mxu0 %v436
        %532 = vmatpush1.bf16.msra.mxu0 %v435
        %533 = vmatprep.subr.bf16.mxu0 %v438
        %534 = vmatpush1.bf16.msra.mxu0 %v437
        %535 = vmatprep.subr.bf16.mxu0 %v440
        %536 = vmatpush1.bf16.msra.mxu0 %v439
        %537 = vmatprep.mubr.bf16.mxu0 %v254
        %538 = vmatmul.mubr.bf16.gmra.mrb[0].mxu0 %v253
        %v539 = vpop.f32.mrb[0].mxu0
        %v540 = vadd.f32 0.0, %v539
        %v541 = vpop.f32.mrb[0].mxu0
        %v542 = vadd.f32 0.0, %v541
        %v543 = vpop.f32.mrb[0].mxu0
        %v544 = vadd.f32 0.0, %v543
        %v545 = vpop.f32.mrb[0].mxu0
        %v546 = vadd.f32 0.0, %v545
        %547 = vmatprep.mubr.bf16.mxu0 %v257
        %548 = vmatmul.mubr.bf16.gmra.mrb[0].mxu0 %v256
        %v549 = vpop.f32.mrb[0].mxu0
        %v550 = vadd.f32 0.0, %v549
        %v551 = vpop.f32.mrb[0].mxu0
        %v552 = vadd.f32 0.0, %v551
        %v553 = vpop.f32.mrb[0].mxu0
        %v554 = vadd.f32 0.0, %v553
        %v555 = vpop.f32.mrb[0].mxu0
        %v556 = vadd.f32 0.0, %v555
        %557 = vdwg.mxu0
        %558 = vmatprep.subr.bf16.mxu0 %v442
        %559 = vmatpush1.bf16.msra.mxu0 %v441
        %560 = vmatprep.subr.bf16.mxu0 %v444
        %561 = vmatpush1.bf16.msra.mxu0 %v443
        %562 = vmatprep.subr.bf16.mxu0 %v446
        %563 = vmatpush1.bf16.msra.mxu0 %v445
        %564 = vmatprep.subr.bf16.mxu0 %v448
        %565 = vmatpush1.bf16.msra.mxu0 %v447
        %566 = vmatprep.subr.bf16.mxu0 %v450
        %567 = vmatpush1.bf16.msra.mxu0 %v449
        %568 = vmatprep.subr.bf16.mxu0 %v452
        %569 = vmatpush1.bf16.msra.mxu0 %v451
        %570 = vmatprep.subr.bf16.mxu0 %v454
        %571 = vmatpush1.bf16.msra.mxu0 %v453
        %572 = vmatprep.subr.bf16.mxu0 %v456
        %573 = vmatpush1.bf16.msra.mxu0 %v455
        %574 = vmatprep.subr.bf16.mxu0 0
        %575 = vmatpush1.bf16.msra.mxu0 0
        %576 = vmatprep.subr.bf16.mxu0 0
        %577 = vmatpush1.bf16.msra.mxu0 0
        %578 = vmatprep.subr.bf16.mxu0 0
        %579 = vmatpush1.bf16.msra.mxu0 0
        %580 = vmatprep.subr.bf16.mxu0 0
        %581 = vmatpush1.bf16.msra.mxu0 0
        %582 = vmatprep.subr.bf16.mxu0 0
        %583 = vmatpush1.bf16.msra.mxu0 0
        %584 = vmatprep.subr.bf16.mxu0 0
        %585 = vmatpush1.bf16.msra.mxu0 0
        %586 = vmatprep.subr.bf16.mxu0 0
        %587 = vmatpush1.bf16.msra.mxu0 0
        %588 = vmatprep.subr.bf16.mxu0 0
        %589 = vmatpush1.bf16.msra.mxu0 0
        %590 = vmatprep.mubr.bf16.mxu0 0
        %591 = vmatmul.mubr.bf16.gmra.mrb[0].mxu0 %v255
        %v592 = vpop.f32.mrb[0].mxu0
        %v593 = vadd.f32 %v540, %v592
        %v594 = vpop.f32.mrb[0].mxu0
        %v595 = vadd.f32 %v542, %v594
        %v596 = vpop.f32.mrb[0].mxu0
        %v597 = vadd.f32 %v544, %v596
        %v598 = vpop.f32.mrb[0].mxu0
        %v599 = vadd.f32 %v546, %v598
        %600 = vmatprep.mubr.bf16.mxu0 0
        %601 = vmatmul.mubr.bf16.gmra.mrb[0].mxu0 %v258
        %v602 = vpop.f32.mrb[0].mxu0
        %v603 = vadd.f32 %v550, %v602
        %v604 = vpop.f32.mrb[0].mxu0
        %v605 = vadd.f32 %v552, %v604
        %v606 = vpop.f32.mrb[0].mxu0
        %v607 = vadd.f32 %v554, %v606
        %v608 = vpop.f32.mrb[0].mxu0
        %v609 = vadd.f32 %v556, %v608
        %610 = vdwg.mxu0
        %611 = vst [vmem:[%s163] sm:$0xff] %v593
        %612 = vst [vmem:[%s163 + $0x8] sm:$0xff] %v595
        %613 = vst [vmem:[%s163 + $0x10] sm:$0xff] %v597
        %614 = vst [vmem:[%s163 + $0x18] sm:$0xff] %v599
        %615 = vst [vmem:[%s163 + $0x20] sm:$0xff] %v603
        %616 = vst [vmem:[%s163 + $0x28] sm:$0xff] %v605
        %617 = vst [vmem:[%s163 + $0x30] sm:$0xff] %v607
        %618 = vst [vmem:[%s163 + $0x38] sm:$0xff] %v609
        %s619 = sand.u32 %s87, 1
        %s620 = scalar_lea.sflag [#allocation3], %s619
        %s621 = sand.u32 %s87, 1
        %s622 = smul.addr %s621, 64
        %s623 = scalar_lea.vmem [#allocation2], %s622
        // Predicated region
        $region29: #{mask_transformer_forward.5} parent=27 // pred_check
          %p624 = pneg %p97
        $region30: #{mask_transformer_forward.5} parent=27 // pred_check_branch
          %626 = sbr.rel (%p624) target = $region32
        $region31: #{mask_transformer_forward.5} parent=27 // pred_region
          %s627 = smul.u32 4, %s21
          %s629 = ssub.s32 1024, 1024
          %630 = vsyncadd %s620, %s629
          %s631 = smul.addr %s627, 2
          %s632 = smul.addr %s20, 8
          %s633 = sadd.s32 %s631, %s632
          %s634 = smul.addr %s633, 128
          %s635 = scalar_lea.hbm %s2, %s634
          %s636 = sshll.u32 %s623, 4
          %s637 = int_to_ptr.vmem [resolvable:$true] %s636
          %642 = dma.vmem_to_hbm [thread:$0]  %s637, 1024, %s635, %s620, 256, 256, 16
        $region32: #{mask_transformer_forward.5} parent=27 // pred_fallthru
          _
      $region28: #{mask_transformer_forward.5} parent=5 // pred_fallthru
        _
      %p643 = scmp.le.s32.totalorder 2, %s11
      // Predicated region
      $region33: #{mask_transformer_forward.5} parent=5 // pred_check
        %p644 = pneg %p643
      $region34: #{mask_transformer_forward.5} parent=5 // pred_check_branch
        %646 = sbr.rel (%p644) target = $region36
      $region35: #{mask_transformer_forward.5} parent=5 // pred_region
        %s647 = ssub.s32 %s11, 2
        // Predicated region
        $region37: #{mask_transformer_forward.5} parent=35 // pred_check
          %p648 = pneg %p103
        $region38: #{mask_transformer_forward.5} parent=35 // pred_check_branch
          %650 = sbr.rel (%p648) target = $region40
        $region39: #{mask_transformer_forward.5} parent=35 // pred_region
          %s651 = sand.u32 %s88, 1
          %s652 = scalar_lea.sflag [#allocation3], %s651
          %s653 = sand.u32 %s88, 1
          %s654 = smul.addr %s653, 64
          %s655 = scalar_lea.vmem [#allocation2], %s654
          %656 = dma.done %s652, 1024
        $region40: #{mask_transformer_forward.5} parent=35 // pred_fallthru
          _
      $region36: #{mask_transformer_forward.5} parent=5 // pred_fallthru
        _
    $region6: #{mask_transformer_forward.5} parent=1 // loop_footer
      %s15 = sadd.s32 1, %s11
    $region7: #{mask_transformer_forward.5} parent=1 // loop_footer_branch
      %10 = sbr.rel target = $region3
    $region8: #{mask_transformer_forward.5} parent=1 // loop_exit
      _
    %657 = vsyncpa [#allocation3], 1
    %s658 = scalar_lea.sflag [#allocation3], 1
    %659 = vsyncpa %s658, 1

// kernel: mask_transformer_forward.3
$region0: #{mask_transformer_forward.3}
  #allocation0 [shape = 'u32[]', space=smem, size = 0x4, offset = 0x4, fixed_abs, tag = 'smem constant byte address 0x4 - core index']
  #allocation1 [shape = 'u32[144,128]{1,0:T(1,128)}', space=vmem, size = 0x12000, scoped, tag = 'internal scratch']
  %s0 = inlined_call_operand.vmem [shape: bf16[2,32,384], index: 0, kind: input, shape index: {}]
  %s1 = inlined_call_operand.hbm [shape: bf16[384,384], index: 1, kind: input, shape index: {}]
  %s2 = inlined_call_operand.vmem [shape: f32[32,384], index: 2, kind: input, shape index: {}]
  %s3 = inlined_call_operand.vmem [shape: bf16[2,32,384], index: 3, kind: output, shape index: {}]
  %s4 = sld [smem:[#allocation0]]
  $region49: #{mask_transformer_forward.3} parent=0
    _
  %s6 = ssub.s32 1, %s4
  %s7 = scalar_select 0, %s6, %s4
  $region1: #{mask_transformer_forward.3} parent=0
    #allocation2 [shape = 'u8[294912]{0}', space=vmem, size = 0x48000, scoped, tag = 'input window, operand 1, single buffered']
    #allocation3 [shape = 's32[2]{0}', space=sflag, size = 0x8, scoped, tag = 'scoped memory for mask_transformer_forward.3']
    %8 = vsyncpa [#allocation3], 0
    loop: start=0, step=1, limit=4
    $region2: #{mask_transformer_forward.3} parent=1 // loop_pre_header
      _
    $region3: #{mask_transformer_forward.3} parent=1 // loop_header
      %s10 = sphi 0, %s14
      %p11 = scmp.ge.s32.totalorder %s10, 4
      %s17 = sphi 0, %s29
      %s18 = sphi 0, %s25
      %s19 = sphi 0, %s17
      %s20 = sphi 0, %s18
      %s21 = sphi 0, %s19
      %s22 = sphi 0, %s20
      %s34 = sphi 0, %s36
      %s37 = sphi 0, %s34
      %s38 = sphi 0, %s37
      %s54 = sphi 0, %s38
      %s58 = sphi 0, %s58
      %s60 = sphi 0, %s58
      %s61 = sphi 0, %s60
      %s75 = sphi 0, %s61
      %s81 = sphi 0, %s83
      %s84 = sphi 0, %s81
      %s85 = sphi 0, %s84
      %s101 = sphi 0, %s85
      %s109 = sphi 0, %s111
      %s112 = sphi 0, %s109
      %s113 = sphi 0, %s112
      %s129 = sphi 0, %s113
    $region4: #{mask_transformer_forward.3} parent=1 // loop_header_branch
      %13 = sbr.rel (%p11) target = $region8
    $region5: #{mask_transformer_forward.3} parent=1 // loop_body
      %s15 = ssub.s32 %s10, 1
      %s16 = ssub.s32 %s10, 2
      %s23 = sadd.s32 1, %s18
      %p24 = scmp.ge.s32.totalorder %s23, 1
      %s25 = scalar_select %p24, 0, %s23
      %s26 = sadd.s32 1, %s17
      %s27 = scalar_select %p24, %s26, %s17
      %p28 = scmp.ge.s32.totalorder %s27, 2
      %s29 = scalar_select %p28, 0, %s27
      %s30 = ssub.s32 %s17, %s29
      %s31 = ssub.s32 %s18, %s25
      %s32 = sor.u32 %s30, %s31
      %p33 = scmp.eq.s32.totalorder %s32, 0
      %s35 = sadd.s32 %s34, 1
      %s36 = scalar_select %p33, %s34, %s35
      %p39 = pneg %p33
      %p40 = scmp.eq.s32.totalorder %s10, 1
      %p41 = por %p39, %p40
      %p42 = scmp.ne.s32.totalorder %s34, %s37
      %p43 = scmp.eq.s32.totalorder %s10, 0
      %p44 = por %p42, %p43
      %p45 = scmp.ne.s32.totalorder %s34, %s37
      %p46 = scmp.eq.s32.totalorder %s15, 1
      %p47 = por %p45, %p46
      %p48 = scmp.ne.s32.totalorder %s37, %s38
      %p49 = scmp.eq.s32.totalorder %s15, 0
      %p50 = por %p48, %p49
      %p51 = scmp.ne.s32.totalorder %s37, %s38
      %p52 = scmp.eq.s32.totalorder %s16, 1
      %p53 = por %p51, %p52
      %p55 = scmp.ne.s32.totalorder %s38, %s54
      %p56 = scmp.eq.s32.totalorder %s16, 0
      %p57 = por %p55, %p56
      %s59 = sadd.s32 %s58, 1
      %p62 = scmp.eq.s32.totalorder %s10, 1
      %p63 = scmp.ne.s32.totalorder %s58, %s60
      %p64 = scmp.eq.s32.totalorder %s10, 0
      %p65 = por %p63, %p64
      %p66 = scmp.ne.s32.totalorder %s58, %s60
      %p67 = scmp.eq.s32.totalorder %s15, 1
      %p68 = por %p66, %p67
      %p69 = scmp.ne.s32.totalorder %s60, %s61
      %p70 = scmp.eq.s32.totalorder %s15, 0
      %p71 = por %p69, %p70
      %p72 = scmp.ne.s32.totalorder %s60, %s61
      %p73 = scmp.eq.s32.totalorder %s16, 1
      %p74 = por %p72, %p73
      %p76 = scmp.ne.s32.totalorder %s61, %s75
      %p77 = scmp.eq.s32.totalorder %s16, 0
      %p78 = por %p76, %p77
      %s79 = ssub.s32 %s18, %s25
      %p80 = scmp.eq.s32.totalorder %s79, 0
      %s82 = sadd.s32 %s81, 1
      %s83 = scalar_select %p80, %s81, %s82
      %p86 = pneg %p80
      %p87 = scmp.eq.s32.totalorder %s10, 1
      %p88 = por %p86, %p87
      %p89 = scmp.ne.s32.totalorder %s81, %s84
      %p90 = scmp.eq.s32.totalorder %s10, 0
      %p91 = por %p89, %p90
      %p92 = scmp.ne.s32.totalorder %s81, %s84
      %p93 = scmp.eq.s32.totalorder %s15, 1
      %p94 = por %p92, %p93
      %p95 = scmp.ne.s32.totalorder %s84, %s85
      %p96 = scmp.eq.s32.totalorder %s15, 0
      %p97 = por %p95, %p96
      %p98 = scmp.ne.s32.totalorder %s84, %s85
      %p99 = scmp.eq.s32.totalorder %s16, 1
      %p100 = por %p98, %p99
      %p102 = scmp.ne.s32.totalorder %s85, %s101
      %p103 = scmp.eq.s32.totalorder %s16, 0
      %p104 = por %p102, %p103
      %s105 = ssub.s32 %s17, %s29
      %s106 = ssub.s32 %s18, %s25
      %s107 = sor.u32 %s105, %s106
      %p108 = scmp.eq.s32.totalorder %s107, 0
      %s110 = sadd.s32 %s109, 1
      %s111 = scalar_select %p108, %s109, %s110
      %p114 = pneg %p108
      %p115 = scmp.eq.s32.totalorder %s10, 1
      %p116 = por %p114, %p115
      %p117 = scmp.ne.s32.totalorder %s109, %s112
      %p118 = scmp.eq.s32.totalorder %s10, 0
      %p119 = por %p117, %p118
      %p120 = scmp.ne.s32.totalorder %s109, %s112
      %p121 = scmp.eq.s32.totalorder %s15, 1
      %p122 = por %p120, %p121
      %p123 = scmp.ne.s32.totalorder %s112, %s113
      %p124 = scmp.eq.s32.totalorder %s15, 0
      %p125 = por %p123, %p124
      %p126 = scmp.ne.s32.totalorder %s112, %s113
      %p127 = scmp.eq.s32.totalorder %s16, 1
      %p128 = por %p126, %p127
      %p130 = scmp.ne.s32.totalorder %s113, %s129
      %p131 = scmp.eq.s32.totalorder %s16, 0
      %p132 = por %p130, %p131
      %p133 = scmp.le.s32.totalorder 1, %s10
      %p134 = scmp.lt.s32.totalorder %s10, 3
      %p135 = pnand %p133, %p134
      %p136 = pneg %p135
      // Predicated region
      $region9: #{mask_transformer_forward.3} parent=5 // pred_check
        _
      $region10: #{mask_transformer_forward.3} parent=5 // pred_check_branch
        %138 = sbr.rel (%p135) target = $region12
      $region11: #{mask_transformer_forward.3} parent=5 // pred_region
        %s139 = ssub.s32 %s10, 1
        // Predicated region
        $region13: #{mask_transformer_forward.3} parent=11 // pred_check
          %p140 = pneg %p71
        $region14: #{mask_transformer_forward.3} parent=11 // pred_check_branch
          %142 = sbr.rel (%p140) target = $region16
        $region15: #{mask_transformer_forward.3} parent=11 // pred_region
          %s144 = ssub.s32 9216, 9216
          %145 = vsyncadd [#allocation3], %s144
          %s146 = sshll.u32 [#allocation2], 4
          %s147 = int_to_ptr.vmem [resolvable:$true] %s146
          %152 = dma.hbm_to_vmem [thread:$0]  %s1, 9216, %s147, [#allocation3], 192, 192, 12
        $region16: #{mask_transformer_forward.3} parent=11 // pred_fallthru
          _
        // Predicated region
        $region17: #{mask_transformer_forward.3} parent=11 // pred_check
          %p153 = pneg %p97
        $region18: #{mask_transformer_forward.3} parent=11 // pred_check_branch
          %155 = sbr.rel (%p153) target = $region20
        $region19: #{mask_transformer_forward.3} parent=11 // pred_region
          %s156 = smul.u32 4, %s20
          %p157 = scmp.lt.s32.totalorder %s156, 3
          %s158 = scalar_select %p157, %s156, 3
          %s159 = smul.addr %s158, 3
          %s160 = smul.addr %s159, 8
          %s161 = scalar_lea.vmem %s2, %s160
          %s162 = smul.u32 4, %s20
        $region20: #{mask_transformer_forward.3} parent=11 // pred_fallthru
          _
      $region12: #{mask_transformer_forward.3} parent=5 // pred_fallthru
        _
      %p163 = scmp.lt.s32.totalorder %s10, 2
      // Predicated region
      $region21: #{mask_transformer_forward.3} parent=5 // pred_check
        %p164 = pneg %p163
      $region22: #{mask_transformer_forward.3} parent=5 // pred_check_branch
        %166 = sbr.rel (%p164) target = $region24
      $region23: #{mask_transformer_forward.3} parent=5 // pred_region
        // Predicated region
        $region25: #{mask_transformer_forward.3} parent=23 // pred_check
          %p167 = pneg %p44
        $region26: #{mask_transformer_forward.3} parent=23 // pred_check_branch
          %169 = sbr.rel (%p167) target = $region28
        $region27: #{mask_transformer_forward.3} parent=23 // pred_region
          %s170 = smul.u32 4, %s18
          %p171 = scmp.lt.s32.totalorder %s17, 1
          %s172 = scalar_select %p171, %s17, 1
          %p173 = scmp.lt.s32.totalorder %s170, 3
          %s174 = scalar_select %p173, %s170, 3
          %s175 = smul.addr %s174, 3
          %s176 = smul.addr %s172, 12
          %s177 = sadd.s32 %s175, %s176
          %s178 = smul.addr %s177, 4
          %s179 = scalar_lea.vmem %s0, %s178
          %s180 = smul.u32 4, %s18
        $region28: #{mask_transformer_forward.3} parent=23 // pred_fallthru
          _
      $region24: #{mask_transformer_forward.3} parent=5 // pred_fallthru
        _
      %p181 = scmp.le.s32.totalorder 1, %s10
      %p182 = scmp.lt.s32.totalorder %s10, 3
      %p183 = pnand %p181, %p182
      %p184 = pneg %p183
      // Predicated region
      $region29: #{mask_transformer_forward.3} parent=5 // pred_check
        _
      $region30: #{mask_transformer_forward.3} parent=5 // pred_check_branch
        %186 = sbr.rel (%p183) target = $region32
      $region31: #{mask_transformer_forward.3} parent=5 // pred_region
        %s187 = ssub.s32 %s10, 1
        // Predicated region
        $region33: #{mask_transformer_forward.3} parent=31 // pred_check
          %p188 = pneg %p71
        $region34: #{mask_transformer_forward.3} parent=31 // pred_check_branch
          %190 = sbr.rel (%p188) target = $region36
        $region35: #{mask_transformer_forward.3} parent=31 // pred_region
          %191 = dma.done [#allocation3], 9216
        $region36: #{mask_transformer_forward.3} parent=31 // pred_fallthru
          _
        %s192 = smul.u32 4, %s20
        %p193 = scmp.lt.s32.totalorder %s19, 1
        %s194 = scalar_select %p193, %s19, 1
        %p195 = scmp.lt.s32.totalorder %s192, 3
        %s196 = scalar_select %p195, %s192, 3
        %s197 = smul.addr %s196, 3
        %s198 = smul.addr %s194, 12
        %s199 = sadd.s32 %s197, %s198
        %s200 = smul.addr %s199, 4
        %s201 = scalar_lea.vmem %s0, %s200
        %p202 = pneg %p50
        %p203 = pneg %p47
        %p204 = pneg %p71
        %p205 = pneg %p68
        %s206 = smul.u32 4, %s20
        %p207 = scmp.lt.s32.totalorder %s206, 3
        %s208 = scalar_select %p207, %s206, 3
        %s209 = smul.addr %s208, 3
        %s210 = smul.addr %s209, 8
        %s211 = scalar_lea.vmem %s2, %s210
        %p212 = pneg %p97
        %p213 = pneg %p94
        %p214 = pneg %p125
        %p215 = pneg %p122
        %s216 = smul.u32 4, %s20
        %p217 = scmp.lt.s32.totalorder %s19, 1
        %s218 = scalar_select %p217, %s19, 1
        %p219 = scmp.lt.s32.totalorder %s216, 3
        %s220 = scalar_select %p219, %s216, 3
        %s221 = smul.addr %s220, 3
        %s222 = smul.addr %s218, 12
        %s223 = sadd.s32 %s221, %s222
        %s224 = smul.addr %s223, 4
        %s225 = scalar_lea.vmem %s3, %s224
        %s226 = smul.u32 4, %s20
        %p227 = scmp.lt.s32.totalorder %s19, 1
        %s228 = scalar_select %p227, %s19, 1
        %p229 = scmp.lt.s32.totalorder %s226, 3
        %s230 = scalar_select %p229, %s226, 3
        %s231 = smul.addr %s230, 3
        %s232 = smul.addr %s228, 12
        %s233 = sadd.s32 %s231, %s232
        %s234 = smul.addr %s233, 4
        %s235 = scalar_lea.vmem %s0, %s234
        %s236 = smul.u32 4, %s20
        %s237 = smul.u32 4, %s20
        %p238 = scmp.lt.s32.totalorder %s237, 3
        %s239 = scalar_select %p238, %s237, 3
        %s240 = smul.addr %s239, 3
        %s241 = smul.addr %s240, 8
        %s242 = scalar_lea.vmem %s2, %s241
        %s243 = smul.u32 4, %s20
        %s244 = smul.u32 4, %s20
        %p245 = scmp.lt.s32.totalorder %s19, 1
        %s246 = scalar_select %p245, %s19, 1
        %p247 = scmp.lt.s32.totalorder %s244, 3
        %s248 = scalar_select %p247, %s244, 3
        %s249 = smul.addr %s248, 3
        %s250 = smul.addr %s246, 12
        %s251 = sadd.s32 %s249, %s250
        %s252 = smul.addr %s251, 4
        %s253 = scalar_lea.vmem %s3, %s252
        %s254 = smul.u32 4, %s20
        %v256 = vld [vmem:[%s235] sm:$0xff]
        %v257 = vld [vmem:[%s235 + $0x8] sm:$0xf]
        %v258 = vld [vmem:[%s235 + $0xc] sm:$0xff]
        %v259 = vld [vmem:[%s235 + $0x14] sm:$0xf]
        %v260 = vld [vmem:[%s235 + $0x18] sm:$0xff]
        %v261 = vld [vmem:[%s235 + $0x20] sm:$0xf]
        %v262 = vld [vmem:[%s235 + $0x24] sm:$0xff]
        %v263 = vld [vmem:[%s235 + $0x2c] sm:$0xf]
        %v264 = vld [vmem:[#allocation2] sm:$0xff]
        %v265 = vld [vmem:[#allocation2 + $0x8] sm:$0xf]
        %v266 = vld [vmem:[#allocation2 + $0xc] sm:$0xff]
        %v267 = vld [vmem:[#allocation2 + $0x14] sm:$0xf]
        %v268 = vld [vmem:[#allocation2 + $0x18] sm:$0xff]
        %v269 = vld [vmem:[#allocation2 + $0x20] sm:$0xf]
        %v270 = vld [vmem:[#allocation2 + $0x24] sm:$0xff]
        %v271 = vld [vmem:[#allocation2 + $0x2c] sm:$0xf]
        %v272 = vld [vmem:[#allocation2 + $0x30] sm:$0xff]
        %v273 = vld [vmem:[#allocation2 + $0x38] sm:$0xf]
        %v274 = vld [vmem:[#allocation2 + $0x3c] sm:$0xff]
        %v275 = vld [vmem:[#allocation2 + $0x44] sm:$0xf]
        %v276 = vld [vmem:[#allocation2 + $0x48] sm:$0xff]
        %v277 = vld [vmem:[#allocation2 + $0x50] sm:$0xf]
        %v278 = vld [vmem:[#allocation2 + $0x54] sm:$0xff]
        %v279 = vld [vmem:[#allocation2 + $0x5c] sm:$0xf]
        %v280 = vld [vmem:[#allocation2 + $0x60] sm:$0xff]
        %v281 = vld [vmem:[#allocation2 + $0x68] sm:$0xf]
        %v282 = vld [vmem:[#allocation2 + $0x6c] sm:$0xff]
        %v283 = vld [vmem:[#allocation2 + $0x74] sm:$0xf]
        %v284 = vld [vmem:[#allocation2 + $0x78] sm:$0xff]
        %v285 = vld [vmem:[#allocation2 + $0x80] sm:$0xf]
        %v286 = vld [vmem:[#allocation2 + $0x84] sm:$0xff]
        %v287 = vld [vmem:[#allocation2 + $0x8c] sm:$0xf]
        %v288 = vld [vmem:[#allocation2 + $0x90] sm:$0xff]
        %v289 = vld [vmem:[#allocation2 + $0x98] sm:$0xf]
        %v290 = vld [vmem:[#allocation2 + $0x9c] sm:$0xff]
        %v291 = vld [vmem:[#allocation2 + $0xa4] sm:$0xf]
        %v292 = vld [vmem:[#allocation2 + $0xa8] sm:$0xff]
        %v293 = vld [vmem:[#allocation2 + $0xb0] sm:$0xf]
        %v294 = vld [vmem:[#allocation2 + $0xb4] sm:$0xff]
        %v295 = vld [vmem:[#allocation2 + $0xbc] sm:$0xf]
        %v296 = vld [vmem:[#allocation2 + $0xc0] sm:$0xff]
        %v297 = vld [vmem:[#allocation2 + $0xc8] sm:$0xf]
        %v298 = vld [vmem:[#allocation2 + $0xcc] sm:$0xff]
        %v299 = vld [vmem:[#allocation2 + $0xd4] sm:$0xf]
        %v300 = vld [vmem:[#allocation2 + $0xd8] sm:$0xff]
        %v301 = vld [vmem:[#allocation2 + $0xe0] sm:$0xf]
        %v302 = vld [vmem:[#allocation2 + $0xe4] sm:$0xff]
        %v303 = vld [vmem:[#allocation2 + $0xec] sm:$0xf]
        %v304 = vld [vmem:[#allocation2 + $0xf0] sm:$0xff]
        %v305 = vld [vmem:[#allocation2 + $0xf8] sm:$0xf]
        %v306 = vld [vmem:[#allocation2 + $0xfc] sm:$0xff]
        %v307 = vld [vmem:[#allocation2 + $0x104] sm:$0xf]
        %v308 = vld [vmem:[#allocation2 + $0x108] sm:$0xff]
        %v309 = vld [vmem:[#allocation2 + $0x110] sm:$0xf]
        %v310 = vld [vmem:[#allocation2 + $0x114] sm:$0xff]
        %v311 = vld [vmem:[#allocation2 + $0x11c] sm:$0xf]
        %v312 = vld [vmem:[#allocation2 + $0x120] sm:$0xff]
        %v313 = vld [vmem:[#allocation2 + $0x128] sm:$0xf]
        %v314 = vld [vmem:[#allocation2 + $0x12c] sm:$0xff]
        %v315 = vld [vmem:[#allocation2 + $0x134] sm:$0xf]
        %v316 = vld [vmem:[#allocation2 + $0x138] sm:$0xff]
        %v317 = vld [vmem:[#allocation2 + $0x140] sm:$0xf]
        %v318 = vld [vmem:[#allocation2 + $0x144] sm:$0xff]
        %v319 = vld [vmem:[#allocation2 + $0x14c] sm:$0xf]
        %v320 = vld [vmem:[#allocation2 + $0x150] sm:$0xff]
        %v321 = vld [vmem:[#allocation2 + $0x158] sm:$0xf]
        %v322 = vld [vmem:[#allocation2 + $0x15c] sm:$0xff]
        %v323 = vld [vmem:[#allocation2 + $0x164] sm:$0xf]
        %v324 = vld [vmem:[#allocation2 + $0x168] sm:$0xff]
        %v325 = vld [vmem:[#allocation2 + $0x170] sm:$0xf]
        %v326 = vld [vmem:[#allocation2 + $0x174] sm:$0xff]
        %v327 = vld [vmem:[#allocation2 + $0x17c] sm:$0xf]
        %v328 = vld [vmem:[#allocation2 + $0x180] sm:$0xff]
        %v329 = vld [vmem:[#allocation2 + $0x188] sm:$0xf]
        %v330 = vld [vmem:[#allocation2 + $0x18c] sm:$0xff]
        %v331 = vld [vmem:[#allocation2 + $0x194] sm:$0xf]
        %v332 = vld [vmem:[#allocation2 + $0x198] sm:$0xff]
        %v333 = vld [vmem:[#allocation2 + $0x1a0] sm:$0xf]
        %v334 = vld [vmem:[#allocation2 + $0x1a4] sm:$0xff]
        %v335 = vld [vmem:[#allocation2 + $0x1ac] sm:$0xf]
        %v336 = vld [vmem:[#allocation2 + $0x1b0] sm:$0xff]
        %v337 = vld [vmem:[#allocation2 + $0x1b8] sm:$0xf]
        %v338 = vld [vmem:[#allocation2 + $0x1bc] sm:$0xff]
        %v339 = vld [vmem:[#allocation2 + $0x1c4] sm:$0xf]
        %v340 = vld [vmem:[#allocation2 + $0x1c8] sm:$0xff]
        %v341 = vld [vmem:[#allocation2 + $0x1d0] sm:$0xf]
        %v342 = vld [vmem:[#allocation2 + $0x1d4] sm:$0xff]
        %v343 = vld [vmem:[#allocation2 + $0x1dc] sm:$0xf]
        %v344 = vld [vmem:[#allocation2 + $0x1e0] sm:$0xff]
        %v345 = vld [vmem:[#allocation2 + $0x1e8] sm:$0xf]
        %v346 = vld [vmem:[#allocation2 + $0x1ec] sm:$0xff]
        %v347 = vld [vmem:[#allocation2 + $0x1f4] sm:$0xf]
        %v348 = vld [vmem:[#allocation2 + $0x1f8] sm:$0xff]
        %v349 = vld [vmem:[#allocation2 + $0x200] sm:$0xf]
        %v350 = vld [vmem:[#allocation2 + $0x204] sm:$0xff]
        %v351 = vld [vmem:[#allocation2 + $0x20c] sm:$0xf]
        %v352 = vld [vmem:[#allocation2 + $0x210] sm:$0xff]
        %v353 = vld [vmem:[#allocation2 + $0x218] sm:$0xf]
        %v354 = vld [vmem:[#allocation2 + $0x21c] sm:$0xff]
        %v355 = vld [vmem:[#allocation2 + $0x224] sm:$0xf]
        %v356 = vld [vmem:[#allocation2 + $0x228] sm:$0xff]
        %v357 = vld [vmem:[#allocation2 + $0x230] sm:$0xf]
        %v358 = vld [vmem:[#allocation2 + $0x234] sm:$0xff]
        %v359 = vld [vmem:[#allocation2 + $0x23c] sm:$0xf]
        %v360 = vld [vmem:[%s242] sm:$0xff]
        %v361 = vld [vmem:[%s242 + $0x8] sm:$0xff]
        %v362 = vld [vmem:[%s242 + $0x10] sm:$0xff]
        %v363 = vld [vmem:[%s242 + $0x18] sm:$0xff]
        %v364 = vld [vmem:[%s242 + $0x20] sm:$0xff]
        %v365 = vld [vmem:[%s242 + $0x28] sm:$0xff]
        %v366 = vld [vmem:[%s242 + $0x30] sm:$0xff]
        %v367 = vld [vmem:[%s242 + $0x38] sm:$0xff]
        %v368 = vld [vmem:[%s242 + $0x40] sm:$0xff]
        %v369 = vld [vmem:[%s242 + $0x48] sm:$0xff]
        %v370 = vld [vmem:[%s242 + $0x50] sm:$0xff]
        %v371 = vld [vmem:[%s242 + $0x58] sm:$0xff]
        %v380 = vunpack.c.l.b16 %v256
        %v381 = vunpack.c.h.b16 %v256
        %v382 = vunpack.c.l.b16 %v257
        %v383 = vunpack.c.l.b16 %v258
        %v384 = vunpack.c.h.b16 %v258
        %v385 = vunpack.c.l.b16 %v259
        %v386 = vunpack.c.l.b16 %v260
        %v387 = vunpack.c.h.b16 %v260
        %v388 = vunpack.c.l.b16 %v261
        %v389 = vunpack.c.l.b16 %v262
        %v390 = vunpack.c.h.b16 %v262
        %v391 = vunpack.c.l.b16 %v263
        %v392 = vpack.c.b16 %v383, %v380
        %v393 = vpack.c.b16 %v384, %v381
        %v394 = vpack.c.b16 %v385, %v382
        %v395 = vpack.c.b16 %v389, %v386
        %v396 = vpack.c.b16 %v390, %v387
        %v397 = vpack.c.b16 %v391, %v388
        %v500 = vunpack.c.l.b16 %v264
        %v501 = vunpack.c.h.b16 %v264
        %v502 = vunpack.c.l.b16 %v265
        %v503 = vunpack.c.l.b16 %v266
        %v504 = vunpack.c.h.b16 %v266
        %v505 = vunpack.c.l.b16 %v267
        %v506 = vunpack.c.l.b16 %v268
        %v507 = vunpack.c.h.b16 %v268
        %v508 = vunpack.c.l.b16 %v269
        %v509 = vunpack.c.l.b16 %v270
        %v510 = vunpack.c.h.b16 %v270
        %v511 = vunpack.c.l.b16 %v271
        %v512 = vunpack.c.l.b16 %v272
        %v513 = vunpack.c.h.b16 %v272
        %v514 = vunpack.c.l.b16 %v273
        %v515 = vunpack.c.l.b16 %v274
        %v516 = vunpack.c.h.b16 %v274
        %v517 = vunpack.c.l.b16 %v275
        %v518 = vunpack.c.l.b16 %v276
        %v519 = vunpack.c.h.b16 %v276
        %v520 = vunpack.c.l.b16 %v277
        %v521 = vunpack.c.l.b16 %v278
        %v522 = vunpack.c.h.b16 %v278
        %v523 = vunpack.c.l.b16 %v279
        %v524 = vunpack.c.l.b16 %v280
        %v525 = vunpack.c.h.b16 %v280
        %v526 = vunpack.c.l.b16 %v281
        %v527 = vunpack.c.l.b16 %v282
        %v528 = vunpack.c.h.b16 %v282
        %v529 = vunpack.c.l.b16 %v283
        %v530 = vunpack.c.l.b16 %v284
        %v531 = vunpack.c.h.b16 %v284
        %v532 = vunpack.c.l.b16 %v285
        %v533 = vunpack.c.l.b16 %v286
        %v534 = vunpack.c.h.b16 %v286
        %v535 = vunpack.c.l.b16 %v287
        %v536 = vunpack.c.l.b16 %v288
        %v537 = vunpack.c.h.b16 %v288
        %v538 = vunpack.c.l.b16 %v289
        %v539 = vunpack.c.l.b16 %v290
        %v540 = vunpack.c.h.b16 %v290
        %v541 = vunpack.c.l.b16 %v291
        %v542 = vunpack.c.l.b16 %v292
        %v543 = vunpack.c.h.b16 %v292
        %v544 = vunpack.c.l.b16 %v293
        %v545 = vunpack.c.l.b16 %v294
        %v546 = vunpack.c.h.b16 %v294
        %v547 = vunpack.c.l.b16 %v295
        %v548 = vunpack.c.l.b16 %v296
        %v549 = vunpack.c.h.b16 %v296
        %v550 = vunpack.c.l.b16 %v297
        %v551 = vunpack.c.l.b16 %v298
        %v552 = vunpack.c.h.b16 %v298
        %v553 = vunpack.c.l.b16 %v299
        %v554 = vunpack.c.l.b16 %v300
        %v555 = vunpack.c.h.b16 %v300
        %v556 = vunpack.c.l.b16 %v301
        %v557 = vunpack.c.l.b16 %v302
        %v558 = vunpack.c.h.b16 %v302
        %v559 = vunpack.c.l.b16 %v303
        %v560 = vunpack.c.l.b16 %v304
        %v561 = vunpack.c.h.b16 %v304
        %v562 = vunpack.c.l.b16 %v305
        %v563 = vunpack.c.l.b16 %v306
        %v564 = vunpack.c.h.b16 %v306
        %v565 = vunpack.c.l.b16 %v307
        %v566 = vunpack.c.l.b16 %v308
        %v567 = vunpack.c.h.b16 %v308
        %v568 = vunpack.c.l.b16 %v309
        %v569 = vunpack.c.l.b16 %v310
        %v570 = vunpack.c.h.b16 %v310
        %v571 = vunpack.c.l.b16 %v311
        %v572 = vunpack.c.l.b16 %v312
        %v573 = vunpack.c.h.b16 %v312
        %v574 = vunpack.c.l.b16 %v313
        %v575 = vunpack.c.l.b16 %v314
        %v576 = vunpack.c.h.b16 %v314
        %v577 = vunpack.c.l.b16 %v315
        %v578 = vunpack.c.l.b16 %v316
        %v579 = vunpack.c.h.b16 %v316
        %v580 = vunpack.c.l.b16 %v317
        %v581 = vunpack.c.l.b16 %v318
        %v582 = vunpack.c.h.b16 %v318
        %v583 = vunpack.c.l.b16 %v319
        %v584 = vunpack.c.l.b16 %v320
        %v585 = vunpack.c.h.b16 %v320
        %v586 = vunpack.c.l.b16 %v321
        %v587 = vunpack.c.l.b16 %v322
        %v588 = vunpack.c.h.b16 %v322
        %v589 = vunpack.c.l.b16 %v323
        %v590 = vunpack.c.l.b16 %v324
        %v591 = vunpack.c.h.b16 %v324
        %v592 = vunpack.c.l.b16 %v325
        %v593 = vunpack.c.l.b16 %v326
        %v594 = vunpack.c.h.b16 %v326
        %v595 = vunpack.c.l.b16 %v327
        %v596 = vunpack.c.l.b16 %v328
        %v597 = vunpack.c.h.b16 %v328
        %v598 = vunpack.c.l.b16 %v329
        %v599 = vunpack.c.l.b16 %v330
        %v600 = vunpack.c.h.b16 %v330
        %v601 = vunpack.c.l.b16 %v331
        %v602 = vunpack.c.l.b16 %v332
        %v603 = vunpack.c.h.b16 %v332
        %v604 = vunpack.c.l.b16 %v333
        %v605 = vunpack.c.l.b16 %v334
        %v606 = vunpack.c.h.b16 %v334
        %v607 = vunpack.c.l.b16 %v335
        %v608 = vunpack.c.l.b16 %v336
        %v609 = vunpack.c.h.b16 %v336
        %v610 = vunpack.c.l.b16 %v337
        %v611 = vunpack.c.l.b16 %v338
        %v612 = vunpack.c.h.b16 %v338
        %v613 = vunpack.c.l.b16 %v339
        %v614 = vunpack.c.l.b16 %v340
        %v615 = vunpack.c.h.b16 %v340
        %v616 = vunpack.c.l.b16 %v341
        %v617 = vunpack.c.l.b16 %v342
        %v618 = vunpack.c.h.b16 %v342
        %v619 = vunpack.c.l.b16 %v343
        %v620 = vunpack.c.l.b16 %v344
        %v621 = vunpack.c.h.b16 %v344
        %v622 = vunpack.c.l.b16 %v345
        %v623 = vunpack.c.l.b16 %v346
        %v624 = vunpack.c.h.b16 %v346
        %v625 = vunpack.c.l.b16 %v347
        %v626 = vunpack.c.l.b16 %v348
        %v627 = vunpack.c.h.b16 %v348
        %v628 = vunpack.c.l.b16 %v349
        %v629 = vunpack.c.l.b16 %v350
        %v630 = vunpack.c.h.b16 %v350
        %v631 = vunpack.c.l.b16 %v351
        %v632 = vunpack.c.l.b16 %v352
        %v633 = vunpack.c.h.b16 %v352
        %v634 = vunpack.c.l.b16 %v353
        %v635 = vunpack.c.l.b16 %v354
        %v636 = vunpack.c.h.b16 %v354
        %v637 = vunpack.c.l.b16 %v355
        %v638 = vunpack.c.l.b16 %v356
        %v639 = vunpack.c.h.b16 %v356
        %v640 = vunpack.c.l.b16 %v357
        %v641 = vunpack.c.l.b16 %v358
        %v642 = vunpack.c.h.b16 %v358
        %v643 = vunpack.c.l.b16 %v359
        %v644 = vpack.c.b16 %v503, %v500
        %v645 = vpack.c.b16 %v504, %v501
        %v646 = vpack.c.b16 %v505, %v502
        %v647 = vpack.c.b16 %v509, %v506
        %v648 = vpack.c.b16 %v510, %v507
        %v649 = vpack.c.b16 %v511, %v508
        %v650 = vpack.c.b16 %v515, %v512
        %v651 = vpack.c.b16 %v516, %v513
        %v652 = vpack.c.b16 %v517, %v514
        %v653 = vpack.c.b16 %v521, %v518
        %v654 = vpack.c.b16 %v522, %v519
        %v655 = vpack.c.b16 %v523, %v520
        %v656 = vpack.c.b16 %v527, %v524
        %v657 = vpack.c.b16 %v528, %v525
        %v658 = vpack.c.b16 %v529, %v526
        %v659 = vpack.c.b16 %v533, %v530
        %v660 = vpack.c.b16 %v534, %v531
        %v661 = vpack.c.b16 %v535, %v532
        %v662 = vpack.c.b16 %v539, %v536
        %v663 = vpack.c.b16 %v540, %v537
        %v664 = vpack.c.b16 %v541, %v538
        %v665 = vpack.c.b16 %v545, %v542
        %v666 = vpack.c.b16 %v546, %v543
        %v667 = vpack.c.b16 %v547, %v544
        %v668 = vpack.c.b16 %v551, %v548
        %v669 = vpack.c.b16 %v552, %v549
        %v670 = vpack.c.b16 %v553, %v550
        %v671 = vpack.c.b16 %v557, %v554
        %v672 = vpack.c.b16 %v558, %v555
        %v673 = vpack.c.b16 %v559, %v556
        %v674 = vpack.c.b16 %v563, %v560
        %v675 = vpack.c.b16 %v564, %v561
        %v676 = vpack.c.b16 %v565, %v562
        %v677 = vpack.c.b16 %v569, %v566
        %v678 = vpack.c.b16 %v570, %v567
        %v679 = vpack.c.b16 %v571, %v568
        %v680 = vpack.c.b16 %v575, %v572
        %v681 = vpack.c.b16 %v576, %v573
        %v682 = vpack.c.b16 %v577, %v574
        %v683 = vpack.c.b16 %v581, %v578
        %v684 = vpack.c.b16 %v582, %v579
        %v685 = vpack.c.b16 %v583, %v580
        %v686 = vpack.c.b16 %v587, %v584
        %v687 = vpack.c.b16 %v588, %v585
        %v688 = vpack.c.b16 %v589, %v586
        %v689 = vpack.c.b16 %v593, %v590
        %v690 = vpack.c.b16 %v594, %v591
        %v691 = vpack.c.b16 %v595, %v592
        %v692 = vpack.c.b16 %v599, %v596
        %v693 = vpack.c.b16 %v600, %v597
        %v694 = vpack.c.b16 %v601, %v598
        %v695 = vpack.c.b16 %v605, %v602
        %v696 = vpack.c.b16 %v606, %v603
        %v697 = vpack.c.b16 %v607, %v604
        %v698 = vpack.c.b16 %v611, %v608
        %v699 = vpack.c.b16 %v612, %v609
        %v700 = vpack.c.b16 %v613, %v610
        %v701 = vpack.c.b16 %v617, %v614
        %v702 = vpack.c.b16 %v618, %v615
        %v703 = vpack.c.b16 %v619, %v616
        %v704 = vpack.c.b16 %v623, %v620
        %v705 = vpack.c.b16 %v624, %v621
        %v706 = vpack.c.b16 %v625, %v622
        %v707 = vpack.c.b16 %v629, %v626
        %v708 = vpack.c.b16 %v630, %v627
        %v709 = vpack.c.b16 %v631, %v628
        %v710 = vpack.c.b16 %v635, %v632
        %v711 = vpack.c.b16 %v636, %v633
        %v712 = vpack.c.b16 %v637, %v634
        %v713 = vpack.c.b16 %v641, %v638
        %v714 = vpack.c.b16 %v642, %v639
        %v715 = vpack.c.b16 %v643, %v640
        %788 = vmatprep.subr.bf16.mxu0 %v645
        %789 = vmatpush1.bf16.msra.mxu0 %v644
        %790 = vmatprep.subr.bf16.mxu0 %v648
        %791 = vmatpush1.bf16.msra.mxu0 %v647
        %792 = vmatprep.subr.bf16.mxu0 %v651
        %793 = vmatpush1.bf16.msra.mxu0 %v650
        %794 = vmatprep.subr.bf16.mxu0 %v654
        %795 = vmatpush1.bf16.msra.mxu0 %v653
        %796 = vmatprep.subr.bf16.mxu0 %v657
        %797 = vmatpush1.bf16.msra.mxu0 %v656
        %798 = vmatprep.subr.bf16.mxu0 %v660
        %799 = vmatpush1.bf16.msra.mxu0 %v659
        %800 = vmatprep.subr.bf16.mxu0 %v663
        %801 = vmatpush1.bf16.msra.mxu0 %v662
        %802 = vmatprep.subr.bf16.mxu0 %v666
        %803 = vmatpush1.bf16.msra.mxu0 %v665
        %804 = vmatprep.subr.bf16.mxu0 %v669
        %805 = vmatpush1.bf16.msra.mxu0 %v668
        %806 = vmatprep.subr.bf16.mxu0 %v672
        %807 = vmatpush1.bf16.msra.mxu0 %v671
        %808 = vmatprep.subr.bf16.mxu0 %v675
        %809 = vmatpush1.bf16.msra.mxu0 %v674
        %810 = vmatprep.subr.bf16.mxu0 %v678
        %811 = vmatpush1.bf16.msra.mxu0 %v677
        %812 = vmatprep.subr.bf16.mxu0 %v681
        %813 = vmatpush1.bf16.msra.mxu0 %v680
        %814 = vmatprep.subr.bf16.mxu0 %v684
        %815 = vmatpush1.bf16.msra.mxu0 %v683
        %816 = vmatprep.subr.bf16.mxu0 %v687
        %817 = vmatpush1.bf16.msra.mxu0 %v686
        %818 = vmatprep.subr.bf16.mxu0 %v690
        %819 = vmatpush1.bf16.msra.mxu0 %v689
        %820 = vmatprep.mubr.bf16.mxu0 %v393
        %821 = vmatmul.mubr.bf16.gmra.mrb[0].mxu0 %v392
        %v822 = vpop.f32.mrb[0].mxu0
        %v823 = vadd.f32 %v360, %v822
        %v824 = vpop.f32.mrb[0].mxu0
        %v825 = vadd.f32 %v361, %v824
        %v826 = vpop.f32.mrb[0].mxu0
        %v827 = vadd.f32 %v363, %v826
        %v828 = vpop.f32.mrb[0].mxu0
        %v829 = vadd.f32 %v364, %v828
        %830 = vmatprep.mubr.bf16.mxu0 %v396
        %831 = vmatmul.mubr.bf16.gmra.mrb[0].mxu0 %v395
        %v832 = vpop.f32.mrb[0].mxu0
        %v833 = vadd.f32 %v366, %v832
        %v834 = vpop.f32.mrb[0].mxu0
        %v835 = vadd.f32 %v367, %v834
        %v836 = vpop.f32.mrb[0].mxu0
        %v837 = vadd.f32 %v369, %v836
        %v838 = vpop.f32.mrb[0].mxu0
        %v839 = vadd.f32 %v370, %v838
        %840 = vdwg.mxu0
        %841 = vmatprep.subr.bf16.mxu0 %v693
        %842 = vmatpush1.bf16.msra.mxu0 %v692
        %843 = vmatprep.subr.bf16.mxu0 %v696
        %844 = vmatpush1.bf16.msra.mxu0 %v695
        %845 = vmatprep.subr.bf16.mxu0 %v699
        %846 = vmatpush1.bf16.msra.mxu0 %v698
        %847 = vmatprep.subr.bf16.mxu0 %v702
        %848 = vmatpush1.bf16.msra.mxu0 %v701
        %849 = vmatprep.subr.bf16.mxu0 %v705
        %850 = vmatpush1.bf16.msra.mxu0 %v704
        %851 = vmatprep.subr.bf16.mxu0 %v708
        %852 = vmatpush1.bf16.msra.mxu0 %v707
        %853 = vmatprep.subr.bf16.mxu0 %v711
        %854 = vmatpush1.bf16.msra.mxu0 %v710
        %855 = vmatprep.subr.bf16.mxu0 %v714
        %856 = vmatpush1.bf16.msra.mxu0 %v713
        %857 = vmatprep.subr.bf16.mxu0 0
        %858 = vmatpush1.bf16.msra.mxu0 0
        %859 = vmatprep.subr.bf16.mxu0 0
        %860 = vmatpush1.bf16.msra.mxu0 0
        %861 = vmatprep.subr.bf16.mxu0 0
        %862 = vmatpush1.bf16.msra.mxu0 0
        %863 = vmatprep.subr.bf16.mxu0 0
        %864 = vmatpush1.bf16.msra.mxu0 0
        %865 = vmatprep.subr.bf16.mxu0 0
        %866 = vmatpush1.bf16.msra.mxu0 0
        %867 = vmatprep.subr.bf16.mxu0 0
        %868 = vmatpush1.bf16.msra.mxu0 0
        %869 = vmatprep.subr.bf16.mxu0 0
        %870 = vmatpush1.bf16.msra.mxu0 0
        %871 = vmatprep.subr.bf16.mxu0 0
        %872 = vmatpush1.bf16.msra.mxu0 0
        %873 = vmatprep.mubr.bf16.mxu0 0
        %874 = vmatmul.mubr.bf16.gmra.mrb[0].mxu0 %v394
        %v875 = vpop.f32.mrb[0].mxu0
        %v876 = vadd.f32 %v823, %v875
        %v877 = vpop.f32.mrb[0].mxu0
        %v878 = vadd.f32 %v825, %v877
        %v879 = vpop.f32.mrb[0].mxu0
        %v880 = vadd.f32 %v827, %v879
        %v881 = vpop.f32.mrb[0].mxu0
        %v882 = vadd.f32 %v829, %v881
        %883 = vmatprep.mubr.bf16.mxu0 0
        %884 = vmatmul.mubr.bf16.gmra.mrb[0].mxu0 %v397
        %v885 = vpop.f32.mrb[0].mxu0
        %v886 = vadd.f32 %v833, %v885
        %v887 = vpop.f32.mrb[0].mxu0
        %v888 = vadd.f32 %v835, %v887
        %v889 = vpop.f32.mrb[0].mxu0
        %v890 = vadd.f32 %v837, %v889
        %v891 = vpop.f32.mrb[0].mxu0
        %v892 = vadd.f32 %v839, %v891
        %893 = vdwg.mxu0
        %894 = vmatprep.subr.bf16.mxu0 0
        %895 = vmatpush1.bf16.msra.mxu0 %v646
        %896 = vmatprep.subr.bf16.mxu0 0
        %897 = vmatpush1.bf16.msra.mxu0 %v649
        %898 = vmatprep.subr.bf16.mxu0 0
        %899 = vmatpush1.bf16.msra.mxu0 %v652
        %900 = vmatprep.subr.bf16.mxu0 0
        %901 = vmatpush1.bf16.msra.mxu0 %v655
        %902 = vmatprep.subr.bf16.mxu0 0
        %903 = vmatpush1.bf16.msra.mxu0 %v658
        %904 = vmatprep.subr.bf16.mxu0 0
        %905 = vmatpush1.bf16.msra.mxu0 %v661
        %906 = vmatprep.subr.bf16.mxu0 0
        %907 = vmatpush1.bf16.msra.mxu0 %v664
        %908 = vmatprep.subr.bf16.mxu0 0
        %909 = vmatpush1.bf16.msra.mxu0 %v667
        %910 = vmatprep.subr.bf16.mxu0 0
        %911 = vmatpush1.bf16.msra.mxu0 %v670
        %912 = vmatprep.subr.bf16.mxu0 0
        %913 = vmatpush1.bf16.msra.mxu0 %v673
        %914 = vmatprep.subr.bf16.mxu0 0
        %915 = vmatpush1.bf16.msra.mxu0 %v676
        %916 = vmatprep.subr.bf16.mxu0 0
        %917 = vmatpush1.bf16.msra.mxu0 %v679
        %918 = vmatprep.subr.bf16.mxu0 0
        %919 = vmatpush1.bf16.msra.mxu0 %v682
        %920 = vmatprep.subr.bf16.mxu0 0
        %921 = vmatpush1.bf16.msra.mxu0 %v685
        %922 = vmatprep.subr.bf16.mxu0 0
        %923 = vmatpush1.bf16.msra.mxu0 %v688
        %924 = vmatprep.subr.bf16.mxu0 0
        %925 = vmatpush1.bf16.msra.mxu0 %v691
        %926 = vmatprep.mubr.bf16.mxu0 %v393
        %927 = vmatmul.mubr.bf16.gmra.mrb[0].mxu0 %v392
        %v928 = vpop.f32.mrb[0].mxu0
        %v929 = vadd.f32 %v362, %v928
        %v930 = vpop.f32.mrb[0].mxu0
        %v931 = vpop.f32.mrb[0].mxu0
        %v932 = vadd.f32 %v365, %v931
        %v933 = vpop.f32.mrb[0].mxu0
        %934 = vmatprep.mubr.bf16.mxu0 %v396
        %935 = vmatmul.mubr.bf16.gmra.mrb[0].mxu0 %v395
        %v936 = vpop.f32.mrb[0].mxu0
        %v937 = vadd.f32 %v368, %v936
        %v938 = vpop.f32.mrb[0].mxu0
        %v939 = vpop.f32.mrb[0].mxu0
        %v940 = vadd.f32 %v371, %v939
        %v941 = vpop.f32.mrb[0].mxu0
        %942 = vdwg.mxu0
        %943 = vmatprep.subr.bf16.mxu0 0
        %944 = vmatpush1.bf16.msra.mxu0 %v694
        %945 = vmatprep.subr.bf16.mxu0 0
        %946 = vmatpush1.bf16.msra.mxu0 %v697
        %947 = vmatprep.subr.bf16.mxu0 0
        %948 = vmatpush1.bf16.msra.mxu0 %v700
        %949 = vmatprep.subr.bf16.mxu0 0
        %950 = vmatpush1.bf16.msra.mxu0 %v703
        %951 = vmatprep.subr.bf16.mxu0 0
        %952 = vmatpush1.bf16.msra.mxu0 %v706
        %953 = vmatprep.subr.bf16.mxu0 0
        %954 = vmatpush1.bf16.msra.mxu0 %v709
        %955 = vmatprep.subr.bf16.mxu0 0
        %956 = vmatpush1.bf16.msra.mxu0 %v712
        %957 = vmatprep.subr.bf16.mxu0 0
        %958 = vmatpush1.bf16.msra.mxu0 %v715
        %959 = vmatprep.subr.bf16.mxu0 0
        %960 = vmatpush1.bf16.msra.mxu0 0
        %961 = vmatprep.subr.bf16.mxu0 0
        %962 = vmatpush1.bf16.msra.mxu0 0
        %963 = vmatprep.subr.bf16.mxu0 0
        %964 = vmatpush1.bf16.msra.mxu0 0
        %965 = vmatprep.subr.bf16.mxu0 0
        %966 = vmatpush1.bf16.msra.mxu0 0
        %967 = vmatprep.subr.bf16.mxu0 0
        %968 = vmatpush1.bf16.msra.mxu0 0
        %969 = vmatprep.subr.bf16.mxu0 0
        %970 = vmatpush1.bf16.msra.mxu0 0
        %971 = vmatprep.subr.bf16.mxu0 0
        %972 = vmatpush1.bf16.msra.mxu0 0
        %973 = vmatprep.subr.bf16.mxu0 0
        %974 = vmatpush1.bf16.msra.mxu0 0
        %975 = vmatprep.mubr.bf16.mxu0 0
        %976 = vmatmul.mubr.bf16.gmra.mrb[0].mxu0 %v394
        %v977 = vpop.f32.mrb[0].mxu0
        %v978 = vadd.f32 %v929, %v977
        %v979 = vpop.f32.mrb[0].mxu0
        %v980 = vpop.f32.mrb[0].mxu0
        %v981 = vadd.f32 %v932, %v980
        %v982 = vpop.f32.mrb[0].mxu0
        %983 = vmatprep.mubr.bf16.mxu0 0
        %984 = vmatmul.mubr.bf16.gmra.mrb[0].mxu0 %v397
        %v985 = vpop.f32.mrb[0].mxu0
        %v986 = vadd.f32 %v937, %v985
        %v987 = vpop.f32.mrb[0].mxu0
        %v988 = vpop.f32.mrb[0].mxu0
        %v989 = vadd.f32 %v940, %v988
        %v990 = vpop.f32.mrb[0].mxu0
        %991 = vdwg.mxu0
        %v992 = vpack.c.bf16 %v880, %v876
        %v993 = vpack.c.bf16 %v882, %v878
        %v994 = vpack.c.bf16 %v981, %v978
        %v995 = vpack.c.bf16 %v890, %v886
        %v996 = vpack.c.bf16 %v892, %v888
        %v997 = vpack.c.bf16 %v989, %v986
        %v1004 = vunpack.c.l.b16 %v992
        %v1005 = vunpack.c.l.b16 %v993
        %v1006 = vunpack.c.l.b16 %v994
        %v1007 = vunpack.c.h.b16 %v992
        %v1008 = vunpack.c.h.b16 %v993
        %v1009 = vunpack.c.h.b16 %v994
        %v1010 = vunpack.c.l.b16 %v995
        %v1011 = vunpack.c.l.b16 %v996
        %v1012 = vunpack.c.l.b16 %v997
        %v1013 = vunpack.c.h.b16 %v995
        %v1014 = vunpack.c.h.b16 %v996
        %v1015 = vunpack.c.h.b16 %v997
        %v1016 = vpack.c.b16 %v1005, %v1004
        %v1017 = vpack.c.b16 %v1006, %v1006
        %v1018 = vpack.c.b16 %v1008, %v1007
        %v1019 = vpack.c.b16 %v1009, %v1009
        %v1020 = vpack.c.b16 %v1011, %v1010
        %v1021 = vpack.c.b16 %v1012, %v1012
        %v1022 = vpack.c.b16 %v1014, %v1013
        %v1023 = vpack.c.b16 %v1015, %v1015
        %1032 = vst [vmem:[%s253] sm:$0xff] %v1016
        %1033 = vst [vmem:[%s253 + $0x8] sm:$0xf] %v1017
        %1034 = vst [vmem:[%s253 + $0xc] sm:$0xff] %v1018
        %1035 = vst [vmem:[%s253 + $0x14] sm:$0xf] %v1019
        %1036 = vst [vmem:[%s253 + $0x18] sm:$0xff] %v1020
        %1037 = vst [vmem:[%s253 + $0x20] sm:$0xf] %v1021
        %1038 = vst [vmem:[%s253 + $0x24] sm:$0xff] %v1022
        %1039 = vst [vmem:[%s253 + $0x2c] sm:$0xf] %v1023
        %s1040 = smul.u32 4, %s20
        %p1041 = scmp.lt.s32.totalorder %s19, 1
        %s1042 = scalar_select %p1041, %s19, 1
        %p1043 = scmp.lt.s32.totalorder %s1040, 3
        %s1044 = scalar_select %p1043, %s1040, 3
        %s1045 = smul.addr %s1044, 3
        %s1046 = smul.addr %s1042, 12
        %s1047 = sadd.s32 %s1045, %s1046
        %s1048 = smul.addr %s1047, 4
        %s1049 = scalar_lea.vmem %s3, %s1048
        // Predicated region
        $region37: #{mask_transformer_forward.3} parent=31 // pred_check
          %p1050 = pneg %p122
        $region38: #{mask_transformer_forward.3} parent=31 // pred_check_branch
          %1052 = sbr.rel (%p1050) target = $region40
        $region39: #{mask_transformer_forward.3} parent=31 // pred_region
          %s1053 = smul.u32 4, %s20
        $region40: #{mask_transformer_forward.3} parent=31 // pred_fallthru
          _
      $region32: #{mask_transformer_forward.3} parent=5 // pred_fallthru
        _
      %p1054 = scmp.le.s32.totalorder 2, %s10
      // Predicated region
      $region41: #{mask_transformer_forward.3} parent=5 // pred_check
        %p1055 = pneg %p1054
      $region42: #{mask_transformer_forward.3} parent=5 // pred_check_branch
        %1057 = sbr.rel (%p1055) target = $region44
      $region43: #{mask_transformer_forward.3} parent=5 // pred_region
        %s1058 = ssub.s32 %s10, 2
        // Predicated region
        $region45: #{mask_transformer_forward.3} parent=43 // pred_check
          %p1059 = pneg %p128
        $region46: #{mask_transformer_forward.3} parent=43 // pred_check_branch
          %1061 = sbr.rel (%p1059) target = $region48
        $region47: #{mask_transformer_forward.3} parent=43 // pred_region
          %s1062 = smul.u32 4, %s22
          %p1063 = scmp.lt.s32.totalorder %s21, 1
          %s1064 = scalar_select %p1063, %s21, 1
          %p1065 = scmp.lt.s32.totalorder %s1062, 3
          %s1066 = scalar_select %p1065, %s1062, 3
          %s1067 = smul.addr %s1066, 3
          %s1068 = smul.addr %s1064, 12
          %s1069 = sadd.s32 %s1067, %s1068
          %s1070 = smul.addr %s1069, 4
          %s1071 = scalar_lea.vmem %s3, %s1070
        $region48: #{mask_transformer_forward.3} parent=43 // pred_fallthru
          _
      $region44: #{mask_transformer_forward.3} parent=5 // pred_fallthru
        _
    $region6: #{mask_transformer_forward.3} parent=1 // loop_footer
      %s14 = sadd.s32 1, %s10
    $region7: #{mask_transformer_forward.3} parent=1 // loop_footer_branch
      %9 = sbr.rel target = $region3
    $region8: #{mask_transformer_forward.3} parent=1 // loop_exit
      _
    %1072 = vsyncpa [#allocation3], 1
    %s1073 = scalar_lea.sflag [#allocation3], 1
    %1074 = vsyncpa %s1073, 1

// kernel: mask_transformer_forward.4
$region0: #{mask_transformer_forward.4}
  #allocation0 [shape = 'u32[]', space=smem, size = 0x4, offset = 0x4, fixed_abs, tag = 'smem constant byte address 0x4 - core index']
  #allocation1 [shape = 'u32[144,128]{1,0:T(1,128)}', space=vmem, size = 0x12000, scoped, tag = 'internal scratch']
  #allocation2 [shape = 'f32[64,384]{1,0:T(8,128)}', space=vmem, size = 0x18000, scoped, tag = 'scratch operand']
  %s0 = inlined_call_operand.vmem [shape: bf16[2,32,384], index: 0, kind: input, shape index: {}]
  %s1 = inlined_call_operand.hbm [shape: f32[2,1,384], index: 1, kind: input, shape index: {}]
  %s2 = inlined_call_operand.hbm [shape: f32[2,1,384], index: 2, kind: input, shape index: {}]
  %s3 = inlined_call_operand.hbm [shape: bf16[2,384,1152], index: 3, kind: input, shape index: {}]
  %s4 = inlined_call_operand.hbm [shape: f32[2,1,1152], index: 4, kind: input, shape index: {}]
  %s5 = inlined_call_operand.vmem [shape: bf16[2,384,384], index: 5, kind: input, shape index: {}]
  %s6 = inlined_call_operand.hbm [shape: f32[2,1,384], index: 6, kind: input, shape index: {}]
  %s7 = inlined_call_operand.hbm [shape: f32[2,1,384], index: 7, kind: input, shape index: {}]
  %s8 = inlined_call_operand.hbm [shape: f32[2,1,384], index: 8, kind: input, shape index: {}]
  %s9 = inlined_call_operand.hbm [shape: bf16[2,384,768], index: 9, kind: input, shape index: {}]
  %s10 = inlined_call_operand.hbm [shape: f32[2,1,768], index: 10, kind: input, shape index: {}]
  %s11 = inlined_call_operand.hbm [shape: bf16[2,768,384], index: 11, kind: input, shape index: {}]
  %s12 = inlined_call_operand.hbm [shape: f32[2,1,384], index: 12, kind: input, shape index: {}]
  %s13 = inlined_call_operand.vmem [shape: bf16[2,32,384], index: 13, kind: output, shape index: {}]
  %s14 = sld [smem:[#allocation0]]
  $region137: #{mask_transformer_forward.4} parent=0
    _
  %s16 = ssub.s32 1, %s14
  %s17 = scalar_select 0, %s16, %s14
  $region1: #{mask_transformer_forward.4} parent=0
    #allocation3 [shape = 'u8[3072]{0}', space=vmem, size = 0xc00, scoped, tag = 'input window, operand 1']
    #allocation4 [shape = 's32[2]{0}', space=sflag, size = 0x8, scoped, tag = 'scoped memory for mask_transformer_forward.4']
    #allocation5 [shape = 'u8[3072]{0}', space=vmem, size = 0xc00, scoped, tag = 'input window, operand 2']
    #allocation6 [shape = 's32[2]{0}', space=sflag, size = 0x8, scoped, tag = 'scoped memory for mask_transformer_forward.4']
    #allocation7 [shape = 'u8[1769472]{0}', space=vmem, size = 0x1b0000, scoped, tag = 'input window, operand 3']
    #allocation8 [shape = 'u8[9216]{0}', space=vmem, size = 0x2400, scoped, tag = 'input window, operand 4']
    #allocation9 [shape = 's32[2]{0}', space=sflag, size = 0x8, scoped, tag = 'scoped memory for mask_transformer_forward.4']
    #allocation10 [shape = 'u8[3072]{0}', space=vmem, size = 0xc00, scoped, tag = 'input window, operand 6']
    #allocation11 [shape = 'u8[3072]{0}', space=vmem, size = 0xc00, scoped, tag = 'input window, operand 7']
    #allocation12 [shape = 's32[2]{0}', space=sflag, size = 0x8, scoped, tag = 'scoped memory for mask_transformer_forward.4']
    #allocation13 [shape = 'u8[3072]{0}', space=vmem, size = 0xc00, scoped, tag = 'input window, operand 8']
    #allocation14 [shape = 'u8[1179648]{0}', space=vmem, size = 0x120000, scoped, tag = 'input window, operand 9']
    #allocation15 [shape = 's32[2]{0}', space=sflag, size = 0x8, scoped, tag = 'scoped memory for mask_transformer_forward.4']
    #allocation16 [shape = 'u8[6144]{0}', space=vmem, size = 0x1800, scoped, tag = 'input window, operand 10']
    #allocation17 [shape = 'u8[1179648]{0}', space=vmem, size = 0x120000, scoped, tag = 'input window, operand 11']
    #allocation18 [shape = 's32[2]{0}', space=sflag, size = 0x8, scoped, tag = 'scoped memory for mask_transformer_forward.4']
    #allocation19 [shape = 'u8[3072]{0}', space=vmem, size = 0xc00, scoped, tag = 'input window, operand 12']
    %18 = vsyncpa [#allocation4], 0
    %s19 = scalar_lea.sflag [#allocation4], 1
    %20 = vsyncpa %s19, 0
    %21 = vsyncpa [#allocation6], 0
    %s22 = scalar_lea.sflag [#allocation6], 1
    %23 = vsyncpa %s22, 0
    %24 = vsyncpa [#allocation9], 0
    %s25 = scalar_lea.sflag [#allocation9], 1
    %26 = vsyncpa %s25, 0
    %27 = vsyncpa [#allocation12], 0
    %s28 = scalar_lea.sflag [#allocation12], 1
    %29 = vsyncpa %s28, 0
    %30 = vsyncpa [#allocation15], 0
    %s31 = scalar_lea.sflag [#allocation15], 1
    %32 = vsyncpa %s31, 0
    %33 = vsyncpa [#allocation18], 0
    %s34 = scalar_lea.sflag [#allocation18], 1
    %35 = vsyncpa %s34, 0
    loop: start=0, step=1, limit=4
    $region2: #{mask_transformer_forward.4} parent=1 // loop_pre_header
      _
    $region3: #{mask_transformer_forward.4} parent=1 // loop_header
      %s37 = sphi 0, %s41
      %p38 = scmp.ge.s32.totalorder %s37, 4
      %s45 = sphi 0, %s45
      %s47 = sphi 0, %s45
      %s48 = sphi 0, %s47
      %s62 = sphi 0, %s48
      %s68 = sphi 0, %s70
      %s71 = sphi 0, %s68
      %s72 = sphi 0, %s71
      %s88 = sphi 0, %s72
      %s94 = sphi 0, %s96
      %s97 = sphi 0, %s94
      %s98 = sphi 0, %s97
      %s114 = sphi 0, %s98
      %s120 = sphi 0, %s122
      %s123 = sphi 0, %s120
      %s124 = sphi 0, %s123
      %s140 = sphi 0, %s124
      %s146 = sphi 0, %s148
      %s149 = sphi 0, %s146
      %s150 = sphi 0, %s149
      %s166 = sphi 0, %s150
      %s172 = sphi 0, %s174
      %s175 = sphi 0, %s172
      %s176 = sphi 0, %s175
      %s192 = sphi 0, %s176
      %s198 = sphi 0, %s200
      %s201 = sphi 0, %s198
      %s202 = sphi 0, %s201
      %s218 = sphi 0, %s202
      %s224 = sphi 0, %s226
      %s227 = sphi 0, %s224
      %s228 = sphi 0, %s227
      %s244 = sphi 0, %s228
      %s250 = sphi 0, %s252
      %s253 = sphi 0, %s250
      %s254 = sphi 0, %s253
      %s270 = sphi 0, %s254
      %s276 = sphi 0, %s278
      %s279 = sphi 0, %s276
      %s280 = sphi 0, %s279
      %s296 = sphi 0, %s280
      %s302 = sphi 0, %s304
      %s305 = sphi 0, %s302
      %s306 = sphi 0, %s305
      %s322 = sphi 0, %s306
      %s328 = sphi 0, %s330
      %s331 = sphi 0, %s328
      %s332 = sphi 0, %s331
      %s348 = sphi 0, %s332
      %s354 = sphi 0, %s356
      %s357 = sphi 0, %s354
      %s358 = sphi 0, %s357
      %s374 = sphi 0, %s358
      %s378 = sphi 0, %s378
      %s380 = sphi 0, %s378
      %s381 = sphi 0, %s380
      %s395 = sphi 0, %s381
    $region4: #{mask_transformer_forward.4} parent=1 // loop_header_branch
      %40 = sbr.rel (%p38) target = $region8
    $region5: #{mask_transformer_forward.4} parent=1 // loop_body
      %s42 = ssub.s32 %s37, 1
      %s43 = ssub.s32 %s37, 2
      %s44 = sadd.s32 %s37, 1
      %s46 = sadd.s32 %s45, 1
      %p49 = scmp.eq.s32.totalorder %s37, 1
      %p50 = scmp.ne.s32.totalorder %s45, %s47
      %p51 = scmp.eq.s32.totalorder %s37, 0
      %p52 = por %p50, %p51
      %p53 = scmp.ne.s32.totalorder %s45, %s47
      %p54 = scmp.eq.s32.totalorder %s42, 1
      %p55 = por %p53, %p54
      %p56 = scmp.ne.s32.totalorder %s47, %s48
      %p57 = scmp.eq.s32.totalorder %s42, 0
      %p58 = por %p56, %p57
      %p59 = scmp.ne.s32.totalorder %s47, %s48
      %p60 = scmp.eq.s32.totalorder %s43, 1
      %p61 = por %p59, %p60
      %p63 = scmp.ne.s32.totalorder %s48, %s62
      %p64 = scmp.eq.s32.totalorder %s43, 0
      %p65 = por %p63, %p64
      %s66 = ssub.s32 %s37, %s44
      %p67 = scmp.eq.s32.totalorder %s66, 0
      %s69 = sadd.s32 %s68, 1
      %s70 = scalar_select %p67, %s68, %s69
      %p73 = pneg %p67
      %p74 = scmp.eq.s32.totalorder %s37, 1
      %p75 = por %p73, %p74
      %p76 = scmp.ne.s32.totalorder %s68, %s71
      %p77 = scmp.eq.s32.totalorder %s37, 0
      %p78 = por %p76, %p77
      %p79 = scmp.ne.s32.totalorder %s68, %s71
      %p80 = scmp.eq.s32.totalorder %s42, 1
      %p81 = por %p79, %p80
      %p82 = scmp.ne.s32.totalorder %s71, %s72
      %p83 = scmp.eq.s32.totalorder %s42, 0
      %p84 = por %p82, %p83
      %p85 = scmp.ne.s32.totalorder %s71, %s72
      %p86 = scmp.eq.s32.totalorder %s43, 1
      %p87 = por %p85, %p86
      %p89 = scmp.ne.s32.totalorder %s72, %s88
      %p90 = scmp.eq.s32.totalorder %s43, 0
      %p91 = por %p89, %p90
      %s92 = ssub.s32 %s37, %s44
      %p93 = scmp.eq.s32.totalorder %s92, 0
      %s95 = sadd.s32 %s94, 1
      %s96 = scalar_select %p93, %s94, %s95
      %p99 = pneg %p93
      %p100 = scmp.eq.s32.totalorder %s37, 1
      %p101 = por %p99, %p100
      %p102 = scmp.ne.s32.totalorder %s94, %s97
      %p103 = scmp.eq.s32.totalorder %s37, 0
      %p104 = por %p102, %p103
      %p105 = scmp.ne.s32.totalorder %s94, %s97
      %p106 = scmp.eq.s32.totalorder %s42, 1
      %p107 = por %p105, %p106
      %p108 = scmp.ne.s32.totalorder %s97, %s98
      %p109 = scmp.eq.s32.totalorder %s42, 0
      %p110 = por %p108, %p109
      %p111 = scmp.ne.s32.totalorder %s97, %s98
      %p112 = scmp.eq.s32.totalorder %s43, 1
      %p113 = por %p111, %p112
      %p115 = scmp.ne.s32.totalorder %s98, %s114
      %p116 = scmp.eq.s32.totalorder %s43, 0
      %p117 = por %p115, %p116
      %s118 = ssub.s32 %s37, %s44
      %p119 = scmp.eq.s32.totalorder %s118, 0
      %s121 = sadd.s32 %s120, 1
      %s122 = scalar_select %p119, %s120, %s121
      %p125 = pneg %p119
      %p126 = scmp.eq.s32.totalorder %s37, 1
      %p127 = por %p125, %p126
      %p128 = scmp.ne.s32.totalorder %s120, %s123
      %p129 = scmp.eq.s32.totalorder %s37, 0
      %p130 = por %p128, %p129
      %p131 = scmp.ne.s32.totalorder %s120, %s123
      %p132 = scmp.eq.s32.totalorder %s42, 1
      %p133 = por %p131, %p132
      %p134 = scmp.ne.s32.totalorder %s123, %s124
      %p135 = scmp.eq.s32.totalorder %s42, 0
      %p136 = por %p134, %p135
      %p137 = scmp.ne.s32.totalorder %s123, %s124
      %p138 = scmp.eq.s32.totalorder %s43, 1
      %p139 = por %p137, %p138
      %p141 = scmp.ne.s32.totalorder %s124, %s140
      %p142 = scmp.eq.s32.totalorder %s43, 0
      %p143 = por %p141, %p142
      %s144 = ssub.s32 %s37, %s44
      %p145 = scmp.eq.s32.totalorder %s144, 0
      %s147 = sadd.s32 %s146, 1
      %s148 = scalar_select %p145, %s146, %s147
      %p151 = pneg %p145
      %p152 = scmp.eq.s32.totalorder %s37, 1
      %p153 = por %p151, %p152
      %p154 = scmp.ne.s32.totalorder %s146, %s149
      %p155 = scmp.eq.s32.totalorder %s37, 0
      %p156 = por %p154, %p155
      %p157 = scmp.ne.s32.totalorder %s146, %s149
      %p158 = scmp.eq.s32.totalorder %s42, 1
      %p159 = por %p157, %p158
      %p160 = scmp.ne.s32.totalorder %s149, %s150
      %p161 = scmp.eq.s32.totalorder %s42, 0
      %p162 = por %p160, %p161
      %p163 = scmp.ne.s32.totalorder %s149, %s150
      %p164 = scmp.eq.s32.totalorder %s43, 1
      %p165 = por %p163, %p164
      %p167 = scmp.ne.s32.totalorder %s150, %s166
      %p168 = scmp.eq.s32.totalorder %s43, 0
      %p169 = por %p167, %p168
      %s170 = ssub.s32 %s37, %s44
      %p171 = scmp.eq.s32.totalorder %s170, 0
      %s173 = sadd.s32 %s172, 1
      %s174 = scalar_select %p171, %s172, %s173
      %p177 = pneg %p171
      %p178 = scmp.eq.s32.totalorder %s37, 1
      %p179 = por %p177, %p178
      %p180 = scmp.ne.s32.totalorder %s172, %s175
      %p181 = scmp.eq.s32.totalorder %s37, 0
      %p182 = por %p180, %p181
      %p183 = scmp.ne.s32.totalorder %s172, %s175
      %p184 = scmp.eq.s32.totalorder %s42, 1
      %p185 = por %p183, %p184
      %p186 = scmp.ne.s32.totalorder %s175, %s176
      %p187 = scmp.eq.s32.totalorder %s42, 0
      %p188 = por %p186, %p187
      %p189 = scmp.ne.s32.totalorder %s175, %s176
      %p190 = scmp.eq.s32.totalorder %s43, 1
      %p191 = por %p189, %p190
      %p193 = scmp.ne.s32.totalorder %s176, %s192
      %p194 = scmp.eq.s32.totalorder %s43, 0
      %p195 = por %p193, %p194
      %s196 = ssub.s32 %s37, %s44
      %p197 = scmp.eq.s32.totalorder %s196, 0
      %s199 = sadd.s32 %s198, 1
      %s200 = scalar_select %p197, %s198, %s199
      %p203 = pneg %p197
      %p204 = scmp.eq.s32.totalorder %s37, 1
      %p205 = por %p203, %p204
      %p206 = scmp.ne.s32.totalorder %s198, %s201
      %p207 = scmp.eq.s32.totalorder %s37, 0
      %p208 = por %p206, %p207
      %p209 = scmp.ne.s32.totalorder %s198, %s201
      %p210 = scmp.eq.s32.totalorder %s42, 1
      %p211 = por %p209, %p210
      %p212 = scmp.ne.s32.totalorder %s201, %s202
      %p213 = scmp.eq.s32.totalorder %s42, 0
      %p214 = por %p212, %p213
      %p215 = scmp.ne.s32.totalorder %s201, %s202
      %p216 = scmp.eq.s32.totalorder %s43, 1
      %p217 = por %p215, %p216
      %p219 = scmp.ne.s32.totalorder %s202, %s218
      %p220 = scmp.eq.s32.totalorder %s43, 0
      %p221 = por %p219, %p220
      %s222 = ssub.s32 %s37, %s44
      %p223 = scmp.eq.s32.totalorder %s222, 0
      %s225 = sadd.s32 %s224, 1
      %s226 = scalar_select %p223, %s224, %s225
      %p229 = pneg %p223
      %p230 = scmp.eq.s32.totalorder %s37, 1
      %p231 = por %p229, %p230
      %p232 = scmp.ne.s32.totalorder %s224, %s227
      %p233 = scmp.eq.s32.totalorder %s37, 0
      %p234 = por %p232, %p233
      %p235 = scmp.ne.s32.totalorder %s224, %s227
      %p236 = scmp.eq.s32.totalorder %s42, 1
      %p237 = por %p235, %p236
      %p238 = scmp.ne.s32.totalorder %s227, %s228
      %p239 = scmp.eq.s32.totalorder %s42, 0
      %p240 = por %p238, %p239
      %p241 = scmp.ne.s32.totalorder %s227, %s228
      %p242 = scmp.eq.s32.totalorder %s43, 1
      %p243 = por %p241, %p242
      %p245 = scmp.ne.s32.totalorder %s228, %s244
      %p246 = scmp.eq.s32.totalorder %s43, 0
      %p247 = por %p245, %p246
      %s248 = ssub.s32 %s37, %s44
      %p249 = scmp.eq.s32.totalorder %s248, 0
      %s251 = sadd.s32 %s250, 1
      %s252 = scalar_select %p249, %s250, %s251
      %p255 = pneg %p249
      %p256 = scmp.eq.s32.totalorder %s37, 1
      %p257 = por %p255, %p256
      %p258 = scmp.ne.s32.totalorder %s250, %s253
      %p259 = scmp.eq.s32.totalorder %s37, 0
      %p260 = por %p258, %p259
      %p261 = scmp.ne.s32.totalorder %s250, %s253
      %p262 = scmp.eq.s32.totalorder %s42, 1
      %p263 = por %p261, %p262
      %p264 = scmp.ne.s32.totalorder %s253, %s254
      %p265 = scmp.eq.s32.totalorder %s42, 0
      %p266 = por %p264, %p265
      %p267 = scmp.ne.s32.totalorder %s253, %s254
      %p268 = scmp.eq.s32.totalorder %s43, 1
      %p269 = por %p267, %p268
      %p271 = scmp.ne.s32.totalorder %s254, %s270
      %p272 = scmp.eq.s32.totalorder %s43, 0
      %p273 = por %p271, %p272
      %s274 = ssub.s32 %s37, %s44
      %p275 = scmp.eq.s32.totalorder %s274, 0
      %s277 = sadd.s32 %s276, 1
      %s278 = scalar_select %p275, %s276, %s277
      %p281 = pneg %p275
      %p282 = scmp.eq.s32.totalorder %s37, 1
      %p283 = por %p281, %p282
      %p284 = scmp.ne.s32.totalorder %s276, %s279
      %p285 = scmp.eq.s32.totalorder %s37, 0
      %p286 = por %p284, %p285
      %p287 = scmp.ne.s32.totalorder %s276, %s279
      %p288 = scmp.eq.s32.totalorder %s42, 1
      %p289 = por %p287, %p288
      %p290 = scmp.ne.s32.totalorder %s279, %s280
      %p291 = scmp.eq.s32.totalorder %s42, 0
      %p292 = por %p290, %p291
      %p293 = scmp.ne.s32.totalorder %s279, %s280
      %p294 = scmp.eq.s32.totalorder %s43, 1
      %p295 = por %p293, %p294
      %p297 = scmp.ne.s32.totalorder %s280, %s296
      %p298 = scmp.eq.s32.totalorder %s43, 0
      %p299 = por %p297, %p298
      %s300 = ssub.s32 %s37, %s44
      %p301 = scmp.eq.s32.totalorder %s300, 0
      %s303 = sadd.s32 %s302, 1
      %s304 = scalar_select %p301, %s302, %s303
      %p307 = pneg %p301
      %p308 = scmp.eq.s32.totalorder %s37, 1
      %p309 = por %p307, %p308
      %p310 = scmp.ne.s32.totalorder %s302, %s305
      %p311 = scmp.eq.s32.totalorder %s37, 0
      %p312 = por %p310, %p311
      %p313 = scmp.ne.s32.totalorder %s302, %s305
      %p314 = scmp.eq.s32.totalorder %s42, 1
      %p315 = por %p313, %p314
      %p316 = scmp.ne.s32.totalorder %s305, %s306
      %p317 = scmp.eq.s32.totalorder %s42, 0
      %p318 = por %p316, %p317
      %p319 = scmp.ne.s32.totalorder %s305, %s306
      %p320 = scmp.eq.s32.totalorder %s43, 1
      %p321 = por %p319, %p320
      %p323 = scmp.ne.s32.totalorder %s306, %s322
      %p324 = scmp.eq.s32.totalorder %s43, 0
      %p325 = por %p323, %p324
      %s326 = ssub.s32 %s37, %s44
      %p327 = scmp.eq.s32.totalorder %s326, 0
      %s329 = sadd.s32 %s328, 1
      %s330 = scalar_select %p327, %s328, %s329
      %p333 = pneg %p327
      %p334 = scmp.eq.s32.totalorder %s37, 1
      %p335 = por %p333, %p334
      %p336 = scmp.ne.s32.totalorder %s328, %s331
      %p337 = scmp.eq.s32.totalorder %s37, 0
      %p338 = por %p336, %p337
      %p339 = scmp.ne.s32.totalorder %s328, %s331
      %p340 = scmp.eq.s32.totalorder %s42, 1
      %p341 = por %p339, %p340
      %p342 = scmp.ne.s32.totalorder %s331, %s332
      %p343 = scmp.eq.s32.totalorder %s42, 0
      %p344 = por %p342, %p343
      %p345 = scmp.ne.s32.totalorder %s331, %s332
      %p346 = scmp.eq.s32.totalorder %s43, 1
      %p347 = por %p345, %p346
      %p349 = scmp.ne.s32.totalorder %s332, %s348
      %p350 = scmp.eq.s32.totalorder %s43, 0
      %p351 = por %p349, %p350
      %s352 = ssub.s32 %s37, %s44
      %p353 = scmp.eq.s32.totalorder %s352, 0
      %s355 = sadd.s32 %s354, 1
      %s356 = scalar_select %p353, %s354, %s355
      %p359 = pneg %p353
      %p360 = scmp.eq.s32.totalorder %s37, 1
      %p361 = por %p359, %p360
      %p362 = scmp.ne.s32.totalorder %s354, %s357
      %p363 = scmp.eq.s32.totalorder %s37, 0
      %p364 = por %p362, %p363
      %p365 = scmp.ne.s32.totalorder %s354, %s357
      %p366 = scmp.eq.s32.totalorder %s42, 1
      %p367 = por %p365, %p366
      %p368 = scmp.ne.s32.totalorder %s357, %s358
      %p369 = scmp.eq.s32.totalorder %s42, 0
      %p370 = por %p368, %p369
      %p371 = scmp.ne.s32.totalorder %s357, %s358
      %p372 = scmp.eq.s32.totalorder %s43, 1
      %p373 = por %p371, %p372
      %p375 = scmp.ne.s32.totalorder %s358, %s374
      %p376 = scmp.eq.s32.totalorder %s43, 0
      %p377 = por %p375, %p376
      %s379 = sadd.s32 %s378, 1
      %p382 = scmp.eq.s32.totalorder %s37, 1
      %p383 = scmp.ne.s32.totalorder %s378, %s380
      %p384 = scmp.eq.s32.totalorder %s37, 0
      %p385 = por %p383, %p384
      %p386 = scmp.ne.s32.totalorder %s378, %s380
      %p387 = scmp.eq.s32.totalorder %s42, 1
      %p388 = por %p386, %p387
      %p389 = scmp.ne.s32.totalorder %s380, %s381
      %p390 = scmp.eq.s32.totalorder %s42, 0
      %p391 = por %p389, %p390
      %p392 = scmp.ne.s32.totalorder %s380, %s381
      %p393 = scmp.eq.s32.totalorder %s43, 1
      %p394 = por %p392, %p393
      %p396 = scmp.ne.s32.totalorder %s381, %s395
      %p397 = scmp.eq.s32.totalorder %s43, 0
      %p398 = por %p396, %p397
      %p399 = scmp.le.s32.totalorder 1, %s37
      %p400 = scmp.lt.s32.totalorder %s37, 3
      %p401 = pnand %p399, %p400
      %p402 = pneg %p401
      // Predicated region
      $region9: #{mask_transformer_forward.4} parent=5 // pred_check
        _
      $region10: #{mask_transformer_forward.4} parent=5 // pred_check_branch
        %404 = sbr.rel (%p401) target = $region12
      $region11: #{mask_transformer_forward.4} parent=5 // pred_region
        %s405 = ssub.s32 %s37, 1
        // Predicated region
        $region13: #{mask_transformer_forward.4} parent=11 // pred_check
          %p406 = pneg %p58
        $region14: #{mask_transformer_forward.4} parent=11 // pred_check_branch
          %408 = sbr.rel (%p406) target = $region16
        $region15: #{mask_transformer_forward.4} parent=11 // pred_region
          _
        $region16: #{mask_transformer_forward.4} parent=11 // pred_fallthru
          _
      $region12: #{mask_transformer_forward.4} parent=5 // pred_fallthru
        _
      %p409 = scmp.lt.s32.totalorder %s37, 2
      // Predicated region
      $region17: #{mask_transformer_forward.4} parent=5 // pred_check
        %p410 = pneg %p409
      $region18: #{mask_transformer_forward.4} parent=5 // pred_check_branch
        %412 = sbr.rel (%p410) target = $region20
      $region19: #{mask_transformer_forward.4} parent=5 // pred_region
        // Predicated region
        $region21: #{mask_transformer_forward.4} parent=19 // pred_check
          %p413 = pneg %p78
        $region22: #{mask_transformer_forward.4} parent=19 // pred_check_branch
          %415 = sbr.rel (%p413) target = $region24
        $region23: #{mask_transformer_forward.4} parent=19 // pred_region
          %s416 = sand.u32 %s68, 1
          %s417 = scalar_lea.sflag [#allocation4], %s416
          %s418 = sand.u32 %s68, 1
          %s419 = smul.addr %s418, 3
          %s420 = scalar_lea.vmem [#allocation3], %s419
          %s422 = ssub.s32 48, 48
          %423 = vsyncadd %s417, %s422
          %s424 = smul.addr %s37, 3
          %s425 = smul.addr %s424, 16
          %s426 = scalar_lea.hbm %s1, %s425
          %s428 = sshll.u32 %s420, 4
          %s429 = int_to_ptr.vmem [resolvable:$true] %s428
          %431 = dma.hbm_to_vmem [thread:$0]  %s426, 48, %s429, %s417
        $region24: #{mask_transformer_forward.4} parent=19 // pred_fallthru
          _
        // Predicated region
        $region25: #{mask_transformer_forward.4} parent=19 // pred_check
          %p432 = pneg %p104
        $region26: #{mask_transformer_forward.4} parent=19 // pred_check_branch
          %434 = sbr.rel (%p432) target = $region28
        $region27: #{mask_transformer_forward.4} parent=19 // pred_region
          %s435 = sand.u32 %s37, 1
          %s436 = scalar_lea.sflag [#allocation6], %s435
          %s437 = sand.u32 %s94, 1
          %s438 = smul.addr %s437, 3
          %s439 = scalar_lea.vmem [#allocation5], %s438
          %s441 = ssub.s32 48, 48
          %442 = vsyncadd %s436, %s441
          %s443 = smul.addr %s37, 3
          %s444 = smul.addr %s443, 16
          %s445 = scalar_lea.hbm %s2, %s444
          %s447 = sshll.u32 %s439, 4
          %s448 = int_to_ptr.vmem [resolvable:$true] %s447
          %450 = dma.hbm_to_vmem [thread:$0]  %s445, 48, %s448, %s436
        $region28: #{mask_transformer_forward.4} parent=19 // pred_fallthru
          _
        // Predicated region
        $region29: #{mask_transformer_forward.4} parent=19 // pred_check
          %p451 = pneg %p130
        $region30: #{mask_transformer_forward.4} parent=19 // pred_check_branch
          %453 = sbr.rel (%p451) target = $region32
        $region31: #{mask_transformer_forward.4} parent=19 // pred_region
          %s454 = sand.u32 %s37, 1
          %s455 = scalar_lea.sflag [#allocation6], %s454
          %s456 = sand.u32 %s120, 1
          %s457 = smul.addr %s456, 1728
          %s458 = scalar_lea.vmem [#allocation7], %s457
          %s460 = ssub.s32 27648, 27648
          %461 = vsyncadd %s455, %s460
          %s462 = smul.addr %s37, 432
          %s463 = smul.addr %s462, 64
          %s464 = scalar_lea.hbm %s3, %s463
          %s465 = sshll.u32 %s458, 4
          %s466 = int_to_ptr.vmem [resolvable:$true] %s465
          %471 = dma.hbm_to_vmem [thread:$0]  %s464, 27648, %s466, %s455, 576, 576, 36
        $region32: #{mask_transformer_forward.4} parent=19 // pred_fallthru
          _
        // Predicated region
        $region33: #{mask_transformer_forward.4} parent=19 // pred_check
          %p472 = pneg %p156
        $region34: #{mask_transformer_forward.4} parent=19 // pred_check_branch
          %474 = sbr.rel (%p472) target = $region36
        $region35: #{mask_transformer_forward.4} parent=19 // pred_region
          %s475 = sand.u32 %s37, 1
          %s476 = scalar_lea.sflag [#allocation9], %s475
          %s477 = sand.u32 %s146, 1
          %s478 = smul.addr %s477, 9
          %s479 = scalar_lea.vmem [#allocation8], %s478
          %s481 = ssub.s32 144, 144
          %482 = vsyncadd %s476, %s481
          %s483 = smul.addr %s37, 9
          %s484 = smul.addr %s483, 16
          %s485 = scalar_lea.hbm %s4, %s484
          %s487 = sshll.u32 %s479, 4
          %s488 = int_to_ptr.vmem [resolvable:$true] %s487
          %490 = dma.hbm_to_vmem [thread:$0]  %s485, 144, %s488, %s476
        $region36: #{mask_transformer_forward.4} parent=19 // pred_fallthru
          _
        // Predicated region
        $region37: #{mask_transformer_forward.4} parent=19 // pred_check
          %p491 = pneg %p182
        $region38: #{mask_transformer_forward.4} parent=19 // pred_check_branch
          %493 = sbr.rel (%p491) target = $region40
        $region39: #{mask_transformer_forward.4} parent=19 // pred_region
          %p494 = scmp.lt.s32.totalorder %s37, 1
          %s495 = scalar_select %p494, %s37, 1
          %s496 = smul.addr %s495, 144
          %s497 = smul.addr %s496, 4
          %s498 = scalar_lea.vmem %s5, %s497
        $region40: #{mask_transformer_forward.4} parent=19 // pred_fallthru
          _
        // Predicated region
        $region41: #{mask_transformer_forward.4} parent=19 // pred_check
          %p499 = pneg %p208
        $region42: #{mask_transformer_forward.4} parent=19 // pred_check_branch
          %501 = sbr.rel (%p499) target = $region44
        $region43: #{mask_transformer_forward.4} parent=19 // pred_region
          %s502 = sand.u32 %s37, 1
          %s503 = scalar_lea.sflag [#allocation9], %s502
          %s504 = sand.u32 %s198, 1
          %s505 = smul.addr %s504, 3
          %s506 = scalar_lea.vmem [#allocation10], %s505
          %s508 = ssub.s32 48, 48
          %509 = vsyncadd %s503, %s508
          %s510 = smul.addr %s37, 3
          %s511 = smul.addr %s510, 16
          %s512 = scalar_lea.hbm %s6, %s511
          %s514 = sshll.u32 %s506, 4
          %s515 = int_to_ptr.vmem [resolvable:$true] %s514
          %517 = dma.hbm_to_vmem [thread:$0]  %s512, 48, %s515, %s503
        $region44: #{mask_transformer_forward.4} parent=19 // pred_fallthru
          _
        // Predicated region
        $region45: #{mask_transformer_forward.4} parent=19 // pred_check
          %p518 = pneg %p234
        $region46: #{mask_transformer_forward.4} parent=19 // pred_check_branch
          %520 = sbr.rel (%p518) target = $region48
        $region47: #{mask_transformer_forward.4} parent=19 // pred_region
          %s521 = sand.u32 %s37, 1
          %s522 = scalar_lea.sflag [#allocation12], %s521
          %s523 = sand.u32 %s224, 1
          %s524 = smul.addr %s523, 3
          %s525 = scalar_lea.vmem [#allocation11], %s524
          %s527 = ssub.s32 48, 48
          %528 = vsyncadd %s522, %s527
          %s529 = smul.addr %s37, 3
          %s530 = smul.addr %s529, 16
          %s531 = scalar_lea.hbm %s7, %s530
          %s533 = sshll.u32 %s525, 4
          %s534 = int_to_ptr.vmem [resolvable:$true] %s533
          %536 = dma.hbm_to_vmem [thread:$0]  %s531, 48, %s534, %s522
        $region48: #{mask_transformer_forward.4} parent=19 // pred_fallthru
          _
        // Predicated region
        $region49: #{mask_transformer_forward.4} parent=19 // pred_check
          %p537 = pneg %p260
        $region50: #{mask_transformer_forward.4} parent=19 // pred_check_branch
          %539 = sbr.rel (%p537) target = $region52
        $region51: #{mask_transformer_forward.4} parent=19 // pred_region
          %s540 = sand.u32 %s37, 1
          %s541 = scalar_lea.sflag [#allocation12], %s540
          %s542 = sand.u32 %s250, 1
          %s543 = smul.addr %s542, 3
          %s544 = scalar_lea.vmem [#allocation13], %s543
          %s546 = ssub.s32 48, 48
          %547 = vsyncadd %s541, %s546
          %s548 = smul.addr %s37, 3
          %s549 = smul.addr %s548, 16
          %s550 = scalar_lea.hbm %s8, %s549
          %s552 = sshll.u32 %s544, 4
          %s553 = int_to_ptr.vmem [resolvable:$true] %s552
          %555 = dma.hbm_to_vmem [thread:$0]  %s550, 48, %s553, %s541
        $region52: #{mask_transformer_forward.4} parent=19 // pred_fallthru
          _
        // Predicated region
        $region53: #{mask_transformer_forward.4} parent=19 // pred_check
          %p556 = pneg %p286
        $region54: #{mask_transformer_forward.4} parent=19 // pred_check_branch
          %558 = sbr.rel (%p556) target = $region56
        $region55: #{mask_transformer_forward.4} parent=19 // pred_region
          %s559 = sand.u32 %s37, 1
          %s560 = scalar_lea.sflag [#allocation15], %s559
          %s561 = sand.u32 %s276, 1
          %s562 = smul.addr %s561, 1152
          %s563 = scalar_lea.vmem [#allocation14], %s562
          %s565 = ssub.s32 18432, 18432
          %566 = vsyncadd %s560, %s565
          %s567 = smul.addr %s37, 288
          %s568 = smul.addr %s567, 64
          %s569 = scalar_lea.hbm %s9, %s568
          %s570 = sshll.u32 %s563, 4
          %s571 = int_to_ptr.vmem [resolvable:$true] %s570
          %576 = dma.hbm_to_vmem [thread:$0]  %s569, 18432, %s571, %s560, 384, 384, 24
        $region56: #{mask_transformer_forward.4} parent=19 // pred_fallthru
          _
        // Predicated region
        $region57: #{mask_transformer_forward.4} parent=19 // pred_check
          %p577 = pneg %p312
        $region58: #{mask_transformer_forward.4} parent=19 // pred_check_branch
          %579 = sbr.rel (%p577) target = $region60
        $region59: #{mask_transformer_forward.4} parent=19 // pred_region
          %s580 = sand.u32 %s37, 1
          %s581 = scalar_lea.sflag [#allocation15], %s580
          %s582 = sand.u32 %s302, 1
          %s583 = smul.addr %s582, 6
          %s584 = scalar_lea.vmem [#allocation16], %s583
          %s586 = ssub.s32 96, 96
          %587 = vsyncadd %s581, %s586
          %s588 = smul.addr %s37, 6
          %s589 = smul.addr %s588, 16
          %s590 = scalar_lea.hbm %s10, %s589
          %s592 = sshll.u32 %s584, 4
          %s593 = int_to_ptr.vmem [resolvable:$true] %s592
          %595 = dma.hbm_to_vmem [thread:$0]  %s590, 96, %s593, %s581
        $region60: #{mask_transformer_forward.4} parent=19 // pred_fallthru
          _
        // Predicated region
        $region61: #{mask_transformer_forward.4} parent=19 // pred_check
          %p596 = pneg %p338
        $region62: #{mask_transformer_forward.4} parent=19 // pred_check_branch
          %598 = sbr.rel (%p596) target = $region64
        $region63: #{mask_transformer_forward.4} parent=19 // pred_region
          %s599 = sand.u32 %s37, 1
          %s600 = scalar_lea.sflag [#allocation18], %s599
          %s601 = sand.u32 %s328, 1
          %s602 = smul.addr %s601, 1152
          %s603 = scalar_lea.vmem [#allocation17], %s602
          %s605 = ssub.s32 18432, 18432
          %606 = vsyncadd %s600, %s605
          %s607 = smul.addr %s37, 288
          %s608 = smul.addr %s607, 64
          %s609 = scalar_lea.hbm %s11, %s608
          %s610 = sshll.u32 %s603, 4
          %s611 = int_to_ptr.vmem [resolvable:$true] %s610
          %616 = dma.hbm_to_vmem [thread:$0]  %s609, 18432, %s611, %s600, 192, 192, 12
        $region64: #{mask_transformer_forward.4} parent=19 // pred_fallthru
          _
        // Predicated region
        $region65: #{mask_transformer_forward.4} parent=19 // pred_check
          %p617 = pneg %p364
        $region66: #{mask_transformer_forward.4} parent=19 // pred_check_branch
          %619 = sbr.rel (%p617) target = $region68
        $region67: #{mask_transformer_forward.4} parent=19 // pred_region
          %s620 = sand.u32 %s37, 1
          %s621 = scalar_lea.sflag [#allocation18], %s620
          %s622 = sand.u32 %s354, 1
          %s623 = smul.addr %s622, 3
          %s624 = scalar_lea.vmem [#allocation19], %s623
          %s626 = ssub.s32 48, 48
          %627 = vsyncadd %s621, %s626
          %s628 = smul.addr %s37, 3
          %s629 = smul.addr %s628, 16
          %s630 = scalar_lea.hbm %s12, %s629
          %s632 = sshll.u32 %s624, 4
          %s633 = int_to_ptr.vmem [resolvable:$true] %s632
          %635 = dma.hbm_to_vmem [thread:$0]  %s630, 48, %s633, %s621
        $region68: #{mask_transformer_forward.4} parent=19 // pred_fallthru
          _
      $region20: #{mask_transformer_forward.4} parent=5 // pred_fallthru
        _
      %p636 = scmp.le.s32.totalorder 1, %s37
      %p637 = scmp.lt.s32.totalorder %s37, 3
      %p638 = pnand %p636, %p637
      %p639 = pneg %p638
      // Predicated region
      $region69: #{mask_transformer_forward.4} parent=5 // pred_check
        _
      $region70: #{mask_transformer_forward.4} parent=5 // pred_check_branch
        %641 = sbr.rel (%p638) target = $region72
      $region71: #{mask_transformer_forward.4} parent=5 // pred_region
        %s642 = ssub.s32 %s37, 1
        %s643 = sand.u32 %s71, 1
        %s644 = scalar_lea.sflag [#allocation4], %s643
        %s645 = sand.u32 %s71, 1
        %s646 = smul.addr %s645, 3
        %s647 = scalar_lea.vmem [#allocation3], %s646
        // Predicated region
        $region73: #{mask_transformer_forward.4} parent=71 // pred_check
          %p648 = pneg %p84
        $region74: #{mask_transformer_forward.4} parent=71 // pred_check_branch
          %650 = sbr.rel (%p648) target = $region76
        $region75: #{mask_transformer_forward.4} parent=71 // pred_region
          %651 = dma.done %s644, 48
        $region76: #{mask_transformer_forward.4} parent=71 // pred_fallthru
          _
        %s652 = sand.u32 %s42, 1
        %s653 = scalar_lea.sflag [#allocation6], %s652
        %s654 = sand.u32 %s97, 1
        %s655 = smul.addr %s654, 3
        %s656 = scalar_lea.vmem [#allocation5], %s655
        // Predicated region
        $region77: #{mask_transformer_forward.4} parent=71 // pred_check
          %p657 = pneg %p110
        $region78: #{mask_transformer_forward.4} parent=71 // pred_check_branch
          %659 = sbr.rel (%p657) target = $region80
        $region79: #{mask_transformer_forward.4} parent=71 // pred_region
          %660 = dma.done %s653, 48
        $region80: #{mask_transformer_forward.4} parent=71 // pred_fallthru
          _
        %s661 = sand.u32 %s42, 1
        %s662 = scalar_lea.sflag [#allocation6], %s661
        %s663 = sand.u32 %s123, 1
        %s664 = smul.addr %s663, 1728
        %s665 = scalar_lea.vmem [#allocation7], %s664
        // Predicated region
        $region81: #{mask_transformer_forward.4} parent=71 // pred_check
          %p666 = pneg %p136
        $region82: #{mask_transformer_forward.4} parent=71 // pred_check_branch
          %668 = sbr.rel (%p666) target = $region84
        $region83: #{mask_transformer_forward.4} parent=71 // pred_region
          %669 = dma.done %s662, 27648
        $region84: #{mask_transformer_forward.4} parent=71 // pred_fallthru
          _
        %s670 = sand.u32 %s42, 1
        %s671 = scalar_lea.sflag [#allocation9], %s670
        %s672 = sand.u32 %s149, 1
        %s673 = smul.addr %s672, 9
        %s674 = scalar_lea.vmem [#allocation8], %s673
        // Predicated region
        $region85: #{mask_transformer_forward.4} parent=71 // pred_check
          %p675 = pneg %p162
        $region86: #{mask_transformer_forward.4} parent=71 // pred_check_branch
          %677 = sbr.rel (%p675) target = $region88
        $region87: #{mask_transformer_forward.4} parent=71 // pred_region
          %678 = dma.done %s671, 144
        $region88: #{mask_transformer_forward.4} parent=71 // pred_fallthru
          _
        %s679 = sand.u32 %s42, 1
        %s680 = scalar_lea.sflag [#allocation9], %s679
        %s681 = sand.u32 %s201, 1
        %s682 = smul.addr %s681, 3
        %s683 = scalar_lea.vmem [#allocation10], %s682
        // Predicated region
        $region89: #{mask_transformer_forward.4} parent=71 // pred_check
          %p684 = pneg %p214
        $region90: #{mask_transformer_forward.4} parent=71 // pred_check_branch
          %686 = sbr.rel (%p684) target = $region92
        $region91: #{mask_transformer_forward.4} parent=71 // pred_region
          %687 = dma.done %s680, 48
        $region92: #{mask_transformer_forward.4} parent=71 // pred_fallthru
          _
        %s688 = sand.u32 %s42, 1
        %s689 = scalar_lea.sflag [#allocation12], %s688
        %s690 = sand.u32 %s227, 1
        %s691 = smul.addr %s690, 3
        %s692 = scalar_lea.vmem [#allocation11], %s691
        // Predicated region
        $region93: #{mask_transformer_forward.4} parent=71 // pred_check
          %p693 = pneg %p240
        $region94: #{mask_transformer_forward.4} parent=71 // pred_check_branch
          %695 = sbr.rel (%p693) target = $region96
        $region95: #{mask_transformer_forward.4} parent=71 // pred_region
          %696 = dma.done %s689, 48
        $region96: #{mask_transformer_forward.4} parent=71 // pred_fallthru
          _
        %s697 = sand.u32 %s42, 1
        %s698 = scalar_lea.sflag [#allocation12], %s697
        %s699 = sand.u32 %s253, 1
        %s700 = smul.addr %s699, 3
        %s701 = scalar_lea.vmem [#allocation13], %s700
        // Predicated region
        $region97: #{mask_transformer_forward.4} parent=71 // pred_check
          %p702 = pneg %p266
        $region98: #{mask_transformer_forward.4} parent=71 // pred_check_branch
          %704 = sbr.rel (%p702) target = $region100
        $region99: #{mask_transformer_forward.4} parent=71 // pred_region
          %705 = dma.done %s698, 48
        $region100: #{mask_transformer_forward.4} parent=71 // pred_fallthru
          _
        %s706 = sand.u32 %s42, 1
        %s707 = scalar_lea.sflag [#allocation15], %s706
        %s708 = sand.u32 %s279, 1
        %s709 = smul.addr %s708, 1152
        %s710 = scalar_lea.vmem [#allocation14], %s709
        // Predicated region
        $region101: #{mask_transformer_forward.4} parent=71 // pred_check
          %p711 = pneg %p292
        $region102: #{mask_transformer_forward.4} parent=71 // pred_check_branch
          %713 = sbr.rel (%p711) target = $region104
        $region103: #{mask_transformer_forward.4} parent=71 // pred_region
          %714 = dma.done %s707, 18432
        $region104: #{mask_transformer_forward.4} parent=71 // pred_fallthru
          _
        %s715 = sand.u32 %s42, 1
        %s716 = scalar_lea.sflag [#allocation15], %s715
        %s717 = sand.u32 %s305, 1
        %s718 = smul.addr %s717, 6
        %s719 = scalar_lea.vmem [#allocation16], %s718
        // Predicated region
        $region105: #{mask_transformer_forward.4} parent=71 // pred_check
          %p720 = pneg %p318
        $region106: #{mask_transformer_forward.4} parent=71 // pred_check_branch
          %722 = sbr.rel (%p720) target = $region108
        $region107: #{mask_transformer_forward.4} parent=71 // pred_region
          %723 = dma.done %s716, 96
        $region108: #{mask_transformer_forward.4} parent=71 // pred_fallthru
          _
        %s724 = sand.u32 %s42, 1
        %s725 = scalar_lea.sflag [#allocation18], %s724
        %s726 = sand.u32 %s331, 1
        %s727 = smul.addr %s726, 1152
        %s728 = scalar_lea.vmem [#allocation17], %s727
        // Predicated region
        $region109: #{mask_transformer_forward.4} parent=71 // pred_check
          %p729 = pneg %p344
        $region110: #{mask_transformer_forward.4} parent=71 // pred_check_branch
          %731 = sbr.rel (%p729) target = $region112
        $region111: #{mask_transformer_forward.4} parent=71 // pred_region
          %732 = dma.done %s725, 18432
        $region112: #{mask_transformer_forward.4} parent=71 // pred_fallthru
          _
        %s733 = sand.u32 %s42, 1
        %s734 = scalar_lea.sflag [#allocation18], %s733
        %s735 = sand.u32 %s357, 1
        %s736 = smul.addr %s735, 3
        %s737 = scalar_lea.vmem [#allocation19], %s736
        // Predicated region
        $region113: #{mask_transformer_forward.4} parent=71 // pred_check
          %p738 = pneg %p370
        $region114: #{mask_transformer_forward.4} parent=71 // pred_check_branch
          %740 = sbr.rel (%p738) target = $region116
        $region115: #{mask_transformer_forward.4} parent=71 // pred_region
          %741 = dma.done %s734, 48
        $region116: #{mask_transformer_forward.4} parent=71 // pred_fallthru
          _
        %p742 = pneg %p58
        %p743 = pneg %p55
        %s744 = sand.u32 %s71, 1
        %s745 = scalar_lea.sflag [#allocation4], %s744
        %s746 = sand.u32 %s71, 1
        %s747 = smul.addr %s746, 3
        %s748 = scalar_lea.vmem [#allocation3], %s747
        %p749 = pneg %p84
        %p750 = pneg %p81
        %s751 = sand.u32 %s42, 1
        %s752 = scalar_lea.sflag [#allocation6], %s751
        %s753 = sand.u32 %s97, 1
        %s754 = smul.addr %s753, 3
        %s755 = scalar_lea.vmem [#allocation5], %s754
        %p756 = pneg %p110
        %p757 = pneg %p107
        %s758 = sand.u32 %s42, 1
        %s759 = scalar_lea.sflag [#allocation6], %s758
        %s760 = sand.u32 %s123, 1
        %s761 = smul.addr %s760, 1728
        %s762 = scalar_lea.vmem [#allocation7], %s761
        %p763 = pneg %p136
        %p764 = pneg %p133
        %s765 = sand.u32 %s42, 1
        %s766 = scalar_lea.sflag [#allocation9], %s765
        %s767 = sand.u32 %s149, 1
        %s768 = smul.addr %s767, 9
        %s769 = scalar_lea.vmem [#allocation8], %s768
        %p770 = pneg %p162
        %p771 = pneg %p159
        %p772 = scmp.lt.s32.totalorder %s42, 1
        %s773 = scalar_select %p772, %s42, 1
        %s774 = smul.addr %s773, 144
        %s775 = smul.addr %s774, 4
        %s776 = scalar_lea.vmem %s5, %s775
        %p777 = pneg %p188
        %p778 = pneg %p185
        %s779 = sand.u32 %s42, 1
        %s780 = scalar_lea.sflag [#allocation9], %s779
        %s781 = sand.u32 %s201, 1
        %s782 = smul.addr %s781, 3
        %s783 = scalar_lea.vmem [#allocation10], %s782
        %p784 = pneg %p214
        %p785 = pneg %p211
        %s786 = sand.u32 %s42, 1
        %s787 = scalar_lea.sflag [#allocation12], %s786
        %s788 = sand.u32 %s227, 1
        %s789 = smul.addr %s788, 3
        %s790 = scalar_lea.vmem [#allocation11], %s789
        %p791 = pneg %p240
        %p792 = pneg %p237
        %s793 = sand.u32 %s42, 1
        %s794 = scalar_lea.sflag [#allocation12], %s793
        %s795 = sand.u32 %s253, 1
        %s796 = smul.addr %s795, 3
        %s797 = scalar_lea.vmem [#allocation13], %s796
        %p798 = pneg %p266
        %p799 = pneg %p263
        %s800 = sand.u32 %s42, 1
        %s801 = scalar_lea.sflag [#allocation15], %s800
        %s802 = sand.u32 %s279, 1
        %s803 = smul.addr %s802, 1152
        %s804 = scalar_lea.vmem [#allocation14], %s803
        %p805 = pneg %p292
        %p806 = pneg %p289
        %s807 = sand.u32 %s42, 1
        %s808 = scalar_lea.sflag [#allocation15], %s807
        %s809 = sand.u32 %s305, 1
        %s810 = smul.addr %s809, 6
        %s811 = scalar_lea.vmem [#allocation16], %s810
        %p812 = pneg %p318
        %p813 = pneg %p315
        %s814 = sand.u32 %s42, 1
        %s815 = scalar_lea.sflag [#allocation18], %s814
        %s816 = sand.u32 %s331, 1
        %s817 = smul.addr %s816, 1152
        %s818 = scalar_lea.vmem [#allocation17], %s817
        %p819 = pneg %p344
        %p820 = pneg %p341
        %s821 = sand.u32 %s42, 1
        %s822 = scalar_lea.sflag [#allocation18], %s821
        %s823 = sand.u32 %s357, 1
        %s824 = smul.addr %s823, 3
        %s825 = scalar_lea.vmem [#allocation19], %s824
        %p826 = pneg %p370
        %p827 = pneg %p367
        %p828 = pneg %p391
        %p829 = pneg %p388
        %p830 = scmp.lt.s32.totalorder %s42, 1
        %s831 = scalar_select %p830, %s42, 1
        %s832 = smul.addr %s831, 144
        %s833 = smul.addr %s832, 4
        %s834 = scalar_lea.vmem %s5, %s833
        %p836 = scmp.eq.s32.totalorder %s42, 0
        // Predicated region
        $region117: #{mask_transformer_forward.4} parent=71 // pred_check
          %p837 = pneg %p836
        $region118: #{mask_transformer_forward.4} parent=71 // pred_check_branch
          %839 = sbr.rel (%p837) target = $region120
        $region119: #{mask_transformer_forward.4} parent=71 // pred_region
          %v840 = vld [vmem:[%s0] sm:$0xff]
          %v841 = vld [vmem:[%s0 + $0x8] sm:$0xf]
          %v842 = vld [vmem:[%s0 + $0xc] sm:$0xff]
          %v843 = vld [vmem:[%s0 + $0x14] sm:$0xf]
          %v844 = vld [vmem:[%s0 + $0x18] sm:$0xff]
          %v845 = vld [vmem:[%s0 + $0x20] sm:$0xf]
          %v846 = vld [vmem:[%s0 + $0x24] sm:$0xff]
          %v847 = vld [vmem:[%s0 + $0x2c] sm:$0xf]
          %v848 = vld [vmem:[%s0 + $0x30] sm:$0xff]
          %v849 = vld [vmem:[%s0 + $0x38] sm:$0xf]
          %v850 = vld [vmem:[%s0 + $0x3c] sm:$0xff]
          %v851 = vld [vmem:[%s0 + $0x44] sm:$0xf]
          %v852 = vld [vmem:[%s0 + $0x48] sm:$0xff]
          %v853 = vld [vmem:[%s0 + $0x50] sm:$0xf]
          %v854 = vld [vmem:[%s0 + $0x54] sm:$0xff]
          %v855 = vld [vmem:[%s0 + $0x5c] sm:$0xf]
          %v856 = vunpack.c.l.bf16 %v840
          %v857 = vunpack.c.h.bf16 %v840
          %v858 = vunpack.c.l.bf16 %v841
          %v859 = vunpack.c.l.bf16 %v842
          %v860 = vunpack.c.h.bf16 %v842
          %v861 = vunpack.c.l.bf16 %v843
          %v862 = vunpack.c.l.bf16 %v844
          %v863 = vunpack.c.h.bf16 %v844
          %v864 = vunpack.c.l.bf16 %v845
          %v865 = vunpack.c.l.bf16 %v846
          %v866 = vunpack.c.h.bf16 %v846
          %v867 = vunpack.c.l.bf16 %v847
          %v868 = vunpack.c.l.bf16 %v848
          %v869 = vunpack.c.h.bf16 %v848
          %v870 = vunpack.c.l.bf16 %v849
          %v871 = vunpack.c.l.bf16 %v850
          %v872 = vunpack.c.h.bf16 %v850
          %v873 = vunpack.c.l.bf16 %v851
          %v874 = vunpack.c.l.bf16 %v852
          %v875 = vunpack.c.h.bf16 %v852
          %v876 = vunpack.c.l.bf16 %v853
          %v877 = vunpack.c.l.bf16 %v854
          %v878 = vunpack.c.h.bf16 %v854
          %v879 = vunpack.c.l.bf16 %v855
          %880 = vst [vmem:[#allocation2] sm:$0xff] %v856
          %881 = vst [vmem:[#allocation2 + $0x8] sm:$0xff] %v857
          %882 = vst [vmem:[#allocation2 + $0x10] sm:$0xff] %v858
          %883 = vst [vmem:[#allocation2 + $0x18] sm:$0xff] %v859
          %884 = vst [vmem:[#allocation2 + $0x20] sm:$0xff] %v860
          %885 = vst [vmem:[#allocation2 + $0x28] sm:$0xff] %v861
          %886 = vst [vmem:[#allocation2 + $0x30] sm:$0xff] %v862
          %887 = vst [vmem:[#allocation2 + $0x38] sm:$0xff] %v863
          %888 = vst [vmem:[#allocation2 + $0x40] sm:$0xff] %v864
          %889 = vst [vmem:[#allocation2 + $0x48] sm:$0xff] %v865
          %890 = vst [vmem:[#allocation2 + $0x50] sm:$0xff] %v866
          %891 = vst [vmem:[#allocation2 + $0x58] sm:$0xff] %v867
          %892 = vst [vmem:[#allocation2 + $0x60] sm:$0xff] %v868
          %893 = vst [vmem:[#allocation2 + $0x68] sm:$0xff] %v869
          %894 = vst [vmem:[#allocation2 + $0x70] sm:$0xff] %v870
          %895 = vst [vmem:[#allocation2 + $0x78] sm:$0xff] %v871
          %896 = vst [vmem:[#allocation2 + $0x80] sm:$0xff] %v872
          %897 = vst [vmem:[#allocation2 + $0x88] sm:$0xff] %v873
          %898 = vst [vmem:[#allocation2 + $0x90] sm:$0xff] %v874
          %899 = vst [vmem:[#allocation2 + $0x98] sm:$0xff] %v875
          %900 = vst [vmem:[#allocation2 + $0xa0] sm:$0xff] %v876
          %901 = vst [vmem:[#allocation2 + $0xa8] sm:$0xff] %v877
          %902 = vst [vmem:[#allocation2 + $0xb0] sm:$0xff] %v878
          %903 = vst [vmem:[#allocation2 + $0xb8] sm:$0xff] %v879
        $region120: #{mask_transformer_forward.4} parent=71 // pred_fallthru
          _
        %v904 = vld [vmem:[#allocation2] sm:$0xff]
        %v905 = vld [vmem:[#allocation2 + $0x8] sm:$0xff]
        %v906 = vld [vmem:[#allocation2 + $0x10] sm:$0xff]
        %v907 = vld [vmem:[#allocation2 + $0x18] sm:$0xff]
        %v908 = vld [vmem:[#allocation2 + $0x20] sm:$0xff]
        %v909 = vld [vmem:[#allocation2 + $0x28] sm:$0xff]
        %v910 = vld [vmem:[#allocation2 + $0x30] sm:$0xff]
        %v911 = vld [vmem:[#allocation2 + $0x38] sm:$0xff]
        %v912 = vld [vmem:[#allocation2 + $0x40] sm:$0xff]
        %v913 = vld [vmem:[#allocation2 + $0x48] sm:$0xff]
        %v914 = vld [vmem:[#allocation2 + $0x50] sm:$0xff]
        %v915 = vld [vmem:[#allocation2 + $0x58] sm:$0xff]
        %v916 = vld [vmem:[#allocation2 + $0x60] sm:$0xff]
        %v917 = vld [vmem:[#allocation2 + $0x68] sm:$0xff]
        %v918 = vld [vmem:[#allocation2 + $0x70] sm:$0xff]
        %v919 = vld [vmem:[#allocation2 + $0x78] sm:$0xff]
        %v920 = vld [vmem:[#allocation2 + $0x80] sm:$0xff]
        %v921 = vld [vmem:[#allocation2 + $0x88] sm:$0xff]
        %v922 = vld [vmem:[#allocation2 + $0x90] sm:$0xff]
        %v923 = vld [vmem:[#allocation2 + $0x98] sm:$0xff]
        %v924 = vld [vmem:[#allocation2 + $0xa0] sm:$0xff]
        %v925 = vld [vmem:[#allocation2 + $0xa8] sm:$0xff]
        %v926 = vld [vmem:[#allocation2 + $0xb0] sm:$0xff]
        %v927 = vld [vmem:[#allocation2 + $0xb8] sm:$0xff]
        %v928 = vadd.f32 %v904, %v905
        %v929 = vadd.f32 %v928, %v906
        %930 = vadd.xlane.f32.xlu0 %v929
        %v931 = vpop.xlane.xlu0 %930
        %v932 = vadd.f32 %v907, %v908
        %v933 = vadd.f32 %v932, %v909
        %934 = vadd.xlane.f32.xlu0 %v933
        %v935 = vpop.xlane.xlu0 %934
        %v936 = vadd.f32 %v910, %v911
        %v937 = vadd.f32 %v936, %v912
        %938 = vadd.xlane.f32.xlu0 %v937
        %v939 = vpop.xlane.xlu0 %938
        %v940 = vadd.f32 %v913, %v914
        %v941 = vadd.f32 %v940, %v915
        %942 = vadd.xlane.f32.xlu0 %v941
        %v943 = vpop.xlane.xlu0 %942
        %v944 = vadd.f32 %v916, %v917
        %v945 = vadd.f32 %v944, %v918
        %946 = vadd.xlane.f32.xlu0 %v945
        %v947 = vpop.xlane.xlu0 %946
        %v948 = vadd.f32 %v919, %v920
        %v949 = vadd.f32 %v948, %v921
        %950 = vadd.xlane.f32.xlu0 %v949
        %v951 = vpop.xlane.xlu0 %950
        %v952 = vadd.f32 %v922, %v923
        %v953 = vadd.f32 %v952, %v924
        %954 = vadd.xlane.f32.xlu0 %v953
        %v955 = vpop.xlane.xlu0 %954
        %v956 = vadd.f32 %v925, %v926
        %v957 = vadd.f32 %v956, %v927
        %958 = vadd.xlane.f32.xlu0 %v957
        %v959 = vpop.xlane.xlu0 %958
        %v960 = vrcp.pop 384.0
        %v961 = vmul.f32 %v931, %v960
        %v962 = vmul.f32 %v935, %v960
        %v963 = vmul.f32 %v939, %v960
        %v964 = vmul.f32 %v943, %v960
        %v965 = vmul.f32 %v947, %v960
        %v966 = vmul.f32 %v951, %v960
        %v967 = vmul.f32 %v955, %v960
        %v968 = vmul.f32 %v959, %v960
        %v969 = vmul.f32 %v904, %v904
        %v970 = vmul.f32 %v905, %v905
        %v971 = vmul.f32 %v906, %v906
        %v972 = vmul.f32 %v907, %v907
        %v973 = vmul.f32 %v908, %v908
        %v974 = vmul.f32 %v909, %v909
        %v975 = vmul.f32 %v910, %v910
        %v976 = vmul.f32 %v911, %v911
        %v977 = vmul.f32 %v912, %v912
        %v978 = vmul.f32 %v913, %v913
        %v979 = vmul.f32 %v914, %v914
        %v980 = vmul.f32 %v915, %v915
        %v981 = vmul.f32 %v916, %v916
        %v982 = vmul.f32 %v917, %v917
        %v983 = vmul.f32 %v918, %v918
        %v984 = vmul.f32 %v919, %v919
        %v985 = vmul.f32 %v920, %v920
        %v986 = vmul.f32 %v921, %v921
        %v987 = vmul.f32 %v922, %v922
        %v988 = vmul.f32 %v923, %v923
        %v989 = vmul.f32 %v924, %v924
        %v990 = vmul.f32 %v925, %v925
        %v991 = vmul.f32 %v926, %v926
        %v992 = vmul.f32 %v927, %v927
        %v993 = vadd.f32 %v969, %v970
        %v994 = vadd.f32 %v993, %v971
        %995 = vadd.xlane.f32.xlu0 %v994
        %v996 = vpop.xlane.xlu0 %995
        %v997 = vadd.f32 %v972, %v973
        %v998 = vadd.f32 %v997, %v974
        %999 = vadd.xlane.f32.xlu0 %v998
        %v1000 = vpop.xlane.xlu0 %999
        %v1001 = vadd.f32 %v975, %v976
        %v1002 = vadd.f32 %v1001, %v977
        %1003 = vadd.xlane.f32.xlu0 %v1002
        %v1004 = vpop.xlane.xlu0 %1003
        %v1005 = vadd.f32 %v978, %v979
        %v1006 = vadd.f32 %v1005, %v980
        %1007 = vadd.xlane.f32.xlu0 %v1006
        %v1008 = vpop.xlane.xlu0 %1007
        %v1009 = vadd.f32 %v981, %v982
        %v1010 = vadd.f32 %v1009, %v983
        %1011 = vadd.xlane.f32.xlu0 %v1010
        %v1012 = vpop.xlane.xlu0 %1011
        %v1013 = vadd.f32 %v984, %v985
        %v1014 = vadd.f32 %v1013, %v986
        %1015 = vadd.xlane.f32.xlu0 %v1014
        %v1016 = vpop.xlane.xlu0 %1015
        %v1017 = vadd.f32 %v987, %v988
        %v1018 = vadd.f32 %v1017, %v989
        %1019 = vadd.xlane.f32.xlu0 %v1018
        %v1020 = vpop.xlane.xlu0 %1019
        %v1021 = vadd.f32 %v990, %v991
        %v1022 = vadd.f32 %v1021, %v992
        %1023 = vadd.xlane.f32.xlu0 %v1022
        %v1024 = vpop.xlane.xlu0 %1023
        %v1025 = vmul.f32 %v996, %v960
        %v1026 = vmul.f32 %v1000, %v960
        %v1027 = vmul.f32 %v1004, %v960
        %v1028 = vmul.f32 %v1008, %v960
        %v1029 = vmul.f32 %v1012, %v960
        %v1030 = vmul.f32 %v1016, %v960
        %v1031 = vmul.f32 %v1020, %v960
        %v1032 = vmul.f32 %v1024, %v960
        %v1033 = vmul.f32 %v961, %v961
        %v1034 = vmul.f32 %v962, %v962
        %v1035 = vmul.f32 %v963, %v963
        %v1036 = vmul.f32 %v964, %v964
        %v1037 = vmul.f32 %v965, %v965
        %v1038 = vmul.f32 %v966, %v966
        %v1039 = vmul.f32 %v967, %v967
        %v1040 = vmul.f32 %v968, %v968
        %v1041 = vsub.f32 %v1025, %v1033
        %v1042 = vsub.f32 %v1026, %v1034
        %v1043 = vsub.f32 %v1027, %v1035
        %v1044 = vsub.f32 %v1028, %v1036
        %v1045 = vsub.f32 %v1029, %v1037
        %v1046 = vsub.f32 %v1030, %v1038
        %v1047 = vsub.f32 %v1031, %v1039
        %v1048 = vsub.f32 %v1032, %v1040
        %v1049 = vsub.f32 %v904, %v961
        %v1050 = vsub.f32 %v905, %v961
        %v1051 = vsub.f32 %v906, %v961
        %v1052 = vsub.f32 %v907, %v962
        %v1053 = vsub.f32 %v908, %v962
        %v1054 = vsub.f32 %v909, %v962
        %v1055 = vsub.f32 %v910, %v963
        %v1056 = vsub.f32 %v911, %v963
        %v1057 = vsub.f32 %v912, %v963
        %v1058 = vsub.f32 %v913, %v964
        %v1059 = vsub.f32 %v914, %v964
        %v1060 = vsub.f32 %v915, %v964
        %v1061 = vsub.f32 %v916, %v965
        %v1062 = vsub.f32 %v917, %v965
        %v1063 = vsub.f32 %v918, %v965
        %v1064 = vsub.f32 %v919, %v966
        %v1065 = vsub.f32 %v920, %v966
        %v1066 = vsub.f32 %v921, %v966
        %v1067 = vsub.f32 %v922, %v967
        %v1068 = vsub.f32 %v923, %v967
        %v1069 = vsub.f32 %v924, %v967
        %v1070 = vsub.f32 %v925, %v968
        %v1071 = vsub.f32 %v926, %v968
        %v1072 = vsub.f32 %v927, %v968
        %v1073 = vadd.f32 %v1041, 1e-05
        %v1074 = vadd.f32 %v1042, 1e-05
        %v1075 = vadd.f32 %v1043, 1e-05
        %v1076 = vadd.f32 %v1044, 1e-05
        %v1077 = vadd.f32 %v1045, 1e-05
        %v1078 = vadd.f32 %v1046, 1e-05
        %v1079 = vadd.f32 %v1047, 1e-05
        %v1080 = vadd.f32 %v1048, 1e-05
        %v1081 = vrsqrt.pop %v1073
        %v1082 = vrsqrt.pop %v1074
        %v1083 = vrsqrt.pop %v1075
        %v1084 = vrsqrt.pop %v1076
        %v1085 = vrsqrt.pop %v1077
        %v1086 = vrsqrt.pop %v1078
        %v1087 = vrsqrt.pop %v1079
        %v1088 = vrsqrt.pop %v1080
        %v1089 = vmul.f32 %v1049, %v1081
        %v1090 = vmul.f32 %v1050, %v1081
        %v1091 = vmul.f32 %v1051, %v1081
        %v1092 = vmul.f32 %v1052, %v1082
        %v1093 = vmul.f32 %v1053, %v1082
        %v1094 = vmul.f32 %v1054, %v1082
        %v1095 = vmul.f32 %v1055, %v1083
        %v1096 = vmul.f32 %v1056, %v1083
        %v1097 = vmul.f32 %v1057, %v1083
        %v1098 = vmul.f32 %v1058, %v1084
        %v1099 = vmul.f32 %v1059, %v1084
        %v1100 = vmul.f32 %v1060, %v1084
        %v1101 = vmul.f32 %v1061, %v1085
        %v1102 = vmul.f32 %v1062, %v1085
        %v1103 = vmul.f32 %v1063, %v1085
        %v1104 = vmul.f32 %v1064, %v1086
        %v1105 = vmul.f32 %v1065, %v1086
        %v1106 = vmul.f32 %v1066, %v1086
        %v1107 = vmul.f32 %v1067, %v1087
        %v1108 = vmul.f32 %v1068, %v1087
        %v1109 = vmul.f32 %v1069, %v1087
        %v1110 = vmul.f32 %v1070, %v1088
        %v1111 = vmul.f32 %v1071, %v1088
        %v1112 = vmul.f32 %v1072, %v1088
        %v1113 = vld [vmem:[%s647] sm:$0x7]
        %v1115 = vlaneseq
        %v1116 = vshrl.u32 %v1115, 7
        %v1117 = vsub.s32 0, %v1116
        %v1118 = vrot.slane %v1113, %v1117
        %v1119 = vlaneseq
        %v1120 = vshrl.u32 %v1119, 7
        %v1121 = vsub.s32 1, %v1120
        %v1122 = vrot.slane %v1113, %v1121
        %v1123 = vlaneseq
        %v1124 = vshrl.u32 %v1123, 7
        %v1125 = vsub.s32 2, %v1124
        %v1126 = vrot.slane %v1113, %v1125
        %v1130 = vmul.f32 %v1089, %v1118
        %v1131 = vmul.f32 %v1090, %v1122
        %v1132 = vmul.f32 %v1091, %v1126
        %v1133 = vmul.f32 %v1092, %v1118
        %v1134 = vmul.f32 %v1093, %v1122
        %v1135 = vmul.f32 %v1094, %v1126
        %v1136 = vmul.f32 %v1095, %v1118
        %v1137 = vmul.f32 %v1096, %v1122
        %v1138 = vmul.f32 %v1097, %v1126
        %v1139 = vmul.f32 %v1098, %v1118
        %v1140 = vmul.f32 %v1099, %v1122
        %v1141 = vmul.f32 %v1100, %v1126
        %v1142 = vmul.f32 %v1101, %v1118
        %v1143 = vmul.f32 %v1102, %v1122
        %v1144 = vmul.f32 %v1103, %v1126
        %v1145 = vmul.f32 %v1104, %v1118
        %v1146 = vmul.f32 %v1105, %v1122
        %v1147 = vmul.f32 %v1106, %v1126
        %v1148 = vmul.f32 %v1107, %v1118
        %v1149 = vmul.f32 %v1108, %v1122
        %v1150 = vmul.f32 %v1109, %v1126
        %v1151 = vmul.f32 %v1110, %v1118
        %v1152 = vmul.f32 %v1111, %v1122
        %v1153 = vmul.f32 %v1112, %v1126
        %v1154 = vld [vmem:[%s656] sm:$0x7]
        %v1156 = vlaneseq
        %v1157 = vshrl.u32 %v1156, 7
        %v1158 = vsub.s32 0, %v1157
        %v1159 = vrot.slane %v1154, %v1158
        %v1160 = vlaneseq
        %v1161 = vshrl.u32 %v1160, 7
        %v1162 = vsub.s32 1, %v1161
        %v1163 = vrot.slane %v1154, %v1162
        %v1164 = vlaneseq
        %v1165 = vshrl.u32 %v1164, 7
        %v1166 = vsub.s32 2, %v1165
        %v1167 = vrot.slane %v1154, %v1166
        %v1171 = vadd.f32 %v1130, %v1159
        %v1172 = vadd.f32 %v1131, %v1163
        %v1173 = vadd.f32 %v1132, %v1167
        %v1174 = vadd.f32 %v1133, %v1159
        %v1175 = vadd.f32 %v1134, %v1163
        %v1176 = vadd.f32 %v1135, %v1167
        %v1177 = vadd.f32 %v1136, %v1159
        %v1178 = vadd.f32 %v1137, %v1163
        %v1179 = vadd.f32 %v1138, %v1167
        %v1180 = vadd.f32 %v1139, %v1159
        %v1181 = vadd.f32 %v1140, %v1163
        %v1182 = vadd.f32 %v1141, %v1167
        %v1183 = vadd.f32 %v1142, %v1159
        %v1184 = vadd.f32 %v1143, %v1163
        %v1185 = vadd.f32 %v1144, %v1167
        %v1186 = vadd.f32 %v1145, %v1159
        %v1187 = vadd.f32 %v1146, %v1163
        %v1188 = vadd.f32 %v1147, %v1167
        %v1189 = vadd.f32 %v1148, %v1159
        %v1190 = vadd.f32 %v1149, %v1163
        %v1191 = vadd.f32 %v1150, %v1167
        %v1192 = vadd.f32 %v1151, %v1159
        %v1193 = vadd.f32 %v1152, %v1163
        %v1194 = vadd.f32 %v1153, %v1167
        %v1195 = vpack.c.bf16 %v1174, %v1171
        %v1196 = vpack.c.bf16 %v1175, %v1172
        %v1197 = vpack.c.bf16 %v1176, %v1173
        %v1198 = vpack.c.bf16 %v1180, %v1177
        %v1199 = vpack.c.bf16 %v1181, %v1178
        %v1200 = vpack.c.bf16 %v1182, %v1179
        %v1201 = vpack.c.bf16 %v1186, %v1183
        %v1202 = vpack.c.bf16 %v1187, %v1184
        %v1203 = vpack.c.bf16 %v1188, %v1185
        %v1204 = vpack.c.bf16 %v1192, %v1189
        %v1205 = vpack.c.bf16 %v1193, %v1190
        %v1206 = vpack.c.bf16 %v1194, %v1191
        %v1207 = vld [vmem:[%s665] sm:$0xff]
        %v1208 = vld [vmem:[%s665 + $0x8] sm:$0xff]
        %v1209 = vld [vmem:[%s665 + $0x10] sm:$0xff]
        %v1210 = vld [vmem:[%s665 + $0x18] sm:$0xff]
        %v1211 = vld [vmem:[%s665 + $0x20] sm:$0xf]
        %v1212 = vld [vmem:[%s665 + $0x24] sm:$0xff]
        %v1213 = vld [vmem:[%s665 + $0x2c] sm:$0xff]
        %v1214 = vld [vmem:[%s665 + $0x34] sm:$0xff]
        %v1215 = vld [vmem:[%s665 + $0x3c] sm:$0xff]
        %v1216 = vld [vmem:[%s665 + $0x44] sm:$0xf]
        %v1217 = vld [vmem:[%s665 + $0x48] sm:$0xff]
        %v1218 = vld [vmem:[%s665 + $0x50] sm:$0xff]
        %v1219 = vld [vmem:[%s665 + $0x58] sm:$0xff]
        %v1220 = vld [vmem:[%s665 + $0x60] sm:$0xff]
        %v1221 = vld [vmem:[%s665 + $0x68] sm:$0xf]
        %v1222 = vld [vmem:[%s665 + $0x6c] sm:$0xff]
        %v1223 = vld [vmem:[%s665 + $0x74] sm:$0xff]
        %v1224 = vld [vmem:[%s665 + $0x7c] sm:$0xff]
        %v1225 = vld [vmem:[%s665 + $0x84] sm:$0xff]
        %v1226 = vld [vmem:[%s665 + $0x8c] sm:$0xf]
        %v1227 = vld [vmem:[%s665 + $0x90] sm:$0xff]
        %v1228 = vld [vmem:[%s665 + $0x98] sm:$0xff]
        %v1229 = vld [vmem:[%s665 + $0xa0] sm:$0xff]
        %v1230 = vld [vmem:[%s665 + $0xa8] sm:$0xff]
        %v1231 = vld [vmem:[%s665 + $0xb0] sm:$0xf]
        %v1232 = vld [vmem:[%s665 + $0xb4] sm:$0xff]
        %v1233 = vld [vmem:[%s665 + $0xbc] sm:$0xff]
        %v1234 = vld [vmem:[%s665 + $0xc4] sm:$0xff]
        %v1235 = vld [vmem:[%s665 + $0xcc] sm:$0xff]
        %v1236 = vld [vmem:[%s665 + $0xd4] sm:$0xf]
        %v1237 = vld [vmem:[%s665 + $0xd8] sm:$0xff]
        %v1238 = vld [vmem:[%s665 + $0xe0] sm:$0xff]
        %v1239 = vld [vmem:[%s665 + $0xe8] sm:$0xff]
        %v1240 = vld [vmem:[%s665 + $0xf0] sm:$0xff]
        %v1241 = vld [vmem:[%s665 + $0xf8] sm:$0xf]
        %v1242 = vld [vmem:[%s665 + $0xfc] sm:$0xff]
        %v1243 = vld [vmem:[%s665 + $0x104] sm:$0xff]
        %v1244 = vld [vmem:[%s665 + $0x10c] sm:$0xff]
        %v1245 = vld [vmem:[%s665 + $0x114] sm:$0xff]
        %v1246 = vld [vmem:[%s665 + $0x11c] sm:$0xf]
        %v1247 = vld [vmem:[%s665 + $0x120] sm:$0xff]
        %v1248 = vld [vmem:[%s665 + $0x128] sm:$0xff]
        %v1249 = vld [vmem:[%s665 + $0x130] sm:$0xff]
        %v1250 = vld [vmem:[%s665 + $0x138] sm:$0xff]
        %v1251 = vld [vmem:[%s665 + $0x140] sm:$0xf]
        %v1252 = vld [vmem:[%s665 + $0x144] sm:$0xff]
        %v1253 = vld [vmem:[%s665 + $0x14c] sm:$0xff]
        %v1254 = vld [vmem:[%s665 + $0x154] sm:$0xff]
        %v1255 = vld [vmem:[%s665 + $0x15c] sm:$0xff]
        %v1256 = vld [vmem:[%s665 + $0x164] sm:$0xf]
        %v1257 = vld [vmem:[%s665 + $0x168] sm:$0xff]
        %v1258 = vld [vmem:[%s665 + $0x170] sm:$0xff]
        %v1259 = vld [vmem:[%s665 + $0x178] sm:$0xff]
        %v1260 = vld [vmem:[%s665 + $0x180] sm:$0xff]
        %v1261 = vld [vmem:[%s665 + $0x188] sm:$0xf]
        %v1262 = vld [vmem:[%s665 + $0x18c] sm:$0xff]
        %v1263 = vld [vmem:[%s665 + $0x194] sm:$0xff]
        %v1264 = vld [vmem:[%s665 + $0x19c] sm:$0xff]
        %v1265 = vld [vmem:[%s665 + $0x1a4] sm:$0xff]
        %v1266 = vld [vmem:[%s665 + $0x1ac] sm:$0xf]
        %v1267 = vld [vmem:[%s665 + $0x1b0] sm:$0xff]
        %v1268 = vld [vmem:[%s665 + $0x1b8] sm:$0xff]
        %v1269 = vld [vmem:[%s665 + $0x1c0] sm:$0xff]
        %v1270 = vld [vmem:[%s665 + $0x1c8] sm:$0xff]
        %v1271 = vld [vmem:[%s665 + $0x1d0] sm:$0xf]
        %v1272 = vld [vmem:[%s665 + $0x1d4] sm:$0xff]
        %v1273 = vld [vmem:[%s665 + $0x1dc] sm:$0xff]
        %v1274 = vld [vmem:[%s665 + $0x1e4] sm:$0xff]
        %v1275 = vld [vmem:[%s665 + $0x1ec] sm:$0xff]
        %v1276 = vld [vmem:[%s665 + $0x1f4] sm:$0xf]
        %v1277 = vld [vmem:[%s665 + $0x1f8] sm:$0xff]
        %v1278 = vld [vmem:[%s665 + $0x200] sm:$0xff]
        %v1279 = vld [vmem:[%s665 + $0x208] sm:$0xff]
        %v1280 = vld [vmem:[%s665 + $0x210] sm:$0xff]
        %v1281 = vld [vmem:[%s665 + $0x218] sm:$0xf]
        %v1282 = vld [vmem:[%s665 + $0x21c] sm:$0xff]
        %v1283 = vld [vmem:[%s665 + $0x224] sm:$0xff]
        %v1284 = vld [vmem:[%s665 + $0x22c] sm:$0xff]
        %v1285 = vld [vmem:[%s665 + $0x234] sm:$0xff]
        %v1286 = vld [vmem:[%s665 + $0x23c] sm:$0xf]
        %v1287 = vld [vmem:[%s665 + $0x240] sm:$0xff]
        %v1288 = vld [vmem:[%s665 + $0x248] sm:$0xff]
        %v1289 = vld [vmem:[%s665 + $0x250] sm:$0xff]
        %v1290 = vld [vmem:[%s665 + $0x258] sm:$0xff]
        %v1291 = vld [vmem:[%s665 + $0x260] sm:$0xf]
        %v1292 = vld [vmem:[%s665 + $0x264] sm:$0xff]
        %v1293 = vld [vmem:[%s665 + $0x26c] sm:$0xff]
        %v1294 = vld [vmem:[%s665 + $0x274] sm:$0xff]
        %v1295 = vld [vmem:[%s665 + $0x27c] sm:$0xff]
        %v1296 = vld [vmem:[%s665 + $0x284] sm:$0xf]
        %v1297 = vld [vmem:[%s665 + $0x288] sm:$0xff]
        %v1298 = vld [vmem:[%s665 + $0x290] sm:$0xff]
        %v1299 = vld [vmem:[%s665 + $0x298] sm:$0xff]
        %v1300 = vld [vmem:[%s665 + $0x2a0] sm:$0xff]
        %v1301 = vld [vmem:[%s665 + $0x2a8] sm:$0xf]
        %v1302 = vld [vmem:[%s665 + $0x2ac] sm:$0xff]
        %v1303 = vld [vmem:[%s665 + $0x2b4] sm:$0xff]
        %v1304 = vld [vmem:[%s665 + $0x2bc] sm:$0xff]
        %v1305 = vld [vmem:[%s665 + $0x2c4] sm:$0xff]
        %v1306 = vld [vmem:[%s665 + $0x2cc] sm:$0xf]
        %v1307 = vld [vmem:[%s665 + $0x2d0] sm:$0xff]
        %v1308 = vld [vmem:[%s665 + $0x2d8] sm:$0xff]
        %v1309 = vld [vmem:[%s665 + $0x2e0] sm:$0xff]
        %v1310 = vld [vmem:[%s665 + $0x2e8] sm:$0xff]
        %v1311 = vld [vmem:[%s665 + $0x2f0] sm:$0xf]
        %v1312 = vld [vmem:[%s665 + $0x2f4] sm:$0xff]
        %v1313 = vld [vmem:[%s665 + $0x2fc] sm:$0xff]
        %v1314 = vld [vmem:[%s665 + $0x304] sm:$0xff]
        %v1315 = vld [vmem:[%s665 + $0x30c] sm:$0xff]
        %v1316 = vld [vmem:[%s665 + $0x314] sm:$0xf]
        %v1317 = vld [vmem:[%s665 + $0x318] sm:$0xff]
        %v1318 = vld [vmem:[%s665 + $0x320] sm:$0xff]
        %v1319 = vld [vmem:[%s665 + $0x328] sm:$0xff]
        %v1320 = vld [vmem:[%s665 + $0x330] sm:$0xff]
        %v1321 = vld [vmem:[%s665 + $0x338] sm:$0xf]
        %v1322 = vld [vmem:[%s665 + $0x33c] sm:$0xff]
        %v1323 = vld [vmem:[%s665 + $0x344] sm:$0xff]
        %v1324 = vld [vmem:[%s665 + $0x34c] sm:$0xff]
        %v1325 = vld [vmem:[%s665 + $0x354] sm:$0xff]
        %v1326 = vld [vmem:[%s665 + $0x35c] sm:$0xf]
        %v1327 = vld [vmem:[%s665 + $0x360] sm:$0xff]
        %v1328 = vld [vmem:[%s665 + $0x368] sm:$0xff]
        %v1329 = vld [vmem:[%s665 + $0x370] sm:$0xff]
        %v1330 = vld [vmem:[%s665 + $0x378] sm:$0xff]
        %v1331 = vld [vmem:[%s665 + $0x380] sm:$0xf]
        %v1332 = vld [vmem:[%s665 + $0x384] sm:$0xff]
        %v1333 = vld [vmem:[%s665 + $0x38c] sm:$0xff]
        %v1334 = vld [vmem:[%s665 + $0x394] sm:$0xff]
        %v1335 = vld [vmem:[%s665 + $0x39c] sm:$0xff]
        %v1336 = vld [vmem:[%s665 + $0x3a4] sm:$0xf]
        %v1337 = vld [vmem:[%s665 + $0x3a8] sm:$0xff]
        %v1338 = vld [vmem:[%s665 + $0x3b0] sm:$0xff]
        %v1339 = vld [vmem:[%s665 + $0x3b8] sm:$0xff]
        %v1340 = vld [vmem:[%s665 + $0x3c0] sm:$0xff]
        %v1341 = vld [vmem:[%s665 + $0x3c8] sm:$0xf]
        %v1342 = vld [vmem:[%s665 + $0x3cc] sm:$0xff]
        %v1343 = vld [vmem:[%s665 + $0x3d4] sm:$0xff]
        %v1344 = vld [vmem:[%s665 + $0x3dc] sm:$0xff]
        %v1345 = vld [vmem:[%s665 + $0x3e4] sm:$0xff]
        %v1346 = vld [vmem:[%s665 + $0x3ec] sm:$0xf]
        %v1347 = vld [vmem:[%s665 + $0x3f0] sm:$0xff]
        %v1348 = vld [vmem:[%s665 + $0x3f8] sm:$0xff]
        %v1349 = vld [vmem:[%s665 + $0x400] sm:$0xff]
        %v1350 = vld [vmem:[%s665 + $0x408] sm:$0xff]
        %v1351 = vld [vmem:[%s665 + $0x410] sm:$0xf]
        %v1352 = vld [vmem:[%s665 + $0x414] sm:$0xff]
        %v1353 = vld [vmem:[%s665 + $0x41c] sm:$0xff]
        %v1354 = vld [vmem:[%s665 + $0x424] sm:$0xff]
        %v1355 = vld [vmem:[%s665 + $0x42c] sm:$0xff]
        %v1356 = vld [vmem:[%s665 + $0x434] sm:$0xf]
        %v1357 = vld [vmem:[%s665 + $0x438] sm:$0xff]
        %v1358 = vld [vmem:[%s665 + $0x440] sm:$0xff]
        %v1359 = vld [vmem:[%s665 + $0x448] sm:$0xff]
        %v1360 = vld [vmem:[%s665 + $0x450] sm:$0xff]
        %v1361 = vld [vmem:[%s665 + $0x458] sm:$0xf]
        %v1362 = vld [vmem:[%s665 + $0x45c] sm:$0xff]
        %v1363 = vld [vmem:[%s665 + $0x464] sm:$0xff]
        %v1364 = vld [vmem:[%s665 + $0x46c] sm:$0xff]
        %v1365 = vld [vmem:[%s665 + $0x474] sm:$0xff]
        %v1366 = vld [vmem:[%s665 + $0x47c] sm:$0xf]
        %v1367 = vld [vmem:[%s665 + $0x480] sm:$0xff]
        %v1368 = vld [vmem:[%s665 + $0x488] sm:$0xff]
        %v1369 = vld [vmem:[%s665 + $0x490] sm:$0xff]
        %v1370 = vld [vmem:[%s665 + $0x498] sm:$0xff]
        %v1371 = vld [vmem:[%s665 + $0x4a0] sm:$0xf]
        %v1372 = vld [vmem:[%s665 + $0x4a4] sm:$0xff]
        %v1373 = vld [vmem:[%s665 + $0x4ac] sm:$0xff]
        %v1374 = vld [vmem:[%s665 + $0x4b4] sm:$0xff]
        %v1375 = vld [vmem:[%s665 + $0x4bc] sm:$0xff]
        %v1376 = vld [vmem:[%s665 + $0x4c4] sm:$0xf]
        %v1377 = vld [vmem:[%s665 + $0x4c8] sm:$0xff]
        %v1378 = vld [vmem:[%s665 + $0x4d0] sm:$0xff]
        %v1379 = vld [vmem:[%s665 + $0x4d8] sm:$0xff]
        %v1380 = vld [vmem:[%s665 + $0x4e0] sm:$0xff]
        %v1381 = vld [vmem:[%s665 + $0x4e8] sm:$0xf]
        %v1382 = vld [vmem:[%s665 + $0x4ec] sm:$0xff]
        %v1383 = vld [vmem:[%s665 + $0x4f4] sm:$0xff]
        %v1384 = vld [vmem:[%s665 + $0x4fc] sm:$0xff]
        %v1385 = vld [vmem:[%s665 + $0x504] sm:$0xff]
        %v1386 = vld [vmem:[%s665 + $0x50c] sm:$0xf]
        %v1387 = vld [vmem:[%s665 + $0x510] sm:$0xff]
        %v1388 = vld [vmem:[%s665 + $0x518] sm:$0xff]
        %v1389 = vld [vmem:[%s665 + $0x520] sm:$0xff]
        %v1390 = vld [vmem:[%s665 + $0x528] sm:$0xff]
        %v1391 = vld [vmem:[%s665 + $0x530] sm:$0xf]
        %v1392 = vld [vmem:[%s665 + $0x534] sm:$0xff]
        %v1393 = vld [vmem:[%s665 + $0x53c] sm:$0xff]
        %v1394 = vld [vmem:[%s665 + $0x544] sm:$0xff]
        %v1395 = vld [vmem:[%s665 + $0x54c] sm:$0xff]
        %v1396 = vld [vmem:[%s665 + $0x554] sm:$0xf]
        %v1397 = vld [vmem:[%s665 + $0x558] sm:$0xff]
        %v1398 = vld [vmem:[%s665 + $0x560] sm:$0xff]
        %v1399 = vld [vmem:[%s665 + $0x568] sm:$0xff]
        %v1400 = vld [vmem:[%s665 + $0x570] sm:$0xff]
        %v1401 = vld [vmem:[%s665 + $0x578] sm:$0xf]
        %v1402 = vld [vmem:[%s665 + $0x57c] sm:$0xff]
        %v1403 = vld [vmem:[%s665 + $0x584] sm:$0xff]
        %v1404 = vld [vmem:[%s665 + $0x58c] sm:$0xff]
        %v1405 = vld [vmem:[%s665 + $0x594] sm:$0xff]
        %v1406 = vld [vmem:[%s665 + $0x59c] sm:$0xf]
        %v1407 = vld [vmem:[%s665 + $0x5a0] sm:$0xff]
        %v1408 = vld [vmem:[%s665 + $0x5a8] sm:$0xff]
        %v1409 = vld [vmem:[%s665 + $0x5b0] sm:$0xff]
        %v1410 = vld [vmem:[%s665 + $0x5b8] sm:$0xff]
        %v1411 = vld [vmem:[%s665 + $0x5c0] sm:$0xf]
        %v1412 = vld [vmem:[%s665 + $0x5c4] sm:$0xff]
        %v1413 = vld [vmem:[%s665 + $0x5cc] sm:$0xff]
        %v1414 = vld [vmem:[%s665 + $0x5d4] sm:$0xff]
        %v1415 = vld [vmem:[%s665 + $0x5dc] sm:$0xff]
        %v1416 = vld [vmem:[%s665 + $0x5e4] sm:$0xf]
        %v1417 = vld [vmem:[%s665 + $0x5e8] sm:$0xff]
        %v1418 = vld [vmem:[%s665 + $0x5f0] sm:$0xff]
        %v1419 = vld [vmem:[%s665 + $0x5f8] sm:$0xff]
        %v1420 = vld [vmem:[%s665 + $0x600] sm:$0xff]
        %v1421 = vld [vmem:[%s665 + $0x608] sm:$0xf]
        %v1422 = vld [vmem:[%s665 + $0x60c] sm:$0xff]
        %v1423 = vld [vmem:[%s665 + $0x614] sm:$0xff]
        %v1424 = vld [vmem:[%s665 + $0x61c] sm:$0xff]
        %v1425 = vld [vmem:[%s665 + $0x624] sm:$0xff]
        %v1426 = vld [vmem:[%s665 + $0x62c] sm:$0xf]
        %v1427 = vld [vmem:[%s665 + $0x630] sm:$0xff]
        %v1428 = vld [vmem:[%s665 + $0x638] sm:$0xff]
        %v1429 = vld [vmem:[%s665 + $0x640] sm:$0xff]
        %v1430 = vld [vmem:[%s665 + $0x648] sm:$0xff]
        %v1431 = vld [vmem:[%s665 + $0x650] sm:$0xf]
        %v1432 = vld [vmem:[%s665 + $0x654] sm:$0xff]
        %v1433 = vld [vmem:[%s665 + $0x65c] sm:$0xff]
        %v1434 = vld [vmem:[%s665 + $0x664] sm:$0xff]
        %v1435 = vld [vmem:[%s665 + $0x66c] sm:$0xff]
        %v1436 = vld [vmem:[%s665 + $0x674] sm:$0xf]
        %v1437 = vld [vmem:[%s665 + $0x678] sm:$0xff]
        %v1438 = vld [vmem:[%s665 + $0x680] sm:$0xff]
        %v1439 = vld [vmem:[%s665 + $0x688] sm:$0xff]
        %v1440 = vld [vmem:[%s665 + $0x690] sm:$0xff]
        %v1441 = vld [vmem:[%s665 + $0x698] sm:$0xf]
        %v1442 = vld [vmem:[%s665 + $0x69c] sm:$0xff]
        %v1443 = vld [vmem:[%s665 + $0x6a4] sm:$0xff]
        %v1444 = vld [vmem:[%s665 + $0x6ac] sm:$0xff]
        %v1445 = vld [vmem:[%s665 + $0x6b4] sm:$0xff]
        %v1446 = vld [vmem:[%s665 + $0x6bc] sm:$0xf]
        %v1447 = vld [vmem:[%s674] sm:$0xff]
        %v1448 = vld [vmem:[%s674 + $0x8] sm:$0x1]
        %v1451 = vlaneseq
        %v1452 = vshrl.u32 %v1451, 7
        %v1453 = vsub.s32 0, %v1452
        %v1454 = vrot.slane %v1447, %v1453
        %v1455 = vlaneseq
        %v1456 = vshrl.u32 %v1455, 7
        %v1457 = vsub.s32 1, %v1456
        %v1458 = vrot.slane %v1447, %v1457
        %v1459 = vlaneseq
        %v1460 = vshrl.u32 %v1459, 7
        %v1461 = vsub.s32 2, %v1460
        %v1462 = vrot.slane %v1447, %v1461
        %v1463 = vlaneseq
        %v1464 = vshrl.u32 %v1463, 7
        %v1465 = vsub.s32 3, %v1464
        %v1466 = vrot.slane %v1447, %v1465
        %v1467 = vlaneseq
        %v1468 = vshrl.u32 %v1467, 7
        %v1469 = vsub.s32 4, %v1468
        %v1470 = vrot.slane %v1447, %v1469
        %v1471 = vlaneseq
        %v1472 = vshrl.u32 %v1471, 7
        %v1473 = vsub.s32 5, %v1472
        %v1474 = vrot.slane %v1447, %v1473
        %v1475 = vlaneseq
        %v1476 = vshrl.u32 %v1475, 7
        %v1477 = vsub.s32 6, %v1476
        %v1478 = vrot.slane %v1447, %v1477
        %v1479 = vlaneseq
        %v1480 = vshrl.u32 %v1479, 7
        %v1481 = vsub.s32 7, %v1480
        %v1482 = vrot.slane %v1447, %v1481
        %v1483 = vlaneseq
        %v1484 = vshrl.u32 %v1483, 7
        %v1485 = vsub.s32 0, %v1484
        %v1486 = vrot.slane %v1448, %v1485
        %v1736 = vunpack.c.l.b16 %v1207
        %v1737 = vunpack.c.h.b16 %v1207
        %v1738 = vunpack.c.l.b16 %v1208
        %v1739 = vunpack.c.h.b16 %v1208
        %v1740 = vunpack.c.l.b16 %v1209
        %v1741 = vunpack.c.h.b16 %v1209
        %v1742 = vunpack.c.l.b16 %v1210
        %v1743 = vunpack.c.h.b16 %v1210
        %v1744 = vunpack.c.l.b16 %v1211
        %v1745 = vunpack.c.l.b16 %v1212
        %v1746 = vunpack.c.h.b16 %v1212
        %v1747 = vunpack.c.l.b16 %v1213
        %v1748 = vunpack.c.h.b16 %v1213
        %v1749 = vunpack.c.l.b16 %v1214
        %v1750 = vunpack.c.h.b16 %v1214
        %v1751 = vunpack.c.l.b16 %v1215
        %v1752 = vunpack.c.h.b16 %v1215
        %v1753 = vunpack.c.l.b16 %v1216
        %v1754 = vunpack.c.l.b16 %v1217
        %v1755 = vunpack.c.h.b16 %v1217
        %v1756 = vunpack.c.l.b16 %v1218
        %v1757 = vunpack.c.h.b16 %v1218
        %v1758 = vunpack.c.l.b16 %v1219
        %v1759 = vunpack.c.h.b16 %v1219
        %v1760 = vunpack.c.l.b16 %v1220
        %v1761 = vunpack.c.h.b16 %v1220
        %v1762 = vunpack.c.l.b16 %v1221
        %v1763 = vunpack.c.l.b16 %v1222
        %v1764 = vunpack.c.h.b16 %v1222
        %v1765 = vunpack.c.l.b16 %v1223
        %v1766 = vunpack.c.h.b16 %v1223
        %v1767 = vunpack.c.l.b16 %v1224
        %v1768 = vunpack.c.h.b16 %v1224
        %v1769 = vunpack.c.l.b16 %v1225
        %v1770 = vunpack.c.h.b16 %v1225
        %v1771 = vunpack.c.l.b16 %v1226
        %v1772 = vunpack.c.l.b16 %v1227
        %v1773 = vunpack.c.h.b16 %v1227
        %v1774 = vunpack.c.l.b16 %v1228
        %v1775 = vunpack.c.h.b16 %v1228
        %v1776 = vunpack.c.l.b16 %v1229
        %v1777 = vunpack.c.h.b16 %v1229
        %v1778 = vunpack.c.l.b16 %v1230
        %v1779 = vunpack.c.h.b16 %v1230
        %v1780 = vunpack.c.l.b16 %v1231
        %v1781 = vunpack.c.l.b16 %v1232
        %v1782 = vunpack.c.h.b16 %v1232
        %v1783 = vunpack.c.l.b16 %v1233
        %v1784 = vunpack.c.h.b16 %v1233
        %v1785 = vunpack.c.l.b16 %v1234
        %v1786 = vunpack.c.h.b16 %v1234
        %v1787 = vunpack.c.l.b16 %v1235
        %v1788 = vunpack.c.h.b16 %v1235
        %v1789 = vunpack.c.l.b16 %v1236
        %v1790 = vunpack.c.l.b16 %v1237
        %v1791 = vunpack.c.h.b16 %v1237
        %v1792 = vunpack.c.l.b16 %v1238
        %v1793 = vunpack.c.h.b16 %v1238
        %v1794 = vunpack.c.l.b16 %v1239
        %v1795 = vunpack.c.h.b16 %v1239
        %v1796 = vunpack.c.l.b16 %v1240
        %v1797 = vunpack.c.h.b16 %v1240
        %v1798 = vunpack.c.l.b16 %v1241
        %v1799 = vunpack.c.l.b16 %v1242
        %v1800 = vunpack.c.h.b16 %v1242
        %v1801 = vunpack.c.l.b16 %v1243
        %v1802 = vunpack.c.h.b16 %v1243
        %v1803 = vunpack.c.l.b16 %v1244
        %v1804 = vunpack.c.h.b16 %v1244
        %v1805 = vunpack.c.l.b16 %v1245
        %v1806 = vunpack.c.h.b16 %v1245
        %v1807 = vunpack.c.l.b16 %v1246
        %v1808 = vunpack.c.l.b16 %v1247
        %v1809 = vunpack.c.h.b16 %v1247
        %v1810 = vunpack.c.l.b16 %v1248
        %v1811 = vunpack.c.h.b16 %v1248
        %v1812 = vunpack.c.l.b16 %v1249
        %v1813 = vunpack.c.h.b16 %v1249
        %v1814 = vunpack.c.l.b16 %v1250
        %v1815 = vunpack.c.h.b16 %v1250
        %v1816 = vunpack.c.l.b16 %v1251
        %v1817 = vunpack.c.l.b16 %v1252
        %v1818 = vunpack.c.h.b16 %v1252
        %v1819 = vunpack.c.l.b16 %v1253
        %v1820 = vunpack.c.h.b16 %v1253
        %v1821 = vunpack.c.l.b16 %v1254
        %v1822 = vunpack.c.h.b16 %v1254
        %v1823 = vunpack.c.l.b16 %v1255
        %v1824 = vunpack.c.h.b16 %v1255
        %v1825 = vunpack.c.l.b16 %v1256
        %v1826 = vunpack.c.l.b16 %v1257
        %v1827 = vunpack.c.h.b16 %v1257
        %v1828 = vunpack.c.l.b16 %v1258
        %v1829 = vunpack.c.h.b16 %v1258
        %v1830 = vunpack.c.l.b16 %v1259
        %v1831 = vunpack.c.h.b16 %v1259
        %v1832 = vunpack.c.l.b16 %v1260
        %v1833 = vunpack.c.h.b16 %v1260
        %v1834 = vunpack.c.l.b16 %v1261
        %v1835 = vunpack.c.l.b16 %v1262
        %v1836 = vunpack.c.h.b16 %v1262
        %v1837 = vunpack.c.l.b16 %v1263
        %v1838 = vunpack.c.h.b16 %v1263
        %v1839 = vunpack.c.l.b16 %v1264
        %v1840 = vunpack.c.h.b16 %v1264
        %v1841 = vunpack.c.l.b16 %v1265
        %v1842 = vunpack.c.h.b16 %v1265
        %v1843 = vunpack.c.l.b16 %v1266
        %v1844 = vunpack.c.l.b16 %v1267
        %v1845 = vunpack.c.h.b16 %v1267
        %v1846 = vunpack.c.l.b16 %v1268
        %v1847 = vunpack.c.h.b16 %v1268
        %v1848 = vunpack.c.l.b16 %v1269
        %v1849 = vunpack.c.h.b16 %v1269
        %v1850 = vunpack.c.l.b16 %v1270
        %v1851 = vunpack.c.h.b16 %v1270
        %v1852 = vunpack.c.l.b16 %v1271
        %v1853 = vunpack.c.l.b16 %v1272
        %v1854 = vunpack.c.h.b16 %v1272
        %v1855 = vunpack.c.l.b16 %v1273
        %v1856 = vunpack.c.h.b16 %v1273
        %v1857 = vunpack.c.l.b16 %v1274
        %v1858 = vunpack.c.h.b16 %v1274
        %v1859 = vunpack.c.l.b16 %v1275
        %v1860 = vunpack.c.h.b16 %v1275
        %v1861 = vunpack.c.l.b16 %v1276
        %v1862 = vunpack.c.l.b16 %v1277
        %v1863 = vunpack.c.h.b16 %v1277
        %v1864 = vunpack.c.l.b16 %v1278
        %v1865 = vunpack.c.h.b16 %v1278
        %v1866 = vunpack.c.l.b16 %v1279
        %v1867 = vunpack.c.h.b16 %v1279
        %v1868 = vunpack.c.l.b16 %v1280
        %v1869 = vunpack.c.h.b16 %v1280
        %v1870 = vunpack.c.l.b16 %v1281
        %v1871 = vunpack.c.l.b16 %v1282
        %v1872 = vunpack.c.h.b16 %v1282
        %v1873 = vunpack.c.l.b16 %v1283
        %v1874 = vunpack.c.h.b16 %v1283
        %v1875 = vunpack.c.l.b16 %v1284
        %v1876 = vunpack.c.h.b16 %v1284
        %v1877 = vunpack.c.l.b16 %v1285
        %v1878 = vunpack.c.h.b16 %v1285
        %v1879 = vunpack.c.l.b16 %v1286
        %v1880 = vunpack.c.l.b16 %v1287
        %v1881 = vunpack.c.h.b16 %v1287
        %v1882 = vunpack.c.l.b16 %v1288
        %v1883 = vunpack.c.h.b16 %v1288
        %v1884 = vunpack.c.l.b16 %v1289
        %v1885 = vunpack.c.h.b16 %v1289
        %v1886 = vunpack.c.l.b16 %v1290
        %v1887 = vunpack.c.h.b16 %v1290
        %v1888 = vunpack.c.l.b16 %v1291
        %v1889 = vunpack.c.l.b16 %v1292
        %v1890 = vunpack.c.h.b16 %v1292
        %v1891 = vunpack.c.l.b16 %v1293
        %v1892 = vunpack.c.h.b16 %v1293
        %v1893 = vunpack.c.l.b16 %v1294
        %v1894 = vunpack.c.h.b16 %v1294
        %v1895 = vunpack.c.l.b16 %v1295
        %v1896 = vunpack.c.h.b16 %v1295
        %v1897 = vunpack.c.l.b16 %v1296
        %v1898 = vunpack.c.l.b16 %v1297
        %v1899 = vunpack.c.h.b16 %v1297
        %v1900 = vunpack.c.l.b16 %v1298
        %v1901 = vunpack.c.h.b16 %v1298
        %v1902 = vunpack.c.l.b16 %v1299
        %v1903 = vunpack.c.h.b16 %v1299
        %v1904 = vunpack.c.l.b16 %v1300
        %v1905 = vunpack.c.h.b16 %v1300
        %v1906 = vunpack.c.l.b16 %v1301
        %v1907 = vunpack.c.l.b16 %v1302
        %v1908 = vunpack.c.h.b16 %v1302
        %v1909 = vunpack.c.l.b16 %v1303
        %v1910 = vunpack.c.h.b16 %v1303
        %v1911 = vunpack.c.l.b16 %v1304
        %v1912 = vunpack.c.h.b16 %v1304
        %v1913 = vunpack.c.l.b16 %v1305
        %v1914 = vunpack.c.h.b16 %v1305
        %v1915 = vunpack.c.l.b16 %v1306
        %v1916 = vunpack.c.l.b16 %v1307
        %v1917 = vunpack.c.h.b16 %v1307
        %v1918 = vunpack.c.l.b16 %v1308
        %v1919 = vunpack.c.h.b16 %v1308
        %v1920 = vunpack.c.l.b16 %v1309
        %v1921 = vunpack.c.h.b16 %v1309
        %v1922 = vunpack.c.l.b16 %v1310
        %v1923 = vunpack.c.h.b16 %v1310
        %v1924 = vunpack.c.l.b16 %v1311
        %v1925 = vunpack.c.l.b16 %v1312
        %v1926 = vunpack.c.h.b16 %v1312
        %v1927 = vunpack.c.l.b16 %v1313
        %v1928 = vunpack.c.h.b16 %v1313
        %v1929 = vunpack.c.l.b16 %v1314
        %v1930 = vunpack.c.h.b16 %v1314
        %v1931 = vunpack.c.l.b16 %v1315
        %v1932 = vunpack.c.h.b16 %v1315
        %v1933 = vunpack.c.l.b16 %v1316
        %v1934 = vunpack.c.l.b16 %v1317
        %v1935 = vunpack.c.h.b16 %v1317
        %v1936 = vunpack.c.l.b16 %v1318
        %v1937 = vunpack.c.h.b16 %v1318
        %v1938 = vunpack.c.l.b16 %v1319
        %v1939 = vunpack.c.h.b16 %v1319
        %v1940 = vunpack.c.l.b16 %v1320
        %v1941 = vunpack.c.h.b16 %v1320
        %v1942 = vunpack.c.l.b16 %v1321
        %v1943 = vunpack.c.l.b16 %v1322
        %v1944 = vunpack.c.h.b16 %v1322
        %v1945 = vunpack.c.l.b16 %v1323
        %v1946 = vunpack.c.h.b16 %v1323
        %v1947 = vunpack.c.l.b16 %v1324
        %v1948 = vunpack.c.h.b16 %v1324
        %v1949 = vunpack.c.l.b16 %v1325
        %v1950 = vunpack.c.h.b16 %v1325
        %v1951 = vunpack.c.l.b16 %v1326
        %v1952 = vunpack.c.l.b16 %v1327
        %v1953 = vunpack.c.h.b16 %v1327
        %v1954 = vunpack.c.l.b16 %v1328
        %v1955 = vunpack.c.h.b16 %v1328
        %v1956 = vunpack.c.l.b16 %v1329
        %v1957 = vunpack.c.h.b16 %v1329
        %v1958 = vunpack.c.l.b16 %v1330
        %v1959 = vunpack.c.h.b16 %v1330
        %v1960 = vunpack.c.l.b16 %v1331
        %v1961 = vunpack.c.l.b16 %v1332
        %v1962 = vunpack.c.h.b16 %v1332
        %v1963 = vunpack.c.l.b16 %v1333
        %v1964 = vunpack.c.h.b16 %v1333
        %v1965 = vunpack.c.l.b16 %v1334
        %v1966 = vunpack.c.h.b16 %v1334
        %v1967 = vunpack.c.l.b16 %v1335
        %v1968 = vunpack.c.h.b16 %v1335
        %v1969 = vunpack.c.l.b16 %v1336
        %v1970 = vunpack.c.l.b16 %v1337
        %v1971 = vunpack.c.h.b16 %v1337
        %v1972 = vunpack.c.l.b16 %v1338
        %v1973 = vunpack.c.h.b16 %v1338
        %v1974 = vunpack.c.l.b16 %v1339
        %v1975 = vunpack.c.h.b16 %v1339
        %v1976 = vunpack.c.l.b16 %v1340
        %v1977 = vunpack.c.h.b16 %v1340
        %v1978 = vunpack.c.l.b16 %v1341
        %v1979 = vunpack.c.l.b16 %v1342
        %v1980 = vunpack.c.h.b16 %v1342
        %v1981 = vunpack.c.l.b16 %v1343
        %v1982 = vunpack.c.h.b16 %v1343
        %v1983 = vunpack.c.l.b16 %v1344
        %v1984 = vunpack.c.h.b16 %v1344
        %v1985 = vunpack.c.l.b16 %v1345
        %v1986 = vunpack.c.h.b16 %v1345
        %v1987 = vunpack.c.l.b16 %v1346
        %v1988 = vunpack.c.l.b16 %v1347
        %v1989 = vunpack.c.h.b16 %v1347
        %v1990 = vunpack.c.l.b16 %v1348
        %v1991 = vunpack.c.h.b16 %v1348
        %v1992 = vunpack.c.l.b16 %v1349
        %v1993 = vunpack.c.h.b16 %v1349
        %v1994 = vunpack.c.l.b16 %v1350
        %v1995 = vunpack.c.h.b16 %v1350
        %v1996 = vunpack.c.l.b16 %v1351
        %v1997 = vunpack.c.l.b16 %v1352
        %v1998 = vunpack.c.h.b16 %v1352
        %v1999 = vunpack.c.l.b16 %v1353
        %v2000 = vunpack.c.h.b16 %v1353
        %v2001 = vunpack.c.l.b16 %v1354
        %v2002 = vunpack.c.h.b16 %v1354
        %v2003 = vunpack.c.l.b16 %v1355
        %v2004 = vunpack.c.h.b16 %v1355
        %v2005 = vunpack.c.l.b16 %v1356
        %v2006 = vunpack.c.l.b16 %v1357
        %v2007 = vunpack.c.h.b16 %v1357
        %v2008 = vunpack.c.l.b16 %v1358
        %v2009 = vunpack.c.h.b16 %v1358
        %v2010 = vunpack.c.l.b16 %v1359
        %v2011 = vunpack.c.h.b16 %v1359
        %v2012 = vunpack.c.l.b16 %v1360
        %v2013 = vunpack.c.h.b16 %v1360
        %v2014 = vunpack.c.l.b16 %v1361
        %v2015 = vunpack.c.l.b16 %v1362
        %v2016 = vunpack.c.h.b16 %v1362
        %v2017 = vunpack.c.l.b16 %v1363
        %v2018 = vunpack.c.h.b16 %v1363
        %v2019 = vunpack.c.l.b16 %v1364
        %v2020 = vunpack.c.h.b16 %v1364
        %v2021 = vunpack.c.l.b16 %v1365
        %v2022 = vunpack.c.h.b16 %v1365
        %v2023 = vunpack.c.l.b16 %v1366
        %v2024 = vunpack.c.l.b16 %v1367
        %v2025 = vunpack.c.h.b16 %v1367
        %v2026 = vunpack.c.l.b16 %v1368
        %v2027 = vunpack.c.h.b16 %v1368
        %v2028 = vunpack.c.l.b16 %v1369
        %v2029 = vunpack.c.h.b16 %v1369
        %v2030 = vunpack.c.l.b16 %v1370
        %v2031 = vunpack.c.h.b16 %v1370
        %v2032 = vunpack.c.l.b16 %v1371
        %v2033 = vunpack.c.l.b16 %v1372
        %v2034 = vunpack.c.h.b16 %v1372
        %v2035 = vunpack.c.l.b16 %v1373
        %v2036 = vunpack.c.h.b16 %v1373
        %v2037 = vunpack.c.l.b16 %v1374
        %v2038 = vunpack.c.h.b16 %v1374
        %v2039 = vunpack.c.l.b16 %v1375
        %v2040 = vunpack.c.h.b16 %v1375
        %v2041 = vunpack.c.l.b16 %v1376
        %v2042 = vunpack.c.l.b16 %v1377
        %v2043 = vunpack.c.h.b16 %v1377
        %v2044 = vunpack.c.l.b16 %v1378
        %v2045 = vunpack.c.h.b16 %v1378
        %v2046 = vunpack.c.l.b16 %v1379
        %v2047 = vunpack.c.h.b16 %v1379
        %v2048 = vunpack.c.l.b16 %v1380
        %v2049 = vunpack.c.h.b16 %v1380
        %v2050 = vunpack.c.l.b16 %v1381
        %v2051 = vunpack.c.l.b16 %v1382
        %v2052 = vunpack.c.h.b16 %v1382
        %v2053 = vunpack.c.l.b16 %v1383
        %v2054 = vunpack.c.h.b16 %v1383
        %v2055 = vunpack.c.l.b16 %v1384
        %v2056 = vunpack.c.h.b16 %v1384
        %v2057 = vunpack.c.l.b16 %v1385
        %v2058 = vunpack.c.h.b16 %v1385
        %v2059 = vunpack.c.l.b16 %v1386
        %v2060 = vunpack.c.l.b16 %v1387
        %v2061 = vunpack.c.h.b16 %v1387
        %v2062 = vunpack.c.l.b16 %v1388
        %v2063 = vunpack.c.h.b16 %v1388
        %v2064 = vunpack.c.l.b16 %v1389
        %v2065 = vunpack.c.h.b16 %v1389
        %v2066 = vunpack.c.l.b16 %v1390
        %v2067 = vunpack.c.h.b16 %v1390
        %v2068 = vunpack.c.l.b16 %v1391
        %v2069 = vunpack.c.l.b16 %v1392
        %v2070 = vunpack.c.h.b16 %v1392
        %v2071 = vunpack.c.l.b16 %v1393
        %v2072 = vunpack.c.h.b16 %v1393
        %v2073 = vunpack.c.l.b16 %v1394
        %v2074 = vunpack.c.h.b16 %v1394
        %v2075 = vunpack.c.l.b16 %v1395
        %v2076 = vunpack.c.h.b16 %v1395
        %v2077 = vunpack.c.l.b16 %v1396
        %v2078 = vunpack.c.l.b16 %v1397
        %v2079 = vunpack.c.h.b16 %v1397
        %v2080 = vunpack.c.l.b16 %v1398
        %v2081 = vunpack.c.h.b16 %v1398
        %v2082 = vunpack.c.l.b16 %v1399
        %v2083 = vunpack.c.h.b16 %v1399
        %v2084 = vunpack.c.l.b16 %v1400
        %v2085 = vunpack.c.h.b16 %v1400
        %v2086 = vunpack.c.l.b16 %v1401
        %v2087 = vunpack.c.l.b16 %v1402
        %v2088 = vunpack.c.h.b16 %v1402
        %v2089 = vunpack.c.l.b16 %v1403
        %v2090 = vunpack.c.h.b16 %v1403
        %v2091 = vunpack.c.l.b16 %v1404
        %v2092 = vunpack.c.h.b16 %v1404
        %v2093 = vunpack.c.l.b16 %v1405
        %v2094 = vunpack.c.h.b16 %v1405
        %v2095 = vunpack.c.l.b16 %v1406
        %v2096 = vunpack.c.l.b16 %v1407
        %v2097 = vunpack.c.h.b16 %v1407
        %v2098 = vunpack.c.l.b16 %v1408
        %v2099 = vunpack.c.h.b16 %v1408
        %v2100 = vunpack.c.l.b16 %v1409
        %v2101 = vunpack.c.h.b16 %v1409
        %v2102 = vunpack.c.l.b16 %v1410
        %v2103 = vunpack.c.h.b16 %v1410
        %v2104 = vunpack.c.l.b16 %v1411
        %v2105 = vunpack.c.l.b16 %v1412
        %v2106 = vunpack.c.h.b16 %v1412
        %v2107 = vunpack.c.l.b16 %v1413
        %v2108 = vunpack.c.h.b16 %v1413
        %v2109 = vunpack.c.l.b16 %v1414
        %v2110 = vunpack.c.h.b16 %v1414
        %v2111 = vunpack.c.l.b16 %v1415
        %v2112 = vunpack.c.h.b16 %v1415
        %v2113 = vunpack.c.l.b16 %v1416
        %v2114 = vunpack.c.l.b16 %v1417
        %v2115 = vunpack.c.h.b16 %v1417
        %v2116 = vunpack.c.l.b16 %v1418
        %v2117 = vunpack.c.h.b16 %v1418
        %v2118 = vunpack.c.l.b16 %v1419
        %v2119 = vunpack.c.h.b16 %v1419
        %v2120 = vunpack.c.l.b16 %v1420
        %v2121 = vunpack.c.h.b16 %v1420
        %v2122 = vunpack.c.l.b16 %v1421
        %v2123 = vunpack.c.l.b16 %v1422
        %v2124 = vunpack.c.h.b16 %v1422
        %v2125 = vunpack.c.l.b16 %v1423
        %v2126 = vunpack.c.h.b16 %v1423
        %v2127 = vunpack.c.l.b16 %v1424
        %v2128 = vunpack.c.h.b16 %v1424
        %v2129 = vunpack.c.l.b16 %v1425
        %v2130 = vunpack.c.h.b16 %v1425
        %v2131 = vunpack.c.l.b16 %v1426
        %v2132 = vunpack.c.l.b16 %v1427
        %v2133 = vunpack.c.h.b16 %v1427
        %v2134 = vunpack.c.l.b16 %v1428
        %v2135 = vunpack.c.h.b16 %v1428
        %v2136 = vunpack.c.l.b16 %v1429
        %v2137 = vunpack.c.h.b16 %v1429
        %v2138 = vunpack.c.l.b16 %v1430
        %v2139 = vunpack.c.h.b16 %v1430
        %v2140 = vunpack.c.l.b16 %v1431
        %v2141 = vunpack.c.l.b16 %v1432
        %v2142 = vunpack.c.h.b16 %v1432
        %v2143 = vunpack.c.l.b16 %v1433
        %v2144 = vunpack.c.h.b16 %v1433
        %v2145 = vunpack.c.l.b16 %v1434
        %v2146 = vunpack.c.h.b16 %v1434
        %v2147 = vunpack.c.l.b16 %v1435
        %v2148 = vunpack.c.h.b16 %v1435
        %v2149 = vunpack.c.l.b16 %v1436
        %v2150 = vunpack.c.l.b16 %v1437
        %v2151 = vunpack.c.h.b16 %v1437
        %v2152 = vunpack.c.l.b16 %v1438
        %v2153 = vunpack.c.h.b16 %v1438
        %v2154 = vunpack.c.l.b16 %v1439
        %v2155 = vunpack.c.h.b16 %v1439
        %v2156 = vunpack.c.l.b16 %v1440
        %v2157 = vunpack.c.h.b16 %v1440
        %v2158 = vunpack.c.l.b16 %v1441
        %v2159 = vunpack.c.l.b16 %v1442
        %v2160 = vunpack.c.h.b16 %v1442
        %v2161 = vunpack.c.l.b16 %v1443
        %v2162 = vunpack.c.h.b16 %v1443
        %v2163 = vunpack.c.l.b16 %v1444
        %v2164 = vunpack.c.h.b16 %v1444
        %v2165 = vunpack.c.l.b16 %v1445
        %v2166 = vunpack.c.h.b16 %v1445
        %v2167 = vunpack.c.l.b16 %v1446
        %v2168 = vpack.c.b16 %v1745, %v1736
        %v2169 = vpack.c.b16 %v1746, %v1737
        %v2170 = vpack.c.b16 %v1747, %v1738
        %v2171 = vpack.c.b16 %v1748, %v1739
        %v2172 = vpack.c.b16 %v1749, %v1740
        %v2173 = vpack.c.b16 %v1750, %v1741
        %v2174 = vpack.c.b16 %v1751, %v1742
        %v2175 = vpack.c.b16 %v1752, %v1743
        %v2176 = vpack.c.b16 %v1753, %v1744
        %v2177 = vpack.c.b16 %v1763, %v1754
        %v2178 = vpack.c.b16 %v1764, %v1755
        %v2179 = vpack.c.b16 %v1765, %v1756
        %v2180 = vpack.c.b16 %v1766, %v1757
        %v2181 = vpack.c.b16 %v1767, %v1758
        %v2182 = vpack.c.b16 %v1768, %v1759
        %v2183 = vpack.c.b16 %v1769, %v1760
        %v2184 = vpack.c.b16 %v1770, %v1761
        %v2185 = vpack.c.b16 %v1771, %v1762
        %v2186 = vpack.c.b16 %v1781, %v1772
        %v2187 = vpack.c.b16 %v1782, %v1773
        %v2188 = vpack.c.b16 %v1783, %v1774
        %v2189 = vpack.c.b16 %v1784, %v1775
        %v2190 = vpack.c.b16 %v1785, %v1776
        %v2191 = vpack.c.b16 %v1786, %v1777
        %v2192 = vpack.c.b16 %v1787, %v1778
        %v2193 = vpack.c.b16 %v1788, %v1779
        %v2194 = vpack.c.b16 %v1789, %v1780
        %v2195 = vpack.c.b16 %v1799, %v1790
        %v2196 = vpack.c.b16 %v1800, %v1791
        %v2197 = vpack.c.b16 %v1801, %v1792
        %v2198 = vpack.c.b16 %v1802, %v1793
        %v2199 = vpack.c.b16 %v1803, %v1794
        %v2200 = vpack.c.b16 %v1804, %v1795
        %v2201 = vpack.c.b16 %v1805, %v1796
        %v2202 = vpack.c.b16 %v1806, %v1797
        %v2203 = vpack.c.b16 %v1807, %v1798
        %v2204 = vpack.c.b16 %v1817, %v1808
        %v2205 = vpack.c.b16 %v1818, %v1809
        %v2206 = vpack.c.b16 %v1819, %v1810
        %v2207 = vpack.c.b16 %v1820, %v1811
        %v2208 = vpack.c.b16 %v1821, %v1812
        %v2209 = vpack.c.b16 %v1822, %v1813
        %v2210 = vpack.c.b16 %v1823, %v1814
        %v2211 = vpack.c.b16 %v1824, %v1815
        %v2212 = vpack.c.b16 %v1825, %v1816
        %v2213 = vpack.c.b16 %v1835, %v1826
        %v2214 = vpack.c.b16 %v1836, %v1827
        %v2215 = vpack.c.b16 %v1837, %v1828
        %v2216 = vpack.c.b16 %v1838, %v1829
        %v2217 = vpack.c.b16 %v1839, %v1830
        %v2218 = vpack.c.b16 %v1840, %v1831
        %v2219 = vpack.c.b16 %v1841, %v1832
        %v2220 = vpack.c.b16 %v1842, %v1833
        %v2221 = vpack.c.b16 %v1843, %v1834
        %v2222 = vpack.c.b16 %v1853, %v1844
        %v2223 = vpack.c.b16 %v1854, %v1845
        %v2224 = vpack.c.b16 %v1855, %v1846
        %v2225 = vpack.c.b16 %v1856, %v1847
        %v2226 = vpack.c.b16 %v1857, %v1848
        %v2227 = vpack.c.b16 %v1858, %v1849
        %v2228 = vpack.c.b16 %v1859, %v1850
        %v2229 = vpack.c.b16 %v1860, %v1851
        %v2230 = vpack.c.b16 %v1861, %v1852
        %v2231 = vpack.c.b16 %v1871, %v1862
        %v2232 = vpack.c.b16 %v1872, %v1863
        %v2233 = vpack.c.b16 %v1873, %v1864
        %v2234 = vpack.c.b16 %v1874, %v1865
        %v2235 = vpack.c.b16 %v1875, %v1866
        %v2236 = vpack.c.b16 %v1876, %v1867
        %v2237 = vpack.c.b16 %v1877, %v1868
        %v2238 = vpack.c.b16 %v1878, %v1869
        %v2239 = vpack.c.b16 %v1879, %v1870
        %v2240 = vpack.c.b16 %v1889, %v1880
        %v2241 = vpack.c.b16 %v1890, %v1881
        %v2242 = vpack.c.b16 %v1891, %v1882
        %v2243 = vpack.c.b16 %v1892, %v1883
        %v2244 = vpack.c.b16 %v1893, %v1884
        %v2245 = vpack.c.b16 %v1894, %v1885
        %v2246 = vpack.c.b16 %v1895, %v1886
        %v2247 = vpack.c.b16 %v1896, %v1887
        %v2248 = vpack.c.b16 %v1897, %v1888
        %v2249 = vpack.c.b16 %v1907, %v1898
        %v2250 = vpack.c.b16 %v1908, %v1899
        %v2251 = vpack.c.b16 %v1909, %v1900
        %v2252 = vpack.c.b16 %v1910, %v1901
        %v2253 = vpack.c.b16 %v1911, %v1902
        %v2254 = vpack.c.b16 %v1912, %v1903
        %v2255 = vpack.c.b16 %v1913, %v1904
        %v2256 = vpack.c.b16 %v1914, %v1905
        %v2257 = vpack.c.b16 %v1915, %v1906
        %v2258 = vpack.c.b16 %v1925, %v1916
        %v2259 = vpack.c.b16 %v1926, %v1917
        %v2260 = vpack.c.b16 %v1927, %v1918
        %v2261 = vpack.c.b16 %v1928, %v1919
        %v2262 = vpack.c.b16 %v1929, %v1920
        %v2263 = vpack.c.b16 %v1930, %v1921
        %v2264 = vpack.c.b16 %v1931, %v1922
        %v2265 = vpack.c.b16 %v1932, %v1923
        %v2266 = vpack.c.b16 %v1933, %v1924
        %v2267 = vpack.c.b16 %v1943, %v1934
        %v2268 = vpack.c.b16 %v1944, %v1935
        %v2269 = vpack.c.b16 %v1945, %v1936
        %v2270 = vpack.c.b16 %v1946, %v1937
        %v2271 = vpack.c.b16 %v1947, %v1938
        %v2272 = vpack.c.b16 %v1948, %v1939
        %v2273 = vpack.c.b16 %v1949, %v1940
        %v2274 = vpack.c.b16 %v1950, %v1941
        %v2275 = vpack.c.b16 %v1951, %v1942
        %v2276 = vpack.c.b16 %v1961, %v1952
        %v2277 = vpack.c.b16 %v1962, %v1953
        %v2278 = vpack.c.b16 %v1963, %v1954
        %v2279 = vpack.c.b16 %v1964, %v1955
        %v2280 = vpack.c.b16 %v1965, %v1956
        %v2281 = vpack.c.b16 %v1966, %v1957
        %v2282 = vpack.c.b16 %v1967, %v1958
        %v2283 = vpack.c.b16 %v1968, %v1959
        %v2284 = vpack.c.b16 %v1969, %v1960
        %v2285 = vpack.c.b16 %v1979, %v1970
        %v2286 = vpack.c.b16 %v1980, %v1971
        %v2287 = vpack.c.b16 %v1981, %v1972
        %v2288 = vpack.c.b16 %v1982, %v1973
        %v2289 = vpack.c.b16 %v1983, %v1974
        %v2290 = vpack.c.b16 %v1984, %v1975
        %v2291 = vpack.c.b16 %v1985, %v1976
        %v2292 = vpack.c.b16 %v1986, %v1977
        %v2293 = vpack.c.b16 %v1987, %v1978
        %v2294 = vpack.c.b16 %v1997, %v1988
        %v2295 = vpack.c.b16 %v1998, %v1989
        %v2296 = vpack.c.b16 %v1999, %v1990
        %v2297 = vpack.c.b16 %v2000, %v1991
        %v2298 = vpack.c.b16 %v2001, %v1992
        %v2299 = vpack.c.b16 %v2002, %v1993
        %v2300 = vpack.c.b16 %v2003, %v1994
        %v2301 = vpack.c.b16 %v2004, %v1995
        %v2302 = vpack.c.b16 %v2005, %v1996
        %v2303 = vpack.c.b16 %v2015, %v2006
        %v2304 = vpack.c.b16 %v2016, %v2007
        %v2305 = vpack.c.b16 %v2017, %v2008
        %v2306 = vpack.c.b16 %v2018, %v2009
        %v2307 = vpack.c.b16 %v2019, %v2010
        %v2308 = vpack.c.b16 %v2020, %v2011
        %v2309 = vpack.c.b16 %v2021, %v2012
        %v2310 = vpack.c.b16 %v2022, %v2013
        %v2311 = vpack.c.b16 %v2023, %v2014
        %v2312 = vpack.c.b16 %v2033, %v2024
        %v2313 = vpack.c.b16 %v2034, %v2025
        %v2314 = vpack.c.b16 %v2035, %v2026
        %v2315 = vpack.c.b16 %v2036, %v2027
        %v2316 = vpack.c.b16 %v2037, %v2028
        %v2317 = vpack.c.b16 %v2038, %v2029
        %v2318 = vpack.c.b16 %v2039, %v2030
        %v2319 = vpack.c.b16 %v2040, %v2031
        %v2320 = vpack.c.b16 %v2041, %v2032
        %v2321 = vpack.c.b16 %v2051, %v2042
        %v2322 = vpack.c.b16 %v2052, %v2043
        %v2323 = vpack.c.b16 %v2053, %v2044
        %v2324 = vpack.c.b16 %v2054, %v2045
        %v2325 = vpack.c.b16 %v2055, %v2046
        %v2326 = vpack.c.b16 %v2056, %v2047
        %v2327 = vpack.c.b16 %v2057, %v2048
        %v2328 = vpack.c.b16 %v2058, %v2049
        %v2329 = vpack.c.b16 %v2059, %v2050
        %v2330 = vpack.c.b16 %v2069, %v2060
        %v2331 = vpack.c.b16 %v2070, %v2061
        %v2332 = vpack.c.b16 %v2071, %v2062
        %v2333 = vpack.c.b16 %v2072, %v2063
        %v2334 = vpack.c.b16 %v2073, %v2064
        %v2335 = vpack.c.b16 %v2074, %v2065
        %v2336 = vpack.c.b16 %v2075, %v2066
        %v2337 = vpack.c.b16 %v2076, %v2067
        %v2338 = vpack.c.b16 %v2077, %v2068
        %v2339 = vpack.c.b16 %v2087, %v2078
        %v2340 = vpack.c.b16 %v2088, %v2079
        %v2341 = vpack.c.b16 %v2089, %v2080
        %v2342 = vpack.c.b16 %v2090, %v2081
        %v2343 = vpack.c.b16 %v2091, %v2082
        %v2344 = vpack.c.b16 %v2092, %v2083
        %v2345 = vpack.c.b16 %v2093, %v2084
        %v2346 = vpack.c.b16 %v2094, %v2085
        %v2347 = vpack.c.b16 %v2095, %v2086
        %v2348 = vpack.c.b16 %v2105, %v2096
        %v2349 = vpack.c.b16 %v2106, %v2097
        %v2350 = vpack.c.b16 %v2107, %v2098
        %v2351 = vpack.c.b16 %v2108, %v2099
        %v2352 = vpack.c.b16 %v2109, %v2100
        %v2353 = vpack.c.b16 %v2110, %v2101
        %v2354 = vpack.c.b16 %v2111, %v2102
        %v2355 = vpack.c.b16 %v2112, %v2103
        %v2356 = vpack.c.b16 %v2113, %v2104
        %v2357 = vpack.c.b16 %v2123, %v2114
        %v2358 = vpack.c.b16 %v2124, %v2115
        %v2359 = vpack.c.b16 %v2125, %v2116
        %v2360 = vpack.c.b16 %v2126, %v2117
        %v2361 = vpack.c.b16 %v2127, %v2118
        %v2362 = vpack.c.b16 %v2128, %v2119
        %v2363 = vpack.c.b16 %v2129, %v2120
        %v2364 = vpack.c.b16 %v2130, %v2121
        %v2365 = vpack.c.b16 %v2131, %v2122
        %v2366 = vpack.c.b16 %v2141, %v2132
        %v2367 = vpack.c.b16 %v2142, %v2133
        %v2368 = vpack.c.b16 %v2143, %v2134
        %v2369 = vpack.c.b16 %v2144, %v2135
        %v2370 = vpack.c.b16 %v2145, %v2136
        %v2371 = vpack.c.b16 %v2146, %v2137
        %v2372 = vpack.c.b16 %v2147, %v2138
        %v2373 = vpack.c.b16 %v2148, %v2139
        %v2374 = vpack.c.b16 %v2149, %v2140
        %v2375 = vpack.c.b16 %v2159, %v2150
        %v2376 = vpack.c.b16 %v2160, %v2151
        %v2377 = vpack.c.b16 %v2161, %v2152
        %v2378 = vpack.c.b16 %v2162, %v2153
        %v2379 = vpack.c.b16 %v2163, %v2154
        %v2380 = vpack.c.b16 %v2164, %v2155
        %v2381 = vpack.c.b16 %v2165, %v2156
        %v2382 = vpack.c.b16 %v2166, %v2157
        %v2383 = vpack.c.b16 %v2167, %v2158
        %2600 = vmatprep.subr.bf16.mxu0 %v2169
        %2601 = vmatpush1.bf16.msra.mxu0 %v2168
        %2602 = vmatprep.subr.bf16.mxu0 %v2178
        %2603 = vmatpush1.bf16.msra.mxu0 %v2177
        %2604 = vmatprep.subr.bf16.mxu0 %v2187
        %2605 = vmatpush1.bf16.msra.mxu0 %v2186
        %2606 = vmatprep.subr.bf16.mxu0 %v2196
        %2607 = vmatpush1.bf16.msra.mxu0 %v2195
        %2608 = vmatprep.subr.bf16.mxu0 %v2205
        %2609 = vmatpush1.bf16.msra.mxu0 %v2204
        %2610 = vmatprep.subr.bf16.mxu0 %v2214
        %2611 = vmatpush1.bf16.msra.mxu0 %v2213
        %2612 = vmatprep.subr.bf16.mxu0 %v2223
        %2613 = vmatpush1.bf16.msra.mxu0 %v2222
        %2614 = vmatprep.subr.bf16.mxu0 %v2232
        %2615 = vmatpush1.bf16.msra.mxu0 %v2231
        %2616 = vmatprep.subr.bf16.mxu0 %v2241
        %2617 = vmatpush1.bf16.msra.mxu0 %v2240
        %2618 = vmatprep.subr.bf16.mxu0 %v2250
        %2619 = vmatpush1.bf16.msra.mxu0 %v2249
        %2620 = vmatprep.subr.bf16.mxu0 %v2259
        %2621 = vmatpush1.bf16.msra.mxu0 %v2258
        %2622 = vmatprep.subr.bf16.mxu0 %v2268
        %2623 = vmatpush1.bf16.msra.mxu0 %v2267
        %2624 = vmatprep.subr.bf16.mxu0 %v2277
        %2625 = vmatpush1.bf16.msra.mxu0 %v2276
        %2626 = vmatprep.subr.bf16.mxu0 %v2286
        %2627 = vmatpush1.bf16.msra.mxu0 %v2285
        %2628 = vmatprep.subr.bf16.mxu0 %v2295
        %2629 = vmatpush1.bf16.msra.mxu0 %v2294
        %2630 = vmatprep.subr.bf16.mxu0 %v2304
        %2631 = vmatpush1.bf16.msra.mxu0 %v2303
        %2632 = vmatprep.mubr.bf16.mxu0 %v1196
        %2633 = vmatmul.mubr.bf16.gmra.mrb[0].mxu0 %v1195
        %v2634 = vpop.f32.mrb[0].mxu0
        %v2635 = vadd.f32 %v1454, %v2634
        %v2636 = vpop.f32.mrb[0].mxu0
        %v2637 = vadd.f32 %v1458, %v2636
        %v2638 = vpop.f32.mrb[0].mxu0
        %v2639 = vadd.f32 %v1454, %v2638
        %v2640 = vpop.f32.mrb[0].mxu0
        %v2641 = vadd.f32 %v1458, %v2640
        %2642 = vmatprep.mubr.bf16.mxu0 %v1199
        %2643 = vmatmul.mubr.bf16.gmra.mrb[0].mxu0 %v1198
        %v2644 = vpop.f32.mrb[0].mxu0
        %v2645 = vadd.f32 %v1454, %v2644
        %v2646 = vpop.f32.mrb[0].mxu0
        %v2647 = vadd.f32 %v1458, %v2646
        %v2648 = vpop.f32.mrb[0].mxu0
        %v2649 = vadd.f32 %v1454, %v2648
        %v2650 = vpop.f32.mrb[0].mxu0
        %v2651 = vadd.f32 %v1458, %v2650
        %2652 = vmatprep.mubr.bf16.mxu0 %v1202
        %2653 = vmatmul.mubr.bf16.gmra.mrb[0].mxu0 %v1201
        %v2654 = vpop.f32.mrb[0].mxu0
        %v2655 = vadd.f32 %v1454, %v2654
        %v2656 = vpop.f32.mrb[0].mxu0
        %v2657 = vadd.f32 %v1458, %v2656
        %v2658 = vpop.f32.mrb[0].mxu0
        %v2659 = vadd.f32 %v1454, %v2658
        %v2660 = vpop.f32.mrb[0].mxu0
        %v2661 = vadd.f32 %v1458, %v2660
        %2662 = vmatprep.mubr.bf16.mxu0 %v1205
        %2663 = vmatmul.mubr.bf16.gmra.mrb[0].mxu0 %v1204
        %v2664 = vpop.f32.mrb[0].mxu0
        %v2665 = vadd.f32 %v1454, %v2664
        %v2666 = vpop.f32.mrb[0].mxu0
        %v2667 = vadd.f32 %v1458, %v2666
        %v2668 = vpop.f32.mrb[0].mxu0
        %v2669 = vadd.f32 %v1454, %v2668
        %v2670 = vpop.f32.mrb[0].mxu0
        %v2671 = vadd.f32 %v1458, %v2670
        %2672 = vdwg.mxu0
        %2673 = vmatprep.subr.bf16.mxu0 %v2313
        %2674 = vmatpush1.bf16.msra.mxu0 %v2312
        %2675 = vmatprep.subr.bf16.mxu0 %v2322
        %2676 = vmatpush1.bf16.msra.mxu0 %v2321
        %2677 = vmatprep.subr.bf16.mxu0 %v2331
        %2678 = vmatpush1.bf16.msra.mxu0 %v2330
        %2679 = vmatprep.subr.bf16.mxu0 %v2340
        %2680 = vmatpush1.bf16.msra.mxu0 %v2339
        %2681 = vmatprep.subr.bf16.mxu0 %v2349
        %2682 = vmatpush1.bf16.msra.mxu0 %v2348
        %2683 = vmatprep.subr.bf16.mxu0 %v2358
        %2684 = vmatpush1.bf16.msra.mxu0 %v2357
        %2685 = vmatprep.subr.bf16.mxu0 %v2367
        %2686 = vmatpush1.bf16.msra.mxu0 %v2366
        %2687 = vmatprep.subr.bf16.mxu0 %v2376
        %2688 = vmatpush1.bf16.msra.mxu0 %v2375
        %2689 = vmatprep.subr.bf16.mxu0 0
        %2690 = vmatpush1.bf16.msra.mxu0 0
        %2691 = vmatprep.subr.bf16.mxu0 0
        %2692 = vmatpush1.bf16.msra.mxu0 0
        %2693 = vmatprep.subr.bf16.mxu0 0
        %2694 = vmatpush1.bf16.msra.mxu0 0
        %2695 = vmatprep.subr.bf16.mxu0 0
        %2696 = vmatpush1.bf16.msra.mxu0 0
        %2697 = vmatprep.subr.bf16.mxu0 0
        %2698 = vmatpush1.bf16.msra.mxu0 0
        %2699 = vmatprep.subr.bf16.mxu0 0
        %2700 = vmatpush1.bf16.msra.mxu0 0
        %2701 = vmatprep.subr.bf16.mxu0 0
        %2702 = vmatpush1.bf16.msra.mxu0 0
        %2703 = vmatprep.subr.bf16.mxu0 0
        %2704 = vmatpush1.bf16.msra.mxu0 0
        %2705 = vmatprep.mubr.bf16.mxu0 0
        %2706 = vmatmul.mubr.bf16.gmra.mrb[0].mxu0 %v1197
        %v2707 = vpop.f32.mrb[0].mxu0
        %v2708 = vadd.f32 %v2635, %v2707
        %v2709 = vpop.f32.mrb[0].mxu0
        %v2710 = vadd.f32 %v2637, %v2709
        %v2711 = vpop.f32.mrb[0].mxu0
        %v2712 = vadd.f32 %v2639, %v2711
        %v2713 = vpop.f32.mrb[0].mxu0
        %v2714 = vadd.f32 %v2641, %v2713
        %2715 = vmatprep.mubr.bf16.mxu0 0
        %2716 = vmatmul.mubr.bf16.gmra.mrb[0].mxu0 %v1200
        %v2717 = vpop.f32.mrb[0].mxu0
        %v2718 = vadd.f32 %v2645, %v2717
        %v2719 = vpop.f32.mrb[0].mxu0
        %v2720 = vadd.f32 %v2647, %v2719
        %v2721 = vpop.f32.mrb[0].mxu0
        %v2722 = vadd.f32 %v2649, %v2721
        %v2723 = vpop.f32.mrb[0].mxu0
        %v2724 = vadd.f32 %v2651, %v2723
        %2725 = vmatprep.mubr.bf16.mxu0 0
        %2726 = vmatmul.mubr.bf16.gmra.mrb[0].mxu0 %v1203
        %v2727 = vpop.f32.mrb[0].mxu0
        %v2728 = vadd.f32 %v2655, %v2727
        %v2729 = vpop.f32.mrb[0].mxu0
        %v2730 = vadd.f32 %v2657, %v2729
        %v2731 = vpop.f32.mrb[0].mxu0
        %v2732 = vadd.f32 %v2659, %v2731
        %v2733 = vpop.f32.mrb[0].mxu0
        %v2734 = vadd.f32 %v2661, %v2733
        %2735 = vmatprep.mubr.bf16.mxu0 0
        %2736 = vmatmul.mubr.bf16.gmra.mrb[0].mxu0 %v1206
        %v2737 = vpop.f32.mrb[0].mxu0
        %v2738 = vadd.f32 %v2665, %v2737
        %v2739 = vpop.f32.mrb[0].mxu0
        %v2740 = vadd.f32 %v2667, %v2739
        %v2741 = vpop.f32.mrb[0].mxu0
        %v2742 = vadd.f32 %v2669, %v2741
        %v2743 = vpop.f32.mrb[0].mxu0
        %v2744 = vadd.f32 %v2671, %v2743
        %2745 = vdwg.mxu0
        %2746 = vmatprep.subr.bf16.mxu0 %v2171
        %2747 = vmatpush1.bf16.msra.mxu0 %v2170
        %2748 = vmatprep.subr.bf16.mxu0 %v2180
        %2749 = vmatpush1.bf16.msra.mxu0 %v2179
        %2750 = vmatprep.subr.bf16.mxu0 %v2189
        %2751 = vmatpush1.bf16.msra.mxu0 %v2188
        %2752 = vmatprep.subr.bf16.mxu0 %v2198
        %2753 = vmatpush1.bf16.msra.mxu0 %v2197
        %2754 = vmatprep.subr.bf16.mxu0 %v2207
        %2755 = vmatpush1.bf16.msra.mxu0 %v2206
        %2756 = vmatprep.subr.bf16.mxu0 %v2216
        %2757 = vmatpush1.bf16.msra.mxu0 %v2215
        %2758 = vmatprep.subr.bf16.mxu0 %v2225
        %2759 = vmatpush1.bf16.msra.mxu0 %v2224
        %2760 = vmatprep.subr.bf16.mxu0 %v2234
        %2761 = vmatpush1.bf16.msra.mxu0 %v2233
        %2762 = vmatprep.subr.bf16.mxu0 %v2243
        %2763 = vmatpush1.bf16.msra.mxu0 %v2242
        %2764 = vmatprep.subr.bf16.mxu0 %v2252
        %2765 = vmatpush1.bf16.msra.mxu0 %v2251
        %2766 = vmatprep.subr.bf16.mxu0 %v2261
        %2767 = vmatpush1.bf16.msra.mxu0 %v2260
        %2768 = vmatprep.subr.bf16.mxu0 %v2270
        %2769 = vmatpush1.bf16.msra.mxu0 %v2269
        %2770 = vmatprep.subr.bf16.mxu0 %v2279
        %2771 = vmatpush1.bf16.msra.mxu0 %v2278
        %2772 = vmatprep.subr.bf16.mxu0 %v2288
        %2773 = vmatpush1.bf16.msra.mxu0 %v2287
        %2774 = vmatprep.subr.bf16.mxu0 %v2297
        %2775 = vmatpush1.bf16.msra.mxu0 %v2296
        %2776 = vmatprep.subr.bf16.mxu0 %v2306
        %2777 = vmatpush1.bf16.msra.mxu0 %v2305
        %2778 = vmatprep.mubr.bf16.mxu0 %v1196
        %2779 = vmatmul.mubr.bf16.gmra.mrb[0].mxu0 %v1195
        %v2780 = vpop.f32.mrb[0].mxu0
        %v2781 = vadd.f32 %v1462, %v2780
        %v2782 = vpop.f32.mrb[0].mxu0
        %v2783 = vadd.f32 %v1466, %v2782
        %v2784 = vpop.f32.mrb[0].mxu0
        %v2785 = vadd.f32 %v1462, %v2784
        %v2786 = vpop.f32.mrb[0].mxu0
        %v2787 = vadd.f32 %v1466, %v2786
        %2788 = vmatprep.mubr.bf16.mxu0 %v1199
        %2789 = vmatmul.mubr.bf16.gmra.mrb[0].mxu0 %v1198
        %v2790 = vpop.f32.mrb[0].mxu0
        %v2791 = vadd.f32 %v1462, %v2790
        %v2792 = vpop.f32.mrb[0].mxu0
        %v2793 = vadd.f32 %v1466, %v2792
        %v2794 = vpop.f32.mrb[0].mxu0
        %v2795 = vadd.f32 %v1462, %v2794
        %v2796 = vpop.f32.mrb[0].mxu0
        %v2797 = vadd.f32 %v1466, %v2796
        %2798 = vmatprep.mubr.bf16.mxu0 %v1202
        %2799 = vmatmul.mubr.bf16.gmra.mrb[0].mxu0 %v1201
        %v2800 = vpop.f32.mrb[0].mxu0
        %v2801 = vadd.f32 %v1462, %v2800
        %v2802 = vpop.f32.mrb[0].mxu0
        %v2803 = vadd.f32 %v1466, %v2802
        %v2804 = vpop.f32.mrb[0].mxu0
        %v2805 = vadd.f32 %v1462, %v2804
        %v2806 = vpop.f32.mrb[0].mxu0
        %v2807 = vadd.f32 %v1466, %v2806
        %2808 = vmatprep.mubr.bf16.mxu0 %v1205
        %2809 = vmatmul.mubr.bf16.gmra.mrb[0].mxu0 %v1204
        %v2810 = vpop.f32.mrb[0].mxu0
        %v2811 = vadd.f32 %v1462, %v2810
        %v2812 = vpop.f32.mrb[0].mxu0
        %v2813 = vadd.f32 %v1466, %v2812
        %v2814 = vpop.f32.mrb[0].mxu0
        %v2815 = vadd.f32 %v1462, %v2814
        %v2816 = vpop.f32.mrb[0].mxu0
        %v2817 = vadd.f32 %v1466, %v2816
        %2818 = vdwg.mxu0
        %2819 = vmatprep.subr.bf16.mxu0 %v2315
        %2820 = vmatpush1.bf16.msra.mxu0 %v2314
        %2821 = vmatprep.subr.bf16.mxu0 %v2324
        %2822 = vmatpush1.bf16.msra.mxu0 %v2323
        %2823 = vmatprep.subr.bf16.mxu0 %v2333
        %2824 = vmatpush1.bf16.msra.mxu0 %v2332
        %2825 = vmatprep.subr.bf16.mxu0 %v2342
        %2826 = vmatpush1.bf16.msra.mxu0 %v2341
        %2827 = vmatprep.subr.bf16.mxu0 %v2351
        %2828 = vmatpush1.bf16.msra.mxu0 %v2350
        %2829 = vmatprep.subr.bf16.mxu0 %v2360
        %2830 = vmatpush1.bf16.msra.mxu0 %v2359
        %2831 = vmatprep.subr.bf16.mxu0 %v2369
        %2832 = vmatpush1.bf16.msra.mxu0 %v2368
        %2833 = vmatprep.subr.bf16.mxu0 %v2378
        %2834 = vmatpush1.bf16.msra.mxu0 %v2377
        %2835 = vmatprep.subr.bf16.mxu0 0
        %2836 = vmatpush1.bf16.msra.mxu0 0
        %2837 = vmatprep.subr.bf16.mxu0 0
        %2838 = vmatpush1.bf16.msra.mxu0 0
        %2839 = vmatprep.subr.bf16.mxu0 0
        %2840 = vmatpush1.bf16.msra.mxu0 0
        %2841 = vmatprep.subr.bf16.mxu0 0
        %2842 = vmatpush1.bf16.msra.mxu0 0
        %2843 = vmatprep.subr.bf16.mxu0 0
        %2844 = vmatpush1.bf16.msra.mxu0 0
        %2845 = vmatprep.subr.bf16.mxu0 0
        %2846 = vmatpush1.bf16.msra.mxu0 0
        %2847 = vmatprep.subr.bf16.mxu0 0
        %2848 = vmatpush1.bf16.msra.mxu0 0
        %2849 = vmatprep.subr.bf16.mxu0 0
        %2850 = vmatpush1.bf16.msra.mxu0 0
        %2851 = vmatprep.mubr.bf16.mxu0 0
        %2852 = vmatmul.mubr.bf16.gmra.mrb[0].mxu0 %v1197
        %v2853 = vpop.f32.mrb[0].mxu0
        %v2854 = vadd.f32 %v2781, %v2853
        %v2855 = vpop.f32.mrb[0].mxu0
        %v2856 = vadd.f32 %v2783, %v2855
        %v2857 = vpop.f32.mrb[0].mxu0
        %v2858 = vadd.f32 %v2785, %v2857
        %v2859 = vpop.f32.mrb[0].mxu0
        %v2860 = vadd.f32 %v2787, %v2859
        %2861 = vmatprep.mubr.bf16.mxu0 0
        %2862 = vmatmul.mubr.bf16.gmra.mrb[0].mxu0 %v1200
        %v2863 = vpop.f32.mrb[0].mxu0
        %v2864 = vadd.f32 %v2791, %v2863
        %v2865 = vpop.f32.mrb[0].mxu0
        %v2866 = vadd.f32 %v2793, %v2865
        %v2867 = vpop.f32.mrb[0].mxu0
        %v2868 = vadd.f32 %v2795, %v2867
        %v2869 = vpop.f32.mrb[0].mxu0
        %v2870 = vadd.f32 %v2797, %v2869
        %2871 = vmatprep.mubr.bf16.mxu0 0
        %2872 = vmatmul.mubr.bf16.gmra.mrb[0].mxu0 %v1203
        %v2873 = vpop.f32.mrb[0].mxu0
        %v2874 = vadd.f32 %v2801, %v2873
        %v2875 = vpop.f32.mrb[0].mxu0
        %v2876 = vadd.f32 %v2803, %v2875
        %v2877 = vpop.f32.mrb[0].mxu0
        %v2878 = vadd.f32 %v2805, %v2877
        %v2879 = vpop.f32.mrb[0].mxu0
        %v2880 = vadd.f32 %v2807, %v2879
        %2881 = vmatprep.mubr.bf16.mxu0 0
        %2882 = vmatmul.mubr.bf16.gmra.mrb[0].mxu0 %v1206
        %v2883 = vpop.f32.mrb[0].mxu0
        %v2884 = vadd.f32 %v2811, %v2883
        %v2885 = vpop.f32.mrb[0].mxu0
        %v2886 = vadd.f32 %v2813, %v2885
        %v2887 = vpop.f32.mrb[0].mxu0
        %v2888 = vadd.f32 %v2815, %v2887
        %v2889 = vpop.f32.mrb[0].mxu0
        %v2890 = vadd.f32 %v2817, %v2889
        %2891 = vdwg.mxu0
        %2892 = vmatprep.subr.bf16.mxu0 %v2173
        %2893 = vmatpush1.bf16.msra.mxu0 %v2172
        %2894 = vmatprep.subr.bf16.mxu0 %v2182
        %2895 = vmatpush1.bf16.msra.mxu0 %v2181
        %2896 = vmatprep.subr.bf16.mxu0 %v2191
        %2897 = vmatpush1.bf16.msra.mxu0 %v2190
        %2898 = vmatprep.subr.bf16.mxu0 %v2200
        %2899 = vmatpush1.bf16.msra.mxu0 %v2199
        %2900 = vmatprep.subr.bf16.mxu0 %v2209
        %2901 = vmatpush1.bf16.msra.mxu0 %v2208
        %2902 = vmatprep.subr.bf16.mxu0 %v2218
        %2903 = vmatpush1.bf16.msra.mxu0 %v2217
        %2904 = vmatprep.subr.bf16.mxu0 %v2227
        %2905 = vmatpush1.bf16.msra.mxu0 %v2226
        %2906 = vmatprep.subr.bf16.mxu0 %v2236
        %2907 = vmatpush1.bf16.msra.mxu0 %v2235
        %2908 = vmatprep.subr.bf16.mxu0 %v2245
        %2909 = vmatpush1.bf16.msra.mxu0 %v2244
        %2910 = vmatprep.subr.bf16.mxu0 %v2254
        %2911 = vmatpush1.bf16.msra.mxu0 %v2253
        %2912 = vmatprep.subr.bf16.mxu0 %v2263
        %2913 = vmatpush1.bf16.msra.mxu0 %v2262
        %2914 = vmatprep.subr.bf16.mxu0 %v2272
        %2915 = vmatpush1.bf16.msra.mxu0 %v2271
        %2916 = vmatprep.subr.bf16.mxu0 %v2281
        %2917 = vmatpush1.bf16.msra.mxu0 %v2280
        %2918 = vmatprep.subr.bf16.mxu0 %v2290
        %2919 = vmatpush1.bf16.msra.mxu0 %v2289
        %2920 = vmatprep.subr.bf16.mxu0 %v2299
        %2921 = vmatpush1.bf16.msra.mxu0 %v2298
        %2922 = vmatprep.subr.bf16.mxu0 %v2308
        %2923 = vmatpush1.bf16.msra.mxu0 %v2307
        %2924 = vmatprep.mubr.bf16.mxu0 %v1196
        %2925 = vmatmul.mubr.bf16.gmra.mrb[0].mxu0 %v1195
        %v2926 = vpop.f32.mrb[0].mxu0
        %v2927 = vadd.f32 %v1470, %v2926
        %v2928 = vpop.f32.mrb[0].mxu0
        %v2929 = vadd.f32 %v1474, %v2928
        %v2930 = vpop.f32.mrb[0].mxu0
        %v2931 = vadd.f32 %v1470, %v2930
        %v2932 = vpop.f32.mrb[0].mxu0
        %v2933 = vadd.f32 %v1474, %v2932
        %2934 = vmatprep.mubr.bf16.mxu0 %v1199
        %2935 = vmatmul.mubr.bf16.gmra.mrb[0].mxu0 %v1198
        %v2936 = vpop.f32.mrb[0].mxu0
        %v2937 = vadd.f32 %v1470, %v2936
        %v2938 = vpop.f32.mrb[0].mxu0
        %v2939 = vadd.f32 %v1474, %v2938
        %v2940 = vpop.f32.mrb[0].mxu0
        %v2941 = vadd.f32 %v1470, %v2940
        %v2942 = vpop.f32.mrb[0].mxu0
        %v2943 = vadd.f32 %v1474, %v2942
        %2944 = vmatprep.mubr.bf16.mxu0 %v1202
        %2945 = vmatmul.mubr.bf16.gmra.mrb[0].mxu0 %v1201
        %v2946 = vpop.f32.mrb[0].mxu0
        %v2947 = vadd.f32 %v1470, %v2946
        %v2948 = vpop.f32.mrb[0].mxu0
        %v2949 = vadd.f32 %v1474, %v2948
        %v2950 = vpop.f32.mrb[0].mxu0
        %v2951 = vadd.f32 %v1470, %v2950
        %v2952 = vpop.f32.mrb[0].mxu0
        %v2953 = vadd.f32 %v1474, %v2952
        %2954 = vmatprep.mubr.bf16.mxu0 %v1205
        %2955 = vmatmul.mubr.bf16.gmra.mrb[0].mxu0 %v1204
        %v2956 = vpop.f32.mrb[0].mxu0
        %v2957 = vadd.f32 %v1470, %v2956
        %v2958 = vpop.f32.mrb[0].mxu0
        %v2959 = vadd.f32 %v1474, %v2958
        %v2960 = vpop.f32.mrb[0].mxu0
        %v2961 = vadd.f32 %v1470, %v2960
        %v2962 = vpop.f32.mrb[0].mxu0
        %v2963 = vadd.f32 %v1474, %v2962
        %2964 = vdwg.mxu0
        %2965 = vmatprep.subr.bf16.mxu0 %v2317
        %2966 = vmatpush1.bf16.msra.mxu0 %v2316
        %2967 = vmatprep.subr.bf16.mxu0 %v2326
        %2968 = vmatpush1.bf16.msra.mxu0 %v2325
        %2969 = vmatprep.subr.bf16.mxu0 %v2335
        %2970 = vmatpush1.bf16.msra.mxu0 %v2334
        %2971 = vmatprep.subr.bf16.mxu0 %v2344
        %2972 = vmatpush1.bf16.msra.mxu0 %v2343
        %2973 = vmatprep.subr.bf16.mxu0 %v2353
        %2974 = vmatpush1.bf16.msra.mxu0 %v2352
        %2975 = vmatprep.subr.bf16.mxu0 %v2362
        %2976 = vmatpush1.bf16.msra.mxu0 %v2361
        %2977 = vmatprep.subr.bf16.mxu0 %v2371
        %2978 = vmatpush1.bf16.msra.mxu0 %v2370
        %2979 = vmatprep.subr.bf16.mxu0 %v2380
        %2980 = vmatpush1.bf16.msra.mxu0 %v2379
        %2981 = vmatprep.subr.bf16.mxu0 0
        %2982 = vmatpush1.bf16.msra.mxu0 0
        %2983 = vmatprep.subr.bf16.mxu0 0
        %2984 = vmatpush1.bf16.msra.mxu0 0
        %2985 = vmatprep.subr.bf16.mxu0 0
        %2986 = vmatpush1.bf16.msra.mxu0 0
        %2987 = vmatprep.subr.bf16.mxu0 0
        %2988 = vmatpush1.bf16.msra.mxu0 0
        %2989 = vmatprep.subr.bf16.mxu0 0
        %2990 = vmatpush1.bf16.msra.mxu0 0
        %2991 = vmatprep.subr.bf16.mxu0 0
        %2992 = vmatpush1.bf16.msra.mxu0 0
        %2993 = vmatprep.subr.bf16.mxu0 0
        %2994 = vmatpush1.bf16.msra.mxu0 0
        %2995 = vmatprep.subr.bf16.mxu0 0
        %2996 = vmatpush1.bf16.msra.mxu0 0
        %2997 = vmatprep.mubr.bf16.mxu0 0
        %2998 = vmatmul.mubr.bf16.gmra.mrb[0].mxu0 %v1197
        %v2999 = vpop.f32.mrb[0].mxu0
        %v3000 = vadd.f32 %v2927, %v2999
        %v3001 = vpop.f32.mrb[0].mxu0
        %v3002 = vadd.f32 %v2929, %v3001
        %v3003 = vpop.f32.mrb[0].mxu0
        %v3004 = vadd.f32 %v2931, %v3003
        %v3005 = vpop.f32.mrb[0].mxu0
        %v3006 = vadd.f32 %v2933, %v3005
        %3007 = vmatprep.mubr.bf16.mxu0 0
        %3008 = vmatmul.mubr.bf16.gmra.mrb[0].mxu0 %v1200
        %v3009 = vpop.f32.mrb[0].mxu0
        %v3010 = vadd.f32 %v2937, %v3009
        %v3011 = vpop.f32.mrb[0].mxu0
        %v3012 = vadd.f32 %v2939, %v3011
        %v3013 = vpop.f32.mrb[0].mxu0
        %v3014 = vadd.f32 %v2941, %v3013
        %v3015 = vpop.f32.mrb[0].mxu0
        %v3016 = vadd.f32 %v2943, %v3015
        %3017 = vmatprep.mubr.bf16.mxu0 0
        %3018 = vmatmul.mubr.bf16.gmra.mrb[0].mxu0 %v1203
        %v3019 = vpop.f32.mrb[0].mxu0
        %v3020 = vadd.f32 %v2947, %v3019
        %v3021 = vpop.f32.mrb[0].mxu0
        %v3022 = vadd.f32 %v2949, %v3021
        %v3023 = vpop.f32.mrb[0].mxu0
        %v3024 = vadd.f32 %v2951, %v3023
        %v3025 = vpop.f32.mrb[0].mxu0
        %v3026 = vadd.f32 %v2953, %v3025
        %3027 = vmatprep.mubr.bf16.mxu0 0
        %3028 = vmatmul.mubr.bf16.gmra.mrb[0].mxu0 %v1206
        %v3029 = vpop.f32.mrb[0].mxu0
        %v3030 = vadd.f32 %v2957, %v3029
        %v3031 = vpop.f32.mrb[0].mxu0
        %v3032 = vadd.f32 %v2959, %v3031
        %v3033 = vpop.f32.mrb[0].mxu0
        %v3034 = vadd.f32 %v2961, %v3033
        %v3035 = vpop.f32.mrb[0].mxu0
        %v3036 = vadd.f32 %v2963, %v3035
        %3037 = vdwg.mxu0
        %3038 = vmatprep.subr.bf16.mxu0 %v2175
        %3039 = vmatpush1.bf16.msra.mxu0 %v2174
        %3040 = vmatprep.subr.bf16.mxu0 %v2184
        %3041 = vmatpush1.bf16.msra.mxu0 %v2183
        %3042 = vmatprep.subr.bf16.mxu0 %v2193
        %3043 = vmatpush1.bf16.msra.mxu0 %v2192
        %3044 = vmatprep.subr.bf16.mxu0 %v2202
        %3045 = vmatpush1.bf16.msra.mxu0 %v2201
        %3046 = vmatprep.subr.bf16.mxu0 %v2211
        %3047 = vmatpush1.bf16.msra.mxu0 %v2210
        %3048 = vmatprep.subr.bf16.mxu0 %v2220
        %3049 = vmatpush1.bf16.msra.mxu0 %v2219
        %3050 = vmatprep.subr.bf16.mxu0 %v2229
        %3051 = vmatpush1.bf16.msra.mxu0 %v2228
        %3052 = vmatprep.subr.bf16.mxu0 %v2238
        %3053 = vmatpush1.bf16.msra.mxu0 %v2237
        %3054 = vmatprep.subr.bf16.mxu0 %v2247
        %3055 = vmatpush1.bf16.msra.mxu0 %v2246
        %3056 = vmatprep.subr.bf16.mxu0 %v2256
        %3057 = vmatpush1.bf16.msra.mxu0 %v2255
        %3058 = vmatprep.subr.bf16.mxu0 %v2265
        %3059 = vmatpush1.bf16.msra.mxu0 %v2264
        %3060 = vmatprep.subr.bf16.mxu0 %v2274
        %3061 = vmatpush1.bf16.msra.mxu0 %v2273
        %3062 = vmatprep.subr.bf16.mxu0 %v2283
        %3063 = vmatpush1.bf16.msra.mxu0 %v2282
        %3064 = vmatprep.subr.bf16.mxu0 %v2292
        %3065 = vmatpush1.bf16.msra.mxu0 %v2291
        %3066 = vmatprep.subr.bf16.mxu0 %v2301
        %3067 = vmatpush1.bf16.msra.mxu0 %v2300
        %3068 = vmatprep.subr.bf16.mxu0 %v2310
        %3069 = vmatpush1.bf16.msra.mxu0 %v2309
        %3070 = vmatprep.mubr.bf16.mxu0 %v1196
        %3071 = vmatmul.mubr.bf16.gmra.mrb[0].mxu0 %v1195
        %v3072 = vpop.f32.mrb[0].mxu0
        %v3073 = vadd.f32 %v1478, %v3072
        %v3074 = vpop.f32.mrb[0].mxu0
        %v3075 = vadd.f32 %v1482, %v3074
        %v3076 = vpop.f32.mrb[0].mxu0
        %v3077 = vadd.f32 %v1478, %v3076
        %v3078 = vpop.f32.mrb[0].mxu0
        %v3079 = vadd.f32 %v1482, %v3078
        %3080 = vmatprep.mubr.bf16.mxu0 %v1199
        %3081 = vmatmul.mubr.bf16.gmra.mrb[0].mxu0 %v1198
        %v3082 = vpop.f32.mrb[0].mxu0
        %v3083 = vadd.f32 %v1478, %v3082
        %v3084 = vpop.f32.mrb[0].mxu0
        %v3085 = vadd.f32 %v1482, %v3084
        %v3086 = vpop.f32.mrb[0].mxu0
        %v3087 = vadd.f32 %v1478, %v3086
        %v3088 = vpop.f32.mrb[0].mxu0
        %v3089 = vadd.f32 %v1482, %v3088
        %3090 = vmatprep.mubr.bf16.mxu0 %v1202
        %3091 = vmatmul.mubr.bf16.gmra.mrb[0].mxu0 %v1201
        %v3092 = vpop.f32.mrb[0].mxu0
        %v3093 = vadd.f32 %v1478, %v3092
        %v3094 = vpop.f32.mrb[0].mxu0
        %v3095 = vadd.f32 %v1482, %v3094
        %v3096 = vpop.f32.mrb[0].mxu0
        %v3097 = vadd.f32 %v1478, %v3096
        %v3098 = vpop.f32.mrb[0].mxu0
        %v3099 = vadd.f32 %v1482, %v3098
        %3100 = vmatprep.mubr.bf16.mxu0 %v1205
        %3101 = vmatmul.mubr.bf16.gmra.mrb[0].mxu0 %v1204
        %v3102 = vpop.f32.mrb[0].mxu0
        %v3103 = vadd.f32 %v1478, %v3102
        %v3104 = vpop.f32.mrb[0].mxu0
        %v3105 = vadd.f32 %v1482, %v3104
        %v3106 = vpop.f32.mrb[0].mxu0
        %v3107 = vadd.f32 %v1478, %v3106
        %v3108 = vpop.f32.mrb[0].mxu0
        %v3109 = vadd.f32 %v1482, %v3108
        %3110 = vdwg.mxu0
        %3111 = vmatprep.subr.bf16.mxu0 %v2319
        %3112 = vmatpush1.bf16.msra.mxu0 %v2318
        %3113 = vmatprep.subr.bf16.mxu0 %v2328
        %3114 = vmatpush1.bf16.msra.mxu0 %v2327
        %3115 = vmatprep.subr.bf16.mxu0 %v2337
        %3116 = vmatpush1.bf16.msra.mxu0 %v2336
        %3117 = vmatprep.subr.bf16.mxu0 %v2346
        %3118 = vmatpush1.bf16.msra.mxu0 %v2345
        %3119 = vmatprep.subr.bf16.mxu0 %v2355
        %3120 = vmatpush1.bf16.msra.mxu0 %v2354
        %3121 = vmatprep.subr.bf16.mxu0 %v2364
        %3122 = vmatpush1.bf16.msra.mxu0 %v2363
        %3123 = vmatprep.subr.bf16.mxu0 %v2373
        %3124 = vmatpush1.bf16.msra.mxu0 %v2372
        %3125 = vmatprep.subr.bf16.mxu0 %v2382
        %3126 = vmatpush1.bf16.msra.mxu0 %v2381
        %3127 = vmatprep.subr.bf16.mxu0 0
        %3128 = vmatpush1.bf16.msra.mxu0 0
        %3129 = vmatprep.subr.bf16.mxu0 0
        %3130 = vmatpush1.bf16.msra.mxu0 0
        %3131 = vmatprep.subr.bf16.mxu0 0
        %3132 = vmatpush1.bf16.msra.mxu0 0
        %3133 = vmatprep.subr.bf16.mxu0 0
        %3134 = vmatpush1.bf16.msra.mxu0 0
        %3135 = vmatprep.subr.bf16.mxu0 0
        %3136 = vmatpush1.bf16.msra.mxu0 0
        %3137 = vmatprep.subr.bf16.mxu0 0
        %3138 = vmatpush1.bf16.msra.mxu0 0
        %3139 = vmatprep.subr.bf16.mxu0 0
        %3140 = vmatpush1.bf16.msra.mxu0 0
        %3141 = vmatprep.subr.bf16.mxu0 0
        %3142 = vmatpush1.bf16.msra.mxu0 0
        %3143 = vmatprep.mubr.bf16.mxu0 0
        %3144 = vmatmul.mubr.bf16.gmra.mrb[0].mxu0 %v1197
        %v3145 = vpop.f32.mrb[0].mxu0
        %v3146 = vadd.f32 %v3073, %v3145
        %v3147 = vpop.f32.mrb[0].mxu0
        %v3148 = vadd.f32 %v3075, %v3147
        %v3149 = vpop.f32.mrb[0].mxu0
        %v3150 = vadd.f32 %v3077, %v3149
        %v3151 = vpop.f32.mrb[0].mxu0
        %v3152 = vadd.f32 %v3079, %v3151
        %3153 = vmatprep.mubr.bf16.mxu0 0
        %3154 = vmatmul.mubr.bf16.gmra.mrb[0].mxu0 %v1200
        %v3155 = vpop.f32.mrb[0].mxu0
        %v3156 = vadd.f32 %v3083, %v3155
        %v3157 = vpop.f32.mrb[0].mxu0
        %v3158 = vadd.f32 %v3085, %v3157
        %v3159 = vpop.f32.mrb[0].mxu0
        %v3160 = vadd.f32 %v3087, %v3159
        %v3161 = vpop.f32.mrb[0].mxu0
        %v3162 = vadd.f32 %v3089, %v3161
        %3163 = vmatprep.mubr.bf16.mxu0 0
        %3164 = vmatmul.mubr.bf16.gmra.mrb[0].mxu0 %v1203
        %v3165 = vpop.f32.mrb[0].mxu0
        %v3166 = vadd.f32 %v3093, %v3165
        %v3167 = vpop.f32.mrb[0].mxu0
        %v3168 = vadd.f32 %v3095, %v3167
        %v3169 = vpop.f32.mrb[0].mxu0
        %v3170 = vadd.f32 %v3097, %v3169
        %v3171 = vpop.f32.mrb[0].mxu0
        %v3172 = vadd.f32 %v3099, %v3171
        %3173 = vmatprep.mubr.bf16.mxu0 0
        %3174 = vmatmul.mubr.bf16.gmra.mrb[0].mxu0 %v1206
        %v3175 = vpop.f32.mrb[0].mxu0
        %v3176 = vadd.f32 %v3103, %v3175
        %v3177 = vpop.f32.mrb[0].mxu0
        %v3178 = vadd.f32 %v3105, %v3177
        %v3179 = vpop.f32.mrb[0].mxu0
        %v3180 = vadd.f32 %v3107, %v3179
        %v3181 = vpop.f32.mrb[0].mxu0
        %v3182 = vadd.f32 %v3109, %v3181
        %3183 = vdwg.mxu0
        %3184 = vmatprep.subr.bf16.mxu0 0
        %3185 = vmatpush1.bf16.msra.mxu0 %v2176
        %3186 = vmatprep.subr.bf16.mxu0 0
        %3187 = vmatpush1.bf16.msra.mxu0 %v2185
        %3188 = vmatprep.subr.bf16.mxu0 0
        %3189 = vmatpush1.bf16.msra.mxu0 %v2194
        %3190 = vmatprep.subr.bf16.mxu0 0
        %3191 = vmatpush1.bf16.msra.mxu0 %v2203
        %3192 = vmatprep.subr.bf16.mxu0 0
        %3193 = vmatpush1.bf16.msra.mxu0 %v2212
        %3194 = vmatprep.subr.bf16.mxu0 0
        %3195 = vmatpush1.bf16.msra.mxu0 %v2221
        %3196 = vmatprep.subr.bf16.mxu0 0
        %3197 = vmatpush1.bf16.msra.mxu0 %v2230
        %3198 = vmatprep.subr.bf16.mxu0 0
        %3199 = vmatpush1.bf16.msra.mxu0 %v2239
        %3200 = vmatprep.subr.bf16.mxu0 0
        %3201 = vmatpush1.bf16.msra.mxu0 %v2248
        %3202 = vmatprep.subr.bf16.mxu0 0
        %3203 = vmatpush1.bf16.msra.mxu0 %v2257
        %3204 = vmatprep.subr.bf16.mxu0 0
        %3205 = vmatpush1.bf16.msra.mxu0 %v2266
        %3206 = vmatprep.subr.bf16.mxu0 0
        %3207 = vmatpush1.bf16.msra.mxu0 %v2275
        %3208 = vmatprep.subr.bf16.mxu0 0
        %3209 = vmatpush1.bf16.msra.mxu0 %v2284
        %3210 = vmatprep.subr.bf16.mxu0 0
        %3211 = vmatpush1.bf16.msra.mxu0 %v2293
        %3212 = vmatprep.subr.bf16.mxu0 0
        %3213 = vmatpush1.bf16.msra.mxu0 %v2302
        %3214 = vmatprep.subr.bf16.mxu0 0
        %3215 = vmatpush1.bf16.msra.mxu0 %v2311
        %3216 = vmatprep.mubr.bf16.mxu0 %v1196
        %3217 = vmatmul.mubr.bf16.gmra.mrb[0].mxu0 %v1195
        %v3218 = vpop.f32.mrb[0].mxu0
        %v3219 = vadd.f32 %v1486, %v3218
        %v3220 = vpop.f32.mrb[0].mxu0
        %v3221 = vpop.f32.mrb[0].mxu0
        %v3222 = vadd.f32 %v1486, %v3221
        %v3223 = vpop.f32.mrb[0].mxu0
        %3224 = vmatprep.mubr.bf16.mxu0 %v1199
        %3225 = vmatmul.mubr.bf16.gmra.mrb[0].mxu0 %v1198
        %v3226 = vpop.f32.mrb[0].mxu0
        %v3227 = vadd.f32 %v1486, %v3226
        %v3228 = vpop.f32.mrb[0].mxu0
        %v3229 = vpop.f32.mrb[0].mxu0
        %v3230 = vadd.f32 %v1486, %v3229
        %v3231 = vpop.f32.mrb[0].mxu0
        %3232 = vmatprep.mubr.bf16.mxu0 %v1202
        %3233 = vmatmul.mubr.bf16.gmra.mrb[0].mxu0 %v1201
        %v3234 = vpop.f32.mrb[0].mxu0
        %v3235 = vadd.f32 %v1486, %v3234
        %v3236 = vpop.f32.mrb[0].mxu0
        %v3237 = vpop.f32.mrb[0].mxu0
        %v3238 = vadd.f32 %v1486, %v3237
        %v3239 = vpop.f32.mrb[0].mxu0
        %3240 = vmatprep.mubr.bf16.mxu0 %v1205
        %3241 = vmatmul.mubr.bf16.gmra.mrb[0].mxu0 %v1204
        %v3242 = vpop.f32.mrb[0].mxu0
        %v3243 = vadd.f32 %v1486, %v3242
        %v3244 = vpop.f32.mrb[0].mxu0
        %v3245 = vpop.f32.mrb[0].mxu0
        %v3246 = vadd.f32 %v1486, %v3245
        %v3247 = vpop.f32.mrb[0].mxu0
        %3248 = vdwg.mxu0
        %3249 = vmatprep.subr.bf16.mxu0 0
        %3250 = vmatpush1.bf16.msra.mxu0 %v2320
        %3251 = vmatprep.subr.bf16.mxu0 0
        %3252 = vmatpush1.bf16.msra.mxu0 %v2329
        %3253 = vmatprep.subr.bf16.mxu0 0
        %3254 = vmatpush1.bf16.msra.mxu0 %v2338
        %3255 = vmatprep.subr.bf16.mxu0 0
        %3256 = vmatpush1.bf16.msra.mxu0 %v2347
        %3257 = vmatprep.subr.bf16.mxu0 0
        %3258 = vmatpush1.bf16.msra.mxu0 %v2356
        %3259 = vmatprep.subr.bf16.mxu0 0
        %3260 = vmatpush1.bf16.msra.mxu0 %v2365
        %3261 = vmatprep.subr.bf16.mxu0 0
        %3262 = vmatpush1.bf16.msra.mxu0 %v2374
        %3263 = vmatprep.subr.bf16.mxu0 0
        %3264 = vmatpush1.bf16.msra.mxu0 %v2383
        %3265 = vmatprep.subr.bf16.mxu0 0
        %3266 = vmatpush1.bf16.msra.mxu0 0
        %3267 = vmatprep.subr.bf16.mxu0 0
        %3268 = vmatpush1.bf16.msra.mxu0 0
        %3269 = vmatprep.subr.bf16.mxu0 0
        %3270 = vmatpush1.bf16.msra.mxu0 0
        %3271 = vmatprep.subr.bf16.mxu0 0
        %3272 = vmatpush1.bf16.msra.mxu0 0
        %3273 = vmatprep.subr.bf16.mxu0 0
        %3274 = vmatpush1.bf16.msra.mxu0 0
        %3275 = vmatprep.subr.bf16.mxu0 0
        %3276 = vmatpush1.bf16.msra.mxu0 0
        %3277 = vmatprep.subr.bf16.mxu0 0
        %3278 = vmatpush1.bf16.msra.mxu0 0
        %3279 = vmatprep.subr.bf16.mxu0 0
        %3280 = vmatpush1.bf16.msra.mxu0 0
        %3281 = vmatprep.mubr.bf16.mxu0 0
        %3282 = vmatmul.mubr.bf16.gmra.mrb[0].mxu0 %v1197
        %v3283 = vpop.f32.mrb[0].mxu0
        %v3284 = vadd.f32 %v3219, %v3283
        %v3285 = vpop.f32.mrb[0].mxu0
        %v3286 = vpop.f32.mrb[0].mxu0
        %v3287 = vadd.f32 %v3222, %v3286
        %v3288 = vpop.f32.mrb[0].mxu0
        %3289 = vmatprep.mubr.bf16.mxu0 0
        %3290 = vmatmul.mubr.bf16.gmra.mrb[0].mxu0 %v1200
        %v3291 = vpop.f32.mrb[0].mxu0
        %v3292 = vadd.f32 %v3227, %v3291
        %v3293 = vpop.f32.mrb[0].mxu0
        %v3294 = vpop.f32.mrb[0].mxu0
        %v3295 = vadd.f32 %v3230, %v3294
        %v3296 = vpop.f32.mrb[0].mxu0
        %3297 = vmatprep.mubr.bf16.mxu0 0
        %3298 = vmatmul.mubr.bf16.gmra.mrb[0].mxu0 %v1203
        %v3299 = vpop.f32.mrb[0].mxu0
        %v3300 = vadd.f32 %v3235, %v3299
        %v3301 = vpop.f32.mrb[0].mxu0
        %v3302 = vpop.f32.mrb[0].mxu0
        %v3303 = vadd.f32 %v3238, %v3302
        %v3304 = vpop.f32.mrb[0].mxu0
        %3305 = vmatprep.mubr.bf16.mxu0 0
        %3306 = vmatmul.mubr.bf16.gmra.mrb[0].mxu0 %v1206
        %v3307 = vpop.f32.mrb[0].mxu0
        %v3308 = vadd.f32 %v3243, %v3307
        %v3309 = vpop.f32.mrb[0].mxu0
        %v3310 = vpop.f32.mrb[0].mxu0
        %v3311 = vadd.f32 %v3246, %v3310
        %v3312 = vpop.f32.mrb[0].mxu0
        %3313 = vdwg.mxu0
        %v3314 = vpack.c.bf16 %v2712, %v2708
        %v3315 = vpack.c.bf16 %v2714, %v2710
        %v3316 = vpack.c.bf16 %v2858, %v2854
        %v3317 = vpack.c.bf16 %v2860, %v2856
        %v3318 = vpack.c.bf16 %v3004, %v3000
        %v3319 = vpack.c.bf16 %v3006, %v3002
        %v3320 = vpack.c.bf16 %v3150, %v3146
        %v3321 = vpack.c.bf16 %v3152, %v3148
        %v3322 = vpack.c.bf16 %v3287, %v3284
        %v3323 = vpack.c.bf16 %v2722, %v2718
        %v3324 = vpack.c.bf16 %v2724, %v2720
        %v3325 = vpack.c.bf16 %v2868, %v2864
        %v3326 = vpack.c.bf16 %v2870, %v2866
        %v3327 = vpack.c.bf16 %v3014, %v3010
        %v3328 = vpack.c.bf16 %v3016, %v3012
        %v3329 = vpack.c.bf16 %v3160, %v3156
        %v3330 = vpack.c.bf16 %v3162, %v3158
        %v3331 = vpack.c.bf16 %v3295, %v3292
        %v3332 = vpack.c.bf16 %v2732, %v2728
        %v3333 = vpack.c.bf16 %v2734, %v2730
        %v3334 = vpack.c.bf16 %v2878, %v2874
        %v3335 = vpack.c.bf16 %v2880, %v2876
        %v3336 = vpack.c.bf16 %v3024, %v3020
        %v3337 = vpack.c.bf16 %v3026, %v3022
        %v3338 = vpack.c.bf16 %v3170, %v3166
        %v3339 = vpack.c.bf16 %v3172, %v3168
        %v3340 = vpack.c.bf16 %v3303, %v3300
        %v3341 = vpack.c.bf16 %v2742, %v2738
        %v3342 = vpack.c.bf16 %v2744, %v2740
        %v3343 = vpack.c.bf16 %v2888, %v2884
        %v3344 = vpack.c.bf16 %v2890, %v2886
        %v3345 = vpack.c.bf16 %v3034, %v3030
        %v3346 = vpack.c.bf16 %v3036, %v3032
        %v3347 = vpack.c.bf16 %v3180, %v3176
        %v3348 = vpack.c.bf16 %v3182, %v3178
        %v3349 = vpack.c.bf16 %v3311, %v3308
        %3350 = vmatprep.subr.bf16.mxu0 0
        %3351 = vmatpush1.bf16.xpose.msra.mxu0 %v3317
        %3352 = vmatprep.subr.bf16.mxu0 0
        %3353 = vmatpush1.bf16.xpose.msra.mxu0 %v3326
        %3354 = vmatprep.subr.bf16.mxu0 0
        %3355 = vmatpush1.bf16.xpose.msra.mxu0 0
        %3356 = vmatprep.subr.bf16.mxu0 0
        %3357 = vmatpush1.bf16.xpose.msra.mxu0 0
        %3358 = vmatprep.subr.bf16.mxu0 0
        %3359 = vmatpush1.bf16.xpose.msra.mxu0 0
        %3360 = vmatprep.subr.bf16.mxu0 0
        %3361 = vmatpush1.bf16.xpose.msra.mxu0 0
        %3362 = vmatprep.subr.bf16.mxu0 0
        %3363 = vmatpush1.bf16.xpose.msra.mxu0 0
        %3364 = vmatprep.subr.bf16.mxu0 0
        %3365 = vmatpush1.bf16.xpose.msra.mxu0 0
        %3366 = vmatprep.subr.bf16.mxu0 0
        %3367 = vmatpush1.bf16.xpose.msra.mxu0 0
        %3368 = vmatprep.subr.bf16.mxu0 0
        %3369 = vmatpush1.bf16.xpose.msra.mxu0 0
        %3370 = vmatprep.subr.bf16.mxu0 0
        %3371 = vmatpush1.bf16.xpose.msra.mxu0 0
        %3372 = vmatprep.subr.bf16.mxu0 0
        %3373 = vmatpush1.bf16.xpose.msra.mxu0 0
        %3374 = vmatprep.subr.bf16.mxu0 0
        %3375 = vmatpush1.bf16.xpose.msra.mxu0 0
        %3376 = vmatprep.subr.bf16.mxu0 0
        %3377 = vmatpush1.bf16.xpose.msra.mxu0 0
        %3378 = vmatprep.subr.bf16.mxu0 0
        %3379 = vmatpush1.bf16.xpose.msra.mxu0 0
        %3380 = vmatprep.subr.bf16.mxu0 0
        %3381 = vmatpush1.bf16.xpose.msra.mxu0 0
        %3382 = vmatprep.mubr.bf16.mxu0 0
        %3383 = vmatmul.mubr.bf16.gmra.mrb[0].mxu0 %v3314
        %v3384 = vpop.f32.mrb[0].mxu0
        %v3385 = vadd.f32 0.0, %v3384
        %v3386 = vpop.f32.mrb[0].mxu0
        %v3387 = vpop.f32.mrb[0].mxu0
        %v3388 = vadd.f32 0.0, %v3387
        %v3389 = vpop.f32.mrb[0].mxu0
        %3390 = vmatprep.mubr.bf16.mxu0 0
        %3391 = vmatmul.mubr.bf16.gmra.mrb[0].mxu0 %v3323
        %v3392 = vpop.f32.mrb[0].mxu0
        %v3393 = vadd.f32 0.0, %v3392
        %v3394 = vpop.f32.mrb[0].mxu0
        %v3395 = vpop.f32.mrb[0].mxu0
        %v3396 = vadd.f32 0.0, %v3395
        %v3397 = vpop.f32.mrb[0].mxu0
        %3398 = vdwg.mxu0
        %3399 = vmatprep.subr.bf16.mxu0 0
        %3400 = vmatpush1.bf16.xpose.msra.mxu0 %v3335
        %3401 = vmatprep.subr.bf16.mxu0 0
        %3402 = vmatpush1.bf16.xpose.msra.mxu0 %v3344
        %3403 = vmatprep.subr.bf16.mxu0 0
        %3404 = vmatpush1.bf16.xpose.msra.mxu0 0
        %3405 = vmatprep.subr.bf16.mxu0 0
        %3406 = vmatpush1.bf16.xpose.msra.mxu0 0
        %3407 = vmatprep.subr.bf16.mxu0 0
        %3408 = vmatpush1.bf16.xpose.msra.mxu0 0
        %3409 = vmatprep.subr.bf16.mxu0 0
        %3410 = vmatpush1.bf16.xpose.msra.mxu0 0
        %3411 = vmatprep.subr.bf16.mxu0 0
        %3412 = vmatpush1.bf16.xpose.msra.mxu0 0
        %3413 = vmatprep.subr.bf16.mxu0 0
        %3414 = vmatpush1.bf16.xpose.msra.mxu0 0
        %3415 = vmatprep.subr.bf16.mxu0 0
        %3416 = vmatpush1.bf16.xpose.msra.mxu0 0
        %3417 = vmatprep.subr.bf16.mxu0 0
        %3418 = vmatpush1.bf16.xpose.msra.mxu0 0
        %3419 = vmatprep.subr.bf16.mxu0 0
        %3420 = vmatpush1.bf16.xpose.msra.mxu0 0
        %3421 = vmatprep.subr.bf16.mxu0 0
        %3422 = vmatpush1.bf16.xpose.msra.mxu0 0
        %3423 = vmatprep.subr.bf16.mxu0 0
        %3424 = vmatpush1.bf16.xpose.msra.mxu0 0
        %3425 = vmatprep.subr.bf16.mxu0 0
        %3426 = vmatpush1.bf16.xpose.msra.mxu0 0
        %3427 = vmatprep.subr.bf16.mxu0 0
        %3428 = vmatpush1.bf16.xpose.msra.mxu0 0
        %3429 = vmatprep.subr.bf16.mxu0 0
        %3430 = vmatpush1.bf16.xpose.msra.mxu0 0
        %3431 = vmatprep.mubr.bf16.mxu0 0
        %3432 = vmatmul.mubr.bf16.gmra.mrb[0].mxu0 %v3332
        %v3433 = vpop.f32.mrb[0].mxu0
        %v3434 = vadd.f32 0.0, %v3433
        %v3435 = vpop.f32.mrb[0].mxu0
        %v3436 = vpop.f32.mrb[0].mxu0
        %v3437 = vadd.f32 0.0, %v3436
        %v3438 = vpop.f32.mrb[0].mxu0
        %3439 = vmatprep.mubr.bf16.mxu0 0
        %3440 = vmatmul.mubr.bf16.gmra.mrb[0].mxu0 %v3341
        %v3441 = vpop.f32.mrb[0].mxu0
        %v3442 = vadd.f32 0.0, %v3441
        %v3443 = vpop.f32.mrb[0].mxu0
        %v3444 = vpop.f32.mrb[0].mxu0
        %v3445 = vadd.f32 0.0, %v3444
        %v3446 = vpop.f32.mrb[0].mxu0
        %3447 = vdwg.mxu0
        %vm3448 = vcmask 261120
        %v3449 = vsel %vm3448, %v3385, -inf
        %3450 = vmax.xlane.f32.xlu0 %v3449
        %v3451 = vpop.xlane.xlu0 %3450
        %v3452 = vsel %vm3448, %v3388, -inf
        %3453 = vmax.xlane.f32.xlu0 %v3452
        %v3454 = vpop.xlane.xlu0 %3453
        %v3455 = vsel %vm3448, %v3393, -inf
        %3456 = vmax.xlane.f32.xlu0 %v3455
        %v3457 = vpop.xlane.xlu0 %3456
        %v3458 = vsel %vm3448, %v3396, -inf
        %3459 = vmax.xlane.f32.xlu0 %v3458
        %v3460 = vpop.xlane.xlu0 %3459
        %v3461 = vsel %vm3448, %v3434, -inf
        %3462 = vmax.xlane.f32.xlu0 %v3461
        %v3463 = vpop.xlane.xlu0 %3462
        %v3464 = vsel %vm3448, %v3437, -inf
        %3465 = vmax.xlane.f32.xlu0 %v3464
        %v3466 = vpop.xlane.xlu0 %3465
        %v3467 = vsel %vm3448, %v3442, -inf
        %3468 = vmax.xlane.f32.xlu0 %v3467
        %v3469 = vpop.xlane.xlu0 %3468
        %v3470 = vsel %vm3448, %v3445, -inf
        %3471 = vmax.xlane.f32.xlu0 %v3470
        %v3472 = vpop.xlane.xlu0 %3471
        %v3473 = vsub.f32 %v3385, %v3451
        %v3474 = vsub.f32 %v3388, %v3454
        %v3475 = vsub.f32 %v3393, %v3457
        %v3476 = vsub.f32 %v3396, %v3460
        %v3477 = vsub.f32 %v3434, %v3463
        %v3478 = vsub.f32 %v3437, %v3466
        %v3479 = vsub.f32 %v3442, %v3469
        %v3480 = vsub.f32 %v3445, %v3472
        %v3481 = vmul.f32 %v3473, 1.442695
        %v3482 = vpow.pop %v3481
        %v3483 = vmul.f32 %v3474, 1.442695
        %v3484 = vpow.pop %v3483
        %v3485 = vmul.f32 %v3475, 1.442695
        %v3486 = vpow.pop %v3485
        %v3487 = vmul.f32 %v3476, 1.442695
        %v3488 = vpow.pop %v3487
        %v3489 = vmul.f32 %v3477, 1.442695
        %v3490 = vpow.pop %v3489
        %v3491 = vmul.f32 %v3478, 1.442695
        %v3492 = vpow.pop %v3491
        %v3493 = vmul.f32 %v3479, 1.442695
        %v3494 = vpow.pop %v3493
        %v3495 = vmul.f32 %v3480, 1.442695
        %v3496 = vpow.pop %v3495
        %v3497 = vsel %vm3448, %v3482, 0.0
        %3498 = vadd.xlane.f32.xlu0 %v3497
        %v3499 = vpop.xlane.xlu0 %3498
        %v3500 = vsel %vm3448, %v3484, 0.0
        %3501 = vadd.xlane.f32.xlu0 %v3500
        %v3502 = vpop.xlane.xlu0 %3501
        %v3503 = vsel %vm3448, %v3486, 0.0
        %3504 = vadd.xlane.f32.xlu0 %v3503
        %v3505 = vpop.xlane.xlu0 %3504
        %v3506 = vsel %vm3448, %v3488, 0.0
        %3507 = vadd.xlane.f32.xlu0 %v3506
        %v3508 = vpop.xlane.xlu0 %3507
        %v3509 = vsel %vm3448, %v3490, 0.0
        %3510 = vadd.xlane.f32.xlu0 %v3509
        %v3511 = vpop.xlane.xlu0 %3510
        %v3512 = vsel %vm3448, %v3492, 0.0
        %3513 = vadd.xlane.f32.xlu0 %v3512
        %v3514 = vpop.xlane.xlu0 %3513
        %v3515 = vsel %vm3448, %v3494, 0.0
        %3516 = vadd.xlane.f32.xlu0 %v3515
        %v3517 = vpop.xlane.xlu0 %3516
        %v3518 = vsel %vm3448, %v3496, 0.0
        %3519 = vadd.xlane.f32.xlu0 %v3518
        %v3520 = vpop.xlane.xlu0 %3519
        %v3521 = vrcp.pop %v3499
        %v3522 = vrcp.pop %v3502
        %v3523 = vrcp.pop %v3505
        %v3524 = vrcp.pop %v3508
        %v3525 = vrcp.pop %v3511
        %v3526 = vrcp.pop %v3514
        %v3527 = vrcp.pop %v3517
        %v3528 = vrcp.pop %v3520
        %v3529 = vmul.f32 %v3482, %v3521
        %v3530 = vmul.f32 %v3484, %v3522
        %v3531 = vmul.f32 %v3486, %v3523
        %v3532 = vmul.f32 %v3488, %v3524
        %v3533 = vmul.f32 %v3490, %v3525
        %v3534 = vmul.f32 %v3492, %v3526
        %v3535 = vmul.f32 %v3494, %v3527
        %v3536 = vmul.f32 %v3496, %v3528
        %v3537 = vpack.c.bf16 %v3530, %v3529
        %v3538 = vpack.c.bf16 %v3532, %v3531
        %v3539 = vpack.c.bf16 %v3534, %v3533
        %v3540 = vpack.c.bf16 %v3536, %v3535
        %v3542 = vsel %vm3448, %v3537, 0
        %v3545 = vsel %vm3448, %v3538, 0
        %3547 = vmatprep.subr.bf16.mxu0 0
        %3548 = vmatpush1.bf16.msra.mxu0 %v3320
        %3549 = vmatprep.subr.bf16.mxu0 0
        %3550 = vmatpush1.bf16.msra.mxu0 %v3329
        %3551 = vmatprep.subr.bf16.mxu0 0
        %3552 = vmatpush1.bf16.msra.mxu0 0
        %3553 = vmatprep.subr.bf16.mxu0 0
        %3554 = vmatpush1.bf16.msra.mxu0 0
        %3555 = vmatprep.subr.bf16.mxu0 0
        %3556 = vmatpush1.bf16.msra.mxu0 0
        %3557 = vmatprep.subr.bf16.mxu0 0
        %3558 = vmatpush1.bf16.msra.mxu0 0
        %3559 = vmatprep.subr.bf16.mxu0 0
        %3560 = vmatpush1.bf16.msra.mxu0 0
        %3561 = vmatprep.subr.bf16.mxu0 0
        %3562 = vmatpush1.bf16.msra.mxu0 0
        %3563 = vmatprep.subr.bf16.mxu0 0
        %3564 = vmatpush1.bf16.msra.mxu0 0
        %3565 = vmatprep.subr.bf16.mxu0 0
        %3566 = vmatpush1.bf16.msra.mxu0 0
        %3567 = vmatprep.subr.bf16.mxu0 0
        %3568 = vmatpush1.bf16.msra.mxu0 0
        %3569 = vmatprep.subr.bf16.mxu0 0
        %3570 = vmatpush1.bf16.msra.mxu0 0
        %3571 = vmatprep.subr.bf16.mxu0 0
        %3572 = vmatpush1.bf16.msra.mxu0 0
        %3573 = vmatprep.subr.bf16.mxu0 0
        %3574 = vmatpush1.bf16.msra.mxu0 0
        %3575 = vmatprep.subr.bf16.mxu0 0
        %3576 = vmatpush1.bf16.msra.mxu0 0
        %3577 = vmatprep.subr.bf16.mxu0 0
        %3578 = vmatpush1.bf16.msra.mxu0 0
        %3579 = vmatprep.mubr.bf16.mxu0 0
        %3580 = vmatmul.mubr.bf16.gmra.mrb[0].mxu0 %v3542
        %v3581 = vpop.f32.mrb[0].mxu0
        %v3582 = vadd.f32 0.0, %v3581
        %v3583 = vpop.f32.mrb[0].mxu0
        %v3584 = vpop.f32.mrb[0].mxu0
        %v3585 = vadd.f32 0.0, %v3584
        %v3586 = vpop.f32.mrb[0].mxu0
        %3587 = vmatprep.mubr.bf16.mxu0 0
        %3588 = vmatmul.mubr.bf16.gmra.mrb[0].mxu0 %v3545
        %v3589 = vpop.f32.mrb[0].mxu0
        %v3590 = vadd.f32 0.0, %v3589
        %v3591 = vpop.f32.mrb[0].mxu0
        %v3592 = vpop.f32.mrb[0].mxu0
        %v3593 = vadd.f32 0.0, %v3592
        %v3594 = vpop.f32.mrb[0].mxu0
        %3595 = vdwg.mxu0
        %v3597 = vsel %vm3448, %v3539, 0
        %v3600 = vsel %vm3448, %v3540, 0
        %3602 = vmatprep.subr.bf16.mxu0 0
        %3603 = vmatpush1.bf16.msra.mxu0 %v3338
        %3604 = vmatprep.subr.bf16.mxu0 0
        %3605 = vmatpush1.bf16.msra.mxu0 %v3347
        %3606 = vmatprep.subr.bf16.mxu0 0
        %3607 = vmatpush1.bf16.msra.mxu0 0
        %3608 = vmatprep.subr.bf16.mxu0 0
        %3609 = vmatpush1.bf16.msra.mxu0 0
        %3610 = vmatprep.subr.bf16.mxu0 0
        %3611 = vmatpush1.bf16.msra.mxu0 0
        %3612 = vmatprep.subr.bf16.mxu0 0
        %3613 = vmatpush1.bf16.msra.mxu0 0
        %3614 = vmatprep.subr.bf16.mxu0 0
        %3615 = vmatpush1.bf16.msra.mxu0 0
        %3616 = vmatprep.subr.bf16.mxu0 0
        %3617 = vmatpush1.bf16.msra.mxu0 0
        %3618 = vmatprep.subr.bf16.mxu0 0
        %3619 = vmatpush1.bf16.msra.mxu0 0
        %3620 = vmatprep.subr.bf16.mxu0 0
        %3621 = vmatpush1.bf16.msra.mxu0 0
        %3622 = vmatprep.subr.bf16.mxu0 0
        %3623 = vmatpush1.bf16.msra.mxu0 0
        %3624 = vmatprep.subr.bf16.mxu0 0
        %3625 = vmatpush1.bf16.msra.mxu0 0
        %3626 = vmatprep.subr.bf16.mxu0 0
        %3627 = vmatpush1.bf16.msra.mxu0 0
        %3628 = vmatprep.subr.bf16.mxu0 0
        %3629 = vmatpush1.bf16.msra.mxu0 0
        %3630 = vmatprep.subr.bf16.mxu0 0
        %3631 = vmatpush1.bf16.msra.mxu0 0
        %3632 = vmatprep.subr.bf16.mxu0 0
        %3633 = vmatpush1.bf16.msra.mxu0 0
        %3634 = vmatprep.mubr.bf16.mxu0 0
        %3635 = vmatmul.mubr.bf16.gmra.mrb[0].mxu0 %v3597
        %v3636 = vpop.f32.mrb[0].mxu0
        %v3637 = vadd.f32 0.0, %v3636
        %v3638 = vpop.f32.mrb[0].mxu0
        %v3639 = vpop.f32.mrb[0].mxu0
        %v3640 = vadd.f32 0.0, %v3639
        %v3641 = vpop.f32.mrb[0].mxu0
        %3642 = vmatprep.mubr.bf16.mxu0 0
        %3643 = vmatmul.mubr.bf16.gmra.mrb[0].mxu0 %v3600
        %v3644 = vpop.f32.mrb[0].mxu0
        %v3645 = vadd.f32 0.0, %v3644
        %v3646 = vpop.f32.mrb[0].mxu0
        %v3647 = vpop.f32.mrb[0].mxu0
        %v3648 = vadd.f32 0.0, %v3647
        %v3649 = vpop.f32.mrb[0].mxu0
        %3650 = vdwg.mxu0
        %v3651 = vpack.c.bf16 %v3585, %v3582
        %v3652 = vpack.c.bf16 %v3593, %v3590
        %v3653 = vpack.c.bf16 %v3640, %v3637
        %v3654 = vpack.c.bf16 %v3648, %v3645
        %3655 = vmatprep.subr.bf16.mxu0 0
        %3656 = vmatpush1.bf16.xpose.msra.mxu0 %v3318
        %3657 = vmatprep.subr.bf16.mxu0 0
        %3658 = vmatpush1.bf16.xpose.msra.mxu0 %v3327
        %3659 = vmatprep.subr.bf16.mxu0 0
        %3660 = vmatpush1.bf16.xpose.msra.mxu0 0
        %3661 = vmatprep.subr.bf16.mxu0 0
        %3662 = vmatpush1.bf16.xpose.msra.mxu0 0
        %3663 = vmatprep.subr.bf16.mxu0 0
        %3664 = vmatpush1.bf16.xpose.msra.mxu0 0
        %3665 = vmatprep.subr.bf16.mxu0 0
        %3666 = vmatpush1.bf16.xpose.msra.mxu0 0
        %3667 = vmatprep.subr.bf16.mxu0 0
        %3668 = vmatpush1.bf16.xpose.msra.mxu0 0
        %3669 = vmatprep.subr.bf16.mxu0 0
        %3670 = vmatpush1.bf16.xpose.msra.mxu0 0
        %3671 = vmatprep.subr.bf16.mxu0 0
        %3672 = vmatpush1.bf16.xpose.msra.mxu0 0
        %3673 = vmatprep.subr.bf16.mxu0 0
        %3674 = vmatpush1.bf16.xpose.msra.mxu0 0
        %3675 = vmatprep.subr.bf16.mxu0 0
        %3676 = vmatpush1.bf16.xpose.msra.mxu0 0
        %3677 = vmatprep.subr.bf16.mxu0 0
        %3678 = vmatpush1.bf16.xpose.msra.mxu0 0
        %3679 = vmatprep.subr.bf16.mxu0 0
        %3680 = vmatpush1.bf16.xpose.msra.mxu0 0
        %3681 = vmatprep.subr.bf16.mxu0 0
        %3682 = vmatpush1.bf16.xpose.msra.mxu0 0
        %3683 = vmatprep.subr.bf16.mxu0 0
        %3684 = vmatpush1.bf16.xpose.msra.mxu0 0
        %3685 = vmatprep.subr.bf16.mxu0 0
        %3686 = vmatpush1.bf16.xpose.msra.mxu0 0
        %3687 = vmatprep.mubr.bf16.mxu0 0
        %3688 = vmatmul.mubr.bf16.gmra.mrb[0].mxu0 %v3315
        %v3689 = vpop.f32.mrb[0].mxu0
        %v3690 = vadd.f32 0.0, %v3689
        %v3691 = vpop.f32.mrb[0].mxu0
        %v3692 = vpop.f32.mrb[0].mxu0
        %v3693 = vadd.f32 0.0, %v3692
        %v3694 = vpop.f32.mrb[0].mxu0
        %3695 = vmatprep.mubr.bf16.mxu0 0
        %3696 = vmatmul.mubr.bf16.gmra.mrb[0].mxu0 %v3324
        %v3697 = vpop.f32.mrb[0].mxu0
        %v3698 = vadd.f32 0.0, %v3697
        %v3699 = vpop.f32.mrb[0].mxu0
        %v3700 = vpop.f32.mrb[0].mxu0
        %v3701 = vadd.f32 0.0, %v3700
        %v3702 = vpop.f32.mrb[0].mxu0
        %3703 = vdwg.mxu0
        %3704 = vmatprep.subr.bf16.mxu0 0
        %3705 = vmatpush1.bf16.xpose.msra.mxu0 %v3336
        %3706 = vmatprep.subr.bf16.mxu0 0
        %3707 = vmatpush1.bf16.xpose.msra.mxu0 %v3345
        %3708 = vmatprep.subr.bf16.mxu0 0
        %3709 = vmatpush1.bf16.xpose.msra.mxu0 0
        %3710 = vmatprep.subr.bf16.mxu0 0
        %3711 = vmatpush1.bf16.xpose.msra.mxu0 0
        %3712 = vmatprep.subr.bf16.mxu0 0
        %3713 = vmatpush1.bf16.xpose.msra.mxu0 0
        %3714 = vmatprep.subr.bf16.mxu0 0
        %3715 = vmatpush1.bf16.xpose.msra.mxu0 0
        %3716 = vmatprep.subr.bf16.mxu0 0
        %3717 = vmatpush1.bf16.xpose.msra.mxu0 0
        %3718 = vmatprep.subr.bf16.mxu0 0
        %3719 = vmatpush1.bf16.xpose.msra.mxu0 0
        %3720 = vmatprep.subr.bf16.mxu0 0
        %3721 = vmatpush1.bf16.xpose.msra.mxu0 0
        %3722 = vmatprep.subr.bf16.mxu0 0
        %3723 = vmatpush1.bf16.xpose.msra.mxu0 0
        %3724 = vmatprep.subr.bf16.mxu0 0
        %3725 = vmatpush1.bf16.xpose.msra.mxu0 0
        %3726 = vmatprep.subr.bf16.mxu0 0
        %3727 = vmatpush1.bf16.xpose.msra.mxu0 0
        %3728 = vmatprep.subr.bf16.mxu0 0
        %3729 = vmatpush1.bf16.xpose.msra.mxu0 0
        %3730 = vmatprep.subr.bf16.mxu0 0
        %3731 = vmatpush1.bf16.xpose.msra.mxu0 0
        %3732 = vmatprep.subr.bf16.mxu0 0
        %3733 = vmatpush1.bf16.xpose.msra.mxu0 0
        %3734 = vmatprep.subr.bf16.mxu0 0
        %3735 = vmatpush1.bf16.xpose.msra.mxu0 0
        %3736 = vmatprep.mubr.bf16.mxu0 0
        %3737 = vmatmul.mubr.bf16.gmra.mrb[0].mxu0 %v3333
        %v3738 = vpop.f32.mrb[0].mxu0
        %v3739 = vadd.f32 0.0, %v3738
        %v3740 = vpop.f32.mrb[0].mxu0
        %v3741 = vpop.f32.mrb[0].mxu0
        %v3742 = vadd.f32 0.0, %v3741
        %v3743 = vpop.f32.mrb[0].mxu0
        %3744 = vmatprep.mubr.bf16.mxu0 0
        %3745 = vmatmul.mubr.bf16.gmra.mrb[0].mxu0 %v3342
        %v3746 = vpop.f32.mrb[0].mxu0
        %v3747 = vadd.f32 0.0, %v3746
        %v3748 = vpop.f32.mrb[0].mxu0
        %v3749 = vpop.f32.mrb[0].mxu0
        %v3750 = vadd.f32 0.0, %v3749
        %v3751 = vpop.f32.mrb[0].mxu0
        %3752 = vdwg.mxu0
        %v3753 = vsel %vm3448, %v3690, -inf
        %3754 = vmax.xlane.f32.xlu0 %v3753
        %v3755 = vpop.xlane.xlu0 %3754
        %v3756 = vsel %vm3448, %v3693, -inf
        %3757 = vmax.xlane.f32.xlu0 %v3756
        %v3758 = vpop.xlane.xlu0 %3757
        %v3759 = vsel %vm3448, %v3698, -inf
        %3760 = vmax.xlane.f32.xlu0 %v3759
        %v3761 = vpop.xlane.xlu0 %3760
        %v3762 = vsel %vm3448, %v3701, -inf
        %3763 = vmax.xlane.f32.xlu0 %v3762
        %v3764 = vpop.xlane.xlu0 %3763
        %v3765 = vsel %vm3448, %v3739, -inf
        %3766 = vmax.xlane.f32.xlu0 %v3765
        %v3767 = vpop.xlane.xlu0 %3766
        %v3768 = vsel %vm3448, %v3742, -inf
        %3769 = vmax.xlane.f32.xlu0 %v3768
        %v3770 = vpop.xlane.xlu0 %3769
        %v3771 = vsel %vm3448, %v3747, -inf
        %3772 = vmax.xlane.f32.xlu0 %v3771
        %v3773 = vpop.xlane.xlu0 %3772
        %v3774 = vsel %vm3448, %v3750, -inf
        %3775 = vmax.xlane.f32.xlu0 %v3774
        %v3776 = vpop.xlane.xlu0 %3775
        %v3777 = vsub.f32 %v3690, %v3755
        %v3778 = vsub.f32 %v3693, %v3758
        %v3779 = vsub.f32 %v3698, %v3761
        %v3780 = vsub.f32 %v3701, %v3764
        %v3781 = vsub.f32 %v3739, %v3767
        %v3782 = vsub.f32 %v3742, %v3770
        %v3783 = vsub.f32 %v3747, %v3773
        %v3784 = vsub.f32 %v3750, %v3776
        %v3785 = vmul.f32 %v3777, 1.442695
        %v3786 = vpow.pop %v3785
        %v3787 = vmul.f32 %v3778, 1.442695
        %v3788 = vpow.pop %v3787
        %v3789 = vmul.f32 %v3779, 1.442695
        %v3790 = vpow.pop %v3789
        %v3791 = vmul.f32 %v3780, 1.442695
        %v3792 = vpow.pop %v3791
        %v3793 = vmul.f32 %v3781, 1.442695
        %v3794 = vpow.pop %v3793
        %v3795 = vmul.f32 %v3782, 1.442695
        %v3796 = vpow.pop %v3795
        %v3797 = vmul.f32 %v3783, 1.442695
        %v3798 = vpow.pop %v3797
        %v3799 = vmul.f32 %v3784, 1.442695
        %v3800 = vpow.pop %v3799
        %v3801 = vsel %vm3448, %v3786, 0.0
        %3802 = vadd.xlane.f32.xlu0 %v3801
        %v3803 = vpop.xlane.xlu0 %3802
        %v3804 = vsel %vm3448, %v3788, 0.0
        %3805 = vadd.xlane.f32.xlu0 %v3804
        %v3806 = vpop.xlane.xlu0 %3805
        %v3807 = vsel %vm3448, %v3790, 0.0
        %3808 = vadd.xlane.f32.xlu0 %v3807
        %v3809 = vpop.xlane.xlu0 %3808
        %v3810 = vsel %vm3448, %v3792, 0.0
        %3811 = vadd.xlane.f32.xlu0 %v3810
        %v3812 = vpop.xlane.xlu0 %3811
        %v3813 = vsel %vm3448, %v3794, 0.0
        %3814 = vadd.xlane.f32.xlu0 %v3813
        %v3815 = vpop.xlane.xlu0 %3814
        %v3816 = vsel %vm3448, %v3796, 0.0
        %3817 = vadd.xlane.f32.xlu0 %v3816
        %v3818 = vpop.xlane.xlu0 %3817
        %v3819 = vsel %vm3448, %v3798, 0.0
        %3820 = vadd.xlane.f32.xlu0 %v3819
        %v3821 = vpop.xlane.xlu0 %3820
        %v3822 = vsel %vm3448, %v3800, 0.0
        %3823 = vadd.xlane.f32.xlu0 %v3822
        %v3824 = vpop.xlane.xlu0 %3823
        %v3825 = vrcp.pop %v3803
        %v3826 = vrcp.pop %v3806
        %v3827 = vrcp.pop %v3809
        %v3828 = vrcp.pop %v3812
        %v3829 = vrcp.pop %v3815
        %v3830 = vrcp.pop %v3818
        %v3831 = vrcp.pop %v3821
        %v3832 = vrcp.pop %v3824
        %v3833 = vmul.f32 %v3786, %v3825
        %v3834 = vmul.f32 %v3788, %v3826
        %v3835 = vmul.f32 %v3790, %v3827
        %v3836 = vmul.f32 %v3792, %v3828
        %v3837 = vmul.f32 %v3794, %v3829
        %v3838 = vmul.f32 %v3796, %v3830
        %v3839 = vmul.f32 %v3798, %v3831
        %v3840 = vmul.f32 %v3800, %v3832
        %v3841 = vpack.c.bf16 %v3834, %v3833
        %v3842 = vpack.c.bf16 %v3836, %v3835
        %v3843 = vpack.c.bf16 %v3838, %v3837
        %v3844 = vpack.c.bf16 %v3840, %v3839
        %v3846 = vsel %vm3448, %v3841, 0
        %v3849 = vsel %vm3448, %v3842, 0
        %3851 = vmatprep.subr.bf16.mxu0 0
        %3852 = vmatpush1.bf16.msra.mxu0 %v3321
        %3853 = vmatprep.subr.bf16.mxu0 0
        %3854 = vmatpush1.bf16.msra.mxu0 %v3330
        %3855 = vmatprep.subr.bf16.mxu0 0
        %3856 = vmatpush1.bf16.msra.mxu0 0
        %3857 = vmatprep.subr.bf16.mxu0 0
        %3858 = vmatpush1.bf16.msra.mxu0 0
        %3859 = vmatprep.subr.bf16.mxu0 0
        %3860 = vmatpush1.bf16.msra.mxu0 0
        %3861 = vmatprep.subr.bf16.mxu0 0
        %3862 = vmatpush1.bf16.msra.mxu0 0
        %3863 = vmatprep.subr.bf16.mxu0 0
        %3864 = vmatpush1.bf16.msra.mxu0 0
        %3865 = vmatprep.subr.bf16.mxu0 0
        %3866 = vmatpush1.bf16.msra.mxu0 0
        %3867 = vmatprep.subr.bf16.mxu0 0
        %3868 = vmatpush1.bf16.msra.mxu0 0
        %3869 = vmatprep.subr.bf16.mxu0 0
        %3870 = vmatpush1.bf16.msra.mxu0 0
        %3871 = vmatprep.subr.bf16.mxu0 0
        %3872 = vmatpush1.bf16.msra.mxu0 0
        %3873 = vmatprep.subr.bf16.mxu0 0
        %3874 = vmatpush1.bf16.msra.mxu0 0
        %3875 = vmatprep.subr.bf16.mxu0 0
        %3876 = vmatpush1.bf16.msra.mxu0 0
        %3877 = vmatprep.subr.bf16.mxu0 0
        %3878 = vmatpush1.bf16.msra.mxu0 0
        %3879 = vmatprep.subr.bf16.mxu0 0
        %3880 = vmatpush1.bf16.msra.mxu0 0
        %3881 = vmatprep.subr.bf16.mxu0 0
        %3882 = vmatpush1.bf16.msra.mxu0 0
        %3883 = vmatprep.mubr.bf16.mxu0 0
        %3884 = vmatmul.mubr.bf16.gmra.mrb[0].mxu0 %v3846
        %v3885 = vpop.f32.mrb[0].mxu0
        %v3886 = vadd.f32 0.0, %v3885
        %v3887 = vpop.f32.mrb[0].mxu0
        %v3888 = vpop.f32.mrb[0].mxu0
        %v3889 = vadd.f32 0.0, %v3888
        %v3890 = vpop.f32.mrb[0].mxu0
        %3891 = vmatprep.mubr.bf16.mxu0 0
        %3892 = vmatmul.mubr.bf16.gmra.mrb[0].mxu0 %v3849
        %v3893 = vpop.f32.mrb[0].mxu0
        %v3894 = vadd.f32 0.0, %v3893
        %v3895 = vpop.f32.mrb[0].mxu0
        %v3896 = vpop.f32.mrb[0].mxu0
        %v3897 = vadd.f32 0.0, %v3896
        %v3898 = vpop.f32.mrb[0].mxu0
        %3899 = vdwg.mxu0
        %v3901 = vsel %vm3448, %v3843, 0
        %v3904 = vsel %vm3448, %v3844, 0
        %3906 = vmatprep.subr.bf16.mxu0 0
        %3907 = vmatpush1.bf16.msra.mxu0 %v3339
        %3908 = vmatprep.subr.bf16.mxu0 0
        %3909 = vmatpush1.bf16.msra.mxu0 %v3348
        %3910 = vmatprep.subr.bf16.mxu0 0
        %3911 = vmatpush1.bf16.msra.mxu0 0
        %3912 = vmatprep.subr.bf16.mxu0 0
        %3913 = vmatpush1.bf16.msra.mxu0 0
        %3914 = vmatprep.subr.bf16.mxu0 0
        %3915 = vmatpush1.bf16.msra.mxu0 0
        %3916 = vmatprep.subr.bf16.mxu0 0
        %3917 = vmatpush1.bf16.msra.mxu0 0
        %3918 = vmatprep.subr.bf16.mxu0 0
        %3919 = vmatpush1.bf16.msra.mxu0 0
        %3920 = vmatprep.subr.bf16.mxu0 0
        %3921 = vmatpush1.bf16.msra.mxu0 0
        %3922 = vmatprep.subr.bf16.mxu0 0
        %3923 = vmatpush1.bf16.msra.mxu0 0
        %3924 = vmatprep.subr.bf16.mxu0 0
        %3925 = vmatpush1.bf16.msra.mxu0 0
        %3926 = vmatprep.subr.bf16.mxu0 0
        %3927 = vmatpush1.bf16.msra.mxu0 0
        %3928 = vmatprep.subr.bf16.mxu0 0
        %3929 = vmatpush1.bf16.msra.mxu0 0
        %3930 = vmatprep.subr.bf16.mxu0 0
        %3931 = vmatpush1.bf16.msra.mxu0 0
        %3932 = vmatprep.subr.bf16.mxu0 0
        %3933 = vmatpush1.bf16.msra.mxu0 0
        %3934 = vmatprep.subr.bf16.mxu0 0
        %3935 = vmatpush1.bf16.msra.mxu0 0
        %3936 = vmatprep.subr.bf16.mxu0 0
        %3937 = vmatpush1.bf16.msra.mxu0 0
        %3938 = vmatprep.mubr.bf16.mxu0 0
        %3939 = vmatmul.mubr.bf16.gmra.mrb[0].mxu0 %v3901
        %v3940 = vpop.f32.mrb[0].mxu0
        %v3941 = vadd.f32 0.0, %v3940
        %v3942 = vpop.f32.mrb[0].mxu0
        %v3943 = vpop.f32.mrb[0].mxu0
        %v3944 = vadd.f32 0.0, %v3943
        %v3945 = vpop.f32.mrb[0].mxu0
        %3946 = vmatprep.mubr.bf16.mxu0 0
        %3947 = vmatmul.mubr.bf16.gmra.mrb[0].mxu0 %v3904
        %v3948 = vpop.f32.mrb[0].mxu0
        %v3949 = vadd.f32 0.0, %v3948
        %v3950 = vpop.f32.mrb[0].mxu0
        %v3951 = vpop.f32.mrb[0].mxu0
        %v3952 = vadd.f32 0.0, %v3951
        %v3953 = vpop.f32.mrb[0].mxu0
        %3954 = vdwg.mxu0
        %v3955 = vpack.c.bf16 %v3889, %v3886
        %v3956 = vpack.c.bf16 %v3897, %v3894
        %v3957 = vpack.c.bf16 %v3944, %v3941
        %v3958 = vpack.c.bf16 %v3952, %v3949
        %3959 = vmatprep.subr.bf16.mxu0 0
        %3960 = vmatpush1.bf16.xpose.msra.mxu0 %v3319
        %3961 = vmatprep.subr.bf16.mxu0 0
        %3962 = vmatpush1.bf16.xpose.msra.mxu0 %v3328
        %3963 = vmatprep.subr.bf16.mxu0 0
        %3964 = vmatpush1.bf16.xpose.msra.mxu0 0
        %3965 = vmatprep.subr.bf16.mxu0 0
        %3966 = vmatpush1.bf16.xpose.msra.mxu0 0
        %3967 = vmatprep.subr.bf16.mxu0 0
        %3968 = vmatpush1.bf16.xpose.msra.mxu0 0
        %3969 = vmatprep.subr.bf16.mxu0 0
        %3970 = vmatpush1.bf16.xpose.msra.mxu0 0
        %3971 = vmatprep.subr.bf16.mxu0 0
        %3972 = vmatpush1.bf16.xpose.msra.mxu0 0
        %3973 = vmatprep.subr.bf16.mxu0 0
        %3974 = vmatpush1.bf16.xpose.msra.mxu0 0
        %3975 = vmatprep.subr.bf16.mxu0 0
        %3976 = vmatpush1.bf16.xpose.msra.mxu0 0
        %3977 = vmatprep.subr.bf16.mxu0 0
        %3978 = vmatpush1.bf16.xpose.msra.mxu0 0
        %3979 = vmatprep.subr.bf16.mxu0 0
        %3980 = vmatpush1.bf16.xpose.msra.mxu0 0
        %3981 = vmatprep.subr.bf16.mxu0 0
        %3982 = vmatpush1.bf16.xpose.msra.mxu0 0
        %3983 = vmatprep.subr.bf16.mxu0 0
        %3984 = vmatpush1.bf16.xpose.msra.mxu0 0
        %3985 = vmatprep.subr.bf16.mxu0 0
        %3986 = vmatpush1.bf16.xpose.msra.mxu0 0
        %3987 = vmatprep.subr.bf16.mxu0 0
        %3988 = vmatpush1.bf16.xpose.msra.mxu0 0
        %3989 = vmatprep.subr.bf16.mxu0 0
        %3990 = vmatpush1.bf16.xpose.msra.mxu0 0
        %3991 = vmatprep.mubr.bf16.mxu0 0
        %3992 = vmatmul.mubr.bf16.gmra.mrb[0].mxu0 %v3316
        %v3993 = vpop.f32.mrb[0].mxu0
        %v3994 = vadd.f32 0.0, %v3993
        %v3995 = vpop.f32.mrb[0].mxu0
        %v3996 = vpop.f32.mrb[0].mxu0
        %v3997 = vadd.f32 0.0, %v3996
        %v3998 = vpop.f32.mrb[0].mxu0
        %3999 = vmatprep.mubr.bf16.mxu0 0
        %4000 = vmatmul.mubr.bf16.gmra.mrb[0].mxu0 %v3325
        %v4001 = vpop.f32.mrb[0].mxu0
        %v4002 = vadd.f32 0.0, %v4001
        %v4003 = vpop.f32.mrb[0].mxu0
        %v4004 = vpop.f32.mrb[0].mxu0
        %v4005 = vadd.f32 0.0, %v4004
        %v4006 = vpop.f32.mrb[0].mxu0
        %4007 = vdwg.mxu0
        %4008 = vmatprep.subr.bf16.mxu0 0
        %4009 = vmatpush1.bf16.xpose.msra.mxu0 %v3337
        %4010 = vmatprep.subr.bf16.mxu0 0
        %4011 = vmatpush1.bf16.xpose.msra.mxu0 %v3346
        %4012 = vmatprep.subr.bf16.mxu0 0
        %4013 = vmatpush1.bf16.xpose.msra.mxu0 0
        %4014 = vmatprep.subr.bf16.mxu0 0
        %4015 = vmatpush1.bf16.xpose.msra.mxu0 0
        %4016 = vmatprep.subr.bf16.mxu0 0
        %4017 = vmatpush1.bf16.xpose.msra.mxu0 0
        %4018 = vmatprep.subr.bf16.mxu0 0
        %4019 = vmatpush1.bf16.xpose.msra.mxu0 0
        %4020 = vmatprep.subr.bf16.mxu0 0
        %4021 = vmatpush1.bf16.xpose.msra.mxu0 0
        %4022 = vmatprep.subr.bf16.mxu0 0
        %4023 = vmatpush1.bf16.xpose.msra.mxu0 0
        %4024 = vmatprep.subr.bf16.mxu0 0
        %4025 = vmatpush1.bf16.xpose.msra.mxu0 0
        %4026 = vmatprep.subr.bf16.mxu0 0
        %4027 = vmatpush1.bf16.xpose.msra.mxu0 0
        %4028 = vmatprep.subr.bf16.mxu0 0
        %4029 = vmatpush1.bf16.xpose.msra.mxu0 0
        %4030 = vmatprep.subr.bf16.mxu0 0
        %4031 = vmatpush1.bf16.xpose.msra.mxu0 0
        %4032 = vmatprep.subr.bf16.mxu0 0
        %4033 = vmatpush1.bf16.xpose.msra.mxu0 0
        %4034 = vmatprep.subr.bf16.mxu0 0
        %4035 = vmatpush1.bf16.xpose.msra.mxu0 0
        %4036 = vmatprep.subr.bf16.mxu0 0
        %4037 = vmatpush1.bf16.xpose.msra.mxu0 0
        %4038 = vmatprep.subr.bf16.mxu0 0
        %4039 = vmatpush1.bf16.xpose.msra.mxu0 0
        %4040 = vmatprep.mubr.bf16.mxu0 0
        %4041 = vmatmul.mubr.bf16.gmra.mrb[0].mxu0 %v3334
        %v4042 = vpop.f32.mrb[0].mxu0
        %v4043 = vadd.f32 0.0, %v4042
        %v4044 = vpop.f32.mrb[0].mxu0
        %v4045 = vpop.f32.mrb[0].mxu0
        %v4046 = vadd.f32 0.0, %v4045
        %v4047 = vpop.f32.mrb[0].mxu0
        %4048 = vmatprep.mubr.bf16.mxu0 0
        %4049 = vmatmul.mubr.bf16.gmra.mrb[0].mxu0 %v3343
        %v4050 = vpop.f32.mrb[0].mxu0
        %v4051 = vadd.f32 0.0, %v4050
        %v4052 = vpop.f32.mrb[0].mxu0
        %v4053 = vpop.f32.mrb[0].mxu0
        %v4054 = vadd.f32 0.0, %v4053
        %v4055 = vpop.f32.mrb[0].mxu0
        %4056 = vdwg.mxu0
        %v4057 = vsel %vm3448, %v3994, -inf
        %4058 = vmax.xlane.f32.xlu0 %v4057
        %v4059 = vpop.xlane.xlu0 %4058
        %v4060 = vsel %vm3448, %v3997, -inf
        %4061 = vmax.xlane.f32.xlu0 %v4060
        %v4062 = vpop.xlane.xlu0 %4061
        %v4063 = vsel %vm3448, %v4002, -inf
        %4064 = vmax.xlane.f32.xlu0 %v4063
        %v4065 = vpop.xlane.xlu0 %4064
        %v4066 = vsel %vm3448, %v4005, -inf
        %4067 = vmax.xlane.f32.xlu0 %v4066
        %v4068 = vpop.xlane.xlu0 %4067
        %v4069 = vsel %vm3448, %v4043, -inf
        %4070 = vmax.xlane.f32.xlu0 %v4069
        %v4071 = vpop.xlane.xlu0 %4070
        %v4072 = vsel %vm3448, %v4046, -inf
        %4073 = vmax.xlane.f32.xlu0 %v4072
        %v4074 = vpop.xlane.xlu0 %4073
        %v4075 = vsel %vm3448, %v4051, -inf
        %4076 = vmax.xlane.f32.xlu0 %v4075
        %v4077 = vpop.xlane.xlu0 %4076
        %v4078 = vsel %vm3448, %v4054, -inf
        %4079 = vmax.xlane.f32.xlu0 %v4078
        %v4080 = vpop.xlane.xlu0 %4079
        %v4081 = vsub.f32 %v3994, %v4059
        %v4082 = vsub.f32 %v3997, %v4062
        %v4083 = vsub.f32 %v4002, %v4065
        %v4084 = vsub.f32 %v4005, %v4068
        %v4085 = vsub.f32 %v4043, %v4071
        %v4086 = vsub.f32 %v4046, %v4074
        %v4087 = vsub.f32 %v4051, %v4077
        %v4088 = vsub.f32 %v4054, %v4080
        %v4089 = vmul.f32 %v4081, 1.442695
        %v4090 = vpow.pop %v4089
        %v4091 = vmul.f32 %v4082, 1.442695
        %v4092 = vpow.pop %v4091
        %v4093 = vmul.f32 %v4083, 1.442695
        %v4094 = vpow.pop %v4093
        %v4095 = vmul.f32 %v4084, 1.442695
        %v4096 = vpow.pop %v4095
        %v4097 = vmul.f32 %v4085, 1.442695
        %v4098 = vpow.pop %v4097
        %v4099 = vmul.f32 %v4086, 1.442695
        %v4100 = vpow.pop %v4099
        %v4101 = vmul.f32 %v4087, 1.442695
        %v4102 = vpow.pop %v4101
        %v4103 = vmul.f32 %v4088, 1.442695
        %v4104 = vpow.pop %v4103
        %v4105 = vsel %vm3448, %v4090, 0.0
        %4106 = vadd.xlane.f32.xlu0 %v4105
        %v4107 = vpop.xlane.xlu0 %4106
        %v4108 = vsel %vm3448, %v4092, 0.0
        %4109 = vadd.xlane.f32.xlu0 %v4108
        %v4110 = vpop.xlane.xlu0 %4109
        %v4111 = vsel %vm3448, %v4094, 0.0
        %4112 = vadd.xlane.f32.xlu0 %v4111
        %v4113 = vpop.xlane.xlu0 %4112
        %v4114 = vsel %vm3448, %v4096, 0.0
        %4115 = vadd.xlane.f32.xlu0 %v4114
        %v4116 = vpop.xlane.xlu0 %4115
        %v4117 = vsel %vm3448, %v4098, 0.0
        %4118 = vadd.xlane.f32.xlu0 %v4117
        %v4119 = vpop.xlane.xlu0 %4118
        %v4120 = vsel %vm3448, %v4100, 0.0
        %4121 = vadd.xlane.f32.xlu0 %v4120
        %v4122 = vpop.xlane.xlu0 %4121
        %v4123 = vsel %vm3448, %v4102, 0.0
        %4124 = vadd.xlane.f32.xlu0 %v4123
        %v4125 = vpop.xlane.xlu0 %4124
        %v4126 = vsel %vm3448, %v4104, 0.0
        %4127 = vadd.xlane.f32.xlu0 %v4126
        %v4128 = vpop.xlane.xlu0 %4127
        %v4129 = vrcp.pop %v4107
        %v4130 = vrcp.pop %v4110
        %v4131 = vrcp.pop %v4113
        %v4132 = vrcp.pop %v4116
        %v4133 = vrcp.pop %v4119
        %v4134 = vrcp.pop %v4122
        %v4135 = vrcp.pop %v4125
        %v4136 = vrcp.pop %v4128
        %v4137 = vmul.f32 %v4090, %v4129
        %v4138 = vmul.f32 %v4092, %v4130
        %v4139 = vmul.f32 %v4094, %v4131
        %v4140 = vmul.f32 %v4096, %v4132
        %v4141 = vmul.f32 %v4098, %v4133
        %v4142 = vmul.f32 %v4100, %v4134
        %v4143 = vmul.f32 %v4102, %v4135
        %v4144 = vmul.f32 %v4104, %v4136
        %v4145 = vpack.c.bf16 %v4138, %v4137
        %v4146 = vpack.c.bf16 %v4140, %v4139
        %v4147 = vpack.c.bf16 %v4142, %v4141
        %v4148 = vpack.c.bf16 %v4144, %v4143
        %v4150 = vsel %vm3448, %v4145, 0
        %v4153 = vsel %vm3448, %v4146, 0
        %4155 = vmatprep.subr.bf16.mxu0 0
        %4156 = vmatpush1.bf16.msra.mxu0 %v3322
        %4157 = vmatprep.subr.bf16.mxu0 0
        %4158 = vmatpush1.bf16.msra.mxu0 %v3331
        %4159 = vmatprep.subr.bf16.mxu0 0
        %4160 = vmatpush1.bf16.msra.mxu0 0
        %4161 = vmatprep.subr.bf16.mxu0 0
        %4162 = vmatpush1.bf16.msra.mxu0 0
        %4163 = vmatprep.subr.bf16.mxu0 0
        %4164 = vmatpush1.bf16.msra.mxu0 0
        %4165 = vmatprep.subr.bf16.mxu0 0
        %4166 = vmatpush1.bf16.msra.mxu0 0
        %4167 = vmatprep.subr.bf16.mxu0 0
        %4168 = vmatpush1.bf16.msra.mxu0 0
        %4169 = vmatprep.subr.bf16.mxu0 0
        %4170 = vmatpush1.bf16.msra.mxu0 0
        %4171 = vmatprep.subr.bf16.mxu0 0
        %4172 = vmatpush1.bf16.msra.mxu0 0
        %4173 = vmatprep.subr.bf16.mxu0 0
        %4174 = vmatpush1.bf16.msra.mxu0 0
        %4175 = vmatprep.subr.bf16.mxu0 0
        %4176 = vmatpush1.bf16.msra.mxu0 0
        %4177 = vmatprep.subr.bf16.mxu0 0
        %4178 = vmatpush1.bf16.msra.mxu0 0
        %4179 = vmatprep.subr.bf16.mxu0 0
        %4180 = vmatpush1.bf16.msra.mxu0 0
        %4181 = vmatprep.subr.bf16.mxu0 0
        %4182 = vmatpush1.bf16.msra.mxu0 0
        %4183 = vmatprep.subr.bf16.mxu0 0
        %4184 = vmatpush1.bf16.msra.mxu0 0
        %4185 = vmatprep.subr.bf16.mxu0 0
        %4186 = vmatpush1.bf16.msra.mxu0 0
        %4187 = vmatprep.mubr.bf16.mxu0 0
        %4188 = vmatmul.mubr.bf16.gmra.mrb[0].mxu0 %v4150
        %v4189 = vpop.f32.mrb[0].mxu0
        %v4190 = vadd.f32 0.0, %v4189
        %v4191 = vpop.f32.mrb[0].mxu0
        %v4192 = vpop.f32.mrb[0].mxu0
        %v4193 = vadd.f32 0.0, %v4192
        %v4194 = vpop.f32.mrb[0].mxu0
        %4195 = vmatprep.mubr.bf16.mxu0 0
        %4196 = vmatmul.mubr.bf16.gmra.mrb[0].mxu0 %v4153
        %v4197 = vpop.f32.mrb[0].mxu0
        %v4198 = vadd.f32 0.0, %v4197
        %v4199 = vpop.f32.mrb[0].mxu0
        %v4200 = vpop.f32.mrb[0].mxu0
        %v4201 = vadd.f32 0.0, %v4200
        %v4202 = vpop.f32.mrb[0].mxu0
        %4203 = vdwg.mxu0
        %v4205 = vsel %vm3448, %v4147, 0
        %v4208 = vsel %vm3448, %v4148, 0
        %4210 = vmatprep.subr.bf16.mxu0 0
        %4211 = vmatpush1.bf16.msra.mxu0 %v3340
        %4212 = vmatprep.subr.bf16.mxu0 0
        %4213 = vmatpush1.bf16.msra.mxu0 %v3349
        %4214 = vmatprep.subr.bf16.mxu0 0
        %4215 = vmatpush1.bf16.msra.mxu0 0
        %4216 = vmatprep.subr.bf16.mxu0 0
        %4217 = vmatpush1.bf16.msra.mxu0 0
        %4218 = vmatprep.subr.bf16.mxu0 0
        %4219 = vmatpush1.bf16.msra.mxu0 0
        %4220 = vmatprep.subr.bf16.mxu0 0
        %4221 = vmatpush1.bf16.msra.mxu0 0
        %4222 = vmatprep.subr.bf16.mxu0 0
        %4223 = vmatpush1.bf16.msra.mxu0 0
        %4224 = vmatprep.subr.bf16.mxu0 0
        %4225 = vmatpush1.bf16.msra.mxu0 0
        %4226 = vmatprep.subr.bf16.mxu0 0
        %4227 = vmatpush1.bf16.msra.mxu0 0
        %4228 = vmatprep.subr.bf16.mxu0 0
        %4229 = vmatpush1.bf16.msra.mxu0 0
        %4230 = vmatprep.subr.bf16.mxu0 0
        %4231 = vmatpush1.bf16.msra.mxu0 0
        %4232 = vmatprep.subr.bf16.mxu0 0
        %4233 = vmatpush1.bf16.msra.mxu0 0
        %4234 = vmatprep.subr.bf16.mxu0 0
        %4235 = vmatpush1.bf16.msra.mxu0 0
        %4236 = vmatprep.subr.bf16.mxu0 0
        %4237 = vmatpush1.bf16.msra.mxu0 0
        %4238 = vmatprep.subr.bf16.mxu0 0
        %4239 = vmatpush1.bf16.msra.mxu0 0
        %4240 = vmatprep.subr.bf16.mxu0 0
        %4241 = vmatpush1.bf16.msra.mxu0 0
        %4242 = vmatprep.mubr.bf16.mxu0 0
        %4243 = vmatmul.mubr.bf16.gmra.mrb[0].mxu0 %v4205
        %v4244 = vpop.f32.mrb[0].mxu0
        %v4245 = vadd.f32 0.0, %v4244
        %v4246 = vpop.f32.mrb[0].mxu0
        %v4247 = vpop.f32.mrb[0].mxu0
        %v4248 = vadd.f32 0.0, %v4247
        %v4249 = vpop.f32.mrb[0].mxu0
        %4250 = vmatprep.mubr.bf16.mxu0 0
        %4251 = vmatmul.mubr.bf16.gmra.mrb[0].mxu0 %v4208
        %v4252 = vpop.f32.mrb[0].mxu0
        %v4253 = vadd.f32 0.0, %v4252
        %v4254 = vpop.f32.mrb[0].mxu0
        %v4255 = vpop.f32.mrb[0].mxu0
        %v4256 = vadd.f32 0.0, %v4255
        %v4257 = vpop.f32.mrb[0].mxu0
        %4258 = vdwg.mxu0
        %v4259 = vpack.c.bf16 %v4193, %v4190
        %v4260 = vpack.c.bf16 %v4201, %v4198
        %v4261 = vpack.c.bf16 %v4248, %v4245
        %v4262 = vpack.c.bf16 %v4256, %v4253
        %v4263 = vld [vmem:[%s834] sm:$0xff]
        %v4264 = vld [vmem:[%s834 + $0x8] sm:$0xf]
        %v4265 = vld [vmem:[%s834 + $0xc] sm:$0xff]
        %v4266 = vld [vmem:[%s834 + $0x14] sm:$0xf]
        %v4267 = vld [vmem:[%s834 + $0x18] sm:$0xff]
        %v4268 = vld [vmem:[%s834 + $0x20] sm:$0xf]
        %v4269 = vld [vmem:[%s834 + $0x24] sm:$0xff]
        %v4270 = vld [vmem:[%s834 + $0x2c] sm:$0xf]
        %v4271 = vld [vmem:[%s834 + $0x30] sm:$0xff]
        %v4272 = vld [vmem:[%s834 + $0x38] sm:$0xf]
        %v4273 = vld [vmem:[%s834 + $0x3c] sm:$0xff]
        %v4274 = vld [vmem:[%s834 + $0x44] sm:$0xf]
        %v4275 = vld [vmem:[%s834 + $0x48] sm:$0xff]
        %v4276 = vld [vmem:[%s834 + $0x50] sm:$0xf]
        %v4277 = vld [vmem:[%s834 + $0x54] sm:$0xff]
        %v4278 = vld [vmem:[%s834 + $0x5c] sm:$0xf]
        %v4279 = vld [vmem:[%s834 + $0x60] sm:$0xff]
        %v4280 = vld [vmem:[%s834 + $0x68] sm:$0xf]
        %v4281 = vld [vmem:[%s834 + $0x6c] sm:$0xff]
        %v4282 = vld [vmem:[%s834 + $0x74] sm:$0xf]
        %v4283 = vld [vmem:[%s834 + $0x78] sm:$0xff]
        %v4284 = vld [vmem:[%s834 + $0x80] sm:$0xf]
        %v4285 = vld [vmem:[%s834 + $0x84] sm:$0xff]
        %v4286 = vld [vmem:[%s834 + $0x8c] sm:$0xf]
        %v4287 = vld [vmem:[%s834 + $0x90] sm:$0xff]
        %v4288 = vld [vmem:[%s834 + $0x98] sm:$0xf]
        %v4289 = vld [vmem:[%s834 + $0x9c] sm:$0xff]
        %v4290 = vld [vmem:[%s834 + $0xa4] sm:$0xf]
        %v4291 = vld [vmem:[%s834 + $0xa8] sm:$0xff]
        %v4292 = vld [vmem:[%s834 + $0xb0] sm:$0xf]
        %v4293 = vld [vmem:[%s834 + $0xb4] sm:$0xff]
        %v4294 = vld [vmem:[%s834 + $0xbc] sm:$0xf]
        %v4295 = vld [vmem:[%s834 + $0xc0] sm:$0xff]
        %v4296 = vld [vmem:[%s834 + $0xc8] sm:$0xf]
        %v4297 = vld [vmem:[%s834 + $0xcc] sm:$0xff]
        %v4298 = vld [vmem:[%s834 + $0xd4] sm:$0xf]
        %v4299 = vld [vmem:[%s834 + $0xd8] sm:$0xff]
        %v4300 = vld [vmem:[%s834 + $0xe0] sm:$0xf]
        %v4301 = vld [vmem:[%s834 + $0xe4] sm:$0xff]
        %v4302 = vld [vmem:[%s834 + $0xec] sm:$0xf]
        %v4303 = vld [vmem:[%s834 + $0xf0] sm:$0xff]
        %v4304 = vld [vmem:[%s834 + $0xf8] sm:$0xf]
        %v4305 = vld [vmem:[%s834 + $0xfc] sm:$0xff]
        %v4306 = vld [vmem:[%s834 + $0x104] sm:$0xf]
        %v4307 = vld [vmem:[%s834 + $0x108] sm:$0xff]
        %v4308 = vld [vmem:[%s834 + $0x110] sm:$0xf]
        %v4309 = vld [vmem:[%s834 + $0x114] sm:$0xff]
        %v4310 = vld [vmem:[%s834 + $0x11c] sm:$0xf]
        %v4311 = vld [vmem:[%s834 + $0x120] sm:$0xff]
        %v4312 = vld [vmem:[%s834 + $0x128] sm:$0xf]
        %v4313 = vld [vmem:[%s834 + $0x12c] sm:$0xff]
        %v4314 = vld [vmem:[%s834 + $0x134] sm:$0xf]
        %v4315 = vld [vmem:[%s834 + $0x138] sm:$0xff]
        %v4316 = vld [vmem:[%s834 + $0x140] sm:$0xf]
        %v4317 = vld [vmem:[%s834 + $0x144] sm:$0xff]
        %v4318 = vld [vmem:[%s834 + $0x14c] sm:$0xf]
        %v4319 = vld [vmem:[%s834 + $0x150] sm:$0xff]
        %v4320 = vld [vmem:[%s834 + $0x158] sm:$0xf]
        %v4321 = vld [vmem:[%s834 + $0x15c] sm:$0xff]
        %v4322 = vld [vmem:[%s834 + $0x164] sm:$0xf]
        %v4323 = vld [vmem:[%s834 + $0x168] sm:$0xff]
        %v4324 = vld [vmem:[%s834 + $0x170] sm:$0xf]
        %v4325 = vld [vmem:[%s834 + $0x174] sm:$0xff]
        %v4326 = vld [vmem:[%s834 + $0x17c] sm:$0xf]
        %v4327 = vld [vmem:[%s834 + $0x180] sm:$0xff]
        %v4328 = vld [vmem:[%s834 + $0x188] sm:$0xf]
        %v4329 = vld [vmem:[%s834 + $0x18c] sm:$0xff]
        %v4330 = vld [vmem:[%s834 + $0x194] sm:$0xf]
        %v4331 = vld [vmem:[%s834 + $0x198] sm:$0xff]
        %v4332 = vld [vmem:[%s834 + $0x1a0] sm:$0xf]
        %v4333 = vld [vmem:[%s834 + $0x1a4] sm:$0xff]
        %v4334 = vld [vmem:[%s834 + $0x1ac] sm:$0xf]
        %v4335 = vld [vmem:[%s834 + $0x1b0] sm:$0xff]
        %v4336 = vld [vmem:[%s834 + $0x1b8] sm:$0xf]
        %v4337 = vld [vmem:[%s834 + $0x1bc] sm:$0xff]
        %v4338 = vld [vmem:[%s834 + $0x1c4] sm:$0xf]
        %v4339 = vld [vmem:[%s834 + $0x1c8] sm:$0xff]
        %v4340 = vld [vmem:[%s834 + $0x1d0] sm:$0xf]
        %v4341 = vld [vmem:[%s834 + $0x1d4] sm:$0xff]
        %v4342 = vld [vmem:[%s834 + $0x1dc] sm:$0xf]
        %v4343 = vld [vmem:[%s834 + $0x1e0] sm:$0xff]
        %v4344 = vld [vmem:[%s834 + $0x1e8] sm:$0xf]
        %v4345 = vld [vmem:[%s834 + $0x1ec] sm:$0xff]
        %v4346 = vld [vmem:[%s834 + $0x1f4] sm:$0xf]
        %v4347 = vld [vmem:[%s834 + $0x1f8] sm:$0xff]
        %v4348 = vld [vmem:[%s834 + $0x200] sm:$0xf]
        %v4349 = vld [vmem:[%s834 + $0x204] sm:$0xff]
        %v4350 = vld [vmem:[%s834 + $0x20c] sm:$0xf]
        %v4351 = vld [vmem:[%s834 + $0x210] sm:$0xff]
        %v4352 = vld [vmem:[%s834 + $0x218] sm:$0xf]
        %v4353 = vld [vmem:[%s834 + $0x21c] sm:$0xff]
        %v4354 = vld [vmem:[%s834 + $0x224] sm:$0xf]
        %v4355 = vld [vmem:[%s834 + $0x228] sm:$0xff]
        %v4356 = vld [vmem:[%s834 + $0x230] sm:$0xf]
        %v4357 = vld [vmem:[%s834 + $0x234] sm:$0xff]
        %v4358 = vld [vmem:[%s834 + $0x23c] sm:$0xf]
        %v4359 = vld [vmem:[%s683] sm:$0x7]
        %v4361 = vlaneseq
        %v4362 = vshrl.u32 %v4361, 7
        %v4363 = vsub.s32 0, %v4362
        %v4364 = vrot.slane %v4359, %v4363
        %v4365 = vlaneseq
        %v4366 = vshrl.u32 %v4365, 7
        %v4367 = vsub.s32 1, %v4366
        %v4368 = vrot.slane %v4359, %v4367
        %v4369 = vlaneseq
        %v4370 = vshrl.u32 %v4369, 7
        %v4371 = vsub.s32 2, %v4370
        %v4372 = vrot.slane %v4359, %v4371
        %v4472 = vunpack.c.l.b16 %v4263
        %v4473 = vunpack.c.h.b16 %v4263
        %v4474 = vunpack.c.l.b16 %v4264
        %v4475 = vunpack.c.l.b16 %v4265
        %v4476 = vunpack.c.h.b16 %v4265
        %v4477 = vunpack.c.l.b16 %v4266
        %v4478 = vunpack.c.l.b16 %v4267
        %v4479 = vunpack.c.h.b16 %v4267
        %v4480 = vunpack.c.l.b16 %v4268
        %v4481 = vunpack.c.l.b16 %v4269
        %v4482 = vunpack.c.h.b16 %v4269
        %v4483 = vunpack.c.l.b16 %v4270
        %v4484 = vunpack.c.l.b16 %v4271
        %v4485 = vunpack.c.h.b16 %v4271
        %v4486 = vunpack.c.l.b16 %v4272
        %v4487 = vunpack.c.l.b16 %v4273
        %v4488 = vunpack.c.h.b16 %v4273
        %v4489 = vunpack.c.l.b16 %v4274
        %v4490 = vunpack.c.l.b16 %v4275
        %v4491 = vunpack.c.h.b16 %v4275
        %v4492 = vunpack.c.l.b16 %v4276
        %v4493 = vunpack.c.l.b16 %v4277
        %v4494 = vunpack.c.h.b16 %v4277
        %v4495 = vunpack.c.l.b16 %v4278
        %v4496 = vunpack.c.l.b16 %v4279
        %v4497 = vunpack.c.h.b16 %v4279
        %v4498 = vunpack.c.l.b16 %v4280
        %v4499 = vunpack.c.l.b16 %v4281
        %v4500 = vunpack.c.h.b16 %v4281
        %v4501 = vunpack.c.l.b16 %v4282
        %v4502 = vunpack.c.l.b16 %v4283
        %v4503 = vunpack.c.h.b16 %v4283
        %v4504 = vunpack.c.l.b16 %v4284
        %v4505 = vunpack.c.l.b16 %v4285
        %v4506 = vunpack.c.h.b16 %v4285
        %v4507 = vunpack.c.l.b16 %v4286
        %v4508 = vunpack.c.l.b16 %v4287
        %v4509 = vunpack.c.h.b16 %v4287
        %v4510 = vunpack.c.l.b16 %v4288
        %v4511 = vunpack.c.l.b16 %v4289
        %v4512 = vunpack.c.h.b16 %v4289
        %v4513 = vunpack.c.l.b16 %v4290
        %v4514 = vunpack.c.l.b16 %v4291
        %v4515 = vunpack.c.h.b16 %v4291
        %v4516 = vunpack.c.l.b16 %v4292
        %v4517 = vunpack.c.l.b16 %v4293
        %v4518 = vunpack.c.h.b16 %v4293
        %v4519 = vunpack.c.l.b16 %v4294
        %v4520 = vunpack.c.l.b16 %v4295
        %v4521 = vunpack.c.h.b16 %v4295
        %v4522 = vunpack.c.l.b16 %v4296
        %v4523 = vunpack.c.l.b16 %v4297
        %v4524 = vunpack.c.h.b16 %v4297
        %v4525 = vunpack.c.l.b16 %v4298
        %v4526 = vunpack.c.l.b16 %v4299
        %v4527 = vunpack.c.h.b16 %v4299
        %v4528 = vunpack.c.l.b16 %v4300
        %v4529 = vunpack.c.l.b16 %v4301
        %v4530 = vunpack.c.h.b16 %v4301
        %v4531 = vunpack.c.l.b16 %v4302
        %v4532 = vunpack.c.l.b16 %v4303
        %v4533 = vunpack.c.h.b16 %v4303
        %v4534 = vunpack.c.l.b16 %v4304
        %v4535 = vunpack.c.l.b16 %v4305
        %v4536 = vunpack.c.h.b16 %v4305
        %v4537 = vunpack.c.l.b16 %v4306
        %v4538 = vunpack.c.l.b16 %v4307
        %v4539 = vunpack.c.h.b16 %v4307
        %v4540 = vunpack.c.l.b16 %v4308
        %v4541 = vunpack.c.l.b16 %v4309
        %v4542 = vunpack.c.h.b16 %v4309
        %v4543 = vunpack.c.l.b16 %v4310
        %v4544 = vunpack.c.l.b16 %v4311
        %v4545 = vunpack.c.h.b16 %v4311
        %v4546 = vunpack.c.l.b16 %v4312
        %v4547 = vunpack.c.l.b16 %v4313
        %v4548 = vunpack.c.h.b16 %v4313
        %v4549 = vunpack.c.l.b16 %v4314
        %v4550 = vunpack.c.l.b16 %v4315
        %v4551 = vunpack.c.h.b16 %v4315
        %v4552 = vunpack.c.l.b16 %v4316
        %v4553 = vunpack.c.l.b16 %v4317
        %v4554 = vunpack.c.h.b16 %v4317
        %v4555 = vunpack.c.l.b16 %v4318
        %v4556 = vunpack.c.l.b16 %v4319
        %v4557 = vunpack.c.h.b16 %v4319
        %v4558 = vunpack.c.l.b16 %v4320
        %v4559 = vunpack.c.l.b16 %v4321
        %v4560 = vunpack.c.h.b16 %v4321
        %v4561 = vunpack.c.l.b16 %v4322
        %v4562 = vunpack.c.l.b16 %v4323
        %v4563 = vunpack.c.h.b16 %v4323
        %v4564 = vunpack.c.l.b16 %v4324
        %v4565 = vunpack.c.l.b16 %v4325
        %v4566 = vunpack.c.h.b16 %v4325
        %v4567 = vunpack.c.l.b16 %v4326
        %v4568 = vunpack.c.l.b16 %v4327
        %v4569 = vunpack.c.h.b16 %v4327
        %v4570 = vunpack.c.l.b16 %v4328
        %v4571 = vunpack.c.l.b16 %v4329
        %v4572 = vunpack.c.h.b16 %v4329
        %v4573 = vunpack.c.l.b16 %v4330
        %v4574 = vunpack.c.l.b16 %v4331
        %v4575 = vunpack.c.h.b16 %v4331
        %v4576 = vunpack.c.l.b16 %v4332
        %v4577 = vunpack.c.l.b16 %v4333
        %v4578 = vunpack.c.h.b16 %v4333
        %v4579 = vunpack.c.l.b16 %v4334
        %v4580 = vunpack.c.l.b16 %v4335
        %v4581 = vunpack.c.h.b16 %v4335
        %v4582 = vunpack.c.l.b16 %v4336
        %v4583 = vunpack.c.l.b16 %v4337
        %v4584 = vunpack.c.h.b16 %v4337
        %v4585 = vunpack.c.l.b16 %v4338
        %v4586 = vunpack.c.l.b16 %v4339
        %v4587 = vunpack.c.h.b16 %v4339
        %v4588 = vunpack.c.l.b16 %v4340
        %v4589 = vunpack.c.l.b16 %v4341
        %v4590 = vunpack.c.h.b16 %v4341
        %v4591 = vunpack.c.l.b16 %v4342
        %v4592 = vunpack.c.l.b16 %v4343
        %v4593 = vunpack.c.h.b16 %v4343
        %v4594 = vunpack.c.l.b16 %v4344
        %v4595 = vunpack.c.l.b16 %v4345
        %v4596 = vunpack.c.h.b16 %v4345
        %v4597 = vunpack.c.l.b16 %v4346
        %v4598 = vunpack.c.l.b16 %v4347
        %v4599 = vunpack.c.h.b16 %v4347
        %v4600 = vunpack.c.l.b16 %v4348
        %v4601 = vunpack.c.l.b16 %v4349
        %v4602 = vunpack.c.h.b16 %v4349
        %v4603 = vunpack.c.l.b16 %v4350
        %v4604 = vunpack.c.l.b16 %v4351
        %v4605 = vunpack.c.h.b16 %v4351
        %v4606 = vunpack.c.l.b16 %v4352
        %v4607 = vunpack.c.l.b16 %v4353
        %v4608 = vunpack.c.h.b16 %v4353
        %v4609 = vunpack.c.l.b16 %v4354
        %v4610 = vunpack.c.l.b16 %v4355
        %v4611 = vunpack.c.h.b16 %v4355
        %v4612 = vunpack.c.l.b16 %v4356
        %v4613 = vunpack.c.l.b16 %v4357
        %v4614 = vunpack.c.h.b16 %v4357
        %v4615 = vunpack.c.l.b16 %v4358
        %v4616 = vpack.c.b16 %v4475, %v4472
        %v4617 = vpack.c.b16 %v4476, %v4473
        %v4618 = vpack.c.b16 %v4477, %v4474
        %v4619 = vpack.c.b16 %v4481, %v4478
        %v4620 = vpack.c.b16 %v4482, %v4479
        %v4621 = vpack.c.b16 %v4483, %v4480
        %v4622 = vpack.c.b16 %v4487, %v4484
        %v4623 = vpack.c.b16 %v4488, %v4485
        %v4624 = vpack.c.b16 %v4489, %v4486
        %v4625 = vpack.c.b16 %v4493, %v4490
        %v4626 = vpack.c.b16 %v4494, %v4491
        %v4627 = vpack.c.b16 %v4495, %v4492
        %v4628 = vpack.c.b16 %v4499, %v4496
        %v4629 = vpack.c.b16 %v4500, %v4497
        %v4630 = vpack.c.b16 %v4501, %v4498
        %v4631 = vpack.c.b16 %v4505, %v4502
        %v4632 = vpack.c.b16 %v4506, %v4503
        %v4633 = vpack.c.b16 %v4507, %v4504
        %v4634 = vpack.c.b16 %v4511, %v4508
        %v4635 = vpack.c.b16 %v4512, %v4509
        %v4636 = vpack.c.b16 %v4513, %v4510
        %v4637 = vpack.c.b16 %v4517, %v4514
        %v4638 = vpack.c.b16 %v4518, %v4515
        %v4639 = vpack.c.b16 %v4519, %v4516
        %v4640 = vpack.c.b16 %v4523, %v4520
        %v4641 = vpack.c.b16 %v4524, %v4521
        %v4642 = vpack.c.b16 %v4525, %v4522
        %v4643 = vpack.c.b16 %v4529, %v4526
        %v4644 = vpack.c.b16 %v4530, %v4527
        %v4645 = vpack.c.b16 %v4531, %v4528
        %v4646 = vpack.c.b16 %v4535, %v4532
        %v4647 = vpack.c.b16 %v4536, %v4533
        %v4648 = vpack.c.b16 %v4537, %v4534
        %v4649 = vpack.c.b16 %v4541, %v4538
        %v4650 = vpack.c.b16 %v4542, %v4539
        %v4651 = vpack.c.b16 %v4543, %v4540
        %v4652 = vpack.c.b16 %v4547, %v4544
        %v4653 = vpack.c.b16 %v4548, %v4545
        %v4654 = vpack.c.b16 %v4549, %v4546
        %v4655 = vpack.c.b16 %v4553, %v4550
        %v4656 = vpack.c.b16 %v4554, %v4551
        %v4657 = vpack.c.b16 %v4555, %v4552
        %v4658 = vpack.c.b16 %v4559, %v4556
        %v4659 = vpack.c.b16 %v4560, %v4557
        %v4660 = vpack.c.b16 %v4561, %v4558
        %v4661 = vpack.c.b16 %v4565, %v4562
        %v4662 = vpack.c.b16 %v4566, %v4563
        %v4663 = vpack.c.b16 %v4567, %v4564
        %v4664 = vpack.c.b16 %v4571, %v4568
        %v4665 = vpack.c.b16 %v4572, %v4569
        %v4666 = vpack.c.b16 %v4573, %v4570
        %v4667 = vpack.c.b16 %v4577, %v4574
        %v4668 = vpack.c.b16 %v4578, %v4575
        %v4669 = vpack.c.b16 %v4579, %v4576
        %v4670 = vpack.c.b16 %v4583, %v4580
        %v4671 = vpack.c.b16 %v4584, %v4581
        %v4672 = vpack.c.b16 %v4585, %v4582
        %v4673 = vpack.c.b16 %v4589, %v4586
        %v4674 = vpack.c.b16 %v4590, %v4587
        %v4675 = vpack.c.b16 %v4591, %v4588
        %v4676 = vpack.c.b16 %v4595, %v4592
        %v4677 = vpack.c.b16 %v4596, %v4593
        %v4678 = vpack.c.b16 %v4597, %v4594
        %v4679 = vpack.c.b16 %v4601, %v4598
        %v4680 = vpack.c.b16 %v4602, %v4599
        %v4681 = vpack.c.b16 %v4603, %v4600
        %v4682 = vpack.c.b16 %v4607, %v4604
        %v4683 = vpack.c.b16 %v4608, %v4605
        %v4684 = vpack.c.b16 %v4609, %v4606
        %v4685 = vpack.c.b16 %v4613, %v4610
        %v4686 = vpack.c.b16 %v4614, %v4611
        %v4687 = vpack.c.b16 %v4615, %v4612
        %4760 = vmatprep.subr.bf16.mxu0 %v4617
        %4761 = vmatpush1.bf16.msra.mxu0 %v4616
        %4762 = vmatprep.subr.bf16.mxu0 %v4620
        %4763 = vmatpush1.bf16.msra.mxu0 %v4619
        %4764 = vmatprep.subr.bf16.mxu0 %v4623
        %4765 = vmatpush1.bf16.msra.mxu0 %v4622
        %4766 = vmatprep.subr.bf16.mxu0 %v4626
        %4767 = vmatpush1.bf16.msra.mxu0 %v4625
        %4768 = vmatprep.subr.bf16.mxu0 %v4629
        %4769 = vmatpush1.bf16.msra.mxu0 %v4628
        %4770 = vmatprep.subr.bf16.mxu0 %v4632
        %4771 = vmatpush1.bf16.msra.mxu0 %v4631
        %4772 = vmatprep.subr.bf16.mxu0 %v4635
        %4773 = vmatpush1.bf16.msra.mxu0 %v4634
        %4774 = vmatprep.subr.bf16.mxu0 %v4638
        %4775 = vmatpush1.bf16.msra.mxu0 %v4637
        %4776 = vmatprep.subr.bf16.mxu0 %v4641
        %4777 = vmatpush1.bf16.msra.mxu0 %v4640
        %4778 = vmatprep.subr.bf16.mxu0 %v4644
        %4779 = vmatpush1.bf16.msra.mxu0 %v4643
        %4780 = vmatprep.subr.bf16.mxu0 %v4647
        %4781 = vmatpush1.bf16.msra.mxu0 %v4646
        %4782 = vmatprep.subr.bf16.mxu0 %v4650
        %4783 = vmatpush1.bf16.msra.mxu0 %v4649
        %4784 = vmatprep.subr.bf16.mxu0 %v4653
        %4785 = vmatpush1.bf16.msra.mxu0 %v4652
        %4786 = vmatprep.subr.bf16.mxu0 %v4656
        %4787 = vmatpush1.bf16.msra.mxu0 %v4655
        %4788 = vmatprep.subr.bf16.mxu0 %v4659
        %4789 = vmatpush1.bf16.msra.mxu0 %v4658
        %4790 = vmatprep.subr.bf16.mxu0 %v4662
        %4791 = vmatpush1.bf16.msra.mxu0 %v4661
        %4792 = vmatprep.mubr.bf16.mxu0 %v3955
        %4793 = vmatmul.mubr.bf16.gmra.mrb[0].mxu0 %v3651
        %v4794 = vpop.f32.mrb[0].mxu0
        %v4795 = vadd.f32 %v4364, %v4794
        %v4796 = vpop.f32.mrb[0].mxu0
        %v4797 = vadd.f32 %v4368, %v4796
        %v4798 = vpop.f32.mrb[0].mxu0
        %v4799 = vadd.f32 %v4364, %v4798
        %v4800 = vpop.f32.mrb[0].mxu0
        %v4801 = vadd.f32 %v4368, %v4800
        %4802 = vmatprep.mubr.bf16.mxu0 %v3956
        %4803 = vmatmul.mubr.bf16.gmra.mrb[0].mxu0 %v3652
        %v4804 = vpop.f32.mrb[0].mxu0
        %v4805 = vadd.f32 %v4364, %v4804
        %v4806 = vpop.f32.mrb[0].mxu0
        %v4807 = vadd.f32 %v4368, %v4806
        %v4808 = vpop.f32.mrb[0].mxu0
        %v4809 = vadd.f32 %v4364, %v4808
        %v4810 = vpop.f32.mrb[0].mxu0
        %v4811 = vadd.f32 %v4368, %v4810
        %4812 = vmatprep.mubr.bf16.mxu0 %v3957
        %4813 = vmatmul.mubr.bf16.gmra.mrb[0].mxu0 %v3653
        %v4814 = vpop.f32.mrb[0].mxu0
        %v4815 = vadd.f32 %v4364, %v4814
        %v4816 = vpop.f32.mrb[0].mxu0
        %v4817 = vadd.f32 %v4368, %v4816
        %v4818 = vpop.f32.mrb[0].mxu0
        %v4819 = vadd.f32 %v4364, %v4818
        %v4820 = vpop.f32.mrb[0].mxu0
        %v4821 = vadd.f32 %v4368, %v4820
        %4822 = vmatprep.mubr.bf16.mxu0 %v3958
        %4823 = vmatmul.mubr.bf16.gmra.mrb[0].mxu0 %v3654
        %v4824 = vpop.f32.mrb[0].mxu0
        %v4825 = vadd.f32 %v4364, %v4824
        %v4826 = vpop.f32.mrb[0].mxu0
        %v4827 = vadd.f32 %v4368, %v4826
        %v4828 = vpop.f32.mrb[0].mxu0
        %v4829 = vadd.f32 %v4364, %v4828
        %v4830 = vpop.f32.mrb[0].mxu0
        %v4831 = vadd.f32 %v4368, %v4830
        %4832 = vdwg.mxu0
        %4833 = vmatprep.subr.bf16.mxu0 %v4665
        %4834 = vmatpush1.bf16.msra.mxu0 %v4664
        %4835 = vmatprep.subr.bf16.mxu0 %v4668
        %4836 = vmatpush1.bf16.msra.mxu0 %v4667
        %4837 = vmatprep.subr.bf16.mxu0 %v4671
        %4838 = vmatpush1.bf16.msra.mxu0 %v4670
        %4839 = vmatprep.subr.bf16.mxu0 %v4674
        %4840 = vmatpush1.bf16.msra.mxu0 %v4673
        %4841 = vmatprep.subr.bf16.mxu0 %v4677
        %4842 = vmatpush1.bf16.msra.mxu0 %v4676
        %4843 = vmatprep.subr.bf16.mxu0 %v4680
        %4844 = vmatpush1.bf16.msra.mxu0 %v4679
        %4845 = vmatprep.subr.bf16.mxu0 %v4683
        %4846 = vmatpush1.bf16.msra.mxu0 %v4682
        %4847 = vmatprep.subr.bf16.mxu0 %v4686
        %4848 = vmatpush1.bf16.msra.mxu0 %v4685
        %4849 = vmatprep.subr.bf16.mxu0 0
        %4850 = vmatpush1.bf16.msra.mxu0 0
        %4851 = vmatprep.subr.bf16.mxu0 0
        %4852 = vmatpush1.bf16.msra.mxu0 0
        %4853 = vmatprep.subr.bf16.mxu0 0
        %4854 = vmatpush1.bf16.msra.mxu0 0
        %4855 = vmatprep.subr.bf16.mxu0 0
        %4856 = vmatpush1.bf16.msra.mxu0 0
        %4857 = vmatprep.subr.bf16.mxu0 0
        %4858 = vmatpush1.bf16.msra.mxu0 0
        %4859 = vmatprep.subr.bf16.mxu0 0
        %4860 = vmatpush1.bf16.msra.mxu0 0
        %4861 = vmatprep.subr.bf16.mxu0 0
        %4862 = vmatpush1.bf16.msra.mxu0 0
        %4863 = vmatprep.subr.bf16.mxu0 0
        %4864 = vmatpush1.bf16.msra.mxu0 0
        %4865 = vmatprep.mubr.bf16.mxu0 0
        %4866 = vmatmul.mubr.bf16.gmra.mrb[0].mxu0 %v4259
        %v4867 = vpop.f32.mrb[0].mxu0
        %v4868 = vadd.f32 %v4795, %v4867
        %v4869 = vpop.f32.mrb[0].mxu0
        %v4870 = vadd.f32 %v4797, %v4869
        %v4871 = vpop.f32.mrb[0].mxu0
        %v4872 = vadd.f32 %v4799, %v4871
        %v4873 = vpop.f32.mrb[0].mxu0
        %v4874 = vadd.f32 %v4801, %v4873
        %4875 = vmatprep.mubr.bf16.mxu0 0
        %4876 = vmatmul.mubr.bf16.gmra.mrb[0].mxu0 %v4260
        %v4877 = vpop.f32.mrb[0].mxu0
        %v4878 = vadd.f32 %v4805, %v4877
        %v4879 = vpop.f32.mrb[0].mxu0
        %v4880 = vadd.f32 %v4807, %v4879
        %v4881 = vpop.f32.mrb[0].mxu0
        %v4882 = vadd.f32 %v4809, %v4881
        %v4883 = vpop.f32.mrb[0].mxu0
        %v4884 = vadd.f32 %v4811, %v4883
        %4885 = vmatprep.mubr.bf16.mxu0 0
        %4886 = vmatmul.mubr.bf16.gmra.mrb[0].mxu0 %v4261
        %v4887 = vpop.f32.mrb[0].mxu0
        %v4888 = vadd.f32 %v4815, %v4887
        %v4889 = vpop.f32.mrb[0].mxu0
        %v4890 = vadd.f32 %v4817, %v4889
        %v4891 = vpop.f32.mrb[0].mxu0
        %v4892 = vadd.f32 %v4819, %v4891
        %v4893 = vpop.f32.mrb[0].mxu0
        %v4894 = vadd.f32 %v4821, %v4893
        %4895 = vmatprep.mubr.bf16.mxu0 0
        %4896 = vmatmul.mubr.bf16.gmra.mrb[0].mxu0 %v4262
        %v4897 = vpop.f32.mrb[0].mxu0
        %v4898 = vadd.f32 %v4825, %v4897
        %v4899 = vpop.f32.mrb[0].mxu0
        %v4900 = vadd.f32 %v4827, %v4899
        %v4901 = vpop.f32.mrb[0].mxu0
        %v4902 = vadd.f32 %v4829, %v4901
        %v4903 = vpop.f32.mrb[0].mxu0
        %v4904 = vadd.f32 %v4831, %v4903
        %4905 = vdwg.mxu0
        %4906 = vmatprep.subr.bf16.mxu0 0
        %4907 = vmatpush1.bf16.msra.mxu0 %v4618
        %4908 = vmatprep.subr.bf16.mxu0 0
        %4909 = vmatpush1.bf16.msra.mxu0 %v4621
        %4910 = vmatprep.subr.bf16.mxu0 0
        %4911 = vmatpush1.bf16.msra.mxu0 %v4624
        %4912 = vmatprep.subr.bf16.mxu0 0
        %4913 = vmatpush1.bf16.msra.mxu0 %v4627
        %4914 = vmatprep.subr.bf16.mxu0 0
        %4915 = vmatpush1.bf16.msra.mxu0 %v4630
        %4916 = vmatprep.subr.bf16.mxu0 0
        %4917 = vmatpush1.bf16.msra.mxu0 %v4633
        %4918 = vmatprep.subr.bf16.mxu0 0
        %4919 = vmatpush1.bf16.msra.mxu0 %v4636
        %4920 = vmatprep.subr.bf16.mxu0 0
        %4921 = vmatpush1.bf16.msra.mxu0 %v4639
        %4922 = vmatprep.subr.bf16.mxu0 0
        %4923 = vmatpush1.bf16.msra.mxu0 %v4642
        %4924 = vmatprep.subr.bf16.mxu0 0
        %4925 = vmatpush1.bf16.msra.mxu0 %v4645
        %4926 = vmatprep.subr.bf16.mxu0 0
        %4927 = vmatpush1.bf16.msra.mxu0 %v4648
        %4928 = vmatprep.subr.bf16.mxu0 0
        %4929 = vmatpush1.bf16.msra.mxu0 %v4651
        %4930 = vmatprep.subr.bf16.mxu0 0
        %4931 = vmatpush1.bf16.msra.mxu0 %v4654
        %4932 = vmatprep.subr.bf16.mxu0 0
        %4933 = vmatpush1.bf16.msra.mxu0 %v4657
        %4934 = vmatprep.subr.bf16.mxu0 0
        %4935 = vmatpush1.bf16.msra.mxu0 %v4660
        %4936 = vmatprep.subr.bf16.mxu0 0
        %4937 = vmatpush1.bf16.msra.mxu0 %v4663
        %4938 = vmatprep.mubr.bf16.mxu0 %v3955
        %4939 = vmatmul.mubr.bf16.gmra.mrb[0].mxu0 %v3651
        %v4940 = vpop.f32.mrb[0].mxu0
        %v4941 = vadd.f32 %v4372, %v4940
        %v4942 = vpop.f32.mrb[0].mxu0
        %v4943 = vpop.f32.mrb[0].mxu0
        %v4944 = vadd.f32 %v4372, %v4943
        %v4945 = vpop.f32.mrb[0].mxu0
        %4946 = vmatprep.mubr.bf16.mxu0 %v3956
        %4947 = vmatmul.mubr.bf16.gmra.mrb[0].mxu0 %v3652
        %v4948 = vpop.f32.mrb[0].mxu0
        %v4949 = vadd.f32 %v4372, %v4948
        %v4950 = vpop.f32.mrb[0].mxu0
        %v4951 = vpop.f32.mrb[0].mxu0
        %v4952 = vadd.f32 %v4372, %v4951
        %v4953 = vpop.f32.mrb[0].mxu0
        %4954 = vmatprep.mubr.bf16.mxu0 %v3957
        %4955 = vmatmul.mubr.bf16.gmra.mrb[0].mxu0 %v3653
        %v4956 = vpop.f32.mrb[0].mxu0
        %v4957 = vadd.f32 %v4372, %v4956
        %v4958 = vpop.f32.mrb[0].mxu0
        %v4959 = vpop.f32.mrb[0].mxu0
        %v4960 = vadd.f32 %v4372, %v4959
        %v4961 = vpop.f32.mrb[0].mxu0
        %4962 = vmatprep.mubr.bf16.mxu0 %v3958
        %4963 = vmatmul.mubr.bf16.gmra.mrb[0].mxu0 %v3654
        %v4964 = vpop.f32.mrb[0].mxu0
        %v4965 = vadd.f32 %v4372, %v4964
        %v4966 = vpop.f32.mrb[0].mxu0
        %v4967 = vpop.f32.mrb[0].mxu0
        %v4968 = vadd.f32 %v4372, %v4967
        %v4969 = vpop.f32.mrb[0].mxu0
        %4970 = vdwg.mxu0
        %4971 = vmatprep.subr.bf16.mxu0 0
        %4972 = vmatpush1.bf16.msra.mxu0 %v4666
        %4973 = vmatprep.subr.bf16.mxu0 0
        %4974 = vmatpush1.bf16.msra.mxu0 %v4669
        %4975 = vmatprep.subr.bf16.mxu0 0
        %4976 = vmatpush1.bf16.msra.mxu0 %v4672
        %4977 = vmatprep.subr.bf16.mxu0 0
        %4978 = vmatpush1.bf16.msra.mxu0 %v4675
        %4979 = vmatprep.subr.bf16.mxu0 0
        %4980 = vmatpush1.bf16.msra.mxu0 %v4678
        %4981 = vmatprep.subr.bf16.mxu0 0
        %4982 = vmatpush1.bf16.msra.mxu0 %v4681
        %4983 = vmatprep.subr.bf16.mxu0 0
        %4984 = vmatpush1.bf16.msra.mxu0 %v4684
        %4985 = vmatprep.subr.bf16.mxu0 0
        %4986 = vmatpush1.bf16.msra.mxu0 %v4687
        %4987 = vmatprep.subr.bf16.mxu0 0
        %4988 = vmatpush1.bf16.msra.mxu0 0
        %4989 = vmatprep.subr.bf16.mxu0 0
        %4990 = vmatpush1.bf16.msra.mxu0 0
        %4991 = vmatprep.subr.bf16.mxu0 0
        %4992 = vmatpush1.bf16.msra.mxu0 0
        %4993 = vmatprep.subr.bf16.mxu0 0
        %4994 = vmatpush1.bf16.msra.mxu0 0
        %4995 = vmatprep.subr.bf16.mxu0 0
        %4996 = vmatpush1.bf16.msra.mxu0 0
        %4997 = vmatprep.subr.bf16.mxu0 0
        %4998 = vmatpush1.bf16.msra.mxu0 0
        %4999 = vmatprep.subr.bf16.mxu0 0
        %5000 = vmatpush1.bf16.msra.mxu0 0
        %5001 = vmatprep.subr.bf16.mxu0 0
        %5002 = vmatpush1.bf16.msra.mxu0 0
        %5003 = vmatprep.mubr.bf16.mxu0 0
        %5004 = vmatmul.mubr.bf16.gmra.mrb[0].mxu0 %v4259
        %v5005 = vpop.f32.mrb[0].mxu0
        %v5006 = vadd.f32 %v4941, %v5005
        %v5007 = vpop.f32.mrb[0].mxu0
        %v5008 = vpop.f32.mrb[0].mxu0
        %v5009 = vadd.f32 %v4944, %v5008
        %v5010 = vpop.f32.mrb[0].mxu0
        %5011 = vmatprep.mubr.bf16.mxu0 0
        %5012 = vmatmul.mubr.bf16.gmra.mrb[0].mxu0 %v4260
        %v5013 = vpop.f32.mrb[0].mxu0
        %v5014 = vadd.f32 %v4949, %v5013
        %v5015 = vpop.f32.mrb[0].mxu0
        %v5016 = vpop.f32.mrb[0].mxu0
        %v5017 = vadd.f32 %v4952, %v5016
        %v5018 = vpop.f32.mrb[0].mxu0
        %5019 = vmatprep.mubr.bf16.mxu0 0
        %5020 = vmatmul.mubr.bf16.gmra.mrb[0].mxu0 %v4261
        %v5021 = vpop.f32.mrb[0].mxu0
        %v5022 = vadd.f32 %v4957, %v5021
        %v5023 = vpop.f32.mrb[0].mxu0
        %v5024 = vpop.f32.mrb[0].mxu0
        %v5025 = vadd.f32 %v4960, %v5024
        %v5026 = vpop.f32.mrb[0].mxu0
        %5027 = vmatprep.mubr.bf16.mxu0 0
        %5028 = vmatmul.mubr.bf16.gmra.mrb[0].mxu0 %v4262
        %v5029 = vpop.f32.mrb[0].mxu0
        %v5030 = vadd.f32 %v4965, %v5029
        %v5031 = vpop.f32.mrb[0].mxu0
        %v5032 = vpop.f32.mrb[0].mxu0
        %v5033 = vadd.f32 %v4968, %v5032
        %v5034 = vpop.f32.mrb[0].mxu0
        %5035 = vdwg.mxu0
        %v5036 = vadd.f32 %v904, %v4868
        %v5037 = vadd.f32 %v905, %v4870
        %v5038 = vadd.f32 %v906, %v5006
        %v5039 = vadd.f32 %v907, %v4872
        %v5040 = vadd.f32 %v908, %v4874
        %v5041 = vadd.f32 %v909, %v5009
        %v5042 = vadd.f32 %v910, %v4878
        %v5043 = vadd.f32 %v911, %v4880
        %v5044 = vadd.f32 %v912, %v5014
        %v5045 = vadd.f32 %v913, %v4882
        %v5046 = vadd.f32 %v914, %v4884
        %v5047 = vadd.f32 %v915, %v5017
        %v5048 = vadd.f32 %v916, %v4888
        %v5049 = vadd.f32 %v917, %v4890
        %v5050 = vadd.f32 %v918, %v5022
        %v5051 = vadd.f32 %v919, %v4892
        %v5052 = vadd.f32 %v920, %v4894
        %v5053 = vadd.f32 %v921, %v5025
        %v5054 = vadd.f32 %v922, %v4898
        %v5055 = vadd.f32 %v923, %v4900
        %v5056 = vadd.f32 %v924, %v5030
        %v5057 = vadd.f32 %v925, %v4902
        %v5058 = vadd.f32 %v926, %v4904
        %v5059 = vadd.f32 %v927, %v5033
        %v5060 = vadd.f32 %v5036, %v5037
        %v5061 = vadd.f32 %v5060, %v5038
        %5062 = vadd.xlane.f32.xlu0 %v5061
        %v5063 = vpop.xlane.xlu0 %5062
        %v5064 = vadd.f32 %v5039, %v5040
        %v5065 = vadd.f32 %v5064, %v5041
        %5066 = vadd.xlane.f32.xlu0 %v5065
        %v5067 = vpop.xlane.xlu0 %5066
        %v5068 = vadd.f32 %v5042, %v5043
        %v5069 = vadd.f32 %v5068, %v5044
        %5070 = vadd.xlane.f32.xlu0 %v5069
        %v5071 = vpop.xlane.xlu0 %5070
        %v5072 = vadd.f32 %v5045, %v5046
        %v5073 = vadd.f32 %v5072, %v5047
        %5074 = vadd.xlane.f32.xlu0 %v5073
        %v5075 = vpop.xlane.xlu0 %5074
        %v5076 = vadd.f32 %v5048, %v5049
        %v5077 = vadd.f32 %v5076, %v5050
        %5078 = vadd.xlane.f32.xlu0 %v5077
        %v5079 = vpop.xlane.xlu0 %5078
        %v5080 = vadd.f32 %v5051, %v5052
        %v5081 = vadd.f32 %v5080, %v5053
        %5082 = vadd.xlane.f32.xlu0 %v5081
        %v5083 = vpop.xlane.xlu0 %5082
        %v5084 = vadd.f32 %v5054, %v5055
        %v5085 = vadd.f32 %v5084, %v5056
        %5086 = vadd.xlane.f32.xlu0 %v5085
        %v5087 = vpop.xlane.xlu0 %5086
        %v5088 = vadd.f32 %v5057, %v5058
        %v5089 = vadd.f32 %v5088, %v5059
        %5090 = vadd.xlane.f32.xlu0 %v5089
        %v5091 = vpop.xlane.xlu0 %5090
        %v5092 = vmul.f32 %v5063, %v960
        %v5093 = vmul.f32 %v5067, %v960
        %v5094 = vmul.f32 %v5071, %v960
        %v5095 = vmul.f32 %v5075, %v960
        %v5096 = vmul.f32 %v5079, %v960
        %v5097 = vmul.f32 %v5083, %v960
        %v5098 = vmul.f32 %v5087, %v960
        %v5099 = vmul.f32 %v5091, %v960
        %v5100 = vmul.f32 %v5036, %v5036
        %v5101 = vmul.f32 %v5037, %v5037
        %v5102 = vmul.f32 %v5038, %v5038
        %v5103 = vmul.f32 %v5039, %v5039
        %v5104 = vmul.f32 %v5040, %v5040
        %v5105 = vmul.f32 %v5041, %v5041
        %v5106 = vmul.f32 %v5042, %v5042
        %v5107 = vmul.f32 %v5043, %v5043
        %v5108 = vmul.f32 %v5044, %v5044
        %v5109 = vmul.f32 %v5045, %v5045
        %v5110 = vmul.f32 %v5046, %v5046
        %v5111 = vmul.f32 %v5047, %v5047
        %v5112 = vmul.f32 %v5048, %v5048
        %v5113 = vmul.f32 %v5049, %v5049
        %v5114 = vmul.f32 %v5050, %v5050
        %v5115 = vmul.f32 %v5051, %v5051
        %v5116 = vmul.f32 %v5052, %v5052
        %v5117 = vmul.f32 %v5053, %v5053
        %v5118 = vmul.f32 %v5054, %v5054
        %v5119 = vmul.f32 %v5055, %v5055
        %v5120 = vmul.f32 %v5056, %v5056
        %v5121 = vmul.f32 %v5057, %v5057
        %v5122 = vmul.f32 %v5058, %v5058
        %v5123 = vmul.f32 %v5059, %v5059
        %v5124 = vadd.f32 %v5100, %v5101
        %v5125 = vadd.f32 %v5124, %v5102
        %5126 = vadd.xlane.f32.xlu0 %v5125
        %v5127 = vpop.xlane.xlu0 %5126
        %v5128 = vadd.f32 %v5103, %v5104
        %v5129 = vadd.f32 %v5128, %v5105
        %5130 = vadd.xlane.f32.xlu0 %v5129
        %v5131 = vpop.xlane.xlu0 %5130
        %v5132 = vadd.f32 %v5106, %v5107
        %v5133 = vadd.f32 %v5132, %v5108
        %5134 = vadd.xlane.f32.xlu0 %v5133
        %v5135 = vpop.xlane.xlu0 %5134
        %v5136 = vadd.f32 %v5109, %v5110
        %v5137 = vadd.f32 %v5136, %v5111
        %5138 = vadd.xlane.f32.xlu0 %v5137
        %v5139 = vpop.xlane.xlu0 %5138
        %v5140 = vadd.f32 %v5112, %v5113
        %v5141 = vadd.f32 %v5140, %v5114
        %5142 = vadd.xlane.f32.xlu0 %v5141
        %v5143 = vpop.xlane.xlu0 %5142
        %v5144 = vadd.f32 %v5115, %v5116
        %v5145 = vadd.f32 %v5144, %v5117
        %5146 = vadd.xlane.f32.xlu0 %v5145
        %v5147 = vpop.xlane.xlu0 %5146
        %v5148 = vadd.f32 %v5118, %v5119
        %v5149 = vadd.f32 %v5148, %v5120
        %5150 = vadd.xlane.f32.xlu0 %v5149
        %v5151 = vpop.xlane.xlu0 %5150
        %v5152 = vadd.f32 %v5121, %v5122
        %v5153 = vadd.f32 %v5152, %v5123
        %5154 = vadd.xlane.f32.xlu0 %v5153
        %v5155 = vpop.xlane.xlu0 %5154
        %v5156 = vmul.f32 %v5127, %v960
        %v5157 = vmul.f32 %v5131, %v960
        %v5158 = vmul.f32 %v5135, %v960
        %v5159 = vmul.f32 %v5139, %v960
        %v5160 = vmul.f32 %v5143, %v960
        %v5161 = vmul.f32 %v5147, %v960
        %v5162 = vmul.f32 %v5151, %v960
        %v5163 = vmul.f32 %v5155, %v960
        %v5164 = vmul.f32 %v5092, %v5092
        %v5165 = vmul.f32 %v5093, %v5093
        %v5166 = vmul.f32 %v5094, %v5094
        %v5167 = vmul.f32 %v5095, %v5095
        %v5168 = vmul.f32 %v5096, %v5096
        %v5169 = vmul.f32 %v5097, %v5097
        %v5170 = vmul.f32 %v5098, %v5098
        %v5171 = vmul.f32 %v5099, %v5099
        %v5172 = vsub.f32 %v5156, %v5164
        %v5173 = vsub.f32 %v5157, %v5165
        %v5174 = vsub.f32 %v5158, %v5166
        %v5175 = vsub.f32 %v5159, %v5167
        %v5176 = vsub.f32 %v5160, %v5168
        %v5177 = vsub.f32 %v5161, %v5169
        %v5178 = vsub.f32 %v5162, %v5170
        %v5179 = vsub.f32 %v5163, %v5171
        %v5180 = vsub.f32 %v5036, %v5092
        %v5181 = vsub.f32 %v5037, %v5092
        %v5182 = vsub.f32 %v5038, %v5092
        %v5183 = vsub.f32 %v5039, %v5093
        %v5184 = vsub.f32 %v5040, %v5093
        %v5185 = vsub.f32 %v5041, %v5093
        %v5186 = vsub.f32 %v5042, %v5094
        %v5187 = vsub.f32 %v5043, %v5094
        %v5188 = vsub.f32 %v5044, %v5094
        %v5189 = vsub.f32 %v5045, %v5095
        %v5190 = vsub.f32 %v5046, %v5095
        %v5191 = vsub.f32 %v5047, %v5095
        %v5192 = vsub.f32 %v5048, %v5096
        %v5193 = vsub.f32 %v5049, %v5096
        %v5194 = vsub.f32 %v5050, %v5096
        %v5195 = vsub.f32 %v5051, %v5097
        %v5196 = vsub.f32 %v5052, %v5097
        %v5197 = vsub.f32 %v5053, %v5097
        %v5198 = vsub.f32 %v5054, %v5098
        %v5199 = vsub.f32 %v5055, %v5098
        %v5200 = vsub.f32 %v5056, %v5098
        %v5201 = vsub.f32 %v5057, %v5099
        %v5202 = vsub.f32 %v5058, %v5099
        %v5203 = vsub.f32 %v5059, %v5099
        %v5204 = vadd.f32 %v5172, 1e-05
        %v5205 = vadd.f32 %v5173, 1e-05
        %v5206 = vadd.f32 %v5174, 1e-05
        %v5207 = vadd.f32 %v5175, 1e-05
        %v5208 = vadd.f32 %v5176, 1e-05
        %v5209 = vadd.f32 %v5177, 1e-05
        %v5210 = vadd.f32 %v5178, 1e-05
        %v5211 = vadd.f32 %v5179, 1e-05
        %v5212 = vrsqrt.pop %v5204
        %v5213 = vrsqrt.pop %v5205
        %v5214 = vrsqrt.pop %v5206
        %v5215 = vrsqrt.pop %v5207
        %v5216 = vrsqrt.pop %v5208
        %v5217 = vrsqrt.pop %v5209
        %v5218 = vrsqrt.pop %v5210
        %v5219 = vrsqrt.pop %v5211
        %v5220 = vmul.f32 %v5180, %v5212
        %v5221 = vmul.f32 %v5181, %v5212
        %v5222 = vmul.f32 %v5182, %v5212
        %v5223 = vmul.f32 %v5183, %v5213
        %v5224 = vmul.f32 %v5184, %v5213
        %v5225 = vmul.f32 %v5185, %v5213
        %v5226 = vmul.f32 %v5186, %v5214
        %v5227 = vmul.f32 %v5187, %v5214
        %v5228 = vmul.f32 %v5188, %v5214
        %v5229 = vmul.f32 %v5189, %v5215
        %v5230 = vmul.f32 %v5190, %v5215
        %v5231 = vmul.f32 %v5191, %v5215
        %v5232 = vmul.f32 %v5192, %v5216
        %v5233 = vmul.f32 %v5193, %v5216
        %v5234 = vmul.f32 %v5194, %v5216
        %v5235 = vmul.f32 %v5195, %v5217
        %v5236 = vmul.f32 %v5196, %v5217
        %v5237 = vmul.f32 %v5197, %v5217
        %v5238 = vmul.f32 %v5198, %v5218
        %v5239 = vmul.f32 %v5199, %v5218
        %v5240 = vmul.f32 %v5200, %v5218
        %v5241 = vmul.f32 %v5201, %v5219
        %v5242 = vmul.f32 %v5202, %v5219
        %v5243 = vmul.f32 %v5203, %v5219
        %v5244 = vld [vmem:[%s692] sm:$0x7]
        %v5246 = vlaneseq
        %v5247 = vshrl.u32 %v5246, 7
        %v5248 = vsub.s32 0, %v5247
        %v5249 = vrot.slane %v5244, %v5248
        %v5250 = vlaneseq
        %v5251 = vshrl.u32 %v5250, 7
        %v5252 = vsub.s32 1, %v5251
        %v5253 = vrot.slane %v5244, %v5252
        %v5254 = vlaneseq
        %v5255 = vshrl.u32 %v5254, 7
        %v5256 = vsub.s32 2, %v5255
        %v5257 = vrot.slane %v5244, %v5256
        %v5261 = vmul.f32 %v5220, %v5249
        %v5262 = vmul.f32 %v5221, %v5253
        %v5263 = vmul.f32 %v5222, %v5257
        %v5264 = vmul.f32 %v5223, %v5249
        %v5265 = vmul.f32 %v5224, %v5253
        %v5266 = vmul.f32 %v5225, %v5257
        %v5267 = vmul.f32 %v5226, %v5249
        %v5268 = vmul.f32 %v5227, %v5253
        %v5269 = vmul.f32 %v5228, %v5257
        %v5270 = vmul.f32 %v5229, %v5249
        %v5271 = vmul.f32 %v5230, %v5253
        %v5272 = vmul.f32 %v5231, %v5257
        %v5273 = vmul.f32 %v5232, %v5249
        %v5274 = vmul.f32 %v5233, %v5253
        %v5275 = vmul.f32 %v5234, %v5257
        %v5276 = vmul.f32 %v5235, %v5249
        %v5277 = vmul.f32 %v5236, %v5253
        %v5278 = vmul.f32 %v5237, %v5257
        %v5279 = vmul.f32 %v5238, %v5249
        %v5280 = vmul.f32 %v5239, %v5253
        %v5281 = vmul.f32 %v5240, %v5257
        %v5282 = vmul.f32 %v5241, %v5249
        %v5283 = vmul.f32 %v5242, %v5253
        %v5284 = vmul.f32 %v5243, %v5257
        %v5285 = vld [vmem:[%s701] sm:$0x7]
        %v5287 = vlaneseq
        %v5288 = vshrl.u32 %v5287, 7
        %v5289 = vsub.s32 0, %v5288
        %v5290 = vrot.slane %v5285, %v5289
        %v5291 = vlaneseq
        %v5292 = vshrl.u32 %v5291, 7
        %v5293 = vsub.s32 1, %v5292
        %v5294 = vrot.slane %v5285, %v5293
        %v5295 = vlaneseq
        %v5296 = vshrl.u32 %v5295, 7
        %v5297 = vsub.s32 2, %v5296
        %v5298 = vrot.slane %v5285, %v5297
        %v5302 = vadd.f32 %v5261, %v5290
        %v5303 = vadd.f32 %v5262, %v5294
        %v5304 = vadd.f32 %v5263, %v5298
        %v5305 = vadd.f32 %v5264, %v5290
        %v5306 = vadd.f32 %v5265, %v5294
        %v5307 = vadd.f32 %v5266, %v5298
        %v5308 = vadd.f32 %v5267, %v5290
        %v5309 = vadd.f32 %v5268, %v5294
        %v5310 = vadd.f32 %v5269, %v5298
        %v5311 = vadd.f32 %v5270, %v5290
        %v5312 = vadd.f32 %v5271, %v5294
        %v5313 = vadd.f32 %v5272, %v5298
        %v5314 = vadd.f32 %v5273, %v5290
        %v5315 = vadd.f32 %v5274, %v5294
        %v5316 = vadd.f32 %v5275, %v5298
        %v5317 = vadd.f32 %v5276, %v5290
        %v5318 = vadd.f32 %v5277, %v5294
        %v5319 = vadd.f32 %v5278, %v5298
        %v5320 = vadd.f32 %v5279, %v5290
        %v5321 = vadd.f32 %v5280, %v5294
        %v5322 = vadd.f32 %v5281, %v5298
        %v5323 = vadd.f32 %v5282, %v5290
        %v5324 = vadd.f32 %v5283, %v5294
        %v5325 = vadd.f32 %v5284, %v5298
        %v5326 = vpack.c.bf16 %v5305, %v5302
        %v5327 = vpack.c.bf16 %v5306, %v5303
        %v5328 = vpack.c.bf16 %v5307, %v5304
        %v5329 = vpack.c.bf16 %v5311, %v5308
        %v5330 = vpack.c.bf16 %v5312, %v5309
        %v5331 = vpack.c.bf16 %v5313, %v5310
        %v5332 = vpack.c.bf16 %v5317, %v5314
        %v5333 = vpack.c.bf16 %v5318, %v5315
        %v5334 = vpack.c.bf16 %v5319, %v5316
        %v5335 = vpack.c.bf16 %v5323, %v5320
        %v5336 = vpack.c.bf16 %v5324, %v5321
        %v5337 = vpack.c.bf16 %v5325, %v5322
        %v5338 = vld [vmem:[%s710] sm:$0xff]
        %v5339 = vld [vmem:[%s710 + $0x8] sm:$0xff]
        %v5340 = vld [vmem:[%s710 + $0x10] sm:$0xff]
        %v5341 = vld [vmem:[%s710 + $0x18] sm:$0xff]
        %v5342 = vld [vmem:[%s710 + $0x20] sm:$0xff]
        %v5343 = vld [vmem:[%s710 + $0x28] sm:$0xff]
        %v5344 = vld [vmem:[%s710 + $0x30] sm:$0xff]
        %v5345 = vld [vmem:[%s710 + $0x38] sm:$0xff]
        %v5346 = vld [vmem:[%s710 + $0x40] sm:$0xff]
        %v5347 = vld [vmem:[%s710 + $0x48] sm:$0xff]
        %v5348 = vld [vmem:[%s710 + $0x50] sm:$0xff]
        %v5349 = vld [vmem:[%s710 + $0x58] sm:$0xff]
        %v5350 = vld [vmem:[%s710 + $0x60] sm:$0xff]
        %v5351 = vld [vmem:[%s710 + $0x68] sm:$0xff]
        %v5352 = vld [vmem:[%s710 + $0x70] sm:$0xff]
        %v5353 = vld [vmem:[%s710 + $0x78] sm:$0xff]
        %v5354 = vld [vmem:[%s710 + $0x80] sm:$0xff]
        %v5355 = vld [vmem:[%s710 + $0x88] sm:$0xff]
        %v5356 = vld [vmem:[%s710 + $0x90] sm:$0xff]
        %v5357 = vld [vmem:[%s710 + $0x98] sm:$0xff]
        %v5358 = vld [vmem:[%s710 + $0xa0] sm:$0xff]
        %v5359 = vld [vmem:[%s710 + $0xa8] sm:$0xff]
        %v5360 = vld [vmem:[%s710 + $0xb0] sm:$0xff]
        %v5361 = vld [vmem:[%s710 + $0xb8] sm:$0xff]
        %v5362 = vld [vmem:[%s710 + $0xc0] sm:$0xff]
        %v5363 = vld [vmem:[%s710 + $0xc8] sm:$0xff]
        %v5364 = vld [vmem:[%s710 + $0xd0] sm:$0xff]
        %v5365 = vld [vmem:[%s710 + $0xd8] sm:$0xff]
        %v5366 = vld [vmem:[%s710 + $0xe0] sm:$0xff]
        %v5367 = vld [vmem:[%s710 + $0xe8] sm:$0xff]
        %v5368 = vld [vmem:[%s710 + $0xf0] sm:$0xff]
        %v5369 = vld [vmem:[%s710 + $0xf8] sm:$0xff]
        %v5370 = vld [vmem:[%s710 + $0x100] sm:$0xff]
        %v5371 = vld [vmem:[%s710 + $0x108] sm:$0xff]
        %v5372 = vld [vmem:[%s710 + $0x110] sm:$0xff]
        %v5373 = vld [vmem:[%s710 + $0x118] sm:$0xff]
        %v5374 = vld [vmem:[%s710 + $0x120] sm:$0xff]
        %v5375 = vld [vmem:[%s710 + $0x128] sm:$0xff]
        %v5376 = vld [vmem:[%s710 + $0x130] sm:$0xff]
        %v5377 = vld [vmem:[%s710 + $0x138] sm:$0xff]
        %v5378 = vld [vmem:[%s710 + $0x140] sm:$0xff]
        %v5379 = vld [vmem:[%s710 + $0x148] sm:$0xff]
        %v5380 = vld [vmem:[%s710 + $0x150] sm:$0xff]
        %v5381 = vld [vmem:[%s710 + $0x158] sm:$0xff]
        %v5382 = vld [vmem:[%s710 + $0x160] sm:$0xff]
        %v5383 = vld [vmem:[%s710 + $0x168] sm:$0xff]
        %v5384 = vld [vmem:[%s710 + $0x170] sm:$0xff]
        %v5385 = vld [vmem:[%s710 + $0x178] sm:$0xff]
        %v5386 = vld [vmem:[%s710 + $0x180] sm:$0xff]
        %v5387 = vld [vmem:[%s710 + $0x188] sm:$0xff]
        %v5388 = vld [vmem:[%s710 + $0x190] sm:$0xff]
        %v5389 = vld [vmem:[%s710 + $0x198] sm:$0xff]
        %v5390 = vld [vmem:[%s710 + $0x1a0] sm:$0xff]
        %v5391 = vld [vmem:[%s710 + $0x1a8] sm:$0xff]
        %v5392 = vld [vmem:[%s710 + $0x1b0] sm:$0xff]
        %v5393 = vld [vmem:[%s710 + $0x1b8] sm:$0xff]
        %v5394 = vld [vmem:[%s710 + $0x1c0] sm:$0xff]
        %v5395 = vld [vmem:[%s710 + $0x1c8] sm:$0xff]
        %v5396 = vld [vmem:[%s710 + $0x1d0] sm:$0xff]
        %v5397 = vld [vmem:[%s710 + $0x1d8] sm:$0xff]
        %v5398 = vld [vmem:[%s710 + $0x1e0] sm:$0xff]
        %v5399 = vld [vmem:[%s710 + $0x1e8] sm:$0xff]
        %v5400 = vld [vmem:[%s710 + $0x1f0] sm:$0xff]
        %v5401 = vld [vmem:[%s710 + $0x1f8] sm:$0xff]
        %v5402 = vld [vmem:[%s710 + $0x200] sm:$0xff]
        %v5403 = vld [vmem:[%s710 + $0x208] sm:$0xff]
        %v5404 = vld [vmem:[%s710 + $0x210] sm:$0xff]
        %v5405 = vld [vmem:[%s710 + $0x218] sm:$0xff]
        %v5406 = vld [vmem:[%s710 + $0x220] sm:$0xff]
        %v5407 = vld [vmem:[%s710 + $0x228] sm:$0xff]
        %v5408 = vld [vmem:[%s710 + $0x230] sm:$0xff]
        %v5409 = vld [vmem:[%s710 + $0x238] sm:$0xff]
        %v5410 = vld [vmem:[%s710 + $0x240] sm:$0xff]
        %v5411 = vld [vmem:[%s710 + $0x248] sm:$0xff]
        %v5412 = vld [vmem:[%s710 + $0x250] sm:$0xff]
        %v5413 = vld [vmem:[%s710 + $0x258] sm:$0xff]
        %v5414 = vld [vmem:[%s710 + $0x260] sm:$0xff]
        %v5415 = vld [vmem:[%s710 + $0x268] sm:$0xff]
        %v5416 = vld [vmem:[%s710 + $0x270] sm:$0xff]
        %v5417 = vld [vmem:[%s710 + $0x278] sm:$0xff]
        %v5418 = vld [vmem:[%s710 + $0x280] sm:$0xff]
        %v5419 = vld [vmem:[%s710 + $0x288] sm:$0xff]
        %v5420 = vld [vmem:[%s710 + $0x290] sm:$0xff]
        %v5421 = vld [vmem:[%s710 + $0x298] sm:$0xff]
        %v5422 = vld [vmem:[%s710 + $0x2a0] sm:$0xff]
        %v5423 = vld [vmem:[%s710 + $0x2a8] sm:$0xff]
        %v5424 = vld [vmem:[%s710 + $0x2b0] sm:$0xff]
        %v5425 = vld [vmem:[%s710 + $0x2b8] sm:$0xff]
        %v5426 = vld [vmem:[%s710 + $0x2c0] sm:$0xff]
        %v5427 = vld [vmem:[%s710 + $0x2c8] sm:$0xff]
        %v5428 = vld [vmem:[%s710 + $0x2d0] sm:$0xff]
        %v5429 = vld [vmem:[%s710 + $0x2d8] sm:$0xff]
        %v5430 = vld [vmem:[%s710 + $0x2e0] sm:$0xff]
        %v5431 = vld [vmem:[%s710 + $0x2e8] sm:$0xff]
        %v5432 = vld [vmem:[%s710 + $0x2f0] sm:$0xff]
        %v5433 = vld [vmem:[%s710 + $0x2f8] sm:$0xff]
        %v5434 = vld [vmem:[%s710 + $0x300] sm:$0xff]
        %v5435 = vld [vmem:[%s710 + $0x308] sm:$0xff]
        %v5436 = vld [vmem:[%s710 + $0x310] sm:$0xff]
        %v5437 = vld [vmem:[%s710 + $0x318] sm:$0xff]
        %v5438 = vld [vmem:[%s710 + $0x320] sm:$0xff]
        %v5439 = vld [vmem:[%s710 + $0x328] sm:$0xff]
        %v5440 = vld [vmem:[%s710 + $0x330] sm:$0xff]
        %v5441 = vld [vmem:[%s710 + $0x338] sm:$0xff]
        %v5442 = vld [vmem:[%s710 + $0x340] sm:$0xff]
        %v5443 = vld [vmem:[%s710 + $0x348] sm:$0xff]
        %v5444 = vld [vmem:[%s710 + $0x350] sm:$0xff]
        %v5445 = vld [vmem:[%s710 + $0x358] sm:$0xff]
        %v5446 = vld [vmem:[%s710 + $0x360] sm:$0xff]
        %v5447 = vld [vmem:[%s710 + $0x368] sm:$0xff]
        %v5448 = vld [vmem:[%s710 + $0x370] sm:$0xff]
        %v5449 = vld [vmem:[%s710 + $0x378] sm:$0xff]
        %v5450 = vld [vmem:[%s710 + $0x380] sm:$0xff]
        %v5451 = vld [vmem:[%s710 + $0x388] sm:$0xff]
        %v5452 = vld [vmem:[%s710 + $0x390] sm:$0xff]
        %v5453 = vld [vmem:[%s710 + $0x398] sm:$0xff]
        %v5454 = vld [vmem:[%s710 + $0x3a0] sm:$0xff]
        %v5455 = vld [vmem:[%s710 + $0x3a8] sm:$0xff]
        %v5456 = vld [vmem:[%s710 + $0x3b0] sm:$0xff]
        %v5457 = vld [vmem:[%s710 + $0x3b8] sm:$0xff]
        %v5458 = vld [vmem:[%s710 + $0x3c0] sm:$0xff]
        %v5459 = vld [vmem:[%s710 + $0x3c8] sm:$0xff]
        %v5460 = vld [vmem:[%s710 + $0x3d0] sm:$0xff]
        %v5461 = vld [vmem:[%s710 + $0x3d8] sm:$0xff]
        %v5462 = vld [vmem:[%s710 + $0x3e0] sm:$0xff]
        %v5463 = vld [vmem:[%s710 + $0x3e8] sm:$0xff]
        %v5464 = vld [vmem:[%s710 + $0x3f0] sm:$0xff]
        %v5465 = vld [vmem:[%s710 + $0x3f8] sm:$0xff]
        %v5466 = vld [vmem:[%s710 + $0x400] sm:$0xff]
        %v5467 = vld [vmem:[%s710 + $0x408] sm:$0xff]
        %v5468 = vld [vmem:[%s710 + $0x410] sm:$0xff]
        %v5469 = vld [vmem:[%s710 + $0x418] sm:$0xff]
        %v5470 = vld [vmem:[%s710 + $0x420] sm:$0xff]
        %v5471 = vld [vmem:[%s710 + $0x428] sm:$0xff]
        %v5472 = vld [vmem:[%s710 + $0x430] sm:$0xff]
        %v5473 = vld [vmem:[%s710 + $0x438] sm:$0xff]
        %v5474 = vld [vmem:[%s710 + $0x440] sm:$0xff]
        %v5475 = vld [vmem:[%s710 + $0x448] sm:$0xff]
        %v5476 = vld [vmem:[%s710 + $0x450] sm:$0xff]
        %v5477 = vld [vmem:[%s710 + $0x458] sm:$0xff]
        %v5478 = vld [vmem:[%s710 + $0x460] sm:$0xff]
        %v5479 = vld [vmem:[%s710 + $0x468] sm:$0xff]
        %v5480 = vld [vmem:[%s710 + $0x470] sm:$0xff]
        %v5481 = vld [vmem:[%s710 + $0x478] sm:$0xff]
        %v5482 = vld [vmem:[%s719] sm:$0x3f]
        %v5484 = vlaneseq
        %v5485 = vshrl.u32 %v5484, 7
        %v5486 = vsub.s32 0, %v5485
        %v5487 = vrot.slane %v5482, %v5486
        %v5488 = vlaneseq
        %v5489 = vshrl.u32 %v5488, 7
        %v5490 = vsub.s32 1, %v5489
        %v5491 = vrot.slane %v5482, %v5490
        %v5492 = vlaneseq
        %v5493 = vshrl.u32 %v5492, 7
        %v5494 = vsub.s32 2, %v5493
        %v5495 = vrot.slane %v5482, %v5494
        %v5496 = vlaneseq
        %v5497 = vshrl.u32 %v5496, 7
        %v5498 = vsub.s32 3, %v5497
        %v5499 = vrot.slane %v5482, %v5498
        %v5500 = vlaneseq
        %v5501 = vshrl.u32 %v5500, 7
        %v5502 = vsub.s32 4, %v5501
        %v5503 = vrot.slane %v5482, %v5502
        %v5504 = vlaneseq
        %v5505 = vshrl.u32 %v5504, 7
        %v5506 = vsub.s32 5, %v5505
        %v5507 = vrot.slane %v5482, %v5506
        %v5658 = vunpack.c.l.b16 %v5338
        %v5659 = vunpack.c.h.b16 %v5338
        %v5660 = vunpack.c.l.b16 %v5339
        %v5661 = vunpack.c.h.b16 %v5339
        %v5662 = vunpack.c.l.b16 %v5340
        %v5663 = vunpack.c.h.b16 %v5340
        %v5664 = vunpack.c.l.b16 %v5341
        %v5665 = vunpack.c.h.b16 %v5341
        %v5666 = vunpack.c.l.b16 %v5342
        %v5667 = vunpack.c.h.b16 %v5342
        %v5668 = vunpack.c.l.b16 %v5343
        %v5669 = vunpack.c.h.b16 %v5343
        %v5670 = vunpack.c.l.b16 %v5344
        %v5671 = vunpack.c.h.b16 %v5344
        %v5672 = vunpack.c.l.b16 %v5345
        %v5673 = vunpack.c.h.b16 %v5345
        %v5674 = vunpack.c.l.b16 %v5346
        %v5675 = vunpack.c.h.b16 %v5346
        %v5676 = vunpack.c.l.b16 %v5347
        %v5677 = vunpack.c.h.b16 %v5347
        %v5678 = vunpack.c.l.b16 %v5348
        %v5679 = vunpack.c.h.b16 %v5348
        %v5680 = vunpack.c.l.b16 %v5349
        %v5681 = vunpack.c.h.b16 %v5349
        %v5682 = vunpack.c.l.b16 %v5350
        %v5683 = vunpack.c.h.b16 %v5350
        %v5684 = vunpack.c.l.b16 %v5351
        %v5685 = vunpack.c.h.b16 %v5351
        %v5686 = vunpack.c.l.b16 %v5352
        %v5687 = vunpack.c.h.b16 %v5352
        %v5688 = vunpack.c.l.b16 %v5353
        %v5689 = vunpack.c.h.b16 %v5353
        %v5690 = vunpack.c.l.b16 %v5354
        %v5691 = vunpack.c.h.b16 %v5354
        %v5692 = vunpack.c.l.b16 %v5355
        %v5693 = vunpack.c.h.b16 %v5355
        %v5694 = vunpack.c.l.b16 %v5356
        %v5695 = vunpack.c.h.b16 %v5356
        %v5696 = vunpack.c.l.b16 %v5357
        %v5697 = vunpack.c.h.b16 %v5357
        %v5698 = vunpack.c.l.b16 %v5358
        %v5699 = vunpack.c.h.b16 %v5358
        %v5700 = vunpack.c.l.b16 %v5359
        %v5701 = vunpack.c.h.b16 %v5359
        %v5702 = vunpack.c.l.b16 %v5360
        %v5703 = vunpack.c.h.b16 %v5360
        %v5704 = vunpack.c.l.b16 %v5361
        %v5705 = vunpack.c.h.b16 %v5361
        %v5706 = vunpack.c.l.b16 %v5362
        %v5707 = vunpack.c.h.b16 %v5362
        %v5708 = vunpack.c.l.b16 %v5363
        %v5709 = vunpack.c.h.b16 %v5363
        %v5710 = vunpack.c.l.b16 %v5364
        %v5711 = vunpack.c.h.b16 %v5364
        %v5712 = vunpack.c.l.b16 %v5365
        %v5713 = vunpack.c.h.b16 %v5365
        %v5714 = vunpack.c.l.b16 %v5366
        %v5715 = vunpack.c.h.b16 %v5366
        %v5716 = vunpack.c.l.b16 %v5367
        %v5717 = vunpack.c.h.b16 %v5367
        %v5718 = vunpack.c.l.b16 %v5368
        %v5719 = vunpack.c.h.b16 %v5368
        %v5720 = vunpack.c.l.b16 %v5369
        %v5721 = vunpack.c.h.b16 %v5369
        %v5722 = vunpack.c.l.b16 %v5370
        %v5723 = vunpack.c.h.b16 %v5370
        %v5724 = vunpack.c.l.b16 %v5371
        %v5725 = vunpack.c.h.b16 %v5371
        %v5726 = vunpack.c.l.b16 %v5372
        %v5727 = vunpack.c.h.b16 %v5372
        %v5728 = vunpack.c.l.b16 %v5373
        %v5729 = vunpack.c.h.b16 %v5373
        %v5730 = vunpack.c.l.b16 %v5374
        %v5731 = vunpack.c.h.b16 %v5374
        %v5732 = vunpack.c.l.b16 %v5375
        %v5733 = vunpack.c.h.b16 %v5375
        %v5734 = vunpack.c.l.b16 %v5376
        %v5735 = vunpack.c.h.b16 %v5376
        %v5736 = vunpack.c.l.b16 %v5377
        %v5737 = vunpack.c.h.b16 %v5377
        %v5738 = vunpack.c.l.b16 %v5378
        %v5739 = vunpack.c.h.b16 %v5378
        %v5740 = vunpack.c.l.b16 %v5379
        %v5741 = vunpack.c.h.b16 %v5379
        %v5742 = vunpack.c.l.b16 %v5380
        %v5743 = vunpack.c.h.b16 %v5380
        %v5744 = vunpack.c.l.b16 %v5381
        %v5745 = vunpack.c.h.b16 %v5381
        %v5746 = vunpack.c.l.b16 %v5382
        %v5747 = vunpack.c.h.b16 %v5382
        %v5748 = vunpack.c.l.b16 %v5383
        %v5749 = vunpack.c.h.b16 %v5383
        %v5750 = vunpack.c.l.b16 %v5384
        %v5751 = vunpack.c.h.b16 %v5384
        %v5752 = vunpack.c.l.b16 %v5385
        %v5753 = vunpack.c.h.b16 %v5385
        %v5754 = vunpack.c.l.b16 %v5386
        %v5755 = vunpack.c.h.b16 %v5386
        %v5756 = vunpack.c.l.b16 %v5387
        %v5757 = vunpack.c.h.b16 %v5387
        %v5758 = vunpack.c.l.b16 %v5388
        %v5759 = vunpack.c.h.b16 %v5388
        %v5760 = vunpack.c.l.b16 %v5389
        %v5761 = vunpack.c.h.b16 %v5389
        %v5762 = vunpack.c.l.b16 %v5390
        %v5763 = vunpack.c.h.b16 %v5390
        %v5764 = vunpack.c.l.b16 %v5391
        %v5765 = vunpack.c.h.b16 %v5391
        %v5766 = vunpack.c.l.b16 %v5392
        %v5767 = vunpack.c.h.b16 %v5392
        %v5768 = vunpack.c.l.b16 %v5393
        %v5769 = vunpack.c.h.b16 %v5393
        %v5770 = vunpack.c.l.b16 %v5394
        %v5771 = vunpack.c.h.b16 %v5394
        %v5772 = vunpack.c.l.b16 %v5395
        %v5773 = vunpack.c.h.b16 %v5395
        %v5774 = vunpack.c.l.b16 %v5396
        %v5775 = vunpack.c.h.b16 %v5396
        %v5776 = vunpack.c.l.b16 %v5397
        %v5777 = vunpack.c.h.b16 %v5397
        %v5778 = vunpack.c.l.b16 %v5398
        %v5779 = vunpack.c.h.b16 %v5398
        %v5780 = vunpack.c.l.b16 %v5399
        %v5781 = vunpack.c.h.b16 %v5399
        %v5782 = vunpack.c.l.b16 %v5400
        %v5783 = vunpack.c.h.b16 %v5400
        %v5784 = vunpack.c.l.b16 %v5401
        %v5785 = vunpack.c.h.b16 %v5401
        %v5786 = vunpack.c.l.b16 %v5402
        %v5787 = vunpack.c.h.b16 %v5402
        %v5788 = vunpack.c.l.b16 %v5403
        %v5789 = vunpack.c.h.b16 %v5403
        %v5790 = vunpack.c.l.b16 %v5404
        %v5791 = vunpack.c.h.b16 %v5404
        %v5792 = vunpack.c.l.b16 %v5405
        %v5793 = vunpack.c.h.b16 %v5405
        %v5794 = vunpack.c.l.b16 %v5406
        %v5795 = vunpack.c.h.b16 %v5406
        %v5796 = vunpack.c.l.b16 %v5407
        %v5797 = vunpack.c.h.b16 %v5407
        %v5798 = vunpack.c.l.b16 %v5408
        %v5799 = vunpack.c.h.b16 %v5408
        %v5800 = vunpack.c.l.b16 %v5409
        %v5801 = vunpack.c.h.b16 %v5409
        %v5802 = vunpack.c.l.b16 %v5410
        %v5803 = vunpack.c.h.b16 %v5410
        %v5804 = vunpack.c.l.b16 %v5411
        %v5805 = vunpack.c.h.b16 %v5411
        %v5806 = vunpack.c.l.b16 %v5412
        %v5807 = vunpack.c.h.b16 %v5412
        %v5808 = vunpack.c.l.b16 %v5413
        %v5809 = vunpack.c.h.b16 %v5413
        %v5810 = vunpack.c.l.b16 %v5414
        %v5811 = vunpack.c.h.b16 %v5414
        %v5812 = vunpack.c.l.b16 %v5415
        %v5813 = vunpack.c.h.b16 %v5415
        %v5814 = vunpack.c.l.b16 %v5416
        %v5815 = vunpack.c.h.b16 %v5416
        %v5816 = vunpack.c.l.b16 %v5417
        %v5817 = vunpack.c.h.b16 %v5417
        %v5818 = vunpack.c.l.b16 %v5418
        %v5819 = vunpack.c.h.b16 %v5418
        %v5820 = vunpack.c.l.b16 %v5419
        %v5821 = vunpack.c.h.b16 %v5419
        %v5822 = vunpack.c.l.b16 %v5420
        %v5823 = vunpack.c.h.b16 %v5420
        %v5824 = vunpack.c.l.b16 %v5421
        %v5825 = vunpack.c.h.b16 %v5421
        %v5826 = vunpack.c.l.b16 %v5422
        %v5827 = vunpack.c.h.b16 %v5422
        %v5828 = vunpack.c.l.b16 %v5423
        %v5829 = vunpack.c.h.b16 %v5423
        %v5830 = vunpack.c.l.b16 %v5424
        %v5831 = vunpack.c.h.b16 %v5424
        %v5832 = vunpack.c.l.b16 %v5425
        %v5833 = vunpack.c.h.b16 %v5425
        %v5834 = vunpack.c.l.b16 %v5426
        %v5835 = vunpack.c.h.b16 %v5426
        %v5836 = vunpack.c.l.b16 %v5427
        %v5837 = vunpack.c.h.b16 %v5427
        %v5838 = vunpack.c.l.b16 %v5428
        %v5839 = vunpack.c.h.b16 %v5428
        %v5840 = vunpack.c.l.b16 %v5429
        %v5841 = vunpack.c.h.b16 %v5429
        %v5842 = vunpack.c.l.b16 %v5430
        %v5843 = vunpack.c.h.b16 %v5430
        %v5844 = vunpack.c.l.b16 %v5431
        %v5845 = vunpack.c.h.b16 %v5431
        %v5846 = vunpack.c.l.b16 %v5432
        %v5847 = vunpack.c.h.b16 %v5432
        %v5848 = vunpack.c.l.b16 %v5433
        %v5849 = vunpack.c.h.b16 %v5433
        %v5850 = vunpack.c.l.b16 %v5434
        %v5851 = vunpack.c.h.b16 %v5434
        %v5852 = vunpack.c.l.b16 %v5435
        %v5853 = vunpack.c.h.b16 %v5435
        %v5854 = vunpack.c.l.b16 %v5436
        %v5855 = vunpack.c.h.b16 %v5436
        %v5856 = vunpack.c.l.b16 %v5437
        %v5857 = vunpack.c.h.b16 %v5437
        %v5858 = vunpack.c.l.b16 %v5438
        %v5859 = vunpack.c.h.b16 %v5438
        %v5860 = vunpack.c.l.b16 %v5439
        %v5861 = vunpack.c.h.b16 %v5439
        %v5862 = vunpack.c.l.b16 %v5440
        %v5863 = vunpack.c.h.b16 %v5440
        %v5864 = vunpack.c.l.b16 %v5441
        %v5865 = vunpack.c.h.b16 %v5441
        %v5866 = vunpack.c.l.b16 %v5442
        %v5867 = vunpack.c.h.b16 %v5442
        %v5868 = vunpack.c.l.b16 %v5443
        %v5869 = vunpack.c.h.b16 %v5443
        %v5870 = vunpack.c.l.b16 %v5444
        %v5871 = vunpack.c.h.b16 %v5444
        %v5872 = vunpack.c.l.b16 %v5445
        %v5873 = vunpack.c.h.b16 %v5445
        %v5874 = vunpack.c.l.b16 %v5446
        %v5875 = vunpack.c.h.b16 %v5446
        %v5876 = vunpack.c.l.b16 %v5447
        %v5877 = vunpack.c.h.b16 %v5447
        %v5878 = vunpack.c.l.b16 %v5448
        %v5879 = vunpack.c.h.b16 %v5448
        %v5880 = vunpack.c.l.b16 %v5449
        %v5881 = vunpack.c.h.b16 %v5449
        %v5882 = vunpack.c.l.b16 %v5450
        %v5883 = vunpack.c.h.b16 %v5450
        %v5884 = vunpack.c.l.b16 %v5451
        %v5885 = vunpack.c.h.b16 %v5451
        %v5886 = vunpack.c.l.b16 %v5452
        %v5887 = vunpack.c.h.b16 %v5452
        %v5888 = vunpack.c.l.b16 %v5453
        %v5889 = vunpack.c.h.b16 %v5453
        %v5890 = vunpack.c.l.b16 %v5454
        %v5891 = vunpack.c.h.b16 %v5454
        %v5892 = vunpack.c.l.b16 %v5455
        %v5893 = vunpack.c.h.b16 %v5455
        %v5894 = vunpack.c.l.b16 %v5456
        %v5895 = vunpack.c.h.b16 %v5456
        %v5896 = vunpack.c.l.b16 %v5457
        %v5897 = vunpack.c.h.b16 %v5457
        %v5898 = vunpack.c.l.b16 %v5458
        %v5899 = vunpack.c.h.b16 %v5458
        %v5900 = vunpack.c.l.b16 %v5459
        %v5901 = vunpack.c.h.b16 %v5459
        %v5902 = vunpack.c.l.b16 %v5460
        %v5903 = vunpack.c.h.b16 %v5460
        %v5904 = vunpack.c.l.b16 %v5461
        %v5905 = vunpack.c.h.b16 %v5461
        %v5906 = vunpack.c.l.b16 %v5462
        %v5907 = vunpack.c.h.b16 %v5462
        %v5908 = vunpack.c.l.b16 %v5463
        %v5909 = vunpack.c.h.b16 %v5463
        %v5910 = vunpack.c.l.b16 %v5464
        %v5911 = vunpack.c.h.b16 %v5464
        %v5912 = vunpack.c.l.b16 %v5465
        %v5913 = vunpack.c.h.b16 %v5465
        %v5914 = vunpack.c.l.b16 %v5466
        %v5915 = vunpack.c.h.b16 %v5466
        %v5916 = vunpack.c.l.b16 %v5467
        %v5917 = vunpack.c.h.b16 %v5467
        %v5918 = vunpack.c.l.b16 %v5468
        %v5919 = vunpack.c.h.b16 %v5468
        %v5920 = vunpack.c.l.b16 %v5469
        %v5921 = vunpack.c.h.b16 %v5469
        %v5922 = vunpack.c.l.b16 %v5470
        %v5923 = vunpack.c.h.b16 %v5470
        %v5924 = vunpack.c.l.b16 %v5471
        %v5925 = vunpack.c.h.b16 %v5471
        %v5926 = vunpack.c.l.b16 %v5472
        %v5927 = vunpack.c.h.b16 %v5472
        %v5928 = vunpack.c.l.b16 %v5473
        %v5929 = vunpack.c.h.b16 %v5473
        %v5930 = vunpack.c.l.b16 %v5474
        %v5931 = vunpack.c.h.b16 %v5474
        %v5932 = vunpack.c.l.b16 %v5475
        %v5933 = vunpack.c.h.b16 %v5475
        %v5934 = vunpack.c.l.b16 %v5476
        %v5935 = vunpack.c.h.b16 %v5476
        %v5936 = vunpack.c.l.b16 %v5477
        %v5937 = vunpack.c.h.b16 %v5477
        %v5938 = vunpack.c.l.b16 %v5478
        %v5939 = vunpack.c.h.b16 %v5478
        %v5940 = vunpack.c.l.b16 %v5479
        %v5941 = vunpack.c.h.b16 %v5479
        %v5942 = vunpack.c.l.b16 %v5480
        %v5943 = vunpack.c.h.b16 %v5480
        %v5944 = vunpack.c.l.b16 %v5481
        %v5945 = vunpack.c.h.b16 %v5481
        %v5946 = vpack.c.b16 %v5664, %v5658
        %v5947 = vpack.c.b16 %v5665, %v5659
        %v5948 = vpack.c.b16 %v5666, %v5660
        %v5949 = vpack.c.b16 %v5667, %v5661
        %v5950 = vpack.c.b16 %v5668, %v5662
        %v5951 = vpack.c.b16 %v5669, %v5663
        %v5952 = vpack.c.b16 %v5676, %v5670
        %v5953 = vpack.c.b16 %v5677, %v5671
        %v5954 = vpack.c.b16 %v5678, %v5672
        %v5955 = vpack.c.b16 %v5679, %v5673
        %v5956 = vpack.c.b16 %v5680, %v5674
        %v5957 = vpack.c.b16 %v5681, %v5675
        %v5958 = vpack.c.b16 %v5688, %v5682
        %v5959 = vpack.c.b16 %v5689, %v5683
        %v5960 = vpack.c.b16 %v5690, %v5684
        %v5961 = vpack.c.b16 %v5691, %v5685
        %v5962 = vpack.c.b16 %v5692, %v5686
        %v5963 = vpack.c.b16 %v5693, %v5687
        %v5964 = vpack.c.b16 %v5700, %v5694
        %v5965 = vpack.c.b16 %v5701, %v5695
        %v5966 = vpack.c.b16 %v5702, %v5696
        %v5967 = vpack.c.b16 %v5703, %v5697
        %v5968 = vpack.c.b16 %v5704, %v5698
        %v5969 = vpack.c.b16 %v5705, %v5699
        %v5970 = vpack.c.b16 %v5712, %v5706
        %v5971 = vpack.c.b16 %v5713, %v5707
        %v5972 = vpack.c.b16 %v5714, %v5708
        %v5973 = vpack.c.b16 %v5715, %v5709
        %v5974 = vpack.c.b16 %v5716, %v5710
        %v5975 = vpack.c.b16 %v5717, %v5711
        %v5976 = vpack.c.b16 %v5724, %v5718
        %v5977 = vpack.c.b16 %v5725, %v5719
        %v5978 = vpack.c.b16 %v5726, %v5720
        %v5979 = vpack.c.b16 %v5727, %v5721
        %v5980 = vpack.c.b16 %v5728, %v5722
        %v5981 = vpack.c.b16 %v5729, %v5723
        %v5982 = vpack.c.b16 %v5736, %v5730
        %v5983 = vpack.c.b16 %v5737, %v5731
        %v5984 = vpack.c.b16 %v5738, %v5732
        %v5985 = vpack.c.b16 %v5739, %v5733
        %v5986 = vpack.c.b16 %v5740, %v5734
        %v5987 = vpack.c.b16 %v5741, %v5735
        %v5988 = vpack.c.b16 %v5748, %v5742
        %v5989 = vpack.c.b16 %v5749, %v5743
        %v5990 = vpack.c.b16 %v5750, %v5744
        %v5991 = vpack.c.b16 %v5751, %v5745
        %v5992 = vpack.c.b16 %v5752, %v5746
        %v5993 = vpack.c.b16 %v5753, %v5747
        %v5994 = vpack.c.b16 %v5760, %v5754
        %v5995 = vpack.c.b16 %v5761, %v5755
        %v5996 = vpack.c.b16 %v5762, %v5756
        %v5997 = vpack.c.b16 %v5763, %v5757
        %v5998 = vpack.c.b16 %v5764, %v5758
        %v5999 = vpack.c.b16 %v5765, %v5759
        %v6000 = vpack.c.b16 %v5772, %v5766
        %v6001 = vpack.c.b16 %v5773, %v5767
        %v6002 = vpack.c.b16 %v5774, %v5768
        %v6003 = vpack.c.b16 %v5775, %v5769
        %v6004 = vpack.c.b16 %v5776, %v5770
        %v6005 = vpack.c.b16 %v5777, %v5771
        %v6006 = vpack.c.b16 %v5784, %v5778
        %v6007 = vpack.c.b16 %v5785, %v5779
        %v6008 = vpack.c.b16 %v5786, %v5780
        %v6009 = vpack.c.b16 %v5787, %v5781
        %v6010 = vpack.c.b16 %v5788, %v5782
        %v6011 = vpack.c.b16 %v5789, %v5783
        %v6012 = vpack.c.b16 %v5796, %v5790
        %v6013 = vpack.c.b16 %v5797, %v5791
        %v6014 = vpack.c.b16 %v5798, %v5792
        %v6015 = vpack.c.b16 %v5799, %v5793
        %v6016 = vpack.c.b16 %v5800, %v5794
        %v6017 = vpack.c.b16 %v5801, %v5795
        %v6018 = vpack.c.b16 %v5808, %v5802
        %v6019 = vpack.c.b16 %v5809, %v5803
        %v6020 = vpack.c.b16 %v5810, %v5804
        %v6021 = vpack.c.b16 %v5811, %v5805
        %v6022 = vpack.c.b16 %v5812, %v5806
        %v6023 = vpack.c.b16 %v5813, %v5807
        %v6024 = vpack.c.b16 %v5820, %v5814
        %v6025 = vpack.c.b16 %v5821, %v5815
        %v6026 = vpack.c.b16 %v5822, %v5816
        %v6027 = vpack.c.b16 %v5823, %v5817
        %v6028 = vpack.c.b16 %v5824, %v5818
        %v6029 = vpack.c.b16 %v5825, %v5819
        %v6030 = vpack.c.b16 %v5832, %v5826
        %v6031 = vpack.c.b16 %v5833, %v5827
        %v6032 = vpack.c.b16 %v5834, %v5828
        %v6033 = vpack.c.b16 %v5835, %v5829
        %v6034 = vpack.c.b16 %v5836, %v5830
        %v6035 = vpack.c.b16 %v5837, %v5831
        %v6036 = vpack.c.b16 %v5844, %v5838
        %v6037 = vpack.c.b16 %v5845, %v5839
        %v6038 = vpack.c.b16 %v5846, %v5840
        %v6039 = vpack.c.b16 %v5847, %v5841
        %v6040 = vpack.c.b16 %v5848, %v5842
        %v6041 = vpack.c.b16 %v5849, %v5843
        %v6042 = vpack.c.b16 %v5856, %v5850
        %v6043 = vpack.c.b16 %v5857, %v5851
        %v6044 = vpack.c.b16 %v5858, %v5852
        %v6045 = vpack.c.b16 %v5859, %v5853
        %v6046 = vpack.c.b16 %v5860, %v5854
        %v6047 = vpack.c.b16 %v5861, %v5855
        %v6048 = vpack.c.b16 %v5868, %v5862
        %v6049 = vpack.c.b16 %v5869, %v5863
        %v6050 = vpack.c.b16 %v5870, %v5864
        %v6051 = vpack.c.b16 %v5871, %v5865
        %v6052 = vpack.c.b16 %v5872, %v5866
        %v6053 = vpack.c.b16 %v5873, %v5867
        %v6054 = vpack.c.b16 %v5880, %v5874
        %v6055 = vpack.c.b16 %v5881, %v5875
        %v6056 = vpack.c.b16 %v5882, %v5876
        %v6057 = vpack.c.b16 %v5883, %v5877
        %v6058 = vpack.c.b16 %v5884, %v5878
        %v6059 = vpack.c.b16 %v5885, %v5879
        %v6060 = vpack.c.b16 %v5892, %v5886
        %v6061 = vpack.c.b16 %v5893, %v5887
        %v6062 = vpack.c.b16 %v5894, %v5888
        %v6063 = vpack.c.b16 %v5895, %v5889
        %v6064 = vpack.c.b16 %v5896, %v5890
        %v6065 = vpack.c.b16 %v5897, %v5891
        %v6066 = vpack.c.b16 %v5904, %v5898
        %v6067 = vpack.c.b16 %v5905, %v5899
        %v6068 = vpack.c.b16 %v5906, %v5900
        %v6069 = vpack.c.b16 %v5907, %v5901
        %v6070 = vpack.c.b16 %v5908, %v5902
        %v6071 = vpack.c.b16 %v5909, %v5903
        %v6072 = vpack.c.b16 %v5916, %v5910
        %v6073 = vpack.c.b16 %v5917, %v5911
        %v6074 = vpack.c.b16 %v5918, %v5912
        %v6075 = vpack.c.b16 %v5919, %v5913
        %v6076 = vpack.c.b16 %v5920, %v5914
        %v6077 = vpack.c.b16 %v5921, %v5915
        %v6078 = vpack.c.b16 %v5928, %v5922
        %v6079 = vpack.c.b16 %v5929, %v5923
        %v6080 = vpack.c.b16 %v5930, %v5924
        %v6081 = vpack.c.b16 %v5931, %v5925
        %v6082 = vpack.c.b16 %v5932, %v5926
        %v6083 = vpack.c.b16 %v5933, %v5927
        %v6084 = vpack.c.b16 %v5940, %v5934
        %v6085 = vpack.c.b16 %v5941, %v5935
        %v6086 = vpack.c.b16 %v5942, %v5936
        %v6087 = vpack.c.b16 %v5943, %v5937
        %v6088 = vpack.c.b16 %v5944, %v5938
        %v6089 = vpack.c.b16 %v5945, %v5939
        %6234 = vmatprep.subr.bf16.mxu0 %v5947
        %6235 = vmatpush1.bf16.msra.mxu0 %v5946
        %6236 = vmatprep.subr.bf16.mxu0 %v5953
        %6237 = vmatpush1.bf16.msra.mxu0 %v5952
        %6238 = vmatprep.subr.bf16.mxu0 %v5959
        %6239 = vmatpush1.bf16.msra.mxu0 %v5958
        %6240 = vmatprep.subr.bf16.mxu0 %v5965
        %6241 = vmatpush1.bf16.msra.mxu0 %v5964
        %6242 = vmatprep.subr.bf16.mxu0 %v5971
        %6243 = vmatpush1.bf16.msra.mxu0 %v5970
        %6244 = vmatprep.subr.bf16.mxu0 %v5977
        %6245 = vmatpush1.bf16.msra.mxu0 %v5976
        %6246 = vmatprep.subr.bf16.mxu0 %v5983
        %6247 = vmatpush1.bf16.msra.mxu0 %v5982
        %6248 = vmatprep.subr.bf16.mxu0 %v5989
        %6249 = vmatpush1.bf16.msra.mxu0 %v5988
        %6250 = vmatprep.subr.bf16.mxu0 %v5995
        %6251 = vmatpush1.bf16.msra.mxu0 %v5994
        %6252 = vmatprep.subr.bf16.mxu0 %v6001
        %6253 = vmatpush1.bf16.msra.mxu0 %v6000
        %6254 = vmatprep.subr.bf16.mxu0 %v6007
        %6255 = vmatpush1.bf16.msra.mxu0 %v6006
        %6256 = vmatprep.subr.bf16.mxu0 %v6013
        %6257 = vmatpush1.bf16.msra.mxu0 %v6012
        %6258 = vmatprep.subr.bf16.mxu0 %v6019
        %6259 = vmatpush1.bf16.msra.mxu0 %v6018
        %6260 = vmatprep.subr.bf16.mxu0 %v6025
        %6261 = vmatpush1.bf16.msra.mxu0 %v6024
        %6262 = vmatprep.subr.bf16.mxu0 %v6031
        %6263 = vmatpush1.bf16.msra.mxu0 %v6030
        %6264 = vmatprep.subr.bf16.mxu0 %v6037
        %6265 = vmatpush1.bf16.msra.mxu0 %v6036
        %6266 = vmatprep.mubr.bf16.mxu0 %v5327
        %6267 = vmatmul.mubr.bf16.gmra.mrb[0].mxu0 %v5326
        %v6268 = vpop.f32.mrb[0].mxu0
        %v6269 = vadd.f32 %v5487, %v6268
        %v6270 = vpop.f32.mrb[0].mxu0
        %v6271 = vadd.f32 %v5491, %v6270
        %v6272 = vpop.f32.mrb[0].mxu0
        %v6273 = vadd.f32 %v5487, %v6272
        %v6274 = vpop.f32.mrb[0].mxu0
        %v6275 = vadd.f32 %v5491, %v6274
        %6276 = vmatprep.mubr.bf16.mxu0 %v5330
        %6277 = vmatmul.mubr.bf16.gmra.mrb[0].mxu0 %v5329
        %v6278 = vpop.f32.mrb[0].mxu0
        %v6279 = vadd.f32 %v5487, %v6278
        %v6280 = vpop.f32.mrb[0].mxu0
        %v6281 = vadd.f32 %v5491, %v6280
        %v6282 = vpop.f32.mrb[0].mxu0
        %v6283 = vadd.f32 %v5487, %v6282
        %v6284 = vpop.f32.mrb[0].mxu0
        %v6285 = vadd.f32 %v5491, %v6284
        %6286 = vmatprep.mubr.bf16.mxu0 %v5333
        %6287 = vmatmul.mubr.bf16.gmra.mrb[0].mxu0 %v5332
        %v6288 = vpop.f32.mrb[0].mxu0
        %v6289 = vadd.f32 %v5487, %v6288
        %v6290 = vpop.f32.mrb[0].mxu0
        %v6291 = vadd.f32 %v5491, %v6290
        %v6292 = vpop.f32.mrb[0].mxu0
        %v6293 = vadd.f32 %v5487, %v6292
        %v6294 = vpop.f32.mrb[0].mxu0
        %v6295 = vadd.f32 %v5491, %v6294
        %6296 = vmatprep.mubr.bf16.mxu0 %v5336
        %6297 = vmatmul.mubr.bf16.gmra.mrb[0].mxu0 %v5335
        %v6298 = vpop.f32.mrb[0].mxu0
        %v6299 = vadd.f32 %v5487, %v6298
        %v6300 = vpop.f32.mrb[0].mxu0
        %v6301 = vadd.f32 %v5491, %v6300
        %v6302 = vpop.f32.mrb[0].mxu0
        %v6303 = vadd.f32 %v5487, %v6302
        %v6304 = vpop.f32.mrb[0].mxu0
        %v6305 = vadd.f32 %v5491, %v6304
        %6306 = vdwg.mxu0
        %6307 = vmatprep.subr.bf16.mxu0 %v6043
        %6308 = vmatpush1.bf16.msra.mxu0 %v6042
        %6309 = vmatprep.subr.bf16.mxu0 %v6049
        %6310 = vmatpush1.bf16.msra.mxu0 %v6048
        %6311 = vmatprep.subr.bf16.mxu0 %v6055
        %6312 = vmatpush1.bf16.msra.mxu0 %v6054
        %6313 = vmatprep.subr.bf16.mxu0 %v6061
        %6314 = vmatpush1.bf16.msra.mxu0 %v6060
        %6315 = vmatprep.subr.bf16.mxu0 %v6067
        %6316 = vmatpush1.bf16.msra.mxu0 %v6066
        %6317 = vmatprep.subr.bf16.mxu0 %v6073
        %6318 = vmatpush1.bf16.msra.mxu0 %v6072
        %6319 = vmatprep.subr.bf16.mxu0 %v6079
        %6320 = vmatpush1.bf16.msra.mxu0 %v6078
        %6321 = vmatprep.subr.bf16.mxu0 %v6085
        %6322 = vmatpush1.bf16.msra.mxu0 %v6084
        %6323 = vmatprep.subr.bf16.mxu0 0
        %6324 = vmatpush1.bf16.msra.mxu0 0
        %6325 = vmatprep.subr.bf16.mxu0 0
        %6326 = vmatpush1.bf16.msra.mxu0 0
        %6327 = vmatprep.subr.bf16.mxu0 0
        %6328 = vmatpush1.bf16.msra.mxu0 0
        %6329 = vmatprep.subr.bf16.mxu0 0
        %6330 = vmatpush1.bf16.msra.mxu0 0
        %6331 = vmatprep.subr.bf16.mxu0 0
        %6332 = vmatpush1.bf16.msra.mxu0 0
        %6333 = vmatprep.subr.bf16.mxu0 0
        %6334 = vmatpush1.bf16.msra.mxu0 0
        %6335 = vmatprep.subr.bf16.mxu0 0
        %6336 = vmatpush1.bf16.msra.mxu0 0
        %6337 = vmatprep.subr.bf16.mxu0 0
        %6338 = vmatpush1.bf16.msra.mxu0 0
        %6339 = vmatprep.mubr.bf16.mxu0 0
        %6340 = vmatmul.mubr.bf16.gmra.mrb[0].mxu0 %v5328
        %v6341 = vpop.f32.mrb[0].mxu0
        %v6342 = vadd.f32 %v6269, %v6341
        %v6343 = vpop.f32.mrb[0].mxu0
        %v6344 = vadd.f32 %v6271, %v6343
        %v6345 = vpop.f32.mrb[0].mxu0
        %v6346 = vadd.f32 %v6273, %v6345
        %v6347 = vpop.f32.mrb[0].mxu0
        %v6348 = vadd.f32 %v6275, %v6347
        %6349 = vmatprep.mubr.bf16.mxu0 0
        %6350 = vmatmul.mubr.bf16.gmra.mrb[0].mxu0 %v5331
        %v6351 = vpop.f32.mrb[0].mxu0
        %v6352 = vadd.f32 %v6279, %v6351
        %v6353 = vpop.f32.mrb[0].mxu0
        %v6354 = vadd.f32 %v6281, %v6353
        %v6355 = vpop.f32.mrb[0].mxu0
        %v6356 = vadd.f32 %v6283, %v6355
        %v6357 = vpop.f32.mrb[0].mxu0
        %v6358 = vadd.f32 %v6285, %v6357
        %6359 = vmatprep.mubr.bf16.mxu0 0
        %6360 = vmatmul.mubr.bf16.gmra.mrb[0].mxu0 %v5334
        %v6361 = vpop.f32.mrb[0].mxu0
        %v6362 = vadd.f32 %v6289, %v6361
        %v6363 = vpop.f32.mrb[0].mxu0
        %v6364 = vadd.f32 %v6291, %v6363
        %v6365 = vpop.f32.mrb[0].mxu0
        %v6366 = vadd.f32 %v6293, %v6365
        %v6367 = vpop.f32.mrb[0].mxu0
        %v6368 = vadd.f32 %v6295, %v6367
        %6369 = vmatprep.mubr.bf16.mxu0 0
        %6370 = vmatmul.mubr.bf16.gmra.mrb[0].mxu0 %v5337
        %v6371 = vpop.f32.mrb[0].mxu0
        %v6372 = vadd.f32 %v6299, %v6371
        %v6373 = vpop.f32.mrb[0].mxu0
        %v6374 = vadd.f32 %v6301, %v6373
        %v6375 = vpop.f32.mrb[0].mxu0
        %v6376 = vadd.f32 %v6303, %v6375
        %v6377 = vpop.f32.mrb[0].mxu0
        %v6378 = vadd.f32 %v6305, %v6377
        %6379 = vdwg.mxu0
        %6380 = vmatprep.subr.bf16.mxu0 %v5949
        %6381 = vmatpush1.bf16.msra.mxu0 %v5948
        %6382 = vmatprep.subr.bf16.mxu0 %v5955
        %6383 = vmatpush1.bf16.msra.mxu0 %v5954
        %6384 = vmatprep.subr.bf16.mxu0 %v5961
        %6385 = vmatpush1.bf16.msra.mxu0 %v5960
        %6386 = vmatprep.subr.bf16.mxu0 %v5967
        %6387 = vmatpush1.bf16.msra.mxu0 %v5966
        %6388 = vmatprep.subr.bf16.mxu0 %v5973
        %6389 = vmatpush1.bf16.msra.mxu0 %v5972
        %6390 = vmatprep.subr.bf16.mxu0 %v5979
        %6391 = vmatpush1.bf16.msra.mxu0 %v5978
        %6392 = vmatprep.subr.bf16.mxu0 %v5985
        %6393 = vmatpush1.bf16.msra.mxu0 %v5984
        %6394 = vmatprep.subr.bf16.mxu0 %v5991
        %6395 = vmatpush1.bf16.msra.mxu0 %v5990
        %6396 = vmatprep.subr.bf16.mxu0 %v5997
        %6397 = vmatpush1.bf16.msra.mxu0 %v5996
        %6398 = vmatprep.subr.bf16.mxu0 %v6003
        %6399 = vmatpush1.bf16.msra.mxu0 %v6002
        %6400 = vmatprep.subr.bf16.mxu0 %v6009
        %6401 = vmatpush1.bf16.msra.mxu0 %v6008
        %6402 = vmatprep.subr.bf16.mxu0 %v6015
        %6403 = vmatpush1.bf16.msra.mxu0 %v6014
        %6404 = vmatprep.subr.bf16.mxu0 %v6021
        %6405 = vmatpush1.bf16.msra.mxu0 %v6020
        %6406 = vmatprep.subr.bf16.mxu0 %v6027
        %6407 = vmatpush1.bf16.msra.mxu0 %v6026
        %6408 = vmatprep.subr.bf16.mxu0 %v6033
        %6409 = vmatpush1.bf16.msra.mxu0 %v6032
        %6410 = vmatprep.subr.bf16.mxu0 %v6039
        %6411 = vmatpush1.bf16.msra.mxu0 %v6038
        %6412 = vmatprep.mubr.bf16.mxu0 %v5327
        %6413 = vmatmul.mubr.bf16.gmra.mrb[0].mxu0 %v5326
        %v6414 = vpop.f32.mrb[0].mxu0
        %v6415 = vadd.f32 %v5495, %v6414
        %v6416 = vpop.f32.mrb[0].mxu0
        %v6417 = vadd.f32 %v5499, %v6416
        %v6418 = vpop.f32.mrb[0].mxu0
        %v6419 = vadd.f32 %v5495, %v6418
        %v6420 = vpop.f32.mrb[0].mxu0
        %v6421 = vadd.f32 %v5499, %v6420
        %6422 = vmatprep.mubr.bf16.mxu0 %v5330
        %6423 = vmatmul.mubr.bf16.gmra.mrb[0].mxu0 %v5329
        %v6424 = vpop.f32.mrb[0].mxu0
        %v6425 = vadd.f32 %v5495, %v6424
        %v6426 = vpop.f32.mrb[0].mxu0
        %v6427 = vadd.f32 %v5499, %v6426
        %v6428 = vpop.f32.mrb[0].mxu0
        %v6429 = vadd.f32 %v5495, %v6428
        %v6430 = vpop.f32.mrb[0].mxu0
        %v6431 = vadd.f32 %v5499, %v6430
        %6432 = vmatprep.mubr.bf16.mxu0 %v5333
        %6433 = vmatmul.mubr.bf16.gmra.mrb[0].mxu0 %v5332
        %v6434 = vpop.f32.mrb[0].mxu0
        %v6435 = vadd.f32 %v5495, %v6434
        %v6436 = vpop.f32.mrb[0].mxu0
        %v6437 = vadd.f32 %v5499, %v6436
        %v6438 = vpop.f32.mrb[0].mxu0
        %v6439 = vadd.f32 %v5495, %v6438
        %v6440 = vpop.f32.mrb[0].mxu0
        %v6441 = vadd.f32 %v5499, %v6440
        %6442 = vmatprep.mubr.bf16.mxu0 %v5336
        %6443 = vmatmul.mubr.bf16.gmra.mrb[0].mxu0 %v5335
        %v6444 = vpop.f32.mrb[0].mxu0
        %v6445 = vadd.f32 %v5495, %v6444
        %v6446 = vpop.f32.mrb[0].mxu0
        %v6447 = vadd.f32 %v5499, %v6446
        %v6448 = vpop.f32.mrb[0].mxu0
        %v6449 = vadd.f32 %v5495, %v6448
        %v6450 = vpop.f32.mrb[0].mxu0
        %v6451 = vadd.f32 %v5499, %v6450
        %6452 = vdwg.mxu0
        %6453 = vmatprep.subr.bf16.mxu0 %v6045
        %6454 = vmatpush1.bf16.msra.mxu0 %v6044
        %6455 = vmatprep.subr.bf16.mxu0 %v6051
        %6456 = vmatpush1.bf16.msra.mxu0 %v6050
        %6457 = vmatprep.subr.bf16.mxu0 %v6057
        %6458 = vmatpush1.bf16.msra.mxu0 %v6056
        %6459 = vmatprep.subr.bf16.mxu0 %v6063
        %6460 = vmatpush1.bf16.msra.mxu0 %v6062
        %6461 = vmatprep.subr.bf16.mxu0 %v6069
        %6462 = vmatpush1.bf16.msra.mxu0 %v6068
        %6463 = vmatprep.subr.bf16.mxu0 %v6075
        %6464 = vmatpush1.bf16.msra.mxu0 %v6074
        %6465 = vmatprep.subr.bf16.mxu0 %v6081
        %6466 = vmatpush1.bf16.msra.mxu0 %v6080
        %6467 = vmatprep.subr.bf16.mxu0 %v6087
        %6468 = vmatpush1.bf16.msra.mxu0 %v6086
        %6469 = vmatprep.subr.bf16.mxu0 0
        %6470 = vmatpush1.bf16.msra.mxu0 0
        %6471 = vmatprep.subr.bf16.mxu0 0
        %6472 = vmatpush1.bf16.msra.mxu0 0
        %6473 = vmatprep.subr.bf16.mxu0 0
        %6474 = vmatpush1.bf16.msra.mxu0 0
        %6475 = vmatprep.subr.bf16.mxu0 0
        %6476 = vmatpush1.bf16.msra.mxu0 0
        %6477 = vmatprep.subr.bf16.mxu0 0
        %6478 = vmatpush1.bf16.msra.mxu0 0
        %6479 = vmatprep.subr.bf16.mxu0 0
        %6480 = vmatpush1.bf16.msra.mxu0 0
        %6481 = vmatprep.subr.bf16.mxu0 0
        %6482 = vmatpush1.bf16.msra.mxu0 0
        %6483 = vmatprep.subr.bf16.mxu0 0
        %6484 = vmatpush1.bf16.msra.mxu0 0
        %6485 = vmatprep.mubr.bf16.mxu0 0
        %6486 = vmatmul.mubr.bf16.gmra.mrb[0].mxu0 %v5328
        %v6487 = vpop.f32.mrb[0].mxu0
        %v6488 = vadd.f32 %v6415, %v6487
        %v6489 = vpop.f32.mrb[0].mxu0
        %v6490 = vadd.f32 %v6417, %v6489
        %v6491 = vpop.f32.mrb[0].mxu0
        %v6492 = vadd.f32 %v6419, %v6491
        %v6493 = vpop.f32.mrb[0].mxu0
        %v6494 = vadd.f32 %v6421, %v6493
        %6495 = vmatprep.mubr.bf16.mxu0 0
        %6496 = vmatmul.mubr.bf16.gmra.mrb[0].mxu0 %v5331
        %v6497 = vpop.f32.mrb[0].mxu0
        %v6498 = vadd.f32 %v6425, %v6497
        %v6499 = vpop.f32.mrb[0].mxu0
        %v6500 = vadd.f32 %v6427, %v6499
        %v6501 = vpop.f32.mrb[0].mxu0
        %v6502 = vadd.f32 %v6429, %v6501
        %v6503 = vpop.f32.mrb[0].mxu0
        %v6504 = vadd.f32 %v6431, %v6503
        %6505 = vmatprep.mubr.bf16.mxu0 0
        %6506 = vmatmul.mubr.bf16.gmra.mrb[0].mxu0 %v5334
        %v6507 = vpop.f32.mrb[0].mxu0
        %v6508 = vadd.f32 %v6435, %v6507
        %v6509 = vpop.f32.mrb[0].mxu0
        %v6510 = vadd.f32 %v6437, %v6509
        %v6511 = vpop.f32.mrb[0].mxu0
        %v6512 = vadd.f32 %v6439, %v6511
        %v6513 = vpop.f32.mrb[0].mxu0
        %v6514 = vadd.f32 %v6441, %v6513
        %6515 = vmatprep.mubr.bf16.mxu0 0
        %6516 = vmatmul.mubr.bf16.gmra.mrb[0].mxu0 %v5337
        %v6517 = vpop.f32.mrb[0].mxu0
        %v6518 = vadd.f32 %v6445, %v6517
        %v6519 = vpop.f32.mrb[0].mxu0
        %v6520 = vadd.f32 %v6447, %v6519
        %v6521 = vpop.f32.mrb[0].mxu0
        %v6522 = vadd.f32 %v6449, %v6521
        %v6523 = vpop.f32.mrb[0].mxu0
        %v6524 = vadd.f32 %v6451, %v6523
        %6525 = vdwg.mxu0
        %6526 = vmatprep.subr.bf16.mxu0 %v5951
        %6527 = vmatpush1.bf16.msra.mxu0 %v5950
        %6528 = vmatprep.subr.bf16.mxu0 %v5957
        %6529 = vmatpush1.bf16.msra.mxu0 %v5956
        %6530 = vmatprep.subr.bf16.mxu0 %v5963
        %6531 = vmatpush1.bf16.msra.mxu0 %v5962
        %6532 = vmatprep.subr.bf16.mxu0 %v5969
        %6533 = vmatpush1.bf16.msra.mxu0 %v5968
        %6534 = vmatprep.subr.bf16.mxu0 %v5975
        %6535 = vmatpush1.bf16.msra.mxu0 %v5974
        %6536 = vmatprep.subr.bf16.mxu0 %v5981
        %6537 = vmatpush1.bf16.msra.mxu0 %v5980
        %6538 = vmatprep.subr.bf16.mxu0 %v5987
        %6539 = vmatpush1.bf16.msra.mxu0 %v5986
        %6540 = vmatprep.subr.bf16.mxu0 %v5993
        %6541 = vmatpush1.bf16.msra.mxu0 %v5992
        %6542 = vmatprep.subr.bf16.mxu0 %v5999
        %6543 = vmatpush1.bf16.msra.mxu0 %v5998
        %6544 = vmatprep.subr.bf16.mxu0 %v6005
        %6545 = vmatpush1.bf16.msra.mxu0 %v6004
        %6546 = vmatprep.subr.bf16.mxu0 %v6011
        %6547 = vmatpush1.bf16.msra.mxu0 %v6010
        %6548 = vmatprep.subr.bf16.mxu0 %v6017
        %6549 = vmatpush1.bf16.msra.mxu0 %v6016
        %6550 = vmatprep.subr.bf16.mxu0 %v6023
        %6551 = vmatpush1.bf16.msra.mxu0 %v6022
        %6552 = vmatprep.subr.bf16.mxu0 %v6029
        %6553 = vmatpush1.bf16.msra.mxu0 %v6028
        %6554 = vmatprep.subr.bf16.mxu0 %v6035
        %6555 = vmatpush1.bf16.msra.mxu0 %v6034
        %6556 = vmatprep.subr.bf16.mxu0 %v6041
        %6557 = vmatpush1.bf16.msra.mxu0 %v6040
        %6558 = vmatprep.mubr.bf16.mxu0 %v5327
        %6559 = vmatmul.mubr.bf16.gmra.mrb[0].mxu0 %v5326
        %v6560 = vpop.f32.mrb[0].mxu0
        %v6561 = vadd.f32 %v5503, %v6560
        %v6562 = vpop.f32.mrb[0].mxu0
        %v6563 = vadd.f32 %v5507, %v6562
        %v6564 = vpop.f32.mrb[0].mxu0
        %v6565 = vadd.f32 %v5503, %v6564
        %v6566 = vpop.f32.mrb[0].mxu0
        %v6567 = vadd.f32 %v5507, %v6566
        %6568 = vmatprep.mubr.bf16.mxu0 %v5330
        %6569 = vmatmul.mubr.bf16.gmra.mrb[0].mxu0 %v5329
        %v6570 = vpop.f32.mrb[0].mxu0
        %v6571 = vadd.f32 %v5503, %v6570
        %v6572 = vpop.f32.mrb[0].mxu0
        %v6573 = vadd.f32 %v5507, %v6572
        %v6574 = vpop.f32.mrb[0].mxu0
        %v6575 = vadd.f32 %v5503, %v6574
        %v6576 = vpop.f32.mrb[0].mxu0
        %v6577 = vadd.f32 %v5507, %v6576
        %6578 = vmatprep.mubr.bf16.mxu0 %v5333
        %6579 = vmatmul.mubr.bf16.gmra.mrb[0].mxu0 %v5332
        %v6580 = vpop.f32.mrb[0].mxu0
        %v6581 = vadd.f32 %v5503, %v6580
        %v6582 = vpop.f32.mrb[0].mxu0
        %v6583 = vadd.f32 %v5507, %v6582
        %v6584 = vpop.f32.mrb[0].mxu0
        %v6585 = vadd.f32 %v5503, %v6584
        %v6586 = vpop.f32.mrb[0].mxu0
        %v6587 = vadd.f32 %v5507, %v6586
        %6588 = vmatprep.mubr.bf16.mxu0 %v5336
        %6589 = vmatmul.mubr.bf16.gmra.mrb[0].mxu0 %v5335
        %v6590 = vpop.f32.mrb[0].mxu0
        %v6591 = vadd.f32 %v5503, %v6590
        %v6592 = vpop.f32.mrb[0].mxu0
        %v6593 = vadd.f32 %v5507, %v6592
        %v6594 = vpop.f32.mrb[0].mxu0
        %v6595 = vadd.f32 %v5503, %v6594
        %v6596 = vpop.f32.mrb[0].mxu0
        %v6597 = vadd.f32 %v5507, %v6596
        %6598 = vdwg.mxu0
        %6599 = vmatprep.subr.bf16.mxu0 %v6047
        %6600 = vmatpush1.bf16.msra.mxu0 %v6046
        %6601 = vmatprep.subr.bf16.mxu0 %v6053
        %6602 = vmatpush1.bf16.msra.mxu0 %v6052
        %6603 = vmatprep.subr.bf16.mxu0 %v6059
        %6604 = vmatpush1.bf16.msra.mxu0 %v6058
        %6605 = vmatprep.subr.bf16.mxu0 %v6065
        %6606 = vmatpush1.bf16.msra.mxu0 %v6064
        %6607 = vmatprep.subr.bf16.mxu0 %v6071
        %6608 = vmatpush1.bf16.msra.mxu0 %v6070
        %6609 = vmatprep.subr.bf16.mxu0 %v6077
        %6610 = vmatpush1.bf16.msra.mxu0 %v6076
        %6611 = vmatprep.subr.bf16.mxu0 %v6083
        %6612 = vmatpush1.bf16.msra.mxu0 %v6082
        %6613 = vmatprep.subr.bf16.mxu0 %v6089
        %6614 = vmatpush1.bf16.msra.mxu0 %v6088
        %6615 = vmatprep.subr.bf16.mxu0 0
        %6616 = vmatpush1.bf16.msra.mxu0 0
        %6617 = vmatprep.subr.bf16.mxu0 0
        %6618 = vmatpush1.bf16.msra.mxu0 0
        %6619 = vmatprep.subr.bf16.mxu0 0
        %6620 = vmatpush1.bf16.msra.mxu0 0
        %6621 = vmatprep.subr.bf16.mxu0 0
        %6622 = vmatpush1.bf16.msra.mxu0 0
        %6623 = vmatprep.subr.bf16.mxu0 0
        %6624 = vmatpush1.bf16.msra.mxu0 0
        %6625 = vmatprep.subr.bf16.mxu0 0
        %6626 = vmatpush1.bf16.msra.mxu0 0
        %6627 = vmatprep.subr.bf16.mxu0 0
        %6628 = vmatpush1.bf16.msra.mxu0 0
        %6629 = vmatprep.subr.bf16.mxu0 0
        %6630 = vmatpush1.bf16.msra.mxu0 0
        %6631 = vmatprep.mubr.bf16.mxu0 0
        %6632 = vmatmul.mubr.bf16.gmra.mrb[0].mxu0 %v5328
        %v6633 = vpop.f32.mrb[0].mxu0
        %v6634 = vadd.f32 %v6561, %v6633
        %v6635 = vpop.f32.mrb[0].mxu0
        %v6636 = vadd.f32 %v6563, %v6635
        %v6637 = vpop.f32.mrb[0].mxu0
        %v6638 = vadd.f32 %v6565, %v6637
        %v6639 = vpop.f32.mrb[0].mxu0
        %v6640 = vadd.f32 %v6567, %v6639
        %6641 = vmatprep.mubr.bf16.mxu0 0
        %6642 = vmatmul.mubr.bf16.gmra.mrb[0].mxu0 %v5331
        %v6643 = vpop.f32.mrb[0].mxu0
        %v6644 = vadd.f32 %v6571, %v6643
        %v6645 = vpop.f32.mrb[0].mxu0
        %v6646 = vadd.f32 %v6573, %v6645
        %v6647 = vpop.f32.mrb[0].mxu0
        %v6648 = vadd.f32 %v6575, %v6647
        %v6649 = vpop.f32.mrb[0].mxu0
        %v6650 = vadd.f32 %v6577, %v6649
        %6651 = vmatprep.mubr.bf16.mxu0 0
        %6652 = vmatmul.mubr.bf16.gmra.mrb[0].mxu0 %v5334
        %v6653 = vpop.f32.mrb[0].mxu0
        %v6654 = vadd.f32 %v6581, %v6653
        %v6655 = vpop.f32.mrb[0].mxu0
        %v6656 = vadd.f32 %v6583, %v6655
        %v6657 = vpop.f32.mrb[0].mxu0
        %v6658 = vadd.f32 %v6585, %v6657
        %v6659 = vpop.f32.mrb[0].mxu0
        %v6660 = vadd.f32 %v6587, %v6659
        %6661 = vmatprep.mubr.bf16.mxu0 0
        %6662 = vmatmul.mubr.bf16.gmra.mrb[0].mxu0 %v5337
        %v6663 = vpop.f32.mrb[0].mxu0
        %v6664 = vadd.f32 %v6591, %v6663
        %v6665 = vpop.f32.mrb[0].mxu0
        %v6666 = vadd.f32 %v6593, %v6665
        %v6667 = vpop.f32.mrb[0].mxu0
        %v6668 = vadd.f32 %v6595, %v6667
        %v6669 = vpop.f32.mrb[0].mxu0
        %v6670 = vadd.f32 %v6597, %v6669
        %6671 = vdwg.mxu0
        %v6672 = vmul.f32 %v6342, %v6342
        %v6673 = vmul.f32 %v6344, %v6344
        %v6674 = vmul.f32 %v6488, %v6488
        %v6675 = vmul.f32 %v6490, %v6490
        %v6676 = vmul.f32 %v6634, %v6634
        %v6677 = vmul.f32 %v6636, %v6636
        %v6678 = vmul.f32 %v6346, %v6346
        %v6679 = vmul.f32 %v6348, %v6348
        %v6680 = vmul.f32 %v6492, %v6492
        %v6681 = vmul.f32 %v6494, %v6494
        %v6682 = vmul.f32 %v6638, %v6638
        %v6683 = vmul.f32 %v6640, %v6640
        %v6684 = vmul.f32 %v6352, %v6352
        %v6685 = vmul.f32 %v6354, %v6354
        %v6686 = vmul.f32 %v6498, %v6498
        %v6687 = vmul.f32 %v6500, %v6500
        %v6688 = vmul.f32 %v6644, %v6644
        %v6689 = vmul.f32 %v6646, %v6646
        %v6690 = vmul.f32 %v6356, %v6356
        %v6691 = vmul.f32 %v6358, %v6358
        %v6692 = vmul.f32 %v6502, %v6502
        %v6693 = vmul.f32 %v6504, %v6504
        %v6694 = vmul.f32 %v6648, %v6648
        %v6695 = vmul.f32 %v6650, %v6650
        %v6696 = vmul.f32 %v6362, %v6362
        %v6697 = vmul.f32 %v6364, %v6364
        %v6698 = vmul.f32 %v6508, %v6508
        %v6699 = vmul.f32 %v6510, %v6510
        %v6700 = vmul.f32 %v6654, %v6654
        %v6701 = vmul.f32 %v6656, %v6656
        %v6702 = vmul.f32 %v6366, %v6366
        %v6703 = vmul.f32 %v6368, %v6368
        %v6704 = vmul.f32 %v6512, %v6512
        %v6705 = vmul.f32 %v6514, %v6514
        %v6706 = vmul.f32 %v6658, %v6658
        %v6707 = vmul.f32 %v6660, %v6660
        %v6708 = vmul.f32 %v6372, %v6372
        %v6709 = vmul.f32 %v6374, %v6374
        %v6710 = vmul.f32 %v6518, %v6518
        %v6711 = vmul.f32 %v6520, %v6520
        %v6712 = vmul.f32 %v6664, %v6664
        %v6713 = vmul.f32 %v6666, %v6666
        %v6714 = vmul.f32 %v6376, %v6376
        %v6715 = vmul.f32 %v6378, %v6378
        %v6716 = vmul.f32 %v6522, %v6522
        %v6717 = vmul.f32 %v6524, %v6524
        %v6718 = vmul.f32 %v6668, %v6668
        %v6719 = vmul.f32 %v6670, %v6670
        %v6720 = vmul.f32 %v6342, %v6672
        %v6721 = vmul.f32 %v6344, %v6673
        %v6722 = vmul.f32 %v6488, %v6674
        %v6723 = vmul.f32 %v6490, %v6675
        %v6724 = vmul.f32 %v6634, %v6676
        %v6725 = vmul.f32 %v6636, %v6677
        %v6726 = vmul.f32 %v6346, %v6678
        %v6727 = vmul.f32 %v6348, %v6679
        %v6728 = vmul.f32 %v6492, %v6680
        %v6729 = vmul.f32 %v6494, %v6681
        %v6730 = vmul.f32 %v6638, %v6682
        %v6731 = vmul.f32 %v6640, %v6683
        %v6732 = vmul.f32 %v6352, %v6684
        %v6733 = vmul.f32 %v6354, %v6685
        %v6734 = vmul.f32 %v6498, %v6686
        %v6735 = vmul.f32 %v6500, %v6687
        %v6736 = vmul.f32 %v6644, %v6688
        %v6737 = vmul.f32 %v6646, %v6689
        %v6738 = vmul.f32 %v6356, %v6690
        %v6739 = vmul.f32 %v6358, %v6691
        %v6740 = vmul.f32 %v6502, %v6692
        %v6741 = vmul.f32 %v6504, %v6693
        %v6742 = vmul.f32 %v6648, %v6694
        %v6743 = vmul.f32 %v6650, %v6695
        %v6744 = vmul.f32 %v6362, %v6696
        %v6745 = vmul.f32 %v6364, %v6697
        %v6746 = vmul.f32 %v6508, %v6698
        %v6747 = vmul.f32 %v6510, %v6699
        %v6748 = vmul.f32 %v6654, %v6700
        %v6749 = vmul.f32 %v6656, %v6701
        %v6750 = vmul.f32 %v6366, %v6702
        %v6751 = vmul.f32 %v6368, %v6703
        %v6752 = vmul.f32 %v6512, %v6704
        %v6753 = vmul.f32 %v6514, %v6705
        %v6754 = vmul.f32 %v6658, %v6706
        %v6755 = vmul.f32 %v6660, %v6707
        %v6756 = vmul.f32 %v6372, %v6708
        %v6757 = vmul.f32 %v6374, %v6709
        %v6758 = vmul.f32 %v6518, %v6710
        %v6759 = vmul.f32 %v6520, %v6711
        %v6760 = vmul.f32 %v6664, %v6712
        %v6761 = vmul.f32 %v6666, %v6713
        %v6762 = vmul.f32 %v6376, %v6714
        %v6763 = vmul.f32 %v6378, %v6715
        %v6764 = vmul.f32 %v6522, %v6716
        %v6765 = vmul.f32 %v6524, %v6717
        %v6766 = vmul.f32 %v6668, %v6718
        %v6767 = vmul.f32 %v6670, %v6719
        %v6768 = vmul.f32 %v6720, 0.044715
        %v6769 = vmul.f32 %v6721, 0.044715
        %v6770 = vmul.f32 %v6722, 0.044715
        %v6771 = vmul.f32 %v6723, 0.044715
        %v6772 = vmul.f32 %v6724, 0.044715
        %v6773 = vmul.f32 %v6725, 0.044715
        %v6774 = vmul.f32 %v6726, 0.044715
        %v6775 = vmul.f32 %v6727, 0.044715
        %v6776 = vmul.f32 %v6728, 0.044715
        %v6777 = vmul.f32 %v6729, 0.044715
        %v6778 = vmul.f32 %v6730, 0.044715
        %v6779 = vmul.f32 %v6731, 0.044715
        %v6780 = vmul.f32 %v6732, 0.044715
        %v6781 = vmul.f32 %v6733, 0.044715
        %v6782 = vmul.f32 %v6734, 0.044715
        %v6783 = vmul.f32 %v6735, 0.044715
        %v6784 = vmul.f32 %v6736, 0.044715
        %v6785 = vmul.f32 %v6737, 0.044715
        %v6786 = vmul.f32 %v6738, 0.044715
        %v6787 = vmul.f32 %v6739, 0.044715
        %v6788 = vmul.f32 %v6740, 0.044715
        %v6789 = vmul.f32 %v6741, 0.044715
        %v6790 = vmul.f32 %v6742, 0.044715
        %v6791 = vmul.f32 %v6743, 0.044715
        %v6792 = vmul.f32 %v6744, 0.044715
        %v6793 = vmul.f32 %v6745, 0.044715
        %v6794 = vmul.f32 %v6746, 0.044715
        %v6795 = vmul.f32 %v6747, 0.044715
        %v6796 = vmul.f32 %v6748, 0.044715
        %v6797 = vmul.f32 %v6749, 0.044715
        %v6798 = vmul.f32 %v6750, 0.044715
        %v6799 = vmul.f32 %v6751, 0.044715
        %v6800 = vmul.f32 %v6752, 0.044715
        %v6801 = vmul.f32 %v6753, 0.044715
        %v6802 = vmul.f32 %v6754, 0.044715
        %v6803 = vmul.f32 %v6755, 0.044715
        %v6804 = vmul.f32 %v6756, 0.044715
        %v6805 = vmul.f32 %v6757, 0.044715
        %v6806 = vmul.f32 %v6758, 0.044715
        %v6807 = vmul.f32 %v6759, 0.044715
        %v6808 = vmul.f32 %v6760, 0.044715
        %v6809 = vmul.f32 %v6761, 0.044715
        %v6810 = vmul.f32 %v6762, 0.044715
        %v6811 = vmul.f32 %v6763, 0.044715
        %v6812 = vmul.f32 %v6764, 0.044715
        %v6813 = vmul.f32 %v6765, 0.044715
        %v6814 = vmul.f32 %v6766, 0.044715
        %v6815 = vmul.f32 %v6767, 0.044715
        %v6816 = vadd.f32 %v6342, %v6768
        %v6817 = vadd.f32 %v6344, %v6769
        %v6818 = vadd.f32 %v6488, %v6770
        %v6819 = vadd.f32 %v6490, %v6771
        %v6820 = vadd.f32 %v6634, %v6772
        %v6821 = vadd.f32 %v6636, %v6773
        %v6822 = vadd.f32 %v6346, %v6774
        %v6823 = vadd.f32 %v6348, %v6775
        %v6824 = vadd.f32 %v6492, %v6776
        %v6825 = vadd.f32 %v6494, %v6777
        %v6826 = vadd.f32 %v6638, %v6778
        %v6827 = vadd.f32 %v6640, %v6779
        %v6828 = vadd.f32 %v6352, %v6780
        %v6829 = vadd.f32 %v6354, %v6781
        %v6830 = vadd.f32 %v6498, %v6782
        %v6831 = vadd.f32 %v6500, %v6783
        %v6832 = vadd.f32 %v6644, %v6784
        %v6833 = vadd.f32 %v6646, %v6785
        %v6834 = vadd.f32 %v6356, %v6786
        %v6835 = vadd.f32 %v6358, %v6787
        %v6836 = vadd.f32 %v6502, %v6788
        %v6837 = vadd.f32 %v6504, %v6789
        %v6838 = vadd.f32 %v6648, %v6790
        %v6839 = vadd.f32 %v6650, %v6791
        %v6840 = vadd.f32 %v6362, %v6792
        %v6841 = vadd.f32 %v6364, %v6793
        %v6842 = vadd.f32 %v6508, %v6794
        %v6843 = vadd.f32 %v6510, %v6795
        %v6844 = vadd.f32 %v6654, %v6796
        %v6845 = vadd.f32 %v6656, %v6797
        %v6846 = vadd.f32 %v6366, %v6798
        %v6847 = vadd.f32 %v6368, %v6799
        %v6848 = vadd.f32 %v6512, %v6800
        %v6849 = vadd.f32 %v6514, %v6801
        %v6850 = vadd.f32 %v6658, %v6802
        %v6851 = vadd.f32 %v6660, %v6803
        %v6852 = vadd.f32 %v6372, %v6804
        %v6853 = vadd.f32 %v6374, %v6805
        %v6854 = vadd.f32 %v6518, %v6806
        %v6855 = vadd.f32 %v6520, %v6807
        %v6856 = vadd.f32 %v6664, %v6808
        %v6857 = vadd.f32 %v6666, %v6809
        %v6858 = vadd.f32 %v6376, %v6810
        %v6859 = vadd.f32 %v6378, %v6811
        %v6860 = vadd.f32 %v6522, %v6812
        %v6861 = vadd.f32 %v6524, %v6813
        %v6862 = vadd.f32 %v6668, %v6814
        %v6863 = vadd.f32 %v6670, %v6815
        %v6864 = vmul.f32 %v6816, 0.7978846
        %v6865 = vmul.f32 %v6817, 0.7978846
        %v6866 = vmul.f32 %v6818, 0.7978846
        %v6867 = vmul.f32 %v6819, 0.7978846
        %v6868 = vmul.f32 %v6820, 0.7978846
        %v6869 = vmul.f32 %v6821, 0.7978846
        %v6870 = vmul.f32 %v6822, 0.7978846
        %v6871 = vmul.f32 %v6823, 0.7978846
        %v6872 = vmul.f32 %v6824, 0.7978846
        %v6873 = vmul.f32 %v6825, 0.7978846
        %v6874 = vmul.f32 %v6826, 0.7978846
        %v6875 = vmul.f32 %v6827, 0.7978846
        %v6876 = vmul.f32 %v6828, 0.7978846
        %v6877 = vmul.f32 %v6829, 0.7978846
        %v6878 = vmul.f32 %v6830, 0.7978846
        %v6879 = vmul.f32 %v6831, 0.7978846
        %v6880 = vmul.f32 %v6832, 0.7978846
        %v6881 = vmul.f32 %v6833, 0.7978846
        %v6882 = vmul.f32 %v6834, 0.7978846
        %v6883 = vmul.f32 %v6835, 0.7978846
        %v6884 = vmul.f32 %v6836, 0.7978846
        %v6885 = vmul.f32 %v6837, 0.7978846
        %v6886 = vmul.f32 %v6838, 0.7978846
        %v6887 = vmul.f32 %v6839, 0.7978846
        %v6888 = vmul.f32 %v6840, 0.7978846
        %v6889 = vmul.f32 %v6841, 0.7978846
        %v6890 = vmul.f32 %v6842, 0.7978846
        %v6891 = vmul.f32 %v6843, 0.7978846
        %v6892 = vmul.f32 %v6844, 0.7978846
        %v6893 = vmul.f32 %v6845, 0.7978846
        %v6894 = vmul.f32 %v6846, 0.7978846
        %v6895 = vmul.f32 %v6847, 0.7978846
        %v6896 = vmul.f32 %v6848, 0.7978846
        %v6897 = vmul.f32 %v6849, 0.7978846
        %v6898 = vmul.f32 %v6850, 0.7978846
        %v6899 = vmul.f32 %v6851, 0.7978846
        %v6900 = vmul.f32 %v6852, 0.7978846
        %v6901 = vmul.f32 %v6853, 0.7978846
        %v6902 = vmul.f32 %v6854, 0.7978846
        %v6903 = vmul.f32 %v6855, 0.7978846
        %v6904 = vmul.f32 %v6856, 0.7978846
        %v6905 = vmul.f32 %v6857, 0.7978846
        %v6906 = vmul.f32 %v6858, 0.7978846
        %v6907 = vmul.f32 %v6859, 0.7978846
        %v6908 = vmul.f32 %v6860, 0.7978846
        %v6909 = vmul.f32 %v6861, 0.7978846
        %v6910 = vmul.f32 %v6862, 0.7978846
        %v6911 = vmul.f32 %v6863, 0.7978846
        %v6912 = vtanh.pop %v6864
        %v6913 = vtanh.pop %v6865
        %v6914 = vtanh.pop %v6866
        %v6915 = vtanh.pop %v6867
        %v6916 = vtanh.pop %v6868
        %v6917 = vtanh.pop %v6869
        %v6918 = vtanh.pop %v6870
        %v6919 = vtanh.pop %v6871
        %v6920 = vtanh.pop %v6872
        %v6921 = vtanh.pop %v6873
        %v6922 = vtanh.pop %v6874
        %v6923 = vtanh.pop %v6875
        %v6924 = vtanh.pop %v6876
        %v6925 = vtanh.pop %v6877
        %v6926 = vtanh.pop %v6878
        %v6927 = vtanh.pop %v6879
        %v6928 = vtanh.pop %v6880
        %v6929 = vtanh.pop %v6881
        %v6930 = vtanh.pop %v6882
        %v6931 = vtanh.pop %v6883
        %v6932 = vtanh.pop %v6884
        %v6933 = vtanh.pop %v6885
        %v6934 = vtanh.pop %v6886
        %v6935 = vtanh.pop %v6887
        %v6936 = vtanh.pop %v6888
        %v6937 = vtanh.pop %v6889
        %v6938 = vtanh.pop %v6890
        %v6939 = vtanh.pop %v6891
        %v6940 = vtanh.pop %v6892
        %v6941 = vtanh.pop %v6893
        %v6942 = vtanh.pop %v6894
        %v6943 = vtanh.pop %v6895
        %v6944 = vtanh.pop %v6896
        %v6945 = vtanh.pop %v6897
        %v6946 = vtanh.pop %v6898
        %v6947 = vtanh.pop %v6899
        %v6948 = vtanh.pop %v6900
        %v6949 = vtanh.pop %v6901
        %v6950 = vtanh.pop %v6902
        %v6951 = vtanh.pop %v6903
        %v6952 = vtanh.pop %v6904
        %v6953 = vtanh.pop %v6905
        %v6954 = vtanh.pop %v6906
        %v6955 = vtanh.pop %v6907
        %v6956 = vtanh.pop %v6908
        %v6957 = vtanh.pop %v6909
        %v6958 = vtanh.pop %v6910
        %v6959 = vtanh.pop %v6911
        %v6960 = vadd.f32 %v6912, 1.0
        %v6961 = vadd.f32 %v6913, 1.0
        %v6962 = vadd.f32 %v6914, 1.0
        %v6963 = vadd.f32 %v6915, 1.0
        %v6964 = vadd.f32 %v6916, 1.0
        %v6965 = vadd.f32 %v6917, 1.0
        %v6966 = vadd.f32 %v6918, 1.0
        %v6967 = vadd.f32 %v6919, 1.0
        %v6968 = vadd.f32 %v6920, 1.0
        %v6969 = vadd.f32 %v6921, 1.0
        %v6970 = vadd.f32 %v6922, 1.0
        %v6971 = vadd.f32 %v6923, 1.0
        %v6972 = vadd.f32 %v6924, 1.0
        %v6973 = vadd.f32 %v6925, 1.0
        %v6974 = vadd.f32 %v6926, 1.0
        %v6975 = vadd.f32 %v6927, 1.0
        %v6976 = vadd.f32 %v6928, 1.0
        %v6977 = vadd.f32 %v6929, 1.0
        %v6978 = vadd.f32 %v6930, 1.0
        %v6979 = vadd.f32 %v6931, 1.0
        %v6980 = vadd.f32 %v6932, 1.0
        %v6981 = vadd.f32 %v6933, 1.0
        %v6982 = vadd.f32 %v6934, 1.0
        %v6983 = vadd.f32 %v6935, 1.0
        %v6984 = vadd.f32 %v6936, 1.0
        %v6985 = vadd.f32 %v6937, 1.0
        %v6986 = vadd.f32 %v6938, 1.0
        %v6987 = vadd.f32 %v6939, 1.0
        %v6988 = vadd.f32 %v6940, 1.0
        %v6989 = vadd.f32 %v6941, 1.0
        %v6990 = vadd.f32 %v6942, 1.0
        %v6991 = vadd.f32 %v6943, 1.0
        %v6992 = vadd.f32 %v6944, 1.0
        %v6993 = vadd.f32 %v6945, 1.0
        %v6994 = vadd.f32 %v6946, 1.0
        %v6995 = vadd.f32 %v6947, 1.0
        %v6996 = vadd.f32 %v6948, 1.0
        %v6997 = vadd.f32 %v6949, 1.0
        %v6998 = vadd.f32 %v6950, 1.0
        %v6999 = vadd.f32 %v6951, 1.0
        %v7000 = vadd.f32 %v6952, 1.0
        %v7001 = vadd.f32 %v6953, 1.0
        %v7002 = vadd.f32 %v6954, 1.0
        %v7003 = vadd.f32 %v6955, 1.0
        %v7004 = vadd.f32 %v6956, 1.0
        %v7005 = vadd.f32 %v6957, 1.0
        %v7006 = vadd.f32 %v6958, 1.0
        %v7007 = vadd.f32 %v6959, 1.0
        %v7008 = vmul.f32 %v6960, 0.5
        %v7009 = vmul.f32 %v6961, 0.5
        %v7010 = vmul.f32 %v6962, 0.5
        %v7011 = vmul.f32 %v6963, 0.5
        %v7012 = vmul.f32 %v6964, 0.5
        %v7013 = vmul.f32 %v6965, 0.5
        %v7014 = vmul.f32 %v6966, 0.5
        %v7015 = vmul.f32 %v6967, 0.5
        %v7016 = vmul.f32 %v6968, 0.5
        %v7017 = vmul.f32 %v6969, 0.5
        %v7018 = vmul.f32 %v6970, 0.5
        %v7019 = vmul.f32 %v6971, 0.5
        %v7020 = vmul.f32 %v6972, 0.5
        %v7021 = vmul.f32 %v6973, 0.5
        %v7022 = vmul.f32 %v6974, 0.5
        %v7023 = vmul.f32 %v6975, 0.5
        %v7024 = vmul.f32 %v6976, 0.5
        %v7025 = vmul.f32 %v6977, 0.5
        %v7026 = vmul.f32 %v6978, 0.5
        %v7027 = vmul.f32 %v6979, 0.5
        %v7028 = vmul.f32 %v6980, 0.5
        %v7029 = vmul.f32 %v6981, 0.5
        %v7030 = vmul.f32 %v6982, 0.5
        %v7031 = vmul.f32 %v6983, 0.5
        %v7032 = vmul.f32 %v6984, 0.5
        %v7033 = vmul.f32 %v6985, 0.5
        %v7034 = vmul.f32 %v6986, 0.5
        %v7035 = vmul.f32 %v6987, 0.5
        %v7036 = vmul.f32 %v6988, 0.5
        %v7037 = vmul.f32 %v6989, 0.5
        %v7038 = vmul.f32 %v6990, 0.5
        %v7039 = vmul.f32 %v6991, 0.5
        %v7040 = vmul.f32 %v6992, 0.5
        %v7041 = vmul.f32 %v6993, 0.5
        %v7042 = vmul.f32 %v6994, 0.5
        %v7043 = vmul.f32 %v6995, 0.5
        %v7044 = vmul.f32 %v6996, 0.5
        %v7045 = vmul.f32 %v6997, 0.5
        %v7046 = vmul.f32 %v6998, 0.5
        %v7047 = vmul.f32 %v6999, 0.5
        %v7048 = vmul.f32 %v7000, 0.5
        %v7049 = vmul.f32 %v7001, 0.5
        %v7050 = vmul.f32 %v7002, 0.5
        %v7051 = vmul.f32 %v7003, 0.5
        %v7052 = vmul.f32 %v7004, 0.5
        %v7053 = vmul.f32 %v7005, 0.5
        %v7054 = vmul.f32 %v7006, 0.5
        %v7055 = vmul.f32 %v7007, 0.5
        %v7056 = vmul.f32 %v6342, %v7008
        %v7057 = vmul.f32 %v6344, %v7009
        %v7058 = vmul.f32 %v6488, %v7010
        %v7059 = vmul.f32 %v6490, %v7011
        %v7060 = vmul.f32 %v6634, %v7012
        %v7061 = vmul.f32 %v6636, %v7013
        %v7062 = vmul.f32 %v6346, %v7014
        %v7063 = vmul.f32 %v6348, %v7015
        %v7064 = vmul.f32 %v6492, %v7016
        %v7065 = vmul.f32 %v6494, %v7017
        %v7066 = vmul.f32 %v6638, %v7018
        %v7067 = vmul.f32 %v6640, %v7019
        %v7068 = vmul.f32 %v6352, %v7020
        %v7069 = vmul.f32 %v6354, %v7021
        %v7070 = vmul.f32 %v6498, %v7022
        %v7071 = vmul.f32 %v6500, %v7023
        %v7072 = vmul.f32 %v6644, %v7024
        %v7073 = vmul.f32 %v6646, %v7025
        %v7074 = vmul.f32 %v6356, %v7026
        %v7075 = vmul.f32 %v6358, %v7027
        %v7076 = vmul.f32 %v6502, %v7028
        %v7077 = vmul.f32 %v6504, %v7029
        %v7078 = vmul.f32 %v6648, %v7030
        %v7079 = vmul.f32 %v6650, %v7031
        %v7080 = vmul.f32 %v6362, %v7032
        %v7081 = vmul.f32 %v6364, %v7033
        %v7082 = vmul.f32 %v6508, %v7034
        %v7083 = vmul.f32 %v6510, %v7035
        %v7084 = vmul.f32 %v6654, %v7036
        %v7085 = vmul.f32 %v6656, %v7037
        %v7086 = vmul.f32 %v6366, %v7038
        %v7087 = vmul.f32 %v6368, %v7039
        %v7088 = vmul.f32 %v6512, %v7040
        %v7089 = vmul.f32 %v6514, %v7041
        %v7090 = vmul.f32 %v6658, %v7042
        %v7091 = vmul.f32 %v6660, %v7043
        %v7092 = vmul.f32 %v6372, %v7044
        %v7093 = vmul.f32 %v6374, %v7045
        %v7094 = vmul.f32 %v6518, %v7046
        %v7095 = vmul.f32 %v6520, %v7047
        %v7096 = vmul.f32 %v6664, %v7048
        %v7097 = vmul.f32 %v6666, %v7049
        %v7098 = vmul.f32 %v6376, %v7050
        %v7099 = vmul.f32 %v6378, %v7051
        %v7100 = vmul.f32 %v6522, %v7052
        %v7101 = vmul.f32 %v6524, %v7053
        %v7102 = vmul.f32 %v6668, %v7054
        %v7103 = vmul.f32 %v6670, %v7055
        %v7104 = vpack.c.bf16 %v7062, %v7056
        %v7105 = vpack.c.bf16 %v7063, %v7057
        %v7106 = vpack.c.bf16 %v7064, %v7058
        %v7107 = vpack.c.bf16 %v7065, %v7059
        %v7108 = vpack.c.bf16 %v7066, %v7060
        %v7109 = vpack.c.bf16 %v7067, %v7061
        %v7110 = vpack.c.bf16 %v7074, %v7068
        %v7111 = vpack.c.bf16 %v7075, %v7069
        %v7112 = vpack.c.bf16 %v7076, %v7070
        %v7113 = vpack.c.bf16 %v7077, %v7071
        %v7114 = vpack.c.bf16 %v7078, %v7072
        %v7115 = vpack.c.bf16 %v7079, %v7073
        %v7116 = vpack.c.bf16 %v7086, %v7080
        %v7117 = vpack.c.bf16 %v7087, %v7081
        %v7118 = vpack.c.bf16 %v7088, %v7082
        %v7119 = vpack.c.bf16 %v7089, %v7083
        %v7120 = vpack.c.bf16 %v7090, %v7084
        %v7121 = vpack.c.bf16 %v7091, %v7085
        %v7122 = vpack.c.bf16 %v7098, %v7092
        %v7123 = vpack.c.bf16 %v7099, %v7093
        %v7124 = vpack.c.bf16 %v7100, %v7094
        %v7125 = vpack.c.bf16 %v7101, %v7095
        %v7126 = vpack.c.bf16 %v7102, %v7096
        %v7127 = vpack.c.bf16 %v7103, %v7097
        %v7128 = vld [vmem:[%s728] sm:$0xff]
        %v7129 = vld [vmem:[%s728 + $0x8] sm:$0xf]
        %v7130 = vld [vmem:[%s728 + $0xc] sm:$0xff]
        %v7131 = vld [vmem:[%s728 + $0x14] sm:$0xf]
        %v7132 = vld [vmem:[%s728 + $0x18] sm:$0xff]
        %v7133 = vld [vmem:[%s728 + $0x20] sm:$0xf]
        %v7134 = vld [vmem:[%s728 + $0x24] sm:$0xff]
        %v7135 = vld [vmem:[%s728 + $0x2c] sm:$0xf]
        %v7136 = vld [vmem:[%s728 + $0x30] sm:$0xff]
        %v7137 = vld [vmem:[%s728 + $0x38] sm:$0xf]
        %v7138 = vld [vmem:[%s728 + $0x3c] sm:$0xff]
        %v7139 = vld [vmem:[%s728 + $0x44] sm:$0xf]
        %v7140 = vld [vmem:[%s728 + $0x48] sm:$0xff]
        %v7141 = vld [vmem:[%s728 + $0x50] sm:$0xf]
        %v7142 = vld [vmem:[%s728 + $0x54] sm:$0xff]
        %v7143 = vld [vmem:[%s728 + $0x5c] sm:$0xf]
        %v7144 = vld [vmem:[%s728 + $0x60] sm:$0xff]
        %v7145 = vld [vmem:[%s728 + $0x68] sm:$0xf]
        %v7146 = vld [vmem:[%s728 + $0x6c] sm:$0xff]
        %v7147 = vld [vmem:[%s728 + $0x74] sm:$0xf]
        %v7148 = vld [vmem:[%s728 + $0x78] sm:$0xff]
        %v7149 = vld [vmem:[%s728 + $0x80] sm:$0xf]
        %v7150 = vld [vmem:[%s728 + $0x84] sm:$0xff]
        %v7151 = vld [vmem:[%s728 + $0x8c] sm:$0xf]
        %v7152 = vld [vmem:[%s728 + $0x90] sm:$0xff]
        %v7153 = vld [vmem:[%s728 + $0x98] sm:$0xf]
        %v7154 = vld [vmem:[%s728 + $0x9c] sm:$0xff]
        %v7155 = vld [vmem:[%s728 + $0xa4] sm:$0xf]
        %v7156 = vld [vmem:[%s728 + $0xa8] sm:$0xff]
        %v7157 = vld [vmem:[%s728 + $0xb0] sm:$0xf]
        %v7158 = vld [vmem:[%s728 + $0xb4] sm:$0xff]
        %v7159 = vld [vmem:[%s728 + $0xbc] sm:$0xf]
        %v7160 = vld [vmem:[%s728 + $0xc0] sm:$0xff]
        %v7161 = vld [vmem:[%s728 + $0xc8] sm:$0xf]
        %v7162 = vld [vmem:[%s728 + $0xcc] sm:$0xff]
        %v7163 = vld [vmem:[%s728 + $0xd4] sm:$0xf]
        %v7164 = vld [vmem:[%s728 + $0xd8] sm:$0xff]
        %v7165 = vld [vmem:[%s728 + $0xe0] sm:$0xf]
        %v7166 = vld [vmem:[%s728 + $0xe4] sm:$0xff]
        %v7167 = vld [vmem:[%s728 + $0xec] sm:$0xf]
        %v7168 = vld [vmem:[%s728 + $0xf0] sm:$0xff]
        %v7169 = vld [vmem:[%s728 + $0xf8] sm:$0xf]
        %v7170 = vld [vmem:[%s728 + $0xfc] sm:$0xff]
        %v7171 = vld [vmem:[%s728 + $0x104] sm:$0xf]
        %v7172 = vld [vmem:[%s728 + $0x108] sm:$0xff]
        %v7173 = vld [vmem:[%s728 + $0x110] sm:$0xf]
        %v7174 = vld [vmem:[%s728 + $0x114] sm:$0xff]
        %v7175 = vld [vmem:[%s728 + $0x11c] sm:$0xf]
        %v7176 = vld [vmem:[%s728 + $0x120] sm:$0xff]
        %v7177 = vld [vmem:[%s728 + $0x128] sm:$0xf]
        %v7178 = vld [vmem:[%s728 + $0x12c] sm:$0xff]
        %v7179 = vld [vmem:[%s728 + $0x134] sm:$0xf]
        %v7180 = vld [vmem:[%s728 + $0x138] sm:$0xff]
        %v7181 = vld [vmem:[%s728 + $0x140] sm:$0xf]
        %v7182 = vld [vmem:[%s728 + $0x144] sm:$0xff]
        %v7183 = vld [vmem:[%s728 + $0x14c] sm:$0xf]
        %v7184 = vld [vmem:[%s728 + $0x150] sm:$0xff]
        %v7185 = vld [vmem:[%s728 + $0x158] sm:$0xf]
        %v7186 = vld [vmem:[%s728 + $0x15c] sm:$0xff]
        %v7187 = vld [vmem:[%s728 + $0x164] sm:$0xf]
        %v7188 = vld [vmem:[%s728 + $0x168] sm:$0xff]
        %v7189 = vld [vmem:[%s728 + $0x170] sm:$0xf]
        %v7190 = vld [vmem:[%s728 + $0x174] sm:$0xff]
        %v7191 = vld [vmem:[%s728 + $0x17c] sm:$0xf]
        %v7192 = vld [vmem:[%s728 + $0x180] sm:$0xff]
        %v7193 = vld [vmem:[%s728 + $0x188] sm:$0xf]
        %v7194 = vld [vmem:[%s728 + $0x18c] sm:$0xff]
        %v7195 = vld [vmem:[%s728 + $0x194] sm:$0xf]
        %v7196 = vld [vmem:[%s728 + $0x198] sm:$0xff]
        %v7197 = vld [vmem:[%s728 + $0x1a0] sm:$0xf]
        %v7198 = vld [vmem:[%s728 + $0x1a4] sm:$0xff]
        %v7199 = vld [vmem:[%s728 + $0x1ac] sm:$0xf]
        %v7200 = vld [vmem:[%s728 + $0x1b0] sm:$0xff]
        %v7201 = vld [vmem:[%s728 + $0x1b8] sm:$0xf]
        %v7202 = vld [vmem:[%s728 + $0x1bc] sm:$0xff]
        %v7203 = vld [vmem:[%s728 + $0x1c4] sm:$0xf]
        %v7204 = vld [vmem:[%s728 + $0x1c8] sm:$0xff]
        %v7205 = vld [vmem:[%s728 + $0x1d0] sm:$0xf]
        %v7206 = vld [vmem:[%s728 + $0x1d4] sm:$0xff]
        %v7207 = vld [vmem:[%s728 + $0x1dc] sm:$0xf]
        %v7208 = vld [vmem:[%s728 + $0x1e0] sm:$0xff]
        %v7209 = vld [vmem:[%s728 + $0x1e8] sm:$0xf]
        %v7210 = vld [vmem:[%s728 + $0x1ec] sm:$0xff]
        %v7211 = vld [vmem:[%s728 + $0x1f4] sm:$0xf]
        %v7212 = vld [vmem:[%s728 + $0x1f8] sm:$0xff]
        %v7213 = vld [vmem:[%s728 + $0x200] sm:$0xf]
        %v7214 = vld [vmem:[%s728 + $0x204] sm:$0xff]
        %v7215 = vld [vmem:[%s728 + $0x20c] sm:$0xf]
        %v7216 = vld [vmem:[%s728 + $0x210] sm:$0xff]
        %v7217 = vld [vmem:[%s728 + $0x218] sm:$0xf]
        %v7218 = vld [vmem:[%s728 + $0x21c] sm:$0xff]
        %v7219 = vld [vmem:[%s728 + $0x224] sm:$0xf]
        %v7220 = vld [vmem:[%s728 + $0x228] sm:$0xff]
        %v7221 = vld [vmem:[%s728 + $0x230] sm:$0xf]
        %v7222 = vld [vmem:[%s728 + $0x234] sm:$0xff]
        %v7223 = vld [vmem:[%s728 + $0x23c] sm:$0xf]
        %v7224 = vld [vmem:[%s728 + $0x240] sm:$0xff]
        %v7225 = vld [vmem:[%s728 + $0x248] sm:$0xf]
        %v7226 = vld [vmem:[%s728 + $0x24c] sm:$0xff]
        %v7227 = vld [vmem:[%s728 + $0x254] sm:$0xf]
        %v7228 = vld [vmem:[%s728 + $0x258] sm:$0xff]
        %v7229 = vld [vmem:[%s728 + $0x260] sm:$0xf]
        %v7230 = vld [vmem:[%s728 + $0x264] sm:$0xff]
        %v7231 = vld [vmem:[%s728 + $0x26c] sm:$0xf]
        %v7232 = vld [vmem:[%s728 + $0x270] sm:$0xff]
        %v7233 = vld [vmem:[%s728 + $0x278] sm:$0xf]
        %v7234 = vld [vmem:[%s728 + $0x27c] sm:$0xff]
        %v7235 = vld [vmem:[%s728 + $0x284] sm:$0xf]
        %v7236 = vld [vmem:[%s728 + $0x288] sm:$0xff]
        %v7237 = vld [vmem:[%s728 + $0x290] sm:$0xf]
        %v7238 = vld [vmem:[%s728 + $0x294] sm:$0xff]
        %v7239 = vld [vmem:[%s728 + $0x29c] sm:$0xf]
        %v7240 = vld [vmem:[%s728 + $0x2a0] sm:$0xff]
        %v7241 = vld [vmem:[%s728 + $0x2a8] sm:$0xf]
        %v7242 = vld [vmem:[%s728 + $0x2ac] sm:$0xff]
        %v7243 = vld [vmem:[%s728 + $0x2b4] sm:$0xf]
        %v7244 = vld [vmem:[%s728 + $0x2b8] sm:$0xff]
        %v7245 = vld [vmem:[%s728 + $0x2c0] sm:$0xf]
        %v7246 = vld [vmem:[%s728 + $0x2c4] sm:$0xff]
        %v7247 = vld [vmem:[%s728 + $0x2cc] sm:$0xf]
        %v7248 = vld [vmem:[%s728 + $0x2d0] sm:$0xff]
        %v7249 = vld [vmem:[%s728 + $0x2d8] sm:$0xf]
        %v7250 = vld [vmem:[%s728 + $0x2dc] sm:$0xff]
        %v7251 = vld [vmem:[%s728 + $0x2e4] sm:$0xf]
        %v7252 = vld [vmem:[%s728 + $0x2e8] sm:$0xff]
        %v7253 = vld [vmem:[%s728 + $0x2f0] sm:$0xf]
        %v7254 = vld [vmem:[%s728 + $0x2f4] sm:$0xff]
        %v7255 = vld [vmem:[%s728 + $0x2fc] sm:$0xf]
        %v7256 = vld [vmem:[%s728 + $0x300] sm:$0xff]
        %v7257 = vld [vmem:[%s728 + $0x308] sm:$0xf]
        %v7258 = vld [vmem:[%s728 + $0x30c] sm:$0xff]
        %v7259 = vld [vmem:[%s728 + $0x314] sm:$0xf]
        %v7260 = vld [vmem:[%s728 + $0x318] sm:$0xff]
        %v7261 = vld [vmem:[%s728 + $0x320] sm:$0xf]
        %v7262 = vld [vmem:[%s728 + $0x324] sm:$0xff]
        %v7263 = vld [vmem:[%s728 + $0x32c] sm:$0xf]
        %v7264 = vld [vmem:[%s728 + $0x330] sm:$0xff]
        %v7265 = vld [vmem:[%s728 + $0x338] sm:$0xf]
        %v7266 = vld [vmem:[%s728 + $0x33c] sm:$0xff]
        %v7267 = vld [vmem:[%s728 + $0x344] sm:$0xf]
        %v7268 = vld [vmem:[%s728 + $0x348] sm:$0xff]
        %v7269 = vld [vmem:[%s728 + $0x350] sm:$0xf]
        %v7270 = vld [vmem:[%s728 + $0x354] sm:$0xff]
        %v7271 = vld [vmem:[%s728 + $0x35c] sm:$0xf]
        %v7272 = vld [vmem:[%s728 + $0x360] sm:$0xff]
        %v7273 = vld [vmem:[%s728 + $0x368] sm:$0xf]
        %v7274 = vld [vmem:[%s728 + $0x36c] sm:$0xff]
        %v7275 = vld [vmem:[%s728 + $0x374] sm:$0xf]
        %v7276 = vld [vmem:[%s728 + $0x378] sm:$0xff]
        %v7277 = vld [vmem:[%s728 + $0x380] sm:$0xf]
        %v7278 = vld [vmem:[%s728 + $0x384] sm:$0xff]
        %v7279 = vld [vmem:[%s728 + $0x38c] sm:$0xf]
        %v7280 = vld [vmem:[%s728 + $0x390] sm:$0xff]
        %v7281 = vld [vmem:[%s728 + $0x398] sm:$0xf]
        %v7282 = vld [vmem:[%s728 + $0x39c] sm:$0xff]
        %v7283 = vld [vmem:[%s728 + $0x3a4] sm:$0xf]
        %v7284 = vld [vmem:[%s728 + $0x3a8] sm:$0xff]
        %v7285 = vld [vmem:[%s728 + $0x3b0] sm:$0xf]
        %v7286 = vld [vmem:[%s728 + $0x3b4] sm:$0xff]
        %v7287 = vld [vmem:[%s728 + $0x3bc] sm:$0xf]
        %v7288 = vld [vmem:[%s728 + $0x3c0] sm:$0xff]
        %v7289 = vld [vmem:[%s728 + $0x3c8] sm:$0xf]
        %v7290 = vld [vmem:[%s728 + $0x3cc] sm:$0xff]
        %v7291 = vld [vmem:[%s728 + $0x3d4] sm:$0xf]
        %v7292 = vld [vmem:[%s728 + $0x3d8] sm:$0xff]
        %v7293 = vld [vmem:[%s728 + $0x3e0] sm:$0xf]
        %v7294 = vld [vmem:[%s728 + $0x3e4] sm:$0xff]
        %v7295 = vld [vmem:[%s728 + $0x3ec] sm:$0xf]
        %v7296 = vld [vmem:[%s728 + $0x3f0] sm:$0xff]
        %v7297 = vld [vmem:[%s728 + $0x3f8] sm:$0xf]
        %v7298 = vld [vmem:[%s728 + $0x3fc] sm:$0xff]
        %v7299 = vld [vmem:[%s728 + $0x404] sm:$0xf]
        %v7300 = vld [vmem:[%s728 + $0x408] sm:$0xff]
        %v7301 = vld [vmem:[%s728 + $0x410] sm:$0xf]
        %v7302 = vld [vmem:[%s728 + $0x414] sm:$0xff]
        %v7303 = vld [vmem:[%s728 + $0x41c] sm:$0xf]
        %v7304 = vld [vmem:[%s728 + $0x420] sm:$0xff]
        %v7305 = vld [vmem:[%s728 + $0x428] sm:$0xf]
        %v7306 = vld [vmem:[%s728 + $0x42c] sm:$0xff]
        %v7307 = vld [vmem:[%s728 + $0x434] sm:$0xf]
        %v7308 = vld [vmem:[%s728 + $0x438] sm:$0xff]
        %v7309 = vld [vmem:[%s728 + $0x440] sm:$0xf]
        %v7310 = vld [vmem:[%s728 + $0x444] sm:$0xff]
        %v7311 = vld [vmem:[%s728 + $0x44c] sm:$0xf]
        %v7312 = vld [vmem:[%s728 + $0x450] sm:$0xff]
        %v7313 = vld [vmem:[%s728 + $0x458] sm:$0xf]
        %v7314 = vld [vmem:[%s728 + $0x45c] sm:$0xff]
        %v7315 = vld [vmem:[%s728 + $0x464] sm:$0xf]
        %v7316 = vld [vmem:[%s728 + $0x468] sm:$0xff]
        %v7317 = vld [vmem:[%s728 + $0x470] sm:$0xf]
        %v7318 = vld [vmem:[%s728 + $0x474] sm:$0xff]
        %v7319 = vld [vmem:[%s728 + $0x47c] sm:$0xf]
        %v7320 = vld [vmem:[%s737] sm:$0x7]
        %v7322 = vlaneseq
        %v7323 = vshrl.u32 %v7322, 7
        %v7324 = vsub.s32 0, %v7323
        %v7325 = vrot.slane %v7320, %v7324
        %v7326 = vlaneseq
        %v7327 = vshrl.u32 %v7326, 7
        %v7328 = vsub.s32 1, %v7327
        %v7329 = vrot.slane %v7320, %v7328
        %v7330 = vlaneseq
        %v7331 = vshrl.u32 %v7330, 7
        %v7332 = vsub.s32 2, %v7331
        %v7333 = vrot.slane %v7320, %v7332
        %v7529 = vunpack.c.l.b16 %v7128
        %v7530 = vunpack.c.h.b16 %v7128
        %v7531 = vunpack.c.l.b16 %v7129
        %v7532 = vunpack.c.l.b16 %v7130
        %v7533 = vunpack.c.h.b16 %v7130
        %v7534 = vunpack.c.l.b16 %v7131
        %v7535 = vunpack.c.l.b16 %v7132
        %v7536 = vunpack.c.h.b16 %v7132
        %v7537 = vunpack.c.l.b16 %v7133
        %v7538 = vunpack.c.l.b16 %v7134
        %v7539 = vunpack.c.h.b16 %v7134
        %v7540 = vunpack.c.l.b16 %v7135
        %v7541 = vunpack.c.l.b16 %v7136
        %v7542 = vunpack.c.h.b16 %v7136
        %v7543 = vunpack.c.l.b16 %v7137
        %v7544 = vunpack.c.l.b16 %v7138
        %v7545 = vunpack.c.h.b16 %v7138
        %v7546 = vunpack.c.l.b16 %v7139
        %v7547 = vunpack.c.l.b16 %v7140
        %v7548 = vunpack.c.h.b16 %v7140
        %v7549 = vunpack.c.l.b16 %v7141
        %v7550 = vunpack.c.l.b16 %v7142
        %v7551 = vunpack.c.h.b16 %v7142
        %v7552 = vunpack.c.l.b16 %v7143
        %v7553 = vunpack.c.l.b16 %v7144
        %v7554 = vunpack.c.h.b16 %v7144
        %v7555 = vunpack.c.l.b16 %v7145
        %v7556 = vunpack.c.l.b16 %v7146
        %v7557 = vunpack.c.h.b16 %v7146
        %v7558 = vunpack.c.l.b16 %v7147
        %v7559 = vunpack.c.l.b16 %v7148
        %v7560 = vunpack.c.h.b16 %v7148
        %v7561 = vunpack.c.l.b16 %v7149
        %v7562 = vunpack.c.l.b16 %v7150
        %v7563 = vunpack.c.h.b16 %v7150
        %v7564 = vunpack.c.l.b16 %v7151
        %v7565 = vunpack.c.l.b16 %v7152
        %v7566 = vunpack.c.h.b16 %v7152
        %v7567 = vunpack.c.l.b16 %v7153
        %v7568 = vunpack.c.l.b16 %v7154
        %v7569 = vunpack.c.h.b16 %v7154
        %v7570 = vunpack.c.l.b16 %v7155
        %v7571 = vunpack.c.l.b16 %v7156
        %v7572 = vunpack.c.h.b16 %v7156
        %v7573 = vunpack.c.l.b16 %v7157
        %v7574 = vunpack.c.l.b16 %v7158
        %v7575 = vunpack.c.h.b16 %v7158
        %v7576 = vunpack.c.l.b16 %v7159
        %v7577 = vunpack.c.l.b16 %v7160
        %v7578 = vunpack.c.h.b16 %v7160
        %v7579 = vunpack.c.l.b16 %v7161
        %v7580 = vunpack.c.l.b16 %v7162
        %v7581 = vunpack.c.h.b16 %v7162
        %v7582 = vunpack.c.l.b16 %v7163
        %v7583 = vunpack.c.l.b16 %v7164
        %v7584 = vunpack.c.h.b16 %v7164
        %v7585 = vunpack.c.l.b16 %v7165
        %v7586 = vunpack.c.l.b16 %v7166
        %v7587 = vunpack.c.h.b16 %v7166
        %v7588 = vunpack.c.l.b16 %v7167
        %v7589 = vunpack.c.l.b16 %v7168
        %v7590 = vunpack.c.h.b16 %v7168
        %v7591 = vunpack.c.l.b16 %v7169
        %v7592 = vunpack.c.l.b16 %v7170
        %v7593 = vunpack.c.h.b16 %v7170
        %v7594 = vunpack.c.l.b16 %v7171
        %v7595 = vunpack.c.l.b16 %v7172
        %v7596 = vunpack.c.h.b16 %v7172
        %v7597 = vunpack.c.l.b16 %v7173
        %v7598 = vunpack.c.l.b16 %v7174
        %v7599 = vunpack.c.h.b16 %v7174
        %v7600 = vunpack.c.l.b16 %v7175
        %v7601 = vunpack.c.l.b16 %v7176
        %v7602 = vunpack.c.h.b16 %v7176
        %v7603 = vunpack.c.l.b16 %v7177
        %v7604 = vunpack.c.l.b16 %v7178
        %v7605 = vunpack.c.h.b16 %v7178
        %v7606 = vunpack.c.l.b16 %v7179
        %v7607 = vunpack.c.l.b16 %v7180
        %v7608 = vunpack.c.h.b16 %v7180
        %v7609 = vunpack.c.l.b16 %v7181
        %v7610 = vunpack.c.l.b16 %v7182
        %v7611 = vunpack.c.h.b16 %v7182
        %v7612 = vunpack.c.l.b16 %v7183
        %v7613 = vunpack.c.l.b16 %v7184
        %v7614 = vunpack.c.h.b16 %v7184
        %v7615 = vunpack.c.l.b16 %v7185
        %v7616 = vunpack.c.l.b16 %v7186
        %v7617 = vunpack.c.h.b16 %v7186
        %v7618 = vunpack.c.l.b16 %v7187
        %v7619 = vunpack.c.l.b16 %v7188
        %v7620 = vunpack.c.h.b16 %v7188
        %v7621 = vunpack.c.l.b16 %v7189
        %v7622 = vunpack.c.l.b16 %v7190
        %v7623 = vunpack.c.h.b16 %v7190
        %v7624 = vunpack.c.l.b16 %v7191
        %v7625 = vunpack.c.l.b16 %v7192
        %v7626 = vunpack.c.h.b16 %v7192
        %v7627 = vunpack.c.l.b16 %v7193
        %v7628 = vunpack.c.l.b16 %v7194
        %v7629 = vunpack.c.h.b16 %v7194
        %v7630 = vunpack.c.l.b16 %v7195
        %v7631 = vunpack.c.l.b16 %v7196
        %v7632 = vunpack.c.h.b16 %v7196
        %v7633 = vunpack.c.l.b16 %v7197
        %v7634 = vunpack.c.l.b16 %v7198
        %v7635 = vunpack.c.h.b16 %v7198
        %v7636 = vunpack.c.l.b16 %v7199
        %v7637 = vunpack.c.l.b16 %v7200
        %v7638 = vunpack.c.h.b16 %v7200
        %v7639 = vunpack.c.l.b16 %v7201
        %v7640 = vunpack.c.l.b16 %v7202
        %v7641 = vunpack.c.h.b16 %v7202
        %v7642 = vunpack.c.l.b16 %v7203
        %v7643 = vunpack.c.l.b16 %v7204
        %v7644 = vunpack.c.h.b16 %v7204
        %v7645 = vunpack.c.l.b16 %v7205
        %v7646 = vunpack.c.l.b16 %v7206
        %v7647 = vunpack.c.h.b16 %v7206
        %v7648 = vunpack.c.l.b16 %v7207
        %v7649 = vunpack.c.l.b16 %v7208
        %v7650 = vunpack.c.h.b16 %v7208
        %v7651 = vunpack.c.l.b16 %v7209
        %v7652 = vunpack.c.l.b16 %v7210
        %v7653 = vunpack.c.h.b16 %v7210
        %v7654 = vunpack.c.l.b16 %v7211
        %v7655 = vunpack.c.l.b16 %v7212
        %v7656 = vunpack.c.h.b16 %v7212
        %v7657 = vunpack.c.l.b16 %v7213
        %v7658 = vunpack.c.l.b16 %v7214
        %v7659 = vunpack.c.h.b16 %v7214
        %v7660 = vunpack.c.l.b16 %v7215
        %v7661 = vunpack.c.l.b16 %v7216
        %v7662 = vunpack.c.h.b16 %v7216
        %v7663 = vunpack.c.l.b16 %v7217
        %v7664 = vunpack.c.l.b16 %v7218
        %v7665 = vunpack.c.h.b16 %v7218
        %v7666 = vunpack.c.l.b16 %v7219
        %v7667 = vunpack.c.l.b16 %v7220
        %v7668 = vunpack.c.h.b16 %v7220
        %v7669 = vunpack.c.l.b16 %v7221
        %v7670 = vunpack.c.l.b16 %v7222
        %v7671 = vunpack.c.h.b16 %v7222
        %v7672 = vunpack.c.l.b16 %v7223
        %v7673 = vunpack.c.l.b16 %v7224
        %v7674 = vunpack.c.h.b16 %v7224
        %v7675 = vunpack.c.l.b16 %v7225
        %v7676 = vunpack.c.l.b16 %v7226
        %v7677 = vunpack.c.h.b16 %v7226
        %v7678 = vunpack.c.l.b16 %v7227
        %v7679 = vunpack.c.l.b16 %v7228
        %v7680 = vunpack.c.h.b16 %v7228
        %v7681 = vunpack.c.l.b16 %v7229
        %v7682 = vunpack.c.l.b16 %v7230
        %v7683 = vunpack.c.h.b16 %v7230
        %v7684 = vunpack.c.l.b16 %v7231
        %v7685 = vunpack.c.l.b16 %v7232
        %v7686 = vunpack.c.h.b16 %v7232
        %v7687 = vunpack.c.l.b16 %v7233
        %v7688 = vunpack.c.l.b16 %v7234
        %v7689 = vunpack.c.h.b16 %v7234
        %v7690 = vunpack.c.l.b16 %v7235
        %v7691 = vunpack.c.l.b16 %v7236
        %v7692 = vunpack.c.h.b16 %v7236
        %v7693 = vunpack.c.l.b16 %v7237
        %v7694 = vunpack.c.l.b16 %v7238
        %v7695 = vunpack.c.h.b16 %v7238
        %v7696 = vunpack.c.l.b16 %v7239
        %v7697 = vunpack.c.l.b16 %v7240
        %v7698 = vunpack.c.h.b16 %v7240
        %v7699 = vunpack.c.l.b16 %v7241
        %v7700 = vunpack.c.l.b16 %v7242
        %v7701 = vunpack.c.h.b16 %v7242
        %v7702 = vunpack.c.l.b16 %v7243
        %v7703 = vunpack.c.l.b16 %v7244
        %v7704 = vunpack.c.h.b16 %v7244
        %v7705 = vunpack.c.l.b16 %v7245
        %v7706 = vunpack.c.l.b16 %v7246
        %v7707 = vunpack.c.h.b16 %v7246
        %v7708 = vunpack.c.l.b16 %v7247
        %v7709 = vunpack.c.l.b16 %v7248
        %v7710 = vunpack.c.h.b16 %v7248
        %v7711 = vunpack.c.l.b16 %v7249
        %v7712 = vunpack.c.l.b16 %v7250
        %v7713 = vunpack.c.h.b16 %v7250
        %v7714 = vunpack.c.l.b16 %v7251
        %v7715 = vunpack.c.l.b16 %v7252
        %v7716 = vunpack.c.h.b16 %v7252
        %v7717 = vunpack.c.l.b16 %v7253
        %v7718 = vunpack.c.l.b16 %v7254
        %v7719 = vunpack.c.h.b16 %v7254
        %v7720 = vunpack.c.l.b16 %v7255
        %v7721 = vunpack.c.l.b16 %v7256
        %v7722 = vunpack.c.h.b16 %v7256
        %v7723 = vunpack.c.l.b16 %v7257
        %v7724 = vunpack.c.l.b16 %v7258
        %v7725 = vunpack.c.h.b16 %v7258
        %v7726 = vunpack.c.l.b16 %v7259
        %v7727 = vunpack.c.l.b16 %v7260
        %v7728 = vunpack.c.h.b16 %v7260
        %v7729 = vunpack.c.l.b16 %v7261
        %v7730 = vunpack.c.l.b16 %v7262
        %v7731 = vunpack.c.h.b16 %v7262
        %v7732 = vunpack.c.l.b16 %v7263
        %v7733 = vunpack.c.l.b16 %v7264
        %v7734 = vunpack.c.h.b16 %v7264
        %v7735 = vunpack.c.l.b16 %v7265
        %v7736 = vunpack.c.l.b16 %v7266
        %v7737 = vunpack.c.h.b16 %v7266
        %v7738 = vunpack.c.l.b16 %v7267
        %v7739 = vunpack.c.l.b16 %v7268
        %v7740 = vunpack.c.h.b16 %v7268
        %v7741 = vunpack.c.l.b16 %v7269
        %v7742 = vunpack.c.l.b16 %v7270
        %v7743 = vunpack.c.h.b16 %v7270
        %v7744 = vunpack.c.l.b16 %v7271
        %v7745 = vunpack.c.l.b16 %v7272
        %v7746 = vunpack.c.h.b16 %v7272
        %v7747 = vunpack.c.l.b16 %v7273
        %v7748 = vunpack.c.l.b16 %v7274
        %v7749 = vunpack.c.h.b16 %v7274
        %v7750 = vunpack.c.l.b16 %v7275
        %v7751 = vunpack.c.l.b16 %v7276
        %v7752 = vunpack.c.h.b16 %v7276
        %v7753 = vunpack.c.l.b16 %v7277
        %v7754 = vunpack.c.l.b16 %v7278
        %v7755 = vunpack.c.h.b16 %v7278
        %v7756 = vunpack.c.l.b16 %v7279
        %v7757 = vunpack.c.l.b16 %v7280
        %v7758 = vunpack.c.h.b16 %v7280
        %v7759 = vunpack.c.l.b16 %v7281
        %v7760 = vunpack.c.l.b16 %v7282
        %v7761 = vunpack.c.h.b16 %v7282
        %v7762 = vunpack.c.l.b16 %v7283
        %v7763 = vunpack.c.l.b16 %v7284
        %v7764 = vunpack.c.h.b16 %v7284
        %v7765 = vunpack.c.l.b16 %v7285
        %v7766 = vunpack.c.l.b16 %v7286
        %v7767 = vunpack.c.h.b16 %v7286
        %v7768 = vunpack.c.l.b16 %v7287
        %v7769 = vunpack.c.l.b16 %v7288
        %v7770 = vunpack.c.h.b16 %v7288
        %v7771 = vunpack.c.l.b16 %v7289
        %v7772 = vunpack.c.l.b16 %v7290
        %v7773 = vunpack.c.h.b16 %v7290
        %v7774 = vunpack.c.l.b16 %v7291
        %v7775 = vunpack.c.l.b16 %v7292
        %v7776 = vunpack.c.h.b16 %v7292
        %v7777 = vunpack.c.l.b16 %v7293
        %v7778 = vunpack.c.l.b16 %v7294
        %v7779 = vunpack.c.h.b16 %v7294
        %v7780 = vunpack.c.l.b16 %v7295
        %v7781 = vunpack.c.l.b16 %v7296
        %v7782 = vunpack.c.h.b16 %v7296
        %v7783 = vunpack.c.l.b16 %v7297
        %v7784 = vunpack.c.l.b16 %v7298
        %v7785 = vunpack.c.h.b16 %v7298
        %v7786 = vunpack.c.l.b16 %v7299
        %v7787 = vunpack.c.l.b16 %v7300
        %v7788 = vunpack.c.h.b16 %v7300
        %v7789 = vunpack.c.l.b16 %v7301
        %v7790 = vunpack.c.l.b16 %v7302
        %v7791 = vunpack.c.h.b16 %v7302
        %v7792 = vunpack.c.l.b16 %v7303
        %v7793 = vunpack.c.l.b16 %v7304
        %v7794 = vunpack.c.h.b16 %v7304
        %v7795 = vunpack.c.l.b16 %v7305
        %v7796 = vunpack.c.l.b16 %v7306
        %v7797 = vunpack.c.h.b16 %v7306
        %v7798 = vunpack.c.l.b16 %v7307
        %v7799 = vunpack.c.l.b16 %v7308
        %v7800 = vunpack.c.h.b16 %v7308
        %v7801 = vunpack.c.l.b16 %v7309
        %v7802 = vunpack.c.l.b16 %v7310
        %v7803 = vunpack.c.h.b16 %v7310
        %v7804 = vunpack.c.l.b16 %v7311
        %v7805 = vunpack.c.l.b16 %v7312
        %v7806 = vunpack.c.h.b16 %v7312
        %v7807 = vunpack.c.l.b16 %v7313
        %v7808 = vunpack.c.l.b16 %v7314
        %v7809 = vunpack.c.h.b16 %v7314
        %v7810 = vunpack.c.l.b16 %v7315
        %v7811 = vunpack.c.l.b16 %v7316
        %v7812 = vunpack.c.h.b16 %v7316
        %v7813 = vunpack.c.l.b16 %v7317
        %v7814 = vunpack.c.l.b16 %v7318
        %v7815 = vunpack.c.h.b16 %v7318
        %v7816 = vunpack.c.l.b16 %v7319
        %v7817 = vpack.c.b16 %v7532, %v7529
        %v7818 = vpack.c.b16 %v7533, %v7530
        %v7819 = vpack.c.b16 %v7534, %v7531
        %v7820 = vpack.c.b16 %v7538, %v7535
        %v7821 = vpack.c.b16 %v7539, %v7536
        %v7822 = vpack.c.b16 %v7540, %v7537
        %v7823 = vpack.c.b16 %v7544, %v7541
        %v7824 = vpack.c.b16 %v7545, %v7542
        %v7825 = vpack.c.b16 %v7546, %v7543
        %v7826 = vpack.c.b16 %v7550, %v7547
        %v7827 = vpack.c.b16 %v7551, %v7548
        %v7828 = vpack.c.b16 %v7552, %v7549
        %v7829 = vpack.c.b16 %v7556, %v7553
        %v7830 = vpack.c.b16 %v7557, %v7554
        %v7831 = vpack.c.b16 %v7558, %v7555
        %v7832 = vpack.c.b16 %v7562, %v7559
        %v7833 = vpack.c.b16 %v7563, %v7560
        %v7834 = vpack.c.b16 %v7564, %v7561
        %v7835 = vpack.c.b16 %v7568, %v7565
        %v7836 = vpack.c.b16 %v7569, %v7566
        %v7837 = vpack.c.b16 %v7570, %v7567
        %v7838 = vpack.c.b16 %v7574, %v7571
        %v7839 = vpack.c.b16 %v7575, %v7572
        %v7840 = vpack.c.b16 %v7576, %v7573
        %v7841 = vpack.c.b16 %v7580, %v7577
        %v7842 = vpack.c.b16 %v7581, %v7578
        %v7843 = vpack.c.b16 %v7582, %v7579
        %v7844 = vpack.c.b16 %v7586, %v7583
        %v7845 = vpack.c.b16 %v7587, %v7584
        %v7846 = vpack.c.b16 %v7588, %v7585
        %v7847 = vpack.c.b16 %v7592, %v7589
        %v7848 = vpack.c.b16 %v7593, %v7590
        %v7849 = vpack.c.b16 %v7594, %v7591
        %v7850 = vpack.c.b16 %v7598, %v7595
        %v7851 = vpack.c.b16 %v7599, %v7596
        %v7852 = vpack.c.b16 %v7600, %v7597
        %v7853 = vpack.c.b16 %v7604, %v7601
        %v7854 = vpack.c.b16 %v7605, %v7602
        %v7855 = vpack.c.b16 %v7606, %v7603
        %v7856 = vpack.c.b16 %v7610, %v7607
        %v7857 = vpack.c.b16 %v7611, %v7608
        %v7858 = vpack.c.b16 %v7612, %v7609
        %v7859 = vpack.c.b16 %v7616, %v7613
        %v7860 = vpack.c.b16 %v7617, %v7614
        %v7861 = vpack.c.b16 %v7618, %v7615
        %v7862 = vpack.c.b16 %v7622, %v7619
        %v7863 = vpack.c.b16 %v7623, %v7620
        %v7864 = vpack.c.b16 %v7624, %v7621
        %v7865 = vpack.c.b16 %v7628, %v7625
        %v7866 = vpack.c.b16 %v7629, %v7626
        %v7867 = vpack.c.b16 %v7630, %v7627
        %v7868 = vpack.c.b16 %v7634, %v7631
        %v7869 = vpack.c.b16 %v7635, %v7632
        %v7870 = vpack.c.b16 %v7636, %v7633
        %v7871 = vpack.c.b16 %v7640, %v7637
        %v7872 = vpack.c.b16 %v7641, %v7638
        %v7873 = vpack.c.b16 %v7642, %v7639
        %v7874 = vpack.c.b16 %v7646, %v7643
        %v7875 = vpack.c.b16 %v7647, %v7644
        %v7876 = vpack.c.b16 %v7648, %v7645
        %v7877 = vpack.c.b16 %v7652, %v7649
        %v7878 = vpack.c.b16 %v7653, %v7650
        %v7879 = vpack.c.b16 %v7654, %v7651
        %v7880 = vpack.c.b16 %v7658, %v7655
        %v7881 = vpack.c.b16 %v7659, %v7656
        %v7882 = vpack.c.b16 %v7660, %v7657
        %v7883 = vpack.c.b16 %v7664, %v7661
        %v7884 = vpack.c.b16 %v7665, %v7662
        %v7885 = vpack.c.b16 %v7666, %v7663
        %v7886 = vpack.c.b16 %v7670, %v7667
        %v7887 = vpack.c.b16 %v7671, %v7668
        %v7888 = vpack.c.b16 %v7672, %v7669
        %v7889 = vpack.c.b16 %v7676, %v7673
        %v7890 = vpack.c.b16 %v7677, %v7674
        %v7891 = vpack.c.b16 %v7678, %v7675
        %v7892 = vpack.c.b16 %v7682, %v7679
        %v7893 = vpack.c.b16 %v7683, %v7680
        %v7894 = vpack.c.b16 %v7684, %v7681
        %v7895 = vpack.c.b16 %v7688, %v7685
        %v7896 = vpack.c.b16 %v7689, %v7686
        %v7897 = vpack.c.b16 %v7690, %v7687
        %v7898 = vpack.c.b16 %v7694, %v7691
        %v7899 = vpack.c.b16 %v7695, %v7692
        %v7900 = vpack.c.b16 %v7696, %v7693
        %v7901 = vpack.c.b16 %v7700, %v7697
        %v7902 = vpack.c.b16 %v7701, %v7698
        %v7903 = vpack.c.b16 %v7702, %v7699
        %v7904 = vpack.c.b16 %v7706, %v7703
        %v7905 = vpack.c.b16 %v7707, %v7704
        %v7906 = vpack.c.b16 %v7708, %v7705
        %v7907 = vpack.c.b16 %v7712, %v7709
        %v7908 = vpack.c.b16 %v7713, %v7710
        %v7909 = vpack.c.b16 %v7714, %v7711
        %v7910 = vpack.c.b16 %v7718, %v7715
        %v7911 = vpack.c.b16 %v7719, %v7716
        %v7912 = vpack.c.b16 %v7720, %v7717
        %v7913 = vpack.c.b16 %v7724, %v7721
        %v7914 = vpack.c.b16 %v7725, %v7722
        %v7915 = vpack.c.b16 %v7726, %v7723
        %v7916 = vpack.c.b16 %v7730, %v7727
        %v7917 = vpack.c.b16 %v7731, %v7728
        %v7918 = vpack.c.b16 %v7732, %v7729
        %v7919 = vpack.c.b16 %v7736, %v7733
        %v7920 = vpack.c.b16 %v7737, %v7734
        %v7921 = vpack.c.b16 %v7738, %v7735
        %v7922 = vpack.c.b16 %v7742, %v7739
        %v7923 = vpack.c.b16 %v7743, %v7740
        %v7924 = vpack.c.b16 %v7744, %v7741
        %v7925 = vpack.c.b16 %v7748, %v7745
        %v7926 = vpack.c.b16 %v7749, %v7746
        %v7927 = vpack.c.b16 %v7750, %v7747
        %v7928 = vpack.c.b16 %v7754, %v7751
        %v7929 = vpack.c.b16 %v7755, %v7752
        %v7930 = vpack.c.b16 %v7756, %v7753
        %v7931 = vpack.c.b16 %v7760, %v7757
        %v7932 = vpack.c.b16 %v7761, %v7758
        %v7933 = vpack.c.b16 %v7762, %v7759
        %v7934 = vpack.c.b16 %v7766, %v7763
        %v7935 = vpack.c.b16 %v7767, %v7764
        %v7936 = vpack.c.b16 %v7768, %v7765
        %v7937 = vpack.c.b16 %v7772, %v7769
        %v7938 = vpack.c.b16 %v7773, %v7770
        %v7939 = vpack.c.b16 %v7774, %v7771
        %v7940 = vpack.c.b16 %v7778, %v7775
        %v7941 = vpack.c.b16 %v7779, %v7776
        %v7942 = vpack.c.b16 %v7780, %v7777
        %v7943 = vpack.c.b16 %v7784, %v7781
        %v7944 = vpack.c.b16 %v7785, %v7782
        %v7945 = vpack.c.b16 %v7786, %v7783
        %v7946 = vpack.c.b16 %v7790, %v7787
        %v7947 = vpack.c.b16 %v7791, %v7788
        %v7948 = vpack.c.b16 %v7792, %v7789
        %v7949 = vpack.c.b16 %v7796, %v7793
        %v7950 = vpack.c.b16 %v7797, %v7794
        %v7951 = vpack.c.b16 %v7798, %v7795
        %v7952 = vpack.c.b16 %v7802, %v7799
        %v7953 = vpack.c.b16 %v7803, %v7800
        %v7954 = vpack.c.b16 %v7804, %v7801
        %v7955 = vpack.c.b16 %v7808, %v7805
        %v7956 = vpack.c.b16 %v7809, %v7806
        %v7957 = vpack.c.b16 %v7810, %v7807
        %v7958 = vpack.c.b16 %v7814, %v7811
        %v7959 = vpack.c.b16 %v7815, %v7812
        %v7960 = vpack.c.b16 %v7816, %v7813
        %8105 = vmatprep.subr.bf16.mxu0 %v7818
        %8106 = vmatpush1.bf16.msra.mxu0 %v7817
        %8107 = vmatprep.subr.bf16.mxu0 %v7821
        %8108 = vmatpush1.bf16.msra.mxu0 %v7820
        %8109 = vmatprep.subr.bf16.mxu0 %v7824
        %8110 = vmatpush1.bf16.msra.mxu0 %v7823
        %8111 = vmatprep.subr.bf16.mxu0 %v7827
        %8112 = vmatpush1.bf16.msra.mxu0 %v7826
        %8113 = vmatprep.subr.bf16.mxu0 %v7830
        %8114 = vmatpush1.bf16.msra.mxu0 %v7829
        %8115 = vmatprep.subr.bf16.mxu0 %v7833
        %8116 = vmatpush1.bf16.msra.mxu0 %v7832
        %8117 = vmatprep.subr.bf16.mxu0 %v7836
        %8118 = vmatpush1.bf16.msra.mxu0 %v7835
        %8119 = vmatprep.subr.bf16.mxu0 %v7839
        %8120 = vmatpush1.bf16.msra.mxu0 %v7838
        %8121 = vmatprep.subr.bf16.mxu0 %v7842
        %8122 = vmatpush1.bf16.msra.mxu0 %v7841
        %8123 = vmatprep.subr.bf16.mxu0 %v7845
        %8124 = vmatpush1.bf16.msra.mxu0 %v7844
        %8125 = vmatprep.subr.bf16.mxu0 %v7848
        %8126 = vmatpush1.bf16.msra.mxu0 %v7847
        %8127 = vmatprep.subr.bf16.mxu0 %v7851
        %8128 = vmatpush1.bf16.msra.mxu0 %v7850
        %8129 = vmatprep.subr.bf16.mxu0 %v7854
        %8130 = vmatpush1.bf16.msra.mxu0 %v7853
        %8131 = vmatprep.subr.bf16.mxu0 %v7857
        %8132 = vmatpush1.bf16.msra.mxu0 %v7856
        %8133 = vmatprep.subr.bf16.mxu0 %v7860
        %8134 = vmatpush1.bf16.msra.mxu0 %v7859
        %8135 = vmatprep.subr.bf16.mxu0 %v7863
        %8136 = vmatpush1.bf16.msra.mxu0 %v7862
        %8137 = vmatprep.mubr.bf16.mxu0 %v7105
        %8138 = vmatmul.mubr.bf16.gmra.mrb[0].mxu0 %v7104
        %v8139 = vpop.f32.mrb[0].mxu0
        %v8140 = vadd.f32 %v7325, %v8139
        %v8141 = vpop.f32.mrb[0].mxu0
        %v8142 = vadd.f32 %v7329, %v8141
        %v8143 = vpop.f32.mrb[0].mxu0
        %v8144 = vadd.f32 %v7325, %v8143
        %v8145 = vpop.f32.mrb[0].mxu0
        %v8146 = vadd.f32 %v7329, %v8145
        %8147 = vmatprep.mubr.bf16.mxu0 %v7111
        %8148 = vmatmul.mubr.bf16.gmra.mrb[0].mxu0 %v7110
        %v8149 = vpop.f32.mrb[0].mxu0
        %v8150 = vadd.f32 %v7325, %v8149
        %v8151 = vpop.f32.mrb[0].mxu0
        %v8152 = vadd.f32 %v7329, %v8151
        %v8153 = vpop.f32.mrb[0].mxu0
        %v8154 = vadd.f32 %v7325, %v8153
        %v8155 = vpop.f32.mrb[0].mxu0
        %v8156 = vadd.f32 %v7329, %v8155
        %8157 = vmatprep.mubr.bf16.mxu0 %v7117
        %8158 = vmatmul.mubr.bf16.gmra.mrb[0].mxu0 %v7116
        %v8159 = vpop.f32.mrb[0].mxu0
        %v8160 = vadd.f32 %v7325, %v8159
        %v8161 = vpop.f32.mrb[0].mxu0
        %v8162 = vadd.f32 %v7329, %v8161
        %v8163 = vpop.f32.mrb[0].mxu0
        %v8164 = vadd.f32 %v7325, %v8163
        %v8165 = vpop.f32.mrb[0].mxu0
        %v8166 = vadd.f32 %v7329, %v8165
        %8167 = vmatprep.mubr.bf16.mxu0 %v7123
        %8168 = vmatmul.mubr.bf16.gmra.mrb[0].mxu0 %v7122
        %v8169 = vpop.f32.mrb[0].mxu0
        %v8170 = vadd.f32 %v7325, %v8169
        %v8171 = vpop.f32.mrb[0].mxu0
        %v8172 = vadd.f32 %v7329, %v8171
        %v8173 = vpop.f32.mrb[0].mxu0
        %v8174 = vadd.f32 %v7325, %v8173
        %v8175 = vpop.f32.mrb[0].mxu0
        %v8176 = vadd.f32 %v7329, %v8175
        %8177 = vdwg.mxu0
        %8178 = vmatprep.subr.bf16.mxu0 %v7866
        %8179 = vmatpush1.bf16.msra.mxu0 %v7865
        %8180 = vmatprep.subr.bf16.mxu0 %v7869
        %8181 = vmatpush1.bf16.msra.mxu0 %v7868
        %8182 = vmatprep.subr.bf16.mxu0 %v7872
        %8183 = vmatpush1.bf16.msra.mxu0 %v7871
        %8184 = vmatprep.subr.bf16.mxu0 %v7875
        %8185 = vmatpush1.bf16.msra.mxu0 %v7874
        %8186 = vmatprep.subr.bf16.mxu0 %v7878
        %8187 = vmatpush1.bf16.msra.mxu0 %v7877
        %8188 = vmatprep.subr.bf16.mxu0 %v7881
        %8189 = vmatpush1.bf16.msra.mxu0 %v7880
        %8190 = vmatprep.subr.bf16.mxu0 %v7884
        %8191 = vmatpush1.bf16.msra.mxu0 %v7883
        %8192 = vmatprep.subr.bf16.mxu0 %v7887
        %8193 = vmatpush1.bf16.msra.mxu0 %v7886
        %8194 = vmatprep.subr.bf16.mxu0 %v7890
        %8195 = vmatpush1.bf16.msra.mxu0 %v7889
        %8196 = vmatprep.subr.bf16.mxu0 %v7893
        %8197 = vmatpush1.bf16.msra.mxu0 %v7892
        %8198 = vmatprep.subr.bf16.mxu0 %v7896
        %8199 = vmatpush1.bf16.msra.mxu0 %v7895
        %8200 = vmatprep.subr.bf16.mxu0 %v7899
        %8201 = vmatpush1.bf16.msra.mxu0 %v7898
        %8202 = vmatprep.subr.bf16.mxu0 %v7902
        %8203 = vmatpush1.bf16.msra.mxu0 %v7901
        %8204 = vmatprep.subr.bf16.mxu0 %v7905
        %8205 = vmatpush1.bf16.msra.mxu0 %v7904
        %8206 = vmatprep.subr.bf16.mxu0 %v7908
        %8207 = vmatpush1.bf16.msra.mxu0 %v7907
        %8208 = vmatprep.subr.bf16.mxu0 %v7911
        %8209 = vmatpush1.bf16.msra.mxu0 %v7910
        %8210 = vmatprep.mubr.bf16.mxu0 %v7107
        %8211 = vmatmul.mubr.bf16.gmra.mrb[0].mxu0 %v7106
        %v8212 = vpop.f32.mrb[0].mxu0
        %v8213 = vadd.f32 %v8140, %v8212
        %v8214 = vpop.f32.mrb[0].mxu0
        %v8215 = vadd.f32 %v8142, %v8214
        %v8216 = vpop.f32.mrb[0].mxu0
        %v8217 = vadd.f32 %v8144, %v8216
        %v8218 = vpop.f32.mrb[0].mxu0
        %v8219 = vadd.f32 %v8146, %v8218
        %8220 = vmatprep.mubr.bf16.mxu0 %v7113
        %8221 = vmatmul.mubr.bf16.gmra.mrb[0].mxu0 %v7112
        %v8222 = vpop.f32.mrb[0].mxu0
        %v8223 = vadd.f32 %v8150, %v8222
        %v8224 = vpop.f32.mrb[0].mxu0
        %v8225 = vadd.f32 %v8152, %v8224
        %v8226 = vpop.f32.mrb[0].mxu0
        %v8227 = vadd.f32 %v8154, %v8226
        %v8228 = vpop.f32.mrb[0].mxu0
        %v8229 = vadd.f32 %v8156, %v8228
        %8230 = vmatprep.mubr.bf16.mxu0 %v7119
        %8231 = vmatmul.mubr.bf16.gmra.mrb[0].mxu0 %v7118
        %v8232 = vpop.f32.mrb[0].mxu0
        %v8233 = vadd.f32 %v8160, %v8232
        %v8234 = vpop.f32.mrb[0].mxu0
        %v8235 = vadd.f32 %v8162, %v8234
        %v8236 = vpop.f32.mrb[0].mxu0
        %v8237 = vadd.f32 %v8164, %v8236
        %v8238 = vpop.f32.mrb[0].mxu0
        %v8239 = vadd.f32 %v8166, %v8238
        %8240 = vmatprep.mubr.bf16.mxu0 %v7125
        %8241 = vmatmul.mubr.bf16.gmra.mrb[0].mxu0 %v7124
        %v8242 = vpop.f32.mrb[0].mxu0
        %v8243 = vadd.f32 %v8170, %v8242
        %v8244 = vpop.f32.mrb[0].mxu0
        %v8245 = vadd.f32 %v8172, %v8244
        %v8246 = vpop.f32.mrb[0].mxu0
        %v8247 = vadd.f32 %v8174, %v8246
        %v8248 = vpop.f32.mrb[0].mxu0
        %v8249 = vadd.f32 %v8176, %v8248
        %8250 = vdwg.mxu0
        %8251 = vmatprep.subr.bf16.mxu0 %v7914
        %8252 = vmatpush1.bf16.msra.mxu0 %v7913
        %8253 = vmatprep.subr.bf16.mxu0 %v7917
        %8254 = vmatpush1.bf16.msra.mxu0 %v7916
        %8255 = vmatprep.subr.bf16.mxu0 %v7920
        %8256 = vmatpush1.bf16.msra.mxu0 %v7919
        %8257 = vmatprep.subr.bf16.mxu0 %v7923
        %8258 = vmatpush1.bf16.msra.mxu0 %v7922
        %8259 = vmatprep.subr.bf16.mxu0 %v7926
        %8260 = vmatpush1.bf16.msra.mxu0 %v7925
        %8261 = vmatprep.subr.bf16.mxu0 %v7929
        %8262 = vmatpush1.bf16.msra.mxu0 %v7928
        %8263 = vmatprep.subr.bf16.mxu0 %v7932
        %8264 = vmatpush1.bf16.msra.mxu0 %v7931
        %8265 = vmatprep.subr.bf16.mxu0 %v7935
        %8266 = vmatpush1.bf16.msra.mxu0 %v7934
        %8267 = vmatprep.subr.bf16.mxu0 %v7938
        %8268 = vmatpush1.bf16.msra.mxu0 %v7937
        %8269 = vmatprep.subr.bf16.mxu0 %v7941
        %8270 = vmatpush1.bf16.msra.mxu0 %v7940
        %8271 = vmatprep.subr.bf16.mxu0 %v7944
        %8272 = vmatpush1.bf16.msra.mxu0 %v7943
        %8273 = vmatprep.subr.bf16.mxu0 %v7947
        %8274 = vmatpush1.bf16.msra.mxu0 %v7946
        %8275 = vmatprep.subr.bf16.mxu0 %v7950
        %8276 = vmatpush1.bf16.msra.mxu0 %v7949
        %8277 = vmatprep.subr.bf16.mxu0 %v7953
        %8278 = vmatpush1.bf16.msra.mxu0 %v7952
        %8279 = vmatprep.subr.bf16.mxu0 %v7956
        %8280 = vmatpush1.bf16.msra.mxu0 %v7955
        %8281 = vmatprep.subr.bf16.mxu0 %v7959
        %8282 = vmatpush1.bf16.msra.mxu0 %v7958
        %8283 = vmatprep.mubr.bf16.mxu0 %v7109
        %8284 = vmatmul.mubr.bf16.gmra.mrb[0].mxu0 %v7108
        %v8285 = vpop.f32.mrb[0].mxu0
        %v8286 = vadd.f32 %v8213, %v8285
        %v8287 = vpop.f32.mrb[0].mxu0
        %v8288 = vadd.f32 %v8215, %v8287
        %v8289 = vpop.f32.mrb[0].mxu0
        %v8290 = vadd.f32 %v8217, %v8289
        %v8291 = vpop.f32.mrb[0].mxu0
        %v8292 = vadd.f32 %v8219, %v8291
        %8293 = vmatprep.mubr.bf16.mxu0 %v7115
        %8294 = vmatmul.mubr.bf16.gmra.mrb[0].mxu0 %v7114
        %v8295 = vpop.f32.mrb[0].mxu0
        %v8296 = vadd.f32 %v8223, %v8295
        %v8297 = vpop.f32.mrb[0].mxu0
        %v8298 = vadd.f32 %v8225, %v8297
        %v8299 = vpop.f32.mrb[0].mxu0
        %v8300 = vadd.f32 %v8227, %v8299
        %v8301 = vpop.f32.mrb[0].mxu0
        %v8302 = vadd.f32 %v8229, %v8301
        %8303 = vmatprep.mubr.bf16.mxu0 %v7121
        %8304 = vmatmul.mubr.bf16.gmra.mrb[0].mxu0 %v7120
        %v8305 = vpop.f32.mrb[0].mxu0
        %v8306 = vadd.f32 %v8233, %v8305
        %v8307 = vpop.f32.mrb[0].mxu0
        %v8308 = vadd.f32 %v8235, %v8307
        %v8309 = vpop.f32.mrb[0].mxu0
        %v8310 = vadd.f32 %v8237, %v8309
        %v8311 = vpop.f32.mrb[0].mxu0
        %v8312 = vadd.f32 %v8239, %v8311
        %8313 = vmatprep.mubr.bf16.mxu0 %v7127
        %8314 = vmatmul.mubr.bf16.gmra.mrb[0].mxu0 %v7126
        %v8315 = vpop.f32.mrb[0].mxu0
        %v8316 = vadd.f32 %v8243, %v8315
        %v8317 = vpop.f32.mrb[0].mxu0
        %v8318 = vadd.f32 %v8245, %v8317
        %v8319 = vpop.f32.mrb[0].mxu0
        %v8320 = vadd.f32 %v8247, %v8319
        %v8321 = vpop.f32.mrb[0].mxu0
        %v8322 = vadd.f32 %v8249, %v8321
        %8323 = vdwg.mxu0
        %8324 = vmatprep.subr.bf16.mxu0 0
        %8325 = vmatpush1.bf16.msra.mxu0 %v7819
        %8326 = vmatprep.subr.bf16.mxu0 0
        %8327 = vmatpush1.bf16.msra.mxu0 %v7822
        %8328 = vmatprep.subr.bf16.mxu0 0
        %8329 = vmatpush1.bf16.msra.mxu0 %v7825
        %8330 = vmatprep.subr.bf16.mxu0 0
        %8331 = vmatpush1.bf16.msra.mxu0 %v7828
        %8332 = vmatprep.subr.bf16.mxu0 0
        %8333 = vmatpush1.bf16.msra.mxu0 %v7831
        %8334 = vmatprep.subr.bf16.mxu0 0
        %8335 = vmatpush1.bf16.msra.mxu0 %v7834
        %8336 = vmatprep.subr.bf16.mxu0 0
        %8337 = vmatpush1.bf16.msra.mxu0 %v7837
        %8338 = vmatprep.subr.bf16.mxu0 0
        %8339 = vmatpush1.bf16.msra.mxu0 %v7840
        %8340 = vmatprep.subr.bf16.mxu0 0
        %8341 = vmatpush1.bf16.msra.mxu0 %v7843
        %8342 = vmatprep.subr.bf16.mxu0 0
        %8343 = vmatpush1.bf16.msra.mxu0 %v7846
        %8344 = vmatprep.subr.bf16.mxu0 0
        %8345 = vmatpush1.bf16.msra.mxu0 %v7849
        %8346 = vmatprep.subr.bf16.mxu0 0
        %8347 = vmatpush1.bf16.msra.mxu0 %v7852
        %8348 = vmatprep.subr.bf16.mxu0 0
        %8349 = vmatpush1.bf16.msra.mxu0 %v7855
        %8350 = vmatprep.subr.bf16.mxu0 0
        %8351 = vmatpush1.bf16.msra.mxu0 %v7858
        %8352 = vmatprep.subr.bf16.mxu0 0
        %8353 = vmatpush1.bf16.msra.mxu0 %v7861
        %8354 = vmatprep.subr.bf16.mxu0 0
        %8355 = vmatpush1.bf16.msra.mxu0 %v7864
        %8356 = vmatprep.mubr.bf16.mxu0 %v7105
        %8357 = vmatmul.mubr.bf16.gmra.mrb[0].mxu0 %v7104
        %v8358 = vpop.f32.mrb[0].mxu0
        %v8359 = vadd.f32 %v7333, %v8358
        %v8360 = vpop.f32.mrb[0].mxu0
        %v8361 = vpop.f32.mrb[0].mxu0
        %v8362 = vadd.f32 %v7333, %v8361
        %v8363 = vpop.f32.mrb[0].mxu0
        %8364 = vmatprep.mubr.bf16.mxu0 %v7111
        %8365 = vmatmul.mubr.bf16.gmra.mrb[0].mxu0 %v7110
        %v8366 = vpop.f32.mrb[0].mxu0
        %v8367 = vadd.f32 %v7333, %v8366
        %v8368 = vpop.f32.mrb[0].mxu0
        %v8369 = vpop.f32.mrb[0].mxu0
        %v8370 = vadd.f32 %v7333, %v8369
        %v8371 = vpop.f32.mrb[0].mxu0
        %8372 = vmatprep.mubr.bf16.mxu0 %v7117
        %8373 = vmatmul.mubr.bf16.gmra.mrb[0].mxu0 %v7116
        %v8374 = vpop.f32.mrb[0].mxu0
        %v8375 = vadd.f32 %v7333, %v8374
        %v8376 = vpop.f32.mrb[0].mxu0
        %v8377 = vpop.f32.mrb[0].mxu0
        %v8378 = vadd.f32 %v7333, %v8377
        %v8379 = vpop.f32.mrb[0].mxu0
        %8380 = vmatprep.mubr.bf16.mxu0 %v7123
        %8381 = vmatmul.mubr.bf16.gmra.mrb[0].mxu0 %v7122
        %v8382 = vpop.f32.mrb[0].mxu0
        %v8383 = vadd.f32 %v7333, %v8382
        %v8384 = vpop.f32.mrb[0].mxu0
        %v8385 = vpop.f32.mrb[0].mxu0
        %v8386 = vadd.f32 %v7333, %v8385
        %v8387 = vpop.f32.mrb[0].mxu0
        %8388 = vdwg.mxu0
        %8389 = vmatprep.subr.bf16.mxu0 0
        %8390 = vmatpush1.bf16.msra.mxu0 %v7867
        %8391 = vmatprep.subr.bf16.mxu0 0
        %8392 = vmatpush1.bf16.msra.mxu0 %v7870
        %8393 = vmatprep.subr.bf16.mxu0 0
        %8394 = vmatpush1.bf16.msra.mxu0 %v7873
        %8395 = vmatprep.subr.bf16.mxu0 0
        %8396 = vmatpush1.bf16.msra.mxu0 %v7876
        %8397 = vmatprep.subr.bf16.mxu0 0
        %8398 = vmatpush1.bf16.msra.mxu0 %v7879
        %8399 = vmatprep.subr.bf16.mxu0 0
        %8400 = vmatpush1.bf16.msra.mxu0 %v7882
        %8401 = vmatprep.subr.bf16.mxu0 0
        %8402 = vmatpush1.bf16.msra.mxu0 %v7885
        %8403 = vmatprep.subr.bf16.mxu0 0
        %8404 = vmatpush1.bf16.msra.mxu0 %v7888
        %8405 = vmatprep.subr.bf16.mxu0 0
        %8406 = vmatpush1.bf16.msra.mxu0 %v7891
        %8407 = vmatprep.subr.bf16.mxu0 0
        %8408 = vmatpush1.bf16.msra.mxu0 %v7894
        %8409 = vmatprep.subr.bf16.mxu0 0
        %8410 = vmatpush1.bf16.msra.mxu0 %v7897
        %8411 = vmatprep.subr.bf16.mxu0 0
        %8412 = vmatpush1.bf16.msra.mxu0 %v7900
        %8413 = vmatprep.subr.bf16.mxu0 0
        %8414 = vmatpush1.bf16.msra.mxu0 %v7903
        %8415 = vmatprep.subr.bf16.mxu0 0
        %8416 = vmatpush1.bf16.msra.mxu0 %v7906
        %8417 = vmatprep.subr.bf16.mxu0 0
        %8418 = vmatpush1.bf16.msra.mxu0 %v7909
        %8419 = vmatprep.subr.bf16.mxu0 0
        %8420 = vmatpush1.bf16.msra.mxu0 %v7912
        %8421 = vmatprep.mubr.bf16.mxu0 %v7107
        %8422 = vmatmul.mubr.bf16.gmra.mrb[0].mxu0 %v7106
        %v8423 = vpop.f32.mrb[0].mxu0
        %v8424 = vadd.f32 %v8359, %v8423
        %v8425 = vpop.f32.mrb[0].mxu0
        %v8426 = vpop.f32.mrb[0].mxu0
        %v8427 = vadd.f32 %v8362, %v8426
        %v8428 = vpop.f32.mrb[0].mxu0
        %8429 = vmatprep.mubr.bf16.mxu0 %v7113
        %8430 = vmatmul.mubr.bf16.gmra.mrb[0].mxu0 %v7112
        %v8431 = vpop.f32.mrb[0].mxu0
        %v8432 = vadd.f32 %v8367, %v8431
        %v8433 = vpop.f32.mrb[0].mxu0
        %v8434 = vpop.f32.mrb[0].mxu0
        %v8435 = vadd.f32 %v8370, %v8434
        %v8436 = vpop.f32.mrb[0].mxu0
        %8437 = vmatprep.mubr.bf16.mxu0 %v7119
        %8438 = vmatmul.mubr.bf16.gmra.mrb[0].mxu0 %v7118
        %v8439 = vpop.f32.mrb[0].mxu0
        %v8440 = vadd.f32 %v8375, %v8439
        %v8441 = vpop.f32.mrb[0].mxu0
        %v8442 = vpop.f32.mrb[0].mxu0
        %v8443 = vadd.f32 %v8378, %v8442
        %v8444 = vpop.f32.mrb[0].mxu0
        %8445 = vmatprep.mubr.bf16.mxu0 %v7125
        %8446 = vmatmul.mubr.bf16.gmra.mrb[0].mxu0 %v7124
        %v8447 = vpop.f32.mrb[0].mxu0
        %v8448 = vadd.f32 %v8383, %v8447
        %v8449 = vpop.f32.mrb[0].mxu0
        %v8450 = vpop.f32.mrb[0].mxu0
        %v8451 = vadd.f32 %v8386, %v8450
        %v8452 = vpop.f32.mrb[0].mxu0
        %8453 = vdwg.mxu0
        %8454 = vmatprep.subr.bf16.mxu0 0
        %8455 = vmatpush1.bf16.msra.mxu0 %v7915
        %8456 = vmatprep.subr.bf16.mxu0 0
        %8457 = vmatpush1.bf16.msra.mxu0 %v7918
        %8458 = vmatprep.subr.bf16.mxu0 0
        %8459 = vmatpush1.bf16.msra.mxu0 %v7921
        %8460 = vmatprep.subr.bf16.mxu0 0
        %8461 = vmatpush1.bf16.msra.mxu0 %v7924
        %8462 = vmatprep.subr.bf16.mxu0 0
        %8463 = vmatpush1.bf16.msra.mxu0 %v7927
        %8464 = vmatprep.subr.bf16.mxu0 0
        %8465 = vmatpush1.bf16.msra.mxu0 %v7930
        %8466 = vmatprep.subr.bf16.mxu0 0
        %8467 = vmatpush1.bf16.msra.mxu0 %v7933
        %8468 = vmatprep.subr.bf16.mxu0 0
        %8469 = vmatpush1.bf16.msra.mxu0 %v7936
        %8470 = vmatprep.subr.bf16.mxu0 0
        %8471 = vmatpush1.bf16.msra.mxu0 %v7939
        %8472 = vmatprep.subr.bf16.mxu0 0
        %8473 = vmatpush1.bf16.msra.mxu0 %v7942
        %8474 = vmatprep.subr.bf16.mxu0 0
        %8475 = vmatpush1.bf16.msra.mxu0 %v7945
        %8476 = vmatprep.subr.bf16.mxu0 0
        %8477 = vmatpush1.bf16.msra.mxu0 %v7948
        %8478 = vmatprep.subr.bf16.mxu0 0
        %8479 = vmatpush1.bf16.msra.mxu0 %v7951
        %8480 = vmatprep.subr.bf16.mxu0 0
        %8481 = vmatpush1.bf16.msra.mxu0 %v7954
        %8482 = vmatprep.subr.bf16.mxu0 0
        %8483 = vmatpush1.bf16.msra.mxu0 %v7957
        %8484 = vmatprep.subr.bf16.mxu0 0
        %8485 = vmatpush1.bf16.msra.mxu0 %v7960
        %8486 = vmatprep.mubr.bf16.mxu0 %v7109
        %8487 = vmatmul.mubr.bf16.gmra.mrb[0].mxu0 %v7108
        %v8488 = vpop.f32.mrb[0].mxu0
        %v8489 = vadd.f32 %v8424, %v8488
        %v8490 = vpop.f32.mrb[0].mxu0
        %v8491 = vpop.f32.mrb[0].mxu0
        %v8492 = vadd.f32 %v8427, %v8491
        %v8493 = vpop.f32.mrb[0].mxu0
        %8494 = vmatprep.mubr.bf16.mxu0 %v7115
        %8495 = vmatmul.mubr.bf16.gmra.mrb[0].mxu0 %v7114
        %v8496 = vpop.f32.mrb[0].mxu0
        %v8497 = vadd.f32 %v8432, %v8496
        %v8498 = vpop.f32.mrb[0].mxu0
        %v8499 = vpop.f32.mrb[0].mxu0
        %v8500 = vadd.f32 %v8435, %v8499
        %v8501 = vpop.f32.mrb[0].mxu0
        %8502 = vmatprep.mubr.bf16.mxu0 %v7121
        %8503 = vmatmul.mubr.bf16.gmra.mrb[0].mxu0 %v7120
        %v8504 = vpop.f32.mrb[0].mxu0
        %v8505 = vadd.f32 %v8440, %v8504
        %v8506 = vpop.f32.mrb[0].mxu0
        %v8507 = vpop.f32.mrb[0].mxu0
        %v8508 = vadd.f32 %v8443, %v8507
        %v8509 = vpop.f32.mrb[0].mxu0
        %8510 = vmatprep.mubr.bf16.mxu0 %v7127
        %8511 = vmatmul.mubr.bf16.gmra.mrb[0].mxu0 %v7126
        %v8512 = vpop.f32.mrb[0].mxu0
        %v8513 = vadd.f32 %v8448, %v8512
        %v8514 = vpop.f32.mrb[0].mxu0
        %v8515 = vpop.f32.mrb[0].mxu0
        %v8516 = vadd.f32 %v8451, %v8515
        %v8517 = vpop.f32.mrb[0].mxu0
        %8518 = vdwg.mxu0
        %v8519 = vadd.f32 %v5036, %v8286
        %v8520 = vadd.f32 %v5037, %v8288
        %v8521 = vadd.f32 %v5038, %v8489
        %v8522 = vadd.f32 %v5039, %v8290
        %v8523 = vadd.f32 %v5040, %v8292
        %v8524 = vadd.f32 %v5041, %v8492
        %v8525 = vadd.f32 %v5042, %v8296
        %v8526 = vadd.f32 %v5043, %v8298
        %v8527 = vadd.f32 %v5044, %v8497
        %v8528 = vadd.f32 %v5045, %v8300
        %v8529 = vadd.f32 %v5046, %v8302
        %v8530 = vadd.f32 %v5047, %v8500
        %v8531 = vadd.f32 %v5048, %v8306
        %v8532 = vadd.f32 %v5049, %v8308
        %v8533 = vadd.f32 %v5050, %v8505
        %v8534 = vadd.f32 %v5051, %v8310
        %v8535 = vadd.f32 %v5052, %v8312
        %v8536 = vadd.f32 %v5053, %v8508
        %v8537 = vadd.f32 %v5054, %v8316
        %v8538 = vadd.f32 %v5055, %v8318
        %v8539 = vadd.f32 %v5056, %v8513
        %v8540 = vadd.f32 %v5057, %v8320
        %v8541 = vadd.f32 %v5058, %v8322
        %v8542 = vadd.f32 %v5059, %v8516
        %8543 = vst [vmem:[#allocation2] sm:$0xff] %v8519
        %8544 = vst [vmem:[#allocation2 + $0x8] sm:$0xff] %v8520
        %8545 = vst [vmem:[#allocation2 + $0x10] sm:$0xff] %v8521
        %8546 = vst [vmem:[#allocation2 + $0x18] sm:$0xff] %v8522
        %8547 = vst [vmem:[#allocation2 + $0x20] sm:$0xff] %v8523
        %8548 = vst [vmem:[#allocation2 + $0x28] sm:$0xff] %v8524
        %8549 = vst [vmem:[#allocation2 + $0x30] sm:$0xff] %v8525
        %8550 = vst [vmem:[#allocation2 + $0x38] sm:$0xff] %v8526
        %8551 = vst [vmem:[#allocation2 + $0x40] sm:$0xff] %v8527
        %8552 = vst [vmem:[#allocation2 + $0x48] sm:$0xff] %v8528
        %8553 = vst [vmem:[#allocation2 + $0x50] sm:$0xff] %v8529
        %8554 = vst [vmem:[#allocation2 + $0x58] sm:$0xff] %v8530
        %8555 = vst [vmem:[#allocation2 + $0x60] sm:$0xff] %v8531
        %8556 = vst [vmem:[#allocation2 + $0x68] sm:$0xff] %v8532
        %8557 = vst [vmem:[#allocation2 + $0x70] sm:$0xff] %v8533
        %8558 = vst [vmem:[#allocation2 + $0x78] sm:$0xff] %v8534
        %8559 = vst [vmem:[#allocation2 + $0x80] sm:$0xff] %v8535
        %8560 = vst [vmem:[#allocation2 + $0x88] sm:$0xff] %v8536
        %8561 = vst [vmem:[#allocation2 + $0x90] sm:$0xff] %v8537
        %8562 = vst [vmem:[#allocation2 + $0x98] sm:$0xff] %v8538
        %8563 = vst [vmem:[#allocation2 + $0xa0] sm:$0xff] %v8539
        %8564 = vst [vmem:[#allocation2 + $0xa8] sm:$0xff] %v8540
        %8565 = vst [vmem:[#allocation2 + $0xb0] sm:$0xff] %v8541
        %8566 = vst [vmem:[#allocation2 + $0xb8] sm:$0xff] %v8542
        %p8567 = scmp.eq.s32.totalorder %s42, 1
        // Predicated region
        $region121: #{mask_transformer_forward.4} parent=71 // pred_check
          %p8568 = pneg %p8567
        $region122: #{mask_transformer_forward.4} parent=71 // pred_check_branch
          %8570 = sbr.rel (%p8568) target = $region124
        $region123: #{mask_transformer_forward.4} parent=71 // pred_region
          %v8571 = vpack.c.bf16 %v8522, %v8519
          %v8572 = vpack.c.bf16 %v8523, %v8520
          %v8573 = vpack.c.bf16 %v8524, %v8521
          %v8574 = vpack.c.bf16 %v8528, %v8525
          %v8575 = vpack.c.bf16 %v8529, %v8526
          %v8576 = vpack.c.bf16 %v8530, %v8527
          %v8577 = vpack.c.bf16 %v8534, %v8531
          %v8578 = vpack.c.bf16 %v8535, %v8532
          %v8579 = vpack.c.bf16 %v8536, %v8533
          %v8580 = vpack.c.bf16 %v8540, %v8537
          %v8581 = vpack.c.bf16 %v8541, %v8538
          %v8582 = vpack.c.bf16 %v8542, %v8539
          %v8595 = vunpack.c.l.b16 %v8571
          %v8596 = vunpack.c.l.b16 %v8572
          %v8597 = vunpack.c.l.b16 %v8573
          %v8598 = vunpack.c.h.b16 %v8571
          %v8599 = vunpack.c.h.b16 %v8572
          %v8600 = vunpack.c.h.b16 %v8573
          %v8601 = vunpack.c.l.b16 %v8574
          %v8602 = vunpack.c.l.b16 %v8575
          %v8603 = vunpack.c.l.b16 %v8576
          %v8604 = vunpack.c.h.b16 %v8574
          %v8605 = vunpack.c.h.b16 %v8575
          %v8606 = vunpack.c.h.b16 %v8576
          %v8607 = vunpack.c.l.b16 %v8577
          %v8608 = vunpack.c.l.b16 %v8578
          %v8609 = vunpack.c.l.b16 %v8579
          %v8610 = vunpack.c.h.b16 %v8577
          %v8611 = vunpack.c.h.b16 %v8578
          %v8612 = vunpack.c.h.b16 %v8579
          %v8613 = vunpack.c.l.b16 %v8580
          %v8614 = vunpack.c.l.b16 %v8581
          %v8615 = vunpack.c.l.b16 %v8582
          %v8616 = vunpack.c.h.b16 %v8580
          %v8617 = vunpack.c.h.b16 %v8581
          %v8618 = vunpack.c.h.b16 %v8582
          %v8619 = vpack.c.b16 %v8596, %v8595
          %v8620 = vpack.c.b16 %v8597, %v8597
          %v8621 = vpack.c.b16 %v8599, %v8598
          %v8622 = vpack.c.b16 %v8600, %v8600
          %v8623 = vpack.c.b16 %v8602, %v8601
          %v8624 = vpack.c.b16 %v8603, %v8603
          %v8625 = vpack.c.b16 %v8605, %v8604
          %v8626 = vpack.c.b16 %v8606, %v8606
          %v8627 = vpack.c.b16 %v8608, %v8607
          %v8628 = vpack.c.b16 %v8609, %v8609
          %v8629 = vpack.c.b16 %v8611, %v8610
          %v8630 = vpack.c.b16 %v8612, %v8612
          %v8631 = vpack.c.b16 %v8614, %v8613
          %v8632 = vpack.c.b16 %v8615, %v8615
          %v8633 = vpack.c.b16 %v8617, %v8616
          %v8634 = vpack.c.b16 %v8618, %v8618
          %8651 = vst [vmem:[%s13] sm:$0xff] %v8619
          %8652 = vst [vmem:[%s13 + $0x8] sm:$0xf] %v8620
          %8653 = vst [vmem:[%s13 + $0xc] sm:$0xff] %v8621
          %8654 = vst [vmem:[%s13 + $0x14] sm:$0xf] %v8622
          %8655 = vst [vmem:[%s13 + $0x18] sm:$0xff] %v8623
          %8656 = vst [vmem:[%s13 + $0x20] sm:$0xf] %v8624
          %8657 = vst [vmem:[%s13 + $0x24] sm:$0xff] %v8625
          %8658 = vst [vmem:[%s13 + $0x2c] sm:$0xf] %v8626
          %8659 = vst [vmem:[%s13 + $0x30] sm:$0xff] %v8627
          %8660 = vst [vmem:[%s13 + $0x38] sm:$0xf] %v8628
          %8661 = vst [vmem:[%s13 + $0x3c] sm:$0xff] %v8629
          %8662 = vst [vmem:[%s13 + $0x44] sm:$0xf] %v8630
          %8663 = vst [vmem:[%s13 + $0x48] sm:$0xff] %v8631
          %8664 = vst [vmem:[%s13 + $0x50] sm:$0xf] %v8632
          %8665 = vst [vmem:[%s13 + $0x54] sm:$0xff] %v8633
          %8666 = vst [vmem:[%s13 + $0x5c] sm:$0xf] %v8634
        $region124: #{mask_transformer_forward.4} parent=71 // pred_fallthru
          _
        // Predicated region
        $region125: #{mask_transformer_forward.4} parent=71 // pred_check
          %p8667 = pneg %p388
        $region126: #{mask_transformer_forward.4} parent=71 // pred_check_branch
          %8669 = sbr.rel (%p8667) target = $region128
        $region127: #{mask_transformer_forward.4} parent=71 // pred_region
          _
        $region128: #{mask_transformer_forward.4} parent=71 // pred_fallthru
          _
        // Predicated region
        $region129: #{mask_transformer_forward.4} parent=71 // pred_check
          %p8670 = pneg %p388
        $region130: #{mask_transformer_forward.4} parent=71 // pred_check_branch
          %8672 = sbr.rel (%p8670) target = $region132
        $region131: #{mask_transformer_forward.4} parent=71 // pred_region
          _
        $region132: #{mask_transformer_forward.4} parent=71 // pred_fallthru
          _
      $region72: #{mask_transformer_forward.4} parent=5 // pred_fallthru
        _
      %p8673 = scmp.le.s32.totalorder 2, %s37
      // Predicated region
      $region133: #{mask_transformer_forward.4} parent=5 // pred_check
        %p8674 = pneg %p8673
      $region134: #{mask_transformer_forward.4} parent=5 // pred_check_branch
        %8676 = sbr.rel (%p8674) target = $region136
      $region135: #{mask_transformer_forward.4} parent=5 // pred_region
        %s8677 = ssub.s32 %s37, 2
      $region136: #{mask_transformer_forward.4} parent=5 // pred_fallthru
        _
    $region6: #{mask_transformer_forward.4} parent=1 // loop_footer
      %s41 = sadd.s32 1, %s37
    $region7: #{mask_transformer_forward.4} parent=1 // loop_footer_branch
      %36 = sbr.rel target = $region3
    $region8: #{mask_transformer_forward.4} parent=1 // loop_exit
      _
    %8678 = vsyncpa [#allocation4], 1
    %s8679 = scalar_lea.sflag [#allocation4], 1
    %8680 = vsyncpa %s8679, 1
    %8681 = vsyncpa [#allocation6], 1
    %s8682 = scalar_lea.sflag [#allocation6], 1
    %8683 = vsyncpa %s8682, 1
    %8684 = vsyncpa [#allocation9], 1
    %s8685 = scalar_lea.sflag [#allocation9], 1
    %8686 = vsyncpa %s8685, 1
    %8687 = vsyncpa [#allocation12], 1
    %s8688 = scalar_lea.sflag [#allocation12], 1
    %8689 = vsyncpa %s8688, 1
    %8690 = vsyncpa [#allocation15], 1
    %s8691 = scalar_lea.sflag [#allocation15], 1
    %8692 = vsyncpa %s8691, 1
    %8693 = vsyncpa [#allocation18], 1
    %s8694 = scalar_lea.sflag [#allocation18], 1
    %8695 = vsyncpa %s8694, 1

</llo_original>
